<compile_context>
chip_gen: v6e
topology: v6e:2x2x1
jax: 0.10.0
libtpu: 0.0.40
codegen_flags: <defaults>
</compile_context>

<pallas_src>
import functools

import jax
import jax.numpy as jnp
from jax.experimental import pallas as pl
from jax.experimental.pallas import tpu as pltpu

LEAK = 0.01


def _lrelu(x):
    return jnp.where(x >= 0, x, LEAK * x)


# ----------------------------------------------------------------------------
# Fused UNet_ld kernel: one grid step == one batch element through all layers.
# Activations: (C, flattened padded spatial), spatial on lanes.
# ----------------------------------------------------------------------------
def _unet_kernel(x_ref,
                 w0_ref, b0_ref, wd_ref, bd_ref, w1_ref, b1_ref,
                 w2_ref, b2_ref, wu_ref, bu_ref, w3_ref, b3_ref,
                 wp_ref, bp_ref,
                 mf_ref, mh_ref, ssel_ref, uup_ref,
                 pred_ref, enc_ref,
                 pcat, phalf, pc1, po,
                 *, H, W, C0, C1):
    Hs, Ws = H // 2, W // 2
    Wp, Wsp = W + 2, Ws + 2          # padded row widths (full / half res)
    NF, NFh = H * Wp, Hs * Wsp       # flat conv-output lengths
    OFF, OFFh = Wp + 1, Wsp + 1      # interior start offset in padded buffers

    mf = mf_ref[...] > 0.5           # (1, NF)  valid full-res output columns
    mh = mh_ref[...] > 0.5           # (1, NFh) valid half-res output columns

    # Halo strips [0:OFF] and [OFF+NF:] are never reached by the interior
    # stores, so zero them every step (cheap, a few KB).  Halo cells *inside*
    # the interior window coincide exactly with the masked "garbage" columns
    # and are re-zeroed by the masked stores below, so every byte that a conv
    # reads is written in the same grid step (no scratch persistence needed).
    def zero_halo(buf, off, n):
        z = jnp.zeros((buf.shape[0], off), buf.dtype)
        buf[:, 0:off] = z
        buf[:, off + n:off + n + off] = z

    zero_halo(pcat, OFF, NF)
    zero_halo(po, OFF, NF)
    zero_halo(phalf, OFFh, NFh)
    zero_halo(pc1, OFFh, NFh)

    def conv3x3(read, w_ref, wrow, n):
        """9 accumulating MXU dots: sum_t W_t(Co,Ci) @ slice_t(Ci, n)."""
        acc = None
        for t in range(9):
            dy, dx = divmod(t, 3)
            part = jnp.dot(w_ref[t], read(dy * wrow + dx, n),
                           preferred_element_type=jnp.float32)
            acc = part if acc is None else acc + part
        return acc

    # ---- down_1[0]: Conv(C_IN -> C0) (BN folded) + LeakyReLU ----------------
    # Output goes straight into the skip half of pcat; that buffer doubles as
    # the (already padded) input of the stride-2 DownSampling conv.
    a0 = conv3x3(lambda o, n: x_ref[:, o:o + n], w0_ref, Wp, NF)
    d0 = jnp.where(mf, _lrelu(a0 + b0_ref[...]), 0.0)
    pcat[C0:2 * C0, OFF:OFF + NF] = d0.astype(pcat.dtype)

    # ---- down_1[1]: DownSampling = 3x3 stride-2 conv + LeakyReLU ------------
    # Full-res stride-1 conv (same contiguous tap slices), then one 0/1
    # selection matmul picks the even (y, x) positions directly into the
    # half-res padded-flat layout.
    fds = conv3x3(lambda o, n: pcat[C0:2 * C0, o:o + n], wd_ref, Wp, NF)
    ds_pre = jnp.dot(fds, ssel_ref[...], preferred_element_type=jnp.float32)
    ds = jnp.where(mh, _lrelu(ds_pre + bd_ref[...]), 0.0)
    phalf[:, OFFh:OFFh + NFh] = ds.astype(phalf.dtype)

    # ---- down_1[2]: Conv(C0 -> C1) then Conv(C1 -> C1) ----------------------
    a1 = conv3x3(lambda o, n: phalf[:, o:o + n], w1_ref, Wsp, NFh)
    c1 = jnp.where(mh, _lrelu(a1 + b1_ref[...]), 0.0)
    pc1[:, OFFh:OFFh + NFh] = c1.astype(pc1.dtype)

    a2 = conv3x3(lambda o, n: pc1[:, o:o + n], w2_ref, Wsp, NFh)
    enc = _lrelu(a2 + b2_ref[...])                                 # (C1, NFh)
    enc_ref[...] = enc

    # ---- up[0]: UpSampling(C1, C0) ------------------------------------------
    # 1x1 conv commutes with nearest-2x upsample: run it at half res, then the
    # replication is one matmul against a 0/1 matrix that lands directly in the
    # full-res padded-flat layout (its all-zero rows kill the garbage columns).
    upc = jnp.dot(wu_ref[...], enc.astype(jnp.bfloat16),
                  preferred_element_type=jnp.float32)              # (C0, NFh)
    upf = jnp.dot(upc.astype(jnp.bfloat16), uup_ref[...],
                  preferred_element_type=jnp.float32)              # (C0, NF)
    pcat[0:C0, OFF:OFF + NF] = jnp.where(
        mf, upf + bu_ref[...], 0.0).astype(pcat.dtype)

    # ---- up[1]: Conv(2*C0 -> C0) --------------------------------------------
    a3 = conv3x3(lambda o, n: pcat[:, o:o + n], w3_ref, Wp, NF)
    o3 = jnp.where(mf, _lrelu(a3 + b3_ref[...]), 0.0)
    po[:, OFF:OFF + NF] = o3.astype(po.dtype)

    # ---- pred1: Conv(C0 -> C_OUT) + BN (folded), no activation --------------
    ap = conv3x3(lambda o, n: po[:, o:o + n], wp_ref, Wp, NF)
    pred_ref[...] = ap + bp_ref[...]


def unet_ld_pallas(x_flat, pm, *, H, W):
    """x_flat: (B, C_IN, (H+2)*(W+2)+2) bf16 padded-flat; pm: matmul params."""
    B, C_IN, NPF = x_flat.shape
    assert H % 2 == 0 and W % 2 == 0
    Hs, Ws = H // 2, W // 2
    Wp, Wsp = W + 2, Ws + 2
    NF, NFh = H * Wp, Hs * Wsp
    NPH = NFh + 2 * (Wsp + 1)
    assert NPF == NF + 2 * (Wp + 1)

    C0 = pm["w0"].shape[1]
    C1 = pm["w2"].shape[1]
    C_OUT = pm["wp"].shape[1]

    # Host-built constants: validity masks (garbage = pad columns of each row)
    # plus the stride-2 selection and nearest-2x replication matrices.
    jj = jnp.arange(NF)
    yy, xx = jj // Wp, jj % Wp
    kk = jnp.arange(NFh)
    y2, x2 = kk // Wsp, kk % Wsp
    mf = (xx < W).astype(jnp.float32).reshape(1, NF)
    mh = (x2 < Ws).astype(jnp.float32).reshape(1, NFh)
    src_j = (2 * y2) * Wp + 2 * x2
    ssel = ((jj[:, None] == src_j[None, :]) & (x2 < Ws)[None, :]
            ).astype(jnp.float32)                                  # (NF, NFh)
    src_k = (yy // 2) * Wsp + (xx // 2)
    uup = ((kk[:, None] == src_k[None, :]) & (xx < W)[None, :]
           ).astype(jnp.bfloat16)                                  # (NFh, NF)

    kernel = functools.partial(_unet_kernel, H=H, W=W, C0=C0, C1=C1)

    def full_spec(a):
        n = a.ndim
        return pl.BlockSpec(a.shape, lambda b, n=n: (0,) * n)

    consts = [pm[k] for k in ("w0", "b0", "wd", "bd", "w1", "b1", "w2", "b2",
                              "wu", "bu", "w3", "b3", "wp", "bp")]
    consts += [mf, mh, ssel, uup]

    in_specs = [pl.BlockSpec((None, C_IN, NPF), lambda b: (b, 0, 0))]
    in_specs += [full_spec(a) for a in consts]

    out_shape = (jax.ShapeDtypeStruct((B, C_OUT, NF), jnp.float32),
                 jax.ShapeDtypeStruct((B, C1, NFh), jnp.float32))
    out_specs = [pl.BlockSpec((None, C_OUT, NF), lambda b: (b, 0, 0)),
                 pl.BlockSpec((None, C1, NFh), lambda b: (b, 0, 0))]

    scratch = [
        pltpu.VMEM((2 * C0, NPF), jnp.bfloat16),   # pcat: [upsample | d0 skip]
        pltpu.VMEM((C0, NPH), jnp.bfloat16),       # phalf (padded ds)
        pltpu.VMEM((C1, NPH), jnp.bfloat16),       # pc1   (padded c1)
        pltpu.VMEM((C0, NPF), jnp.bfloat16),       # po    (padded conv3 out)
    ]

    pred, enc = pl.pallas_call(
        kernel,
        out_shape=out_shape,
        grid_spec=pltpu.PrefetchScalarGridSpec(
            num_scalar_prefetch=0,
            grid=(B,),
            in_specs=in_specs,
            out_specs=out_specs,
            scratch_shapes=scratch,
        ),
        compiler_params=pltpu.CompilerParams(
            dimension_semantics=("parallel",)),
    )(x_flat, *consts)
    return pred, enc


# ----------------------------------------------------------------------------
# Parameter construction (deterministic, synthetic) and BN folding.
# ----------------------------------------------------------------------------
def _conv_init(key, K, cin, cout):
    kw, kb = jax.random.split(key)
    bound = 1.0 / jnp.sqrt(float(cin * K * K))
    w = jax.random.uniform(kw, (K, K, cin, cout), jnp.float32, -bound, bound)
    b = jax.random.uniform(kb, (cout,), jnp.float32, -bound, bound)
    return w, b


def _bn_init(key, c):
    k1, k2, k3, k4 = jax.random.split(key, 4)
    gamma = jax.random.uniform(k1, (c,), jnp.float32, 0.5, 1.5)
    beta = jax.random.uniform(k2, (c,), jnp.float32, -0.1, 0.1)
    mean = 0.1 * jax.random.normal(k3, (c,), jnp.float32)
    var = jax.random.uniform(k4, (c,), jnp.float32, 0.5, 1.5)
    return gamma, beta, mean, var


def _fold_bn(w, b, bn, eps=1e-5):
    gamma, beta, mean, var = bn
    scale = gamma / jnp.sqrt(var + eps)
    return w * scale, (b - mean) * scale + beta


def make_params(key, ch_in_1, ch_in_2, ch_out=2, ch_list=(16, 32)):
    c0, c1 = ch_list
    keys = jax.random.split(key, 16)
    p = {}
    w, b = _conv_init(keys[0], 3, ch_in_1 + ch_in_2, c0)
    p["conv0"] = (w, b, _bn_init(keys[1], c0))
    p["down"] = _conv_init(keys[2], 3, c0, c0)
    w, b = _conv_init(keys[3], 3, c0, c1)
    p["conv1"] = (w, b, _bn_init(keys[4], c1))
    w, b = _conv_init(keys[5], 3, c1, c1)
    p["conv2"] = (w, b, _bn_init(keys[6], c1))
    p["up"] = _conv_init(keys[7], 1, c1, c0)
    w, b = _conv_init(keys[8], 3, 2 * c0, c0)
    p["conv3"] = (w, b, _bn_init(keys[9], c0))
    w, b = _conv_init(keys[10], 3, c0, ch_out)
    p["pred"] = (w, b, _bn_init(keys[11], ch_out))
    return p


def prep_matmul_params(p):
    """BN-fold + reshape HWIO conv weights to per-tap (9, Co, Ci) bf16 form."""
    def wtap(w):                                   # (3,3,Ci,Co) -> (9,Co,Ci)
        ci, co = w.shape[2], w.shape[3]
        return jnp.transpose(w, (0, 1, 3, 2)).reshape(9, co, ci).astype(
            jnp.bfloat16)

    def bcol(b):
        return b.reshape(-1, 1).astype(jnp.float32)

    w0, b0 = _fold_bn(*p["conv0"][:2], p["conv0"][2])
    w1, b1 = _fold_bn(*p["conv1"][:2], p["conv1"][2])
    w2, b2 = _fold_bn(*p["conv2"][:2], p["conv2"][2])
    w3, b3 = _fold_bn(*p["conv3"][:2], p["conv3"][2])
    wp, bp = _fold_bn(*p["pred"][:2], p["pred"][2])
    wd, bd = p["down"]
    wu, bu = p["up"]
    return {"w0": wtap(w0), "b0": bcol(b0),
            "wd": wtap(wd), "bd": bcol(bd),
            "w1": wtap(w1), "b1": bcol(b1),
            "w2": wtap(w2), "b2": bcol(b2),
            "wu": jnp.transpose(wu[0, 0]).astype(jnp.bfloat16), "bu": bcol(bu),
            "w3": wtap(w3), "b3": bcol(b3),
            "wp": wtap(wp), "bp": bcol(bp)}


def unet_ld_forward(x1_nchw, x2_nchw, p):
    """Forward of UNet_ld. Returns (pred (B,C_OUT,H,W), encoder_res (B,C1,H/2,W/2))."""
    x = jnp.concatenate([x1_nchw, x2_nchw], axis=1).astype(jnp.float32)
    B, C_IN, H, W = x.shape
    Wp, Wsp = W + 2, W // 2 + 2
    # Host-side: pad once and flatten padded rows (lane-dense kernel input).
    xp = jnp.pad(x, ((0, 0), (0, 0), (1, 1), (1, 1)))
    x_flat = xp.reshape(B, C_IN, (H + 2) * Wp)
    x_flat = jnp.pad(x_flat, ((0, 0), (0, 0), (0, 2))).astype(jnp.bfloat16)

    pm = prep_matmul_params(p)
    pred_f, enc_f = unet_ld_pallas(x_flat, pm, H=H, W=W)

    # Strip the 2 pad columns per row (host glue on tiny outputs).
    pred = pred_f.reshape(B, -1, H, Wp)[:, :, :, :W]
    enc = enc_f.reshape(B, -1, H // 2, Wsp)[:, :, :, :W // 2]
    return pred, enc


# ----------------------------------------------------------------------------
# Pure-JAX reference (explicit BN, strided conv) used as a correctness check.
# ----------------------------------------------------------------------------
def _conv_ref(x, w, b, stride=1, pad=1):
    y = jax.lax.conv_general_dilated(
        x, w, (stride, stride), [(pad, pad), (pad, pad)],
        dimension_numbers=("NHWC", "HWIO", "NHWC"))
    return y + b.reshape(1, 1, 1, -1)


def _bn_ref(x, bn, eps=1e-5):
    g, bt, m, v = bn
    return g * (x - m) / jnp.sqrt(v + eps) + bt


def _lrelu_ref(x, s=LEAK):
    return jnp.where(x >= 0, x, s * x)


def unet_ld_reference(x1_nchw, x2_nchw, p):
    x1 = jnp.transpose(x1_nchw, (0, 2, 3, 1)).astype(jnp.float32)
    x2 = jnp.transpose(x2_nchw, (0, 2, 3, 1)).astype(jnp.float32)
    x = jnp.concatenate([x1, x2], axis=-1)
    d0 = _lrelu_ref(_bn_ref(_conv_ref(x, *p["conv0"][:2]), p["conv0"][2]))
    ds = _lrelu_ref(_conv_ref(d0, *p["down"], stride=2, pad=1))
    c1v = _lrelu_ref(_bn_ref(_conv_ref(ds, *p["conv1"][:2]), p["conv1"][2]))
    enc = _lrelu_ref(_bn_ref(_conv_ref(c1v, *p["conv2"][:2]), p["conv2"][2]))
    up = jnp.repeat(jnp.repeat(enc, 2, axis=1), 2, axis=2)
    upc = _conv_ref(up, *p["up"], stride=1, pad=0)
    cat = jnp.concatenate([upc, d0], axis=-1)
    o = _lrelu_ref(_bn_ref(_conv_ref(cat, *p["conv3"][:2]), p["conv3"][2]))
    pred = _bn_ref(_conv_ref(o, *p["pred"][:2]), p["pred"][2])
    return jnp.transpose(pred, (0, 3, 1, 2)), jnp.transpose(enc, (0, 3, 1, 2))


if __name__ == "__main__":
    B, CH_IN_1, CH_IN_2, H, W = 2, 3, 1, 16, 16
    key = jax.random.PRNGKey(0)
    k_x1, k_x2, k_p = jax.random.split(key, 3)
    x1 = jax.random.normal(k_x1, (B, CH_IN_1, H, W), jnp.float32)
    x2 = jax.random.normal(k_x2, (B, CH_IN_2, H, W), jnp.float32)
    params = make_params(k_p, CH_IN_1, CH_IN_2, ch_out=2, ch_list=(16, 32))

    fwd = jax.jit(unet_ld_forward)
    pred, enc = jax.block_until_ready(fwd(x1, x2, params))
    pred_ref, enc_ref = jax.block_until_ready(unet_ld_reference(x1, x2, params))

    assert pred.shape == (B, 2, H, W) and enc.shape == (B, 32, H // 2, W // 2)
    # bf16 MXU operands with f32 accumulation -> a few e-2 worst-case deviation.
    assert jnp.allclose(pred, pred_ref, rtol=5e-2, atol=5e-2)
    assert jnp.allclose(enc, enc_ref, rtol=5e-2, atol=5e-2)
    print("KERNEL_OK")
</pallas_src>

<mosaic_0001>
module attributes {stable_mosaic.version = 11 : i64} {
  func.func @_unet_kernel(%arg0: i32, %arg1: memref<1x4x326xbf16, #tpu.memory_space<vmem>>, %arg2: memref<9x16x4xbf16, #tpu.memory_space<vmem>>, %arg3: memref<16x1xf32, #tpu.memory_space<vmem>>, %arg4: memref<9x16x16xbf16, #tpu.memory_space<vmem>>, %arg5: memref<16x1xf32, #tpu.memory_space<vmem>>, %arg6: memref<9x32x16xbf16, #tpu.memory_space<vmem>>, %arg7: memref<32x1xf32, #tpu.memory_space<vmem>>, %arg8: memref<9x32x32xbf16, #tpu.memory_space<vmem>>, %arg9: memref<32x1xf32, #tpu.memory_space<vmem>>, %arg10: memref<16x32xbf16, #tpu.memory_space<vmem>>, %arg11: memref<16x1xf32, #tpu.memory_space<vmem>>, %arg12: memref<9x16x32xbf16, #tpu.memory_space<vmem>>, %arg13: memref<16x1xf32, #tpu.memory_space<vmem>>, %arg14: memref<9x2x16xbf16, #tpu.memory_space<vmem>>, %arg15: memref<2x1xf32, #tpu.memory_space<vmem>>, %arg16: memref<1x288xf32, #tpu.memory_space<vmem>>, %arg17: memref<1x80xf32, #tpu.memory_space<vmem>>, %arg18: memref<288x80xf32, #tpu.memory_space<vmem>>, %arg19: memref<80x288xbf16, #tpu.memory_space<vmem>>, %arg20: memref<1x2x288xf32, #tpu.memory_space<vmem>>, %arg21: memref<1x32x80xf32, #tpu.memory_space<vmem>>, %arg22: memref<32x326xbf16, #tpu.memory_space<vmem>>, %arg23: memref<16x102xbf16, #tpu.memory_space<vmem>>, %arg24: memref<32x102xbf16, #tpu.memory_space<vmem>>, %arg25: memref<16x326xbf16, #tpu.memory_space<vmem>>) attributes {dimension_semantics = [#tpu.dimension_semantics<parallel>], iteration_bounds = array<i64: 2>, scalar_prefetch = 0 : i64, scratch_operands = 4 : i64, tpu.core_type = #tpu.core_type<tc>, window_params = [{transform_indices = @transform_0, window_bounds = array<i64: 1, 4, 326>}, {pipeline_mode = #tpu.pipeline_mode<synchronous>, transform_indices = @transform_1, window_bounds = array<i64: 9, 16, 4>}, {pipeline_mode = #tpu.pipeline_mode<synchronous>, transform_indices = @transform_2, window_bounds = array<i64: 16, 1>}, {pipeline_mode = #tpu.pipeline_mode<synchronous>, transform_indices = @transform_3, window_bounds = array<i64: 9, 16, 16>}, {pipeline_mode = #tpu.pipeline_mode<synchronous>, transform_indices = @transform_4, window_bounds = array<i64: 16, 1>}, {pipeline_mode = #tpu.pipeline_mode<synchronous>, transform_indices = @transform_5, window_bounds = array<i64: 9, 32, 16>}, {pipeline_mode = #tpu.pipeline_mode<synchronous>, transform_indices = @transform_6, window_bounds = array<i64: 32, 1>}, {pipeline_mode = #tpu.pipeline_mode<synchronous>, transform_indices = @transform_7, window_bounds = array<i64: 9, 32, 32>}, {pipeline_mode = #tpu.pipeline_mode<synchronous>, transform_indices = @transform_8, window_bounds = array<i64: 32, 1>}, {pipeline_mode = #tpu.pipeline_mode<synchronous>, transform_indices = @transform_9, window_bounds = array<i64: 16, 32>}, {pipeline_mode = #tpu.pipeline_mode<synchronous>, transform_indices = @transform_10, window_bounds = array<i64: 16, 1>}, {pipeline_mode = #tpu.pipeline_mode<synchronous>, transform_indices = @transform_11, window_bounds = array<i64: 9, 16, 32>}, {pipeline_mode = #tpu.pipeline_mode<synchronous>, transform_indices = @transform_12, window_bounds = array<i64: 16, 1>}, {pipeline_mode = #tpu.pipeline_mode<synchronous>, transform_indices = @transform_13, window_bounds = array<i64: 9, 2, 16>}, {pipeline_mode = #tpu.pipeline_mode<synchronous>, transform_indices = @transform_14, window_bounds = array<i64: 2, 1>}, {pipeline_mode = #tpu.pipeline_mode<synchronous>, transform_indices = @transform_15, window_bounds = array<i64: 1, 288>}, {pipeline_mode = #tpu.pipeline_mode<synchronous>, transform_indices = @transform_16, window_bounds = array<i64: 1, 80>}, {pipeline_mode = #tpu.pipeline_mode<synchronous>, transform_indices = @transform_17, window_bounds = array<i64: 288, 80>}, {pipeline_mode = #tpu.pipeline_mode<synchronous>, transform_indices = @transform_18, window_bounds = array<i64: 80, 288>}, {transform_indices = @transform_19, window_bounds = array<i64: 1, 2, 288>}, {transform_indices = @transform_20, window_bounds = array<i64: 1, 32, 80>}]} {
    %c0 = arith.constant 0 : index
    %c0_0 = arith.constant 0 : index
    %0 = vector.load %arg16[%c0, %c0_0] : memref<1x288xf32, #tpu.memory_space<vmem>>, vector<1x288xf32>
    %cst = arith.constant 5.000000e-01 : f32
    %1 = vector.broadcast %cst : f32 to vector<1x288xf32>
    %2 = arith.cmpf ogt, %0, %1 : vector<1x288xf32>
    %c0_1 = arith.constant 0 : index
    %c0_2 = arith.constant 0 : index
    %3 = vector.load %arg17[%c0_1, %c0_2] : memref<1x80xf32, #tpu.memory_space<vmem>>, vector<1x80xf32>
    %cst_3 = arith.constant 5.000000e-01 : f32
    %4 = vector.broadcast %cst_3 : f32 to vector<1x80xf32>
    %5 = arith.cmpf ogt, %3, %4 : vector<1x80xf32>
    %cst_4 = arith.constant 0.000000e+00 : bf16
    %6 = vector.broadcast %cst_4 : bf16 to vector<32x19xbf16>
    %c0_5 = arith.constant 0 : index
    %c0_6 = arith.constant 0 : index
    %7 = vector.load %arg22[%c0_5, %c0_6] : memref<32x326xbf16, #tpu.memory_space<vmem>>, vector<32x19xbf16>
    tpu.vector_store %arg22[%c0_5, %c0_6], %6 {strides = array<i32>} : memref<32x326xbf16, #tpu.memory_space<vmem>>, vector<32x19xbf16>,
    %c0_7 = arith.constant 0 : index
    %c307 = arith.constant 307 : index
    %8 = vector.load %arg22[%c0_7, %c307] : memref<32x326xbf16, #tpu.memory_space<vmem>>, vector<32x19xbf16>
    tpu.vector_store %arg22[%c0_7, %c307], %6 {strides = array<i32>} : memref<32x326xbf16, #tpu.memory_space<vmem>>, vector<32x19xbf16>,
    %cst_8 = arith.constant 0.000000e+00 : bf16
    %9 = vector.broadcast %cst_8 : bf16 to vector<16x19xbf16>
    %c0_9 = arith.constant 0 : index
    %c0_10 = arith.constant 0 : index
    %10 = vector.load %arg25[%c0_9, %c0_10] : memref<16x326xbf16, #tpu.memory_space<vmem>>, vector<16x19xbf16>
    tpu.vector_store %arg25[%c0_9, %c0_10], %9 {strides = array<i32>} : memref<16x326xbf16, #tpu.memory_space<vmem>>, vector<16x19xbf16>,
    %c0_11 = arith.constant 0 : index
    %c307_12 = arith.constant 307 : index
    %11 = vector.load %arg25[%c0_11, %c307_12] : memref<16x326xbf16, #tpu.memory_space<vmem>>, vector<16x19xbf16>
    tpu.vector_store %arg25[%c0_11, %c307_12], %9 {strides = array<i32>} : memref<16x326xbf16, #tpu.memory_space<vmem>>, vector<16x19xbf16>,
    %cst_13 = arith.constant 0.000000e+00 : bf16
    %12 = vector.broadcast %cst_13 : bf16 to vector<16x11xbf16>
    %c0_14 = arith.constant 0 : index
    %c0_15 = arith.constant 0 : index
    %13 = vector.load %arg23[%c0_14, %c0_15] : memref<16x102xbf16, #tpu.memory_space<vmem>>, vector<16x11xbf16>
    tpu.vector_store %arg23[%c0_14, %c0_15], %12 {strides = array<i32>} : memref<16x102xbf16, #tpu.memory_space<vmem>>, vector<16x11xbf16>,
    %c0_16 = arith.constant 0 : index
    %c91 = arith.constant 91 : index
    %14 = vector.load %arg23[%c0_16, %c91] : memref<16x102xbf16, #tpu.memory_space<vmem>>, vector<16x11xbf16>
    tpu.vector_store %arg23[%c0_16, %c91], %12 {strides = array<i32>} : memref<16x102xbf16, #tpu.memory_space<vmem>>, vector<16x11xbf16>,
    %cst_17 = arith.constant 0.000000e+00 : bf16
    %15 = vector.broadcast %cst_17 : bf16 to vector<32x11xbf16>
    %c0_18 = arith.constant 0 : index
    %c0_19 = arith.constant 0 : index
    %16 = vector.load %arg24[%c0_18, %c0_19] : memref<32x102xbf16, #tpu.memory_space<vmem>>, vector<32x11xbf16>
    tpu.vector_store %arg24[%c0_18, %c0_19], %15 {strides = array<i32>} : memref<32x102xbf16, #tpu.memory_space<vmem>>, vector<32x11xbf16>,
    %c0_20 = arith.constant 0 : index
    %c91_21 = arith.constant 91 : index
    %17 = vector.load %arg24[%c0_20, %c91_21] : memref<32x102xbf16, #tpu.memory_space<vmem>>, vector<32x11xbf16>
    tpu.vector_store %arg24[%c0_20, %c91_21], %15 {strides = array<i32>} : memref<32x102xbf16, #tpu.memory_space<vmem>>, vector<32x11xbf16>,
    %c0_22 = arith.constant 0 : index
    %c0_23 = arith.constant 0 : index
    %c0_24 = arith.constant 0 : index
    %18 = vector.load %arg2[%c0_22, %c0_23, %c0_24] : memref<9x16x4xbf16, #tpu.memory_space<vmem>>, vector<1x16x4xbf16>
    %19 = vector.shape_cast %18 : vector<1x16x4xbf16> to vector<16x4xbf16>
    %c0_25 = arith.constant 0 : index
    %c0_26 = arith.constant 0 : index
    %c0_27 = arith.constant 0 : index
    %20 = vector.load %arg1[%c0_25, %c0_26, %c0_27] : memref<1x4x326xbf16, #tpu.memory_space<vmem>>, vector<1x4x288xbf16>
    %21 = vector.shape_cast %20 : vector<1x4x288xbf16> to vector<4x288xbf16>
    %cst_28 = arith.constant dense<0.000000e+00> : vector<16x288xf32>
    %22 = tpu.matmul %19, %21, %cst_28 {dimension_numbers = #tpu.dot_dimension_numbers<[1], [0], [0], [1], [0, 0, 1, 1], [], []>} : vector<16x4xbf16>, vector<4x288xbf16>, vector<16x288xf32> -> vector<16x288xf32>
    %c1 = arith.constant 1 : index
    %c0_29 = arith.constant 0 : index
    %c0_30 = arith.constant 0 : index
    %23 = vector.load %arg2[%c1, %c0_29, %c0_30] : memref<9x16x4xbf16, #tpu.memory_space<vmem>>, vector<1x16x4xbf16>
    %24 = vector.shape_cast %23 : vector<1x16x4xbf16> to vector<16x4xbf16>
    %c0_31 = arith.constant 0 : index
    %c0_32 = arith.constant 0 : index
    %c1_33 = arith.constant 1 : index
    %25 = vector.load %arg1[%c0_31, %c0_32, %c1_33] : memref<1x4x326xbf16, #tpu.memory_space<vmem>>, vector<1x4x288xbf16>
    %26 = vector.shape_cast %25 : vector<1x4x288xbf16> to vector<4x288xbf16>
    %cst_34 = arith.constant dense<0.000000e+00> : vector<16x288xf32>
    %27 = tpu.matmul %24, %26, %cst_34 {dimension_numbers = #tpu.dot_dimension_numbers<[1], [0], [0], [1], [0, 0, 1, 1], [], []>} : vector<16x4xbf16>, vector<4x288xbf16>, vector<16x288xf32> -> vector<16x288xf32>
    %28 = arith.addf %22, %27 : vector<16x288xf32>
    %c2 = arith.constant 2 : index
    %c0_35 = arith.constant 0 : index
    %c0_36 = arith.constant 0 : index
    %29 = vector.load %arg2[%c2, %c0_35, %c0_36] : memref<9x16x4xbf16, #tpu.memory_space<vmem>>, vector<1x16x4xbf16>
    %30 = vector.shape_cast %29 : vector<1x16x4xbf16> to vector<16x4xbf16>
    %c0_37 = arith.constant 0 : index
    %c0_38 = arith.constant 0 : index
    %c2_39 = arith.constant 2 : index
    %31 = vector.load %arg1[%c0_37, %c0_38, %c2_39] : memref<1x4x326xbf16, #tpu.memory_space<vmem>>, vector<1x4x288xbf16>
    %32 = vector.shape_cast %31 : vector<1x4x288xbf16> to vector<4x288xbf16>
    %cst_40 = arith.constant dense<0.000000e+00> : vector<16x288xf32>
    %33 = tpu.matmul %30, %32, %cst_40 {dimension_numbers = #tpu.dot_dimension_numbers<[1], [0], [0], [1], [0, 0, 1, 1], [], []>} : vector<16x4xbf16>, vector<4x288xbf16>, vector<16x288xf32> -> vector<16x288xf32>
    %34 = arith.addf %28, %33 : vector<16x288xf32>
    %c3 = arith.constant 3 : index
    %c0_41 = arith.constant 0 : index
    %c0_42 = arith.constant 0 : index
    %35 = vector.load %arg2[%c3, %c0_41, %c0_42] : memref<9x16x4xbf16, #tpu.memory_space<vmem>>, vector<1x16x4xbf16>
    %36 = vector.shape_cast %35 : vector<1x16x4xbf16> to vector<16x4xbf16>
    %c0_43 = arith.constant 0 : index
    %c0_44 = arith.constant 0 : index
    %c18 = arith.constant 18 : index
    %37 = vector.load %arg1[%c0_43, %c0_44, %c18] : memref<1x4x326xbf16, #tpu.memory_space<vmem>>, vector<1x4x288xbf16>
    %38 = vector.shape_cast %37 : vector<1x4x288xbf16> to vector<4x288xbf16>
    %cst_45 = arith.constant dense<0.000000e+00> : vector<16x288xf32>
    %39 = tpu.matmul %36, %38, %cst_45 {dimension_numbers = #tpu.dot_dimension_numbers<[1], [0], [0], [1], [0, 0, 1, 1], [], []>} : vector<16x4xbf16>, vector<4x288xbf16>, vector<16x288xf32> -> vector<16x288xf32>
    %40 = arith.addf %34, %39 : vector<16x288xf32>
    %c4 = arith.constant 4 : index
    %c0_46 = arith.constant 0 : index
    %c0_47 = arith.constant 0 : index
    %41 = vector.load %arg2[%c4, %c0_46, %c0_47] : memref<9x16x4xbf16, #tpu.memory_space<vmem>>, vector<1x16x4xbf16>
    %42 = vector.shape_cast %41 : vector<1x16x4xbf16> to vector<16x4xbf16>
    %c0_48 = arith.constant 0 : index
    %c0_49 = arith.constant 0 : index
    %c19 = arith.constant 19 : index
    %43 = vector.load %arg1[%c0_48, %c0_49, %c19] : memref<1x4x326xbf16, #tpu.memory_space<vmem>>, vector<1x4x288xbf16>
    %44 = vector.shape_cast %43 : vector<1x4x288xbf16> to vector<4x288xbf16>
    %cst_50 = arith.constant dense<0.000000e+00> : vector<16x288xf32>
    %45 = tpu.matmul %42, %44, %cst_50 {dimension_numbers = #tpu.dot_dimension_numbers<[1], [0], [0], [1], [0, 0, 1, 1], [], []>} : vector<16x4xbf16>, vector<4x288xbf16>, vector<16x288xf32> -> vector<16x288xf32>
    %46 = arith.addf %40, %45 : vector<16x288xf32>
    %c5 = arith.constant 5 : index
    %c0_51 = arith.constant 0 : index
    %c0_52 = arith.constant 0 : index
    %47 = vector.load %arg2[%c5, %c0_51, %c0_52] : memref<9x16x4xbf16, #tpu.memory_space<vmem>>, vector<1x16x4xbf16>
    %48 = vector.shape_cast %47 : vector<1x16x4xbf16> to vector<16x4xbf16>
    %c0_53 = arith.constant 0 : index
    %c0_54 = arith.constant 0 : index
    %c20 = arith.constant 20 : index
    %49 = vector.load %arg1[%c0_53, %c0_54, %c20] : memref<1x4x326xbf16, #tpu.memory_space<vmem>>, vector<1x4x288xbf16>
    %50 = vector.shape_cast %49 : vector<1x4x288xbf16> to vector<4x288xbf16>
    %cst_55 = arith.constant dense<0.000000e+00> : vector<16x288xf32>
    %51 = tpu.matmul %48, %50, %cst_55 {dimension_numbers = #tpu.dot_dimension_numbers<[1], [0], [0], [1], [0, 0, 1, 1], [], []>} : vector<16x4xbf16>, vector<4x288xbf16>, vector<16x288xf32> -> vector<16x288xf32>
    %52 = arith.addf %46, %51 : vector<16x288xf32>
    %c6 = arith.constant 6 : index
    %c0_56 = arith.constant 0 : index
    %c0_57 = arith.constant 0 : index
    %53 = vector.load %arg2[%c6, %c0_56, %c0_57] : memref<9x16x4xbf16, #tpu.memory_space<vmem>>, vector<1x16x4xbf16>
    %54 = vector.shape_cast %53 : vector<1x16x4xbf16> to vector<16x4xbf16>
    %c0_58 = arith.constant 0 : index
    %c0_59 = arith.constant 0 : index
    %c36 = arith.constant 36 : index
    %55 = vector.load %arg1[%c0_58, %c0_59, %c36] : memref<1x4x326xbf16, #tpu.memory_space<vmem>>, vector<1x4x288xbf16>
    %56 = vector.shape_cast %55 : vector<1x4x288xbf16> to vector<4x288xbf16>
    %cst_60 = arith.constant dense<0.000000e+00> : vector<16x288xf32>
    %57 = tpu.matmul %54, %56, %cst_60 {dimension_numbers = #tpu.dot_dimension_numbers<[1], [0], [0], [1], [0, 0, 1, 1], [], []>} : vector<16x4xbf16>, vector<4x288xbf16>, vector<16x288xf32> -> vector<16x288xf32>
    %58 = arith.addf %52, %57 : vector<16x288xf32>
    %c7 = arith.constant 7 : index
    %c0_61 = arith.constant 0 : index
    %c0_62 = arith.constant 0 : index
    %59 = vector.load %arg2[%c7, %c0_61, %c0_62] : memref<9x16x4xbf16, #tpu.memory_space<vmem>>, vector<1x16x4xbf16>
    %60 = vector.shape_cast %59 : vector<1x16x4xbf16> to vector<16x4xbf16>
    %c0_63 = arith.constant 0 : index
    %c0_64 = arith.constant 0 : index
    %c37 = arith.constant 37 : index
    %61 = vector.load %arg1[%c0_63, %c0_64, %c37] : memref<1x4x326xbf16, #tpu.memory_space<vmem>>, vector<1x4x288xbf16>
    %62 = vector.shape_cast %61 : vector<1x4x288xbf16> to vector<4x288xbf16>
    %cst_65 = arith.constant dense<0.000000e+00> : vector<16x288xf32>
    %63 = tpu.matmul %60, %62, %cst_65 {dimension_numbers = #tpu.dot_dimension_numbers<[1], [0], [0], [1], [0, 0, 1, 1], [], []>} : vector<16x4xbf16>, vector<4x288xbf16>, vector<16x288xf32> -> vector<16x288xf32>
    %64 = arith.addf %58, %63 : vector<16x288xf32>
    %c8 = arith.constant 8 : index
    %c0_66 = arith.constant 0 : index
    %c0_67 = arith.constant 0 : index
    %65 = vector.load %arg2[%c8, %c0_66, %c0_67] : memref<9x16x4xbf16, #tpu.memory_space<vmem>>, vector<1x16x4xbf16>
    %66 = vector.shape_cast %65 : vector<1x16x4xbf16> to vector<16x4xbf16>
    %c0_68 = arith.constant 0 : index
    %c0_69 = arith.constant 0 : index
    %c38 = arith.constant 38 : index
    %67 = vector.load %arg1[%c0_68, %c0_69, %c38] : memref<1x4x326xbf16, #tpu.memory_space<vmem>>, vector<1x4x288xbf16>
    %68 = vector.shape_cast %67 : vector<1x4x288xbf16> to vector<4x288xbf16>
    %cst_70 = arith.constant dense<0.000000e+00> : vector<16x288xf32>
    %69 = tpu.matmul %66, %68, %cst_70 {dimension_numbers = #tpu.dot_dimension_numbers<[1], [0], [0], [1], [0, 0, 1, 1], [], []>} : vector<16x4xbf16>, vector<4x288xbf16>, vector<16x288xf32> -> vector<16x288xf32>
    %70 = arith.addf %64, %69 : vector<16x288xf32>
    %c0_71 = arith.constant 0 : index
    %c0_72 = arith.constant 0 : index
    %71 = vector.load %arg3[%c0_71, %c0_72] : memref<16x1xf32, #tpu.memory_space<vmem>>, vector<16x1xf32>
    %72 = vector.broadcast %71 : vector<16x1xf32> to vector<16x288xf32>
    %73 = arith.addf %70, %72 : vector<16x288xf32>
    %cst_73 = arith.constant 0.000000e+00 : f32
    %74 = vector.broadcast %cst_73 : f32 to vector<16x288xf32>
    %75 = arith.cmpf oge, %73, %74 : vector<16x288xf32>
    %cst_74 = arith.constant 0.00999999977 : f32
    %76 = vector.broadcast %cst_74 : f32 to vector<16x288xf32>
    %77 = arith.mulf %76, %73 : vector<16x288xf32>
    %78 = arith.select %75, %73, %77 : vector<16x288xi1>, vector<16x288xf32>
    %cst_75 = arith.constant 0.000000e+00 : f32
    %79 = vector.shape_cast %2 : vector<1x288xi1> to vector<1x288xi1>
    %80 = vector.broadcast %79 : vector<1x288xi1> to vector<16x288xi1>
    %81 = vector.broadcast %cst_75 : f32 to vector<16x288xf32>
    %82 = arith.select %80, %78, %81 : vector<16x288xi1>, vector<16x288xf32>
    %83 = arith.truncf %82 : vector<16x288xf32> to vector<16x288xbf16>
    %c16 = arith.constant 16 : index
    %c19_76 = arith.constant 19 : index
    %84 = vector.load %arg22[%c16, %c19_76] : memref<32x326xbf16, #tpu.memory_space<vmem>>, vector<16x288xbf16>
    tpu.vector_store %arg22[%c16, %c19_76], %83 {strides = array<i32>} : memref<32x326xbf16, #tpu.memory_space<vmem>>, vector<16x288xbf16>,
    %c0_77 = arith.constant 0 : index
    %c0_78 = arith.constant 0 : index
    %c0_79 = arith.constant 0 : index
    %85 = vector.load %arg4[%c0_77, %c0_78, %c0_79] : memref<9x16x16xbf16, #tpu.memory_space<vmem>>, vector<1x16x16xbf16>
    %86 = vector.shape_cast %85 : vector<1x16x16xbf16> to vector<16x16xbf16>
    %c16_80 = arith.constant 16 : index
    %c0_81 = arith.constant 0 : index
    %87 = vector.load %arg22[%c16_80, %c0_81] : memref<32x326xbf16, #tpu.memory_space<vmem>>, vector<16x288xbf16>
    %cst_82 = arith.constant dense<0.000000e+00> : vector<16x288xf32>
    %88 = tpu.matmul %86, %87, %cst_82 {dimension_numbers = #tpu.dot_dimension_numbers<[1], [0], [0], [1], [0, 0, 1, 1], [], []>} : vector<16x16xbf16>, vector<16x288xbf16>, vector<16x288xf32> -> vector<16x288xf32>
    %c1_83 = arith.constant 1 : index
    %c0_84 = arith.constant 0 : index
    %c0_85 = arith.constant 0 : index
    %89 = vector.load %arg4[%c1_83, %c0_84, %c0_85] : memref<9x16x16xbf16, #tpu.memory_space<vmem>>, vector<1x16x16xbf16>
    %90 = vector.shape_cast %89 : vector<1x16x16xbf16> to vector<16x16xbf16>
    %c16_86 = arith.constant 16 : index
    %c1_87 = arith.constant 1 : index
    %91 = vector.load %arg22[%c16_86, %c1_87] : memref<32x326xbf16, #tpu.memory_space<vmem>>, vector<16x288xbf16>
    %cst_88 = arith.constant dense<0.000000e+00> : vector<16x288xf32>
    %92 = tpu.matmul %90, %91, %cst_88 {dimension_numbers = #tpu.dot_dimension_numbers<[1], [0], [0], [1], [0, 0, 1, 1], [], []>} : vector<16x16xbf16>, vector<16x288xbf16>, vector<16x288xf32> -> vector<16x288xf32>
    %93 = arith.addf %88, %92 : vector<16x288xf32>
    %c2_89 = arith.constant 2 : index
    %c0_90 = arith.constant 0 : index
    %c0_91 = arith.constant 0 : index
    %94 = vector.load %arg4[%c2_89, %c0_90, %c0_91] : memref<9x16x16xbf16, #tpu.memory_space<vmem>>, vector<1x16x16xbf16>
    %95 = vector.shape_cast %94 : vector<1x16x16xbf16> to vector<16x16xbf16>
    %c16_92 = arith.constant 16 : index
    %c2_93 = arith.constant 2 : index
    %96 = vector.load %arg22[%c16_92, %c2_93] : memref<32x326xbf16, #tpu.memory_space<vmem>>, vector<16x288xbf16>
    %cst_94 = arith.constant dense<0.000000e+00> : vector<16x288xf32>
    %97 = tpu.matmul %95, %96, %cst_94 {dimension_numbers = #tpu.dot_dimension_numbers<[1], [0], [0], [1], [0, 0, 1, 1], [], []>} : vector<16x16xbf16>, vector<16x288xbf16>, vector<16x288xf32> -> vector<16x288xf32>
    %98 = arith.addf %93, %97 : vector<16x288xf32>
    %c3_95 = arith.constant 3 : index
    %c0_96 = arith.constant 0 : index
    %c0_97 = arith.constant 0 : index
    %99 = vector.load %arg4[%c3_95, %c0_96, %c0_97] : memref<9x16x16xbf16, #tpu.memory_space<vmem>>, vector<1x16x16xbf16>
    %100 = vector.shape_cast %99 : vector<1x16x16xbf16> to vector<16x16xbf16>
    %c16_98 = arith.constant 16 : index
    %c18_99 = arith.constant 18 : index
    %101 = vector.load %arg22[%c16_98, %c18_99] : memref<32x326xbf16, #tpu.memory_space<vmem>>, vector<16x288xbf16>
    %cst_100 = arith.constant dense<0.000000e+00> : vector<16x288xf32>
    %102 = tpu.matmul %100, %101, %cst_100 {dimension_numbers = #tpu.dot_dimension_numbers<[1], [0], [0], [1], [0, 0, 1, 1], [], []>} : vector<16x16xbf16>, vector<16x288xbf16>, vector<16x288xf32> -> vector<16x288xf32>
    %103 = arith.addf %98, %102 : vector<16x288xf32>
    %c4_101 = arith.constant 4 : index
    %c0_102 = arith.constant 0 : index
    %c0_103 = arith.constant 0 : index
    %104 = vector.load %arg4[%c4_101, %c0_102, %c0_103] : memref<9x16x16xbf16, #tpu.memory_space<vmem>>, vector<1x16x16xbf16>
    %105 = vector.shape_cast %104 : vector<1x16x16xbf16> to vector<16x16xbf16>
    %c16_104 = arith.constant 16 : index
    %c19_105 = arith.constant 19 : index
    %106 = vector.load %arg22[%c16_104, %c19_105] : memref<32x326xbf16, #tpu.memory_space<vmem>>, vector<16x288xbf16>
    %cst_106 = arith.constant dense<0.000000e+00> : vector<16x288xf32>
    %107 = tpu.matmul %105, %106, %cst_106 {dimension_numbers = #tpu.dot_dimension_numbers<[1], [0], [0], [1], [0, 0, 1, 1], [], []>} : vector<16x16xbf16>, vector<16x288xbf16>, vector<16x288xf32> -> vector<16x288xf32>
    %108 = arith.addf %103, %107 : vector<16x288xf32>
    %c5_107 = arith.constant 5 : index
    %c0_108 = arith.constant 0 : index
    %c0_109 = arith.constant 0 : index
    %109 = vector.load %arg4[%c5_107, %c0_108, %c0_109] : memref<9x16x16xbf16, #tpu.memory_space<vmem>>, vector<1x16x16xbf16>
    %110 = vector.shape_cast %109 : vector<1x16x16xbf16> to vector<16x16xbf16>
    %c16_110 = arith.constant 16 : index
    %c20_111 = arith.constant 20 : index
    %111 = vector.load %arg22[%c16_110, %c20_111] : memref<32x326xbf16, #tpu.memory_space<vmem>>, vector<16x288xbf16>
    %cst_112 = arith.constant dense<0.000000e+00> : vector<16x288xf32>
    %112 = tpu.matmul %110, %111, %cst_112 {dimension_numbers = #tpu.dot_dimension_numbers<[1], [0], [0], [1], [0, 0, 1, 1], [], []>} : vector<16x16xbf16>, vector<16x288xbf16>, vector<16x288xf32> -> vector<16x288xf32>
    %113 = arith.addf %108, %112 : vector<16x288xf32>
    %c6_113 = arith.constant 6 : index
    %c0_114 = arith.constant 0 : index
    %c0_115 = arith.constant 0 : index
    %114 = vector.load %arg4[%c6_113, %c0_114, %c0_115] : memref<9x16x16xbf16, #tpu.memory_space<vmem>>, vector<1x16x16xbf16>
    %115 = vector.shape_cast %114 : vector<1x16x16xbf16> to vector<16x16xbf16>
    %c16_116 = arith.constant 16 : index
    %c36_117 = arith.constant 36 : index
    %116 = vector.load %arg22[%c16_116, %c36_117] : memref<32x326xbf16, #tpu.memory_space<vmem>>, vector<16x288xbf16>
    %cst_118 = arith.constant dense<0.000000e+00> : vector<16x288xf32>
    %117 = tpu.matmul %115, %116, %cst_118 {dimension_numbers = #tpu.dot_dimension_numbers<[1], [0], [0], [1], [0, 0, 1, 1], [], []>} : vector<16x16xbf16>, vector<16x288xbf16>, vector<16x288xf32> -> vector<16x288xf32>
    %118 = arith.addf %113, %117 : vector<16x288xf32>
    %c7_119 = arith.constant 7 : index
    %c0_120 = arith.constant 0 : index
    %c0_121 = arith.constant 0 : index
    %119 = vector.load %arg4[%c7_119, %c0_120, %c0_121] : memref<9x16x16xbf16, #tpu.memory_space<vmem>>, vector<1x16x16xbf16>
    %120 = vector.shape_cast %119 : vector<1x16x16xbf16> to vector<16x16xbf16>
    %c16_122 = arith.constant 16 : index
    %c37_123 = arith.constant 37 : index
    %121 = vector.load %arg22[%c16_122, %c37_123] : memref<32x326xbf16, #tpu.memory_space<vmem>>, vector<16x288xbf16>
    %cst_124 = arith.constant dense<0.000000e+00> : vector<16x288xf32>
    %122 = tpu.matmul %120, %121, %cst_124 {dimension_numbers = #tpu.dot_dimension_numbers<[1], [0], [0], [1], [0, 0, 1, 1], [], []>} : vector<16x16xbf16>, vector<16x288xbf16>, vector<16x288xf32> -> vector<16x288xf32>
    %123 = arith.addf %118, %122 : vector<16x288xf32>
    %c8_125 = arith.constant 8 : index
    %c0_126 = arith.constant 0 : index
    %c0_127 = arith.constant 0 : index
    %124 = vector.load %arg4[%c8_125, %c0_126, %c0_127] : memref<9x16x16xbf16, #tpu.memory_space<vmem>>, vector<1x16x16xbf16>
    %125 = vector.shape_cast %124 : vector<1x16x16xbf16> to vector<16x16xbf16>
    %c16_128 = arith.constant 16 : index
    %c38_129 = arith.constant 38 : index
    %126 = vector.load %arg22[%c16_128, %c38_129] : memref<32x326xbf16, #tpu.memory_space<vmem>>, vector<16x288xbf16>
    %cst_130 = arith.constant dense<0.000000e+00> : vector<16x288xf32>
    %127 = tpu.matmul %125, %126, %cst_130 {dimension_numbers = #tpu.dot_dimension_numbers<[1], [0], [0], [1], [0, 0, 1, 1], [], []>} : vector<16x16xbf16>, vector<16x288xbf16>, vector<16x288xf32> -> vector<16x288xf32>
    %128 = arith.addf %123, %127 : vector<16x288xf32>
    %c0_131 = arith.constant 0 : index
    %c0_132 = arith.constant 0 : index
    %129 = vector.load %arg18[%c0_131, %c0_132] : memref<288x80xf32, #tpu.memory_space<vmem>>, vector<288x80xf32>
    %cst_133 = arith.constant dense<0.000000e+00> : vector<16x80xf32>
    %130 = tpu.matmul %128, %129, %cst_133 {dimension_numbers = #tpu.dot_dimension_numbers<[1], [0], [0], [1], [0, 0, 1, 1], [], []>} : vector<16x288xf32>, vector<288x80xf32>, vector<16x80xf32> -> vector<16x80xf32>
    %c0_134 = arith.constant 0 : index
    %c0_135 = arith.constant 0 : index
    %131 = vector.load %arg5[%c0_134, %c0_135] : memref<16x1xf32, #tpu.memory_space<vmem>>, vector<16x1xf32>
    %132 = vector.broadcast %131 : vector<16x1xf32> to vector<16x80xf32>
    %133 = arith.addf %130, %132 : vector<16x80xf32>
    %cst_136 = arith.constant 0.000000e+00 : f32
    %134 = vector.broadcast %cst_136 : f32 to vector<16x80xf32>
    %135 = arith.cmpf oge, %133, %134 : vector<16x80xf32>
    %cst_137 = arith.constant 0.00999999977 : f32
    %136 = vector.broadcast %cst_137 : f32 to vector<16x80xf32>
    %137 = arith.mulf %136, %133 : vector<16x80xf32>
    %138 = arith.select %135, %133, %137 : vector<16x80xi1>, vector<16x80xf32>
    %cst_138 = arith.constant 0.000000e+00 : f32
    %139 = vector.shape_cast %5 : vector<1x80xi1> to vector<1x80xi1>
    %140 = vector.broadcast %139 : vector<1x80xi1> to vector<16x80xi1>
    %141 = vector.broadcast %cst_138 : f32 to vector<16x80xf32>
    %142 = arith.select %140, %138, %141 : vector<16x80xi1>, vector<16x80xf32>
    %143 = arith.truncf %142 : vector<16x80xf32> to vector<16x80xbf16>
    %c0_139 = arith.constant 0 : index
    %c11 = arith.constant 11 : index
    %144 = vector.load %arg23[%c0_139, %c11] : memref<16x102xbf16, #tpu.memory_space<vmem>>, vector<16x80xbf16>
    tpu.vector_store %arg23[%c0_139, %c11], %143 {strides = array<i32>} : memref<16x102xbf16, #tpu.memory_space<vmem>>, vector<16x80xbf16>,
    %c0_140 = arith.constant 0 : index
    %c0_141 = arith.constant 0 : index
    %c0_142 = arith.constant 0 : index
    %145 = vector.load %arg6[%c0_140, %c0_141, %c0_142] : memref<9x32x16xbf16, #tpu.memory_space<vmem>>, vector<1x32x16xbf16>
    %146 = vector.shape_cast %145 : vector<1x32x16xbf16> to vector<32x16xbf16>
    %c0_143 = arith.constant 0 : index
    %c0_144 = arith.constant 0 : index
    %147 = vector.load %arg23[%c0_143, %c0_144] : memref<16x102xbf16, #tpu.memory_space<vmem>>, vector<16x80xbf16>
    %cst_145 = arith.constant dense<0.000000e+00> : vector<32x80xf32>
    %148 = tpu.matmul %146, %147, %cst_145 {dimension_numbers = #tpu.dot_dimension_numbers<[1], [0], [0], [1], [0, 0, 1, 1], [], []>} : vector<32x16xbf16>, vector<16x80xbf16>, vector<32x80xf32> -> vector<32x80xf32>
    %c1_146 = arith.constant 1 : index
    %c0_147 = arith.constant 0 : index
    %c0_148 = arith.constant 0 : index
    %149 = vector.load %arg6[%c1_146, %c0_147, %c0_148] : memref<9x32x16xbf16, #tpu.memory_space<vmem>>, vector<1x32x16xbf16>
    %150 = vector.shape_cast %149 : vector<1x32x16xbf16> to vector<32x16xbf16>
    %c0_149 = arith.constant 0 : index
    %c1_150 = arith.constant 1 : index
    %151 = vector.load %arg23[%c0_149, %c1_150] : memref<16x102xbf16, #tpu.memory_space<vmem>>, vector<16x80xbf16>
    %cst_151 = arith.constant dense<0.000000e+00> : vector<32x80xf32>
    %152 = tpu.matmul %150, %151, %cst_151 {dimension_numbers = #tpu.dot_dimension_numbers<[1], [0], [0], [1], [0, 0, 1, 1], [], []>} : vector<32x16xbf16>, vector<16x80xbf16>, vector<32x80xf32> -> vector<32x80xf32>
    %153 = arith.addf %148, %152 : vector<32x80xf32>
    %c2_152 = arith.constant 2 : index
    %c0_153 = arith.constant 0 : index
    %c0_154 = arith.constant 0 : index
    %154 = vector.load %arg6[%c2_152, %c0_153, %c0_154] : memref<9x32x16xbf16, #tpu.memory_space<vmem>>, vector<1x32x16xbf16>
    %155 = vector.shape_cast %154 : vector<1x32x16xbf16> to vector<32x16xbf16>
    %c0_155 = arith.constant 0 : index
    %c2_156 = arith.constant 2 : index
    %156 = vector.load %arg23[%c0_155, %c2_156] : memref<16x102xbf16, #tpu.memory_space<vmem>>, vector<16x80xbf16>
    %cst_157 = arith.constant dense<0.000000e+00> : vector<32x80xf32>
    %157 = tpu.matmul %155, %156, %cst_157 {dimension_numbers = #tpu.dot_dimension_numbers<[1], [0], [0], [1], [0, 0, 1, 1], [], []>} : vector<32x16xbf16>, vector<16x80xbf16>, vector<32x80xf32> -> vector<32x80xf32>
    %158 = arith.addf %153, %157 : vector<32x80xf32>
    %c3_158 = arith.constant 3 : index
    %c0_159 = arith.constant 0 : index
    %c0_160 = arith.constant 0 : index
    %159 = vector.load %arg6[%c3_158, %c0_159, %c0_160] : memref<9x32x16xbf16, #tpu.memory_space<vmem>>, vector<1x32x16xbf16>
    %160 = vector.shape_cast %159 : vector<1x32x16xbf16> to vector<32x16xbf16>
    %c0_161 = arith.constant 0 : index
    %c10 = arith.constant 10 : index
    %161 = vector.load %arg23[%c0_161, %c10] : memref<16x102xbf16, #tpu.memory_space<vmem>>, vector<16x80xbf16>
    %cst_162 = arith.constant dense<0.000000e+00> : vector<32x80xf32>
    %162 = tpu.matmul %160, %161, %cst_162 {dimension_numbers = #tpu.dot_dimension_numbers<[1], [0], [0], [1], [0, 0, 1, 1], [], []>} : vector<32x16xbf16>, vector<16x80xbf16>, vector<32x80xf32> -> vector<32x80xf32>
    %163 = arith.addf %158, %162 : vector<32x80xf32>
    %c4_163 = arith.constant 4 : index
    %c0_164 = arith.constant 0 : index
    %c0_165 = arith.constant 0 : index
    %164 = vector.load %arg6[%c4_163, %c0_164, %c0_165] : memref<9x32x16xbf16, #tpu.memory_space<vmem>>, vector<1x32x16xbf16>
    %165 = vector.shape_cast %164 : vector<1x32x16xbf16> to vector<32x16xbf16>
    %c0_166 = arith.constant 0 : index
    %c11_167 = arith.constant 11 : index
    %166 = vector.load %arg23[%c0_166, %c11_167] : memref<16x102xbf16, #tpu.memory_space<vmem>>, vector<16x80xbf16>
    %cst_168 = arith.constant dense<0.000000e+00> : vector<32x80xf32>
    %167 = tpu.matmul %165, %166, %cst_168 {dimension_numbers = #tpu.dot_dimension_numbers<[1], [0], [0], [1], [0, 0, 1, 1], [], []>} : vector<32x16xbf16>, vector<16x80xbf16>, vector<32x80xf32> -> vector<32x80xf32>
    %168 = arith.addf %163, %167 : vector<32x80xf32>
    %c5_169 = arith.constant 5 : index
    %c0_170 = arith.constant 0 : index
    %c0_171 = arith.constant 0 : index
    %169 = vector.load %arg6[%c5_169, %c0_170, %c0_171] : memref<9x32x16xbf16, #tpu.memory_space<vmem>>, vector<1x32x16xbf16>
    %170 = vector.shape_cast %169 : vector<1x32x16xbf16> to vector<32x16xbf16>
    %c0_172 = arith.constant 0 : index
    %c12 = arith.constant 12 : index
    %171 = vector.load %arg23[%c0_172, %c12] : memref<16x102xbf16, #tpu.memory_space<vmem>>, vector<16x80xbf16>
    %cst_173 = arith.constant dense<0.000000e+00> : vector<32x80xf32>
    %172 = tpu.matmul %170, %171, %cst_173 {dimension_numbers = #tpu.dot_dimension_numbers<[1], [0], [0], [1], [0, 0, 1, 1], [], []>} : vector<32x16xbf16>, vector<16x80xbf16>, vector<32x80xf32> -> vector<32x80xf32>
    %173 = arith.addf %168, %172 : vector<32x80xf32>
    %c6_174 = arith.constant 6 : index
    %c0_175 = arith.constant 0 : index
    %c0_176 = arith.constant 0 : index
    %174 = vector.load %arg6[%c6_174, %c0_175, %c0_176] : memref<9x32x16xbf16, #tpu.memory_space<vmem>>, vector<1x32x16xbf16>
    %175 = vector.shape_cast %174 : vector<1x32x16xbf16> to vector<32x16xbf16>
    %c0_177 = arith.constant 0 : index
    %c20_178 = arith.constant 20 : index
    %176 = vector.load %arg23[%c0_177, %c20_178] : memref<16x102xbf16, #tpu.memory_space<vmem>>, vector<16x80xbf16>
    %cst_179 = arith.constant dense<0.000000e+00> : vector<32x80xf32>
    %177 = tpu.matmul %175, %176, %cst_179 {dimension_numbers = #tpu.dot_dimension_numbers<[1], [0], [0], [1], [0, 0, 1, 1], [], []>} : vector<32x16xbf16>, vector<16x80xbf16>, vector<32x80xf32> -> vector<32x80xf32>
    %178 = arith.addf %173, %177 : vector<32x80xf32>
    %c7_180 = arith.constant 7 : index
    %c0_181 = arith.constant 0 : index
    %c0_182 = arith.constant 0 : index
    %179 = vector.load %arg6[%c7_180, %c0_181, %c0_182] : memref<9x32x16xbf16, #tpu.memory_space<vmem>>, vector<1x32x16xbf16>
    %180 = vector.shape_cast %179 : vector<1x32x16xbf16> to vector<32x16xbf16>
    %c0_183 = arith.constant 0 : index
    %c21 = arith.constant 21 : index
    %181 = vector.load %arg23[%c0_183, %c21] : memref<16x102xbf16, #tpu.memory_space<vmem>>, vector<16x80xbf16>
    %cst_184 = arith.constant dense<0.000000e+00> : vector<32x80xf32>
    %182 = tpu.matmul %180, %181, %cst_184 {dimension_numbers = #tpu.dot_dimension_numbers<[1], [0], [0], [1], [0, 0, 1, 1], [], []>} : vector<32x16xbf16>, vector<16x80xbf16>, vector<32x80xf32> -> vector<32x80xf32>
    %183 = arith.addf %178, %182 : vector<32x80xf32>
    %c8_185 = arith.constant 8 : index
    %c0_186 = arith.constant 0 : index
    %c0_187 = arith.constant 0 : index
    %184 = vector.load %arg6[%c8_185, %c0_186, %c0_187] : memref<9x32x16xbf16, #tpu.memory_space<vmem>>, vector<1x32x16xbf16>
    %185 = vector.shape_cast %184 : vector<1x32x16xbf16> to vector<32x16xbf16>
    %c0_188 = arith.constant 0 : index
    %c22 = arith.constant 22 : index
    %186 = vector.load %arg23[%c0_188, %c22] : memref<16x102xbf16, #tpu.memory_space<vmem>>, vector<16x80xbf16>
    %cst_189 = arith.constant dense<0.000000e+00> : vector<32x80xf32>
    %187 = tpu.matmul %185, %186, %cst_189 {dimension_numbers = #tpu.dot_dimension_numbers<[1], [0], [0], [1], [0, 0, 1, 1], [], []>} : vector<32x16xbf16>, vector<16x80xbf16>, vector<32x80xf32> -> vector<32x80xf32>
    %188 = arith.addf %183, %187 : vector<32x80xf32>
    %c0_190 = arith.constant 0 : index
    %c0_191 = arith.constant 0 : index
    %189 = vector.load %arg7[%c0_190, %c0_191] : memref<32x1xf32, #tpu.memory_space<vmem>>, vector<32x1xf32>
    %190 = vector.broadcast %189 : vector<32x1xf32> to vector<32x80xf32>
    %191 = arith.addf %188, %190 : vector<32x80xf32>
    %cst_192 = arith.constant 0.000000e+00 : f32
    %192 = vector.broadcast %cst_192 : f32 to vector<32x80xf32>
    %193 = arith.cmpf oge, %191, %192 : vector<32x80xf32>
    %cst_193 = arith.constant 0.00999999977 : f32
    %194 = vector.broadcast %cst_193 : f32 to vector<32x80xf32>
    %195 = arith.mulf %194, %191 : vector<32x80xf32>
    %196 = arith.select %193, %191, %195 : vector<32x80xi1>, vector<32x80xf32>
    %cst_194 = arith.constant 0.000000e+00 : f32
    %197 = vector.shape_cast %5 : vector<1x80xi1> to vector<1x80xi1>
    %198 = vector.broadcast %197 : vector<1x80xi1> to vector<32x80xi1>
    %199 = vector.broadcast %cst_194 : f32 to vector<32x80xf32>
    %200 = arith.select %198, %196, %199 : vector<32x80xi1>, vector<32x80xf32>
    %201 = arith.truncf %200 : vector<32x80xf32> to vector<32x80xbf16>
    %c0_195 = arith.constant 0 : index
    %c11_196 = arith.constant 11 : index
    %202 = vector.load %arg24[%c0_195, %c11_196] : memref<32x102xbf16, #tpu.memory_space<vmem>>, vector<32x80xbf16>
    tpu.vector_store %arg24[%c0_195, %c11_196], %201 {strides = array<i32>} : memref<32x102xbf16, #tpu.memory_space<vmem>>, vector<32x80xbf16>,
    %c0_197 = arith.constant 0 : index
    %c0_198 = arith.constant 0 : index
    %c0_199 = arith.constant 0 : index
    %203 = vector.load %arg8[%c0_197, %c0_198, %c0_199] : memref<9x32x32xbf16, #tpu.memory_space<vmem>>, vector<1x32x32xbf16>
    %204 = vector.shape_cast %203 : vector<1x32x32xbf16> to vector<32x32xbf16>
    %c0_200 = arith.constant 0 : index
    %c0_201 = arith.constant 0 : index
    %205 = vector.load %arg24[%c0_200, %c0_201] : memref<32x102xbf16, #tpu.memory_space<vmem>>, vector<32x80xbf16>
    %cst_202 = arith.constant dense<0.000000e+00> : vector<32x80xf32>
    %206 = tpu.matmul %204, %205, %cst_202 {dimension_numbers = #tpu.dot_dimension_numbers<[1], [0], [0], [1], [0, 0, 1, 1], [], []>} : vector<32x32xbf16>, vector<32x80xbf16>, vector<32x80xf32> -> vector<32x80xf32>
    %c1_203 = arith.constant 1 : index
    %c0_204 = arith.constant 0 : index
    %c0_205 = arith.constant 0 : index
    %207 = vector.load %arg8[%c1_203, %c0_204, %c0_205] : memref<9x32x32xbf16, #tpu.memory_space<vmem>>, vector<1x32x32xbf16>
    %208 = vector.shape_cast %207 : vector<1x32x32xbf16> to vector<32x32xbf16>
    %c0_206 = arith.constant 0 : index
    %c1_207 = arith.constant 1 : index
    %209 = vector.load %arg24[%c0_206, %c1_207] : memref<32x102xbf16, #tpu.memory_space<vmem>>, vector<32x80xbf16>
    %cst_208 = arith.constant dense<0.000000e+00> : vector<32x80xf32>
    %210 = tpu.matmul %208, %209, %cst_208 {dimension_numbers = #tpu.dot_dimension_numbers<[1], [0], [0], [1], [0, 0, 1, 1], [], []>} : vector<32x32xbf16>, vector<32x80xbf16>, vector<32x80xf32> -> vector<32x80xf32>
    %211 = arith.addf %206, %210 : vector<32x80xf32>
    %c2_209 = arith.constant 2 : index
    %c0_210 = arith.constant 0 : index
    %c0_211 = arith.constant 0 : index
    %212 = vector.load %arg8[%c2_209, %c0_210, %c0_211] : memref<9x32x32xbf16, #tpu.memory_space<vmem>>, vector<1x32x32xbf16>
    %213 = vector.shape_cast %212 : vector<1x32x32xbf16> to vector<32x32xbf16>
    %c0_212 = arith.constant 0 : index
    %c2_213 = arith.constant 2 : index
    %214 = vector.load %arg24[%c0_212, %c2_213] : memref<32x102xbf16, #tpu.memory_space<vmem>>, vector<32x80xbf16>
    %cst_214 = arith.constant dense<0.000000e+00> : vector<32x80xf32>
    %215 = tpu.matmul %213, %214, %cst_214 {dimension_numbers = #tpu.dot_dimension_numbers<[1], [0], [0], [1], [0, 0, 1, 1], [], []>} : vector<32x32xbf16>, vector<32x80xbf16>, vector<32x80xf32> -> vector<32x80xf32>
    %216 = arith.addf %211, %215 : vector<32x80xf32>
    %c3_215 = arith.constant 3 : index
    %c0_216 = arith.constant 0 : index
    %c0_217 = arith.constant 0 : index
    %217 = vector.load %arg8[%c3_215, %c0_216, %c0_217] : memref<9x32x32xbf16, #tpu.memory_space<vmem>>, vector<1x32x32xbf16>
    %218 = vector.shape_cast %217 : vector<1x32x32xbf16> to vector<32x32xbf16>
    %c0_218 = arith.constant 0 : index
    %c10_219 = arith.constant 10 : index
    %219 = vector.load %arg24[%c0_218, %c10_219] : memref<32x102xbf16, #tpu.memory_space<vmem>>, vector<32x80xbf16>
    %cst_220 = arith.constant dense<0.000000e+00> : vector<32x80xf32>
    %220 = tpu.matmul %218, %219, %cst_220 {dimension_numbers = #tpu.dot_dimension_numbers<[1], [0], [0], [1], [0, 0, 1, 1], [], []>} : vector<32x32xbf16>, vector<32x80xbf16>, vector<32x80xf32> -> vector<32x80xf32>
    %221 = arith.addf %216, %220 : vector<32x80xf32>
    %c4_221 = arith.constant 4 : index
    %c0_222 = arith.constant 0 : index
    %c0_223 = arith.constant 0 : index
    %222 = vector.load %arg8[%c4_221, %c0_222, %c0_223] : memref<9x32x32xbf16, #tpu.memory_space<vmem>>, vector<1x32x32xbf16>
    %223 = vector.shape_cast %222 : vector<1x32x32xbf16> to vector<32x32xbf16>
    %c0_224 = arith.constant 0 : index
    %c11_225 = arith.constant 11 : index
    %224 = vector.load %arg24[%c0_224, %c11_225] : memref<32x102xbf16, #tpu.memory_space<vmem>>, vector<32x80xbf16>
    %cst_226 = arith.constant dense<0.000000e+00> : vector<32x80xf32>
    %225 = tpu.matmul %223, %224, %cst_226 {dimension_numbers = #tpu.dot_dimension_numbers<[1], [0], [0], [1], [0, 0, 1, 1], [], []>} : vector<32x32xbf16>, vector<32x80xbf16>, vector<32x80xf32> -> vector<32x80xf32>
    %226 = arith.addf %221, %225 : vector<32x80xf32>
    %c5_227 = arith.constant 5 : index
    %c0_228 = arith.constant 0 : index
    %c0_229 = arith.constant 0 : index
    %227 = vector.load %arg8[%c5_227, %c0_228, %c0_229] : memref<9x32x32xbf16, #tpu.memory_space<vmem>>, vector<1x32x32xbf16>
    %228 = vector.shape_cast %227 : vector<1x32x32xbf16> to vector<32x32xbf16>
    %c0_230 = arith.constant 0 : index
    %c12_231 = arith.constant 12 : index
    %229 = vector.load %arg24[%c0_230, %c12_231] : memref<32x102xbf16, #tpu.memory_space<vmem>>, vector<32x80xbf16>
    %cst_232 = arith.constant dense<0.000000e+00> : vector<32x80xf32>
    %230 = tpu.matmul %228, %229, %cst_232 {dimension_numbers = #tpu.dot_dimension_numbers<[1], [0], [0], [1], [0, 0, 1, 1], [], []>} : vector<32x32xbf16>, vector<32x80xbf16>, vector<32x80xf32> -> vector<32x80xf32>
    %231 = arith.addf %226, %230 : vector<32x80xf32>
    %c6_233 = arith.constant 6 : index
    %c0_234 = arith.constant 0 : index
    %c0_235 = arith.constant 0 : index
    %232 = vector.load %arg8[%c6_233, %c0_234, %c0_235] : memref<9x32x32xbf16, #tpu.memory_space<vmem>>, vector<1x32x32xbf16>
    %233 = vector.shape_cast %232 : vector<1x32x32xbf16> to vector<32x32xbf16>
    %c0_236 = arith.constant 0 : index
    %c20_237 = arith.constant 20 : index
    %234 = vector.load %arg24[%c0_236, %c20_237] : memref<32x102xbf16, #tpu.memory_space<vmem>>, vector<32x80xbf16>
    %cst_238 = arith.constant dense<0.000000e+00> : vector<32x80xf32>
    %235 = tpu.matmul %233, %234, %cst_238 {dimension_numbers = #tpu.dot_dimension_numbers<[1], [0], [0], [1], [0, 0, 1, 1], [], []>} : vector<32x32xbf16>, vector<32x80xbf16>, vector<32x80xf32> -> vector<32x80xf32>
    %236 = arith.addf %231, %235 : vector<32x80xf32>
    %c7_239 = arith.constant 7 : index
    %c0_240 = arith.constant 0 : index
    %c0_241 = arith.constant 0 : index
    %237 = vector.load %arg8[%c7_239, %c0_240, %c0_241] : memref<9x32x32xbf16, #tpu.memory_space<vmem>>, vector<1x32x32xbf16>
    %238 = vector.shape_cast %237 : vector<1x32x32xbf16> to vector<32x32xbf16>
    %c0_242 = arith.constant 0 : index
    %c21_243 = arith.constant 21 : index
    %239 = vector.load %arg24[%c0_242, %c21_243] : memref<32x102xbf16, #tpu.memory_space<vmem>>, vector<32x80xbf16>
    %cst_244 = arith.constant dense<0.000000e+00> : vector<32x80xf32>
    %240 = tpu.matmul %238, %239, %cst_244 {dimension_numbers = #tpu.dot_dimension_numbers<[1], [0], [0], [1], [0, 0, 1, 1], [], []>} : vector<32x32xbf16>, vector<32x80xbf16>, vector<32x80xf32> -> vector<32x80xf32>
    %241 = arith.addf %236, %240 : vector<32x80xf32>
    %c8_245 = arith.constant 8 : index
    %c0_246 = arith.constant 0 : index
    %c0_247 = arith.constant 0 : index
    %242 = vector.load %arg8[%c8_245, %c0_246, %c0_247] : memref<9x32x32xbf16, #tpu.memory_space<vmem>>, vector<1x32x32xbf16>
    %243 = vector.shape_cast %242 : vector<1x32x32xbf16> to vector<32x32xbf16>
    %c0_248 = arith.constant 0 : index
    %c22_249 = arith.constant 22 : index
    %244 = vector.load %arg24[%c0_248, %c22_249] : memref<32x102xbf16, #tpu.memory_space<vmem>>, vector<32x80xbf16>
    %cst_250 = arith.constant dense<0.000000e+00> : vector<32x80xf32>
    %245 = tpu.matmul %243, %244, %cst_250 {dimension_numbers = #tpu.dot_dimension_numbers<[1], [0], [0], [1], [0, 0, 1, 1], [], []>} : vector<32x32xbf16>, vector<32x80xbf16>, vector<32x80xf32> -> vector<32x80xf32>
    %246 = arith.addf %241, %245 : vector<32x80xf32>
    %c0_251 = arith.constant 0 : index
    %c0_252 = arith.constant 0 : index
    %247 = vector.load %arg9[%c0_251, %c0_252] : memref<32x1xf32, #tpu.memory_space<vmem>>, vector<32x1xf32>
    %248 = vector.broadcast %247 : vector<32x1xf32> to vector<32x80xf32>
    %249 = arith.addf %246, %248 : vector<32x80xf32>
    %cst_253 = arith.constant 0.000000e+00 : f32
    %250 = vector.broadcast %cst_253 : f32 to vector<32x80xf32>
    %251 = arith.cmpf oge, %249, %250 : vector<32x80xf32>
    %cst_254 = arith.constant 0.00999999977 : f32
    %252 = vector.broadcast %cst_254 : f32 to vector<32x80xf32>
    %253 = arith.mulf %252, %249 : vector<32x80xf32>
    %254 = arith.select %251, %249, %253 : vector<32x80xi1>, vector<32x80xf32>
    %c0_255 = arith.constant 0 : index
    %c0_256 = arith.constant 0 : index
    %c0_257 = arith.constant 0 : index
    %255 = vector.load %arg21[%c0_255, %c0_256, %c0_257] : memref<1x32x80xf32, #tpu.memory_space<vmem>>, vector<1x32x80xf32>
    %256 = vector.shape_cast %255 : vector<1x32x80xf32> to vector<32x80xf32>
    %257 = vector.shape_cast %254 : vector<32x80xf32> to vector<1x32x80xf32>
    tpu.vector_store %arg21[%c0_255, %c0_256, %c0_257], %257 {strides = array<i32>} : memref<1x32x80xf32, #tpu.memory_space<vmem>>, vector<1x32x80xf32>,
    %c0_258 = arith.constant 0 : index
    %c0_259 = arith.constant 0 : index
    %258 = vector.load %arg10[%c0_258, %c0_259] : memref<16x32xbf16, #tpu.memory_space<vmem>>, vector<16x32xbf16>
    %259 = arith.truncf %254 : vector<32x80xf32> to vector<32x80xbf16>
    %cst_260 = arith.constant dense<0.000000e+00> : vector<16x80xf32>
    %260 = tpu.matmul %258, %259, %cst_260 {dimension_numbers = #tpu.dot_dimension_numbers<[1], [0], [0], [1], [0, 0, 1, 1], [], []>} : vector<16x32xbf16>, vector<32x80xbf16>, vector<16x80xf32> -> vector<16x80xf32>
    %261 = arith.truncf %260 : vector<16x80xf32> to vector<16x80xbf16>
    %c0_261 = arith.constant 0 : index
    %c0_262 = arith.constant 0 : index
    %262 = vector.load %arg19[%c0_261, %c0_262] : memref<80x288xbf16, #tpu.memory_space<vmem>>, vector<80x288xbf16>
    %cst_263 = arith.constant dense<0.000000e+00> : vector<16x288xf32>
    %263 = tpu.matmul %261, %262, %cst_263 {dimension_numbers = #tpu.dot_dimension_numbers<[1], [0], [0], [1], [0, 0, 1, 1], [], []>} : vector<16x80xbf16>, vector<80x288xbf16>, vector<16x288xf32> -> vector<16x288xf32>
    %c0_264 = arith.constant 0 : index
    %c0_265 = arith.constant 0 : index
    %264 = vector.load %arg11[%c0_264, %c0_265] : memref<16x1xf32, #tpu.memory_space<vmem>>, vector<16x1xf32>
    %265 = vector.broadcast %264 : vector<16x1xf32> to vector<16x288xf32>
    %266 = arith.addf %263, %265 : vector<16x288xf32>
    %cst_266 = arith.constant 0.000000e+00 : f32
    %267 = vector.shape_cast %2 : vector<1x288xi1> to vector<1x288xi1>
    %268 = vector.broadcast %267 : vector<1x288xi1> to vector<16x288xi1>
    %269 = vector.broadcast %cst_266 : f32 to vector<16x288xf32>
    %270 = arith.select %268, %266, %269 : vector<16x288xi1>, vector<16x288xf32>
    %271 = arith.truncf %270 : vector<16x288xf32> to vector<16x288xbf16>
    %c0_267 = arith.constant 0 : index
    %c19_268 = arith.constant 19 : index
    %272 = vector.load %arg22[%c0_267, %c19_268] : memref<32x326xbf16, #tpu.memory_space<vmem>>, vector<16x288xbf16>
    tpu.vector_store %arg22[%c0_267, %c19_268], %271 {strides = array<i32>} : memref<32x326xbf16, #tpu.memory_space<vmem>>, vector<16x288xbf16>,
    %c0_269 = arith.constant 0 : index
    %c0_270 = arith.constant 0 : index
    %c0_271 = arith.constant 0 : index
    %273 = vector.load %arg12[%c0_269, %c0_270, %c0_271] : memref<9x16x32xbf16, #tpu.memory_space<vmem>>, vector<1x16x32xbf16>
    %274 = vector.shape_cast %273 : vector<1x16x32xbf16> to vector<16x32xbf16>
    %c0_272 = arith.constant 0 : index
    %c0_273 = arith.constant 0 : index
    %275 = vector.load %arg22[%c0_272, %c0_273] : memref<32x326xbf16, #tpu.memory_space<vmem>>, vector<32x288xbf16>
    %cst_274 = arith.constant dense<0.000000e+00> : vector<16x288xf32>
    %276 = tpu.matmul %274, %275, %cst_274 {dimension_numbers = #tpu.dot_dimension_numbers<[1], [0], [0], [1], [0, 0, 1, 1], [], []>} : vector<16x32xbf16>, vector<32x288xbf16>, vector<16x288xf32> -> vector<16x288xf32>
    %c1_275 = arith.constant 1 : index
    %c0_276 = arith.constant 0 : index
    %c0_277 = arith.constant 0 : index
    %277 = vector.load %arg12[%c1_275, %c0_276, %c0_277] : memref<9x16x32xbf16, #tpu.memory_space<vmem>>, vector<1x16x32xbf16>
    %278 = vector.shape_cast %277 : vector<1x16x32xbf16> to vector<16x32xbf16>
    %c0_278 = arith.constant 0 : index
    %c1_279 = arith.constant 1 : index
    %279 = vector.load %arg22[%c0_278, %c1_279] : memref<32x326xbf16, #tpu.memory_space<vmem>>, vector<32x288xbf16>
    %cst_280 = arith.constant dense<0.000000e+00> : vector<16x288xf32>
    %280 = tpu.matmul %278, %279, %cst_280 {dimension_numbers = #tpu.dot_dimension_numbers<[1], [0], [0], [1], [0, 0, 1, 1], [], []>} : vector<16x32xbf16>, vector<32x288xbf16>, vector<16x288xf32> -> vector<16x288xf32>
    %281 = arith.addf %276, %280 : vector<16x288xf32>
    %c2_281 = arith.constant 2 : index
    %c0_282 = arith.constant 0 : index
    %c0_283 = arith.constant 0 : index
    %282 = vector.load %arg12[%c2_281, %c0_282, %c0_283] : memref<9x16x32xbf16, #tpu.memory_space<vmem>>, vector<1x16x32xbf16>
    %283 = vector.shape_cast %282 : vector<1x16x32xbf16> to vector<16x32xbf16>
    %c0_284 = arith.constant 0 : index
    %c2_285 = arith.constant 2 : index
    %284 = vector.load %arg22[%c0_284, %c2_285] : memref<32x326xbf16, #tpu.memory_space<vmem>>, vector<32x288xbf16>
    %cst_286 = arith.constant dense<0.000000e+00> : vector<16x288xf32>
    %285 = tpu.matmul %283, %284, %cst_286 {dimension_numbers = #tpu.dot_dimension_numbers<[1], [0], [0], [1], [0, 0, 1, 1], [], []>} : vector<16x32xbf16>, vector<32x288xbf16>, vector<16x288xf32> -> vector<16x288xf32>
    %286 = arith.addf %281, %285 : vector<16x288xf32>
    %c3_287 = arith.constant 3 : index
    %c0_288 = arith.constant 0 : index
    %c0_289 = arith.constant 0 : index
    %287 = vector.load %arg12[%c3_287, %c0_288, %c0_289] : memref<9x16x32xbf16, #tpu.memory_space<vmem>>, vector<1x16x32xbf16>
    %288 = vector.shape_cast %287 : vector<1x16x32xbf16> to vector<16x32xbf16>
    %c0_290 = arith.constant 0 : index
    %c18_291 = arith.constant 18 : index
    %289 = vector.load %arg22[%c0_290, %c18_291] : memref<32x326xbf16, #tpu.memory_space<vmem>>, vector<32x288xbf16>
    %cst_292 = arith.constant dense<0.000000e+00> : vector<16x288xf32>
    %290 = tpu.matmul %288, %289, %cst_292 {dimension_numbers = #tpu.dot_dimension_numbers<[1], [0], [0], [1], [0, 0, 1, 1], [], []>} : vector<16x32xbf16>, vector<32x288xbf16>, vector<16x288xf32> -> vector<16x288xf32>
    %291 = arith.addf %286, %290 : vector<16x288xf32>
    %c4_293 = arith.constant 4 : index
    %c0_294 = arith.constant 0 : index
    %c0_295 = arith.constant 0 : index
    %292 = vector.load %arg12[%c4_293, %c0_294, %c0_295] : memref<9x16x32xbf16, #tpu.memory_space<vmem>>, vector<1x16x32xbf16>
    %293 = vector.shape_cast %292 : vector<1x16x32xbf16> to vector<16x32xbf16>
    %c0_296 = arith.constant 0 : index
    %c19_297 = arith.constant 19 : index
    %294 = vector.load %arg22[%c0_296, %c19_297] : memref<32x326xbf16, #tpu.memory_space<vmem>>, vector<32x288xbf16>
    %cst_298 = arith.constant dense<0.000000e+00> : vector<16x288xf32>
    %295 = tpu.matmul %293, %294, %cst_298 {dimension_numbers = #tpu.dot_dimension_numbers<[1], [0], [0], [1], [0, 0, 1, 1], [], []>} : vector<16x32xbf16>, vector<32x288xbf16>, vector<16x288xf32> -> vector<16x288xf32>
    %296 = arith.addf %291, %295 : vector<16x288xf32>
    %c5_299 = arith.constant 5 : index
    %c0_300 = arith.constant 0 : index
    %c0_301 = arith.constant 0 : index
    %297 = vector.load %arg12[%c5_299, %c0_300, %c0_301] : memref<9x16x32xbf16, #tpu.memory_space<vmem>>, vector<1x16x32xbf16>
    %298 = vector.shape_cast %297 : vector<1x16x32xbf16> to vector<16x32xbf16>
    %c0_302 = arith.constant 0 : index
    %c20_303 = arith.constant 20 : index
    %299 = vector.load %arg22[%c0_302, %c20_303] : memref<32x326xbf16, #tpu.memory_space<vmem>>, vector<32x288xbf16>
    %cst_304 = arith.constant dense<0.000000e+00> : vector<16x288xf32>
    %300 = tpu.matmul %298, %299, %cst_304 {dimension_numbers = #tpu.dot_dimension_numbers<[1], [0], [0], [1], [0, 0, 1, 1], [], []>} : vector<16x32xbf16>, vector<32x288xbf16>, vector<16x288xf32> -> vector<16x288xf32>
    %301 = arith.addf %296, %300 : vector<16x288xf32>
    %c6_305 = arith.constant 6 : index
    %c0_306 = arith.constant 0 : index
    %c0_307 = arith.constant 0 : index
    %302 = vector.load %arg12[%c6_305, %c0_306, %c0_307] : memref<9x16x32xbf16, #tpu.memory_space<vmem>>, vector<1x16x32xbf16>
    %303 = vector.shape_cast %302 : vector<1x16x32xbf16> to vector<16x32xbf16>
    %c0_308 = arith.constant 0 : index
    %c36_309 = arith.constant 36 : index
    %304 = vector.load %arg22[%c0_308, %c36_309] : memref<32x326xbf16, #tpu.memory_space<vmem>>, vector<32x288xbf16>
    %cst_310 = arith.constant dense<0.000000e+00> : vector<16x288xf32>
    %305 = tpu.matmul %303, %304, %cst_310 {dimension_numbers = #tpu.dot_dimension_numbers<[1], [0], [0], [1], [0, 0, 1, 1], [], []>} : vector<16x32xbf16>, vector<32x288xbf16>, vector<16x288xf32> -> vector<16x288xf32>
    %306 = arith.addf %301, %305 : vector<16x288xf32>
    %c7_311 = arith.constant 7 : index
    %c0_312 = arith.constant 0 : index
    %c0_313 = arith.constant 0 : index
    %307 = vector.load %arg12[%c7_311, %c0_312, %c0_313] : memref<9x16x32xbf16, #tpu.memory_space<vmem>>, vector<1x16x32xbf16>
    %308 = vector.shape_cast %307 : vector<1x16x32xbf16> to vector<16x32xbf16>
    %c0_314 = arith.constant 0 : index
    %c37_315 = arith.constant 37 : index
    %309 = vector.load %arg22[%c0_314, %c37_315] : memref<32x326xbf16, #tpu.memory_space<vmem>>, vector<32x288xbf16>
    %cst_316 = arith.constant dense<0.000000e+00> : vector<16x288xf32>
    %310 = tpu.matmul %308, %309, %cst_316 {dimension_numbers = #tpu.dot_dimension_numbers<[1], [0], [0], [1], [0, 0, 1, 1], [], []>} : vector<16x32xbf16>, vector<32x288xbf16>, vector<16x288xf32> -> vector<16x288xf32>
    %311 = arith.addf %306, %310 : vector<16x288xf32>
    %c8_317 = arith.constant 8 : index
    %c0_318 = arith.constant 0 : index
    %c0_319 = arith.constant 0 : index
    %312 = vector.load %arg12[%c8_317, %c0_318, %c0_319] : memref<9x16x32xbf16, #tpu.memory_space<vmem>>, vector<1x16x32xbf16>
    %313 = vector.shape_cast %312 : vector<1x16x32xbf16> to vector<16x32xbf16>
    %c0_320 = arith.constant 0 : index
    %c38_321 = arith.constant 38 : index
    %314 = vector.load %arg22[%c0_320, %c38_321] : memref<32x326xbf16, #tpu.memory_space<vmem>>, vector<32x288xbf16>
    %cst_322 = arith.constant dense<0.000000e+00> : vector<16x288xf32>
    %315 = tpu.matmul %313, %314, %cst_322 {dimension_numbers = #tpu.dot_dimension_numbers<[1], [0], [0], [1], [0, 0, 1, 1], [], []>} : vector<16x32xbf16>, vector<32x288xbf16>, vector<16x288xf32> -> vector<16x288xf32>
    %316 = arith.addf %311, %315 : vector<16x288xf32>
    %c0_323 = arith.constant 0 : index
    %c0_324 = arith.constant 0 : index
    %317 = vector.load %arg13[%c0_323, %c0_324] : memref<16x1xf32, #tpu.memory_space<vmem>>, vector<16x1xf32>
    %318 = vector.broadcast %317 : vector<16x1xf32> to vector<16x288xf32>
    %319 = arith.addf %316, %318 : vector<16x288xf32>
    %cst_325 = arith.constant 0.000000e+00 : f32
    %320 = vector.broadcast %cst_325 : f32 to vector<16x288xf32>
    %321 = arith.cmpf oge, %319, %320 : vector<16x288xf32>
    %cst_326 = arith.constant 0.00999999977 : f32
    %322 = vector.broadcast %cst_326 : f32 to vector<16x288xf32>
    %323 = arith.mulf %322, %319 : vector<16x288xf32>
    %324 = arith.select %321, %319, %323 : vector<16x288xi1>, vector<16x288xf32>
    %cst_327 = arith.constant 0.000000e+00 : f32
    %325 = vector.shape_cast %2 : vector<1x288xi1> to vector<1x288xi1>
    %326 = vector.broadcast %325 : vector<1x288xi1> to vector<16x288xi1>
    %327 = vector.broadcast %cst_327 : f32 to vector<16x288xf32>
    %328 = arith.select %326, %324, %327 : vector<16x288xi1>, vector<16x288xf32>
    %329 = arith.truncf %328 : vector<16x288xf32> to vector<16x288xbf16>
    %c0_328 = arith.constant 0 : index
    %c19_329 = arith.constant 19 : index
    %330 = vector.load %arg25[%c0_328, %c19_329] : memref<16x326xbf16, #tpu.memory_space<vmem>>, vector<16x288xbf16>
    tpu.vector_store %arg25[%c0_328, %c19_329], %329 {strides = array<i32>} : memref<16x326xbf16, #tpu.memory_space<vmem>>, vector<16x288xbf16>,
    %c0_330 = arith.constant 0 : index
    %c0_331 = arith.constant 0 : index
    %c0_332 = arith.constant 0 : index
    %331 = vector.load %arg14[%c0_330, %c0_331, %c0_332] : memref<9x2x16xbf16, #tpu.memory_space<vmem>>, vector<1x2x16xbf16>
    %332 = vector.shape_cast %331 : vector<1x2x16xbf16> to vector<2x16xbf16>
    %c0_333 = arith.constant 0 : index
    %c0_334 = arith.constant 0 : index
    %333 = vector.load %arg25[%c0_333, %c0_334] : memref<16x326xbf16, #tpu.memory_space<vmem>>, vector<16x288xbf16>
    %cst_335 = arith.constant dense<0.000000e+00> : vector<2x288xf32>
    %334 = tpu.matmul %332, %333, %cst_335 {dimension_numbers = #tpu.dot_dimension_numbers<[1], [0], [0], [1], [0, 0, 1, 1], [], []>} : vector<2x16xbf16>, vector<16x288xbf16>, vector<2x288xf32> -> vector<2x288xf32>
    %c1_336 = arith.constant 1 : index
    %c0_337 = arith.constant 0 : index
    %c0_338 = arith.constant 0 : index
    %335 = vector.load %arg14[%c1_336, %c0_337, %c0_338] : memref<9x2x16xbf16, #tpu.memory_space<vmem>>, vector<1x2x16xbf16>
    %336 = vector.shape_cast %335 : vector<1x2x16xbf16> to vector<2x16xbf16>
    %c0_339 = arith.constant 0 : index
    %c1_340 = arith.constant 1 : index
    %337 = vector.load %arg25[%c0_339, %c1_340] : memref<16x326xbf16, #tpu.memory_space<vmem>>, vector<16x288xbf16>
    %cst_341 = arith.constant dense<0.000000e+00> : vector<2x288xf32>
    %338 = tpu.matmul %336, %337, %cst_341 {dimension_numbers = #tpu.dot_dimension_numbers<[1], [0], [0], [1], [0, 0, 1, 1], [], []>} : vector<2x16xbf16>, vector<16x288xbf16>, vector<2x288xf32> -> vector<2x288xf32>
    %339 = arith.addf %334, %338 : vector<2x288xf32>
    %c2_342 = arith.constant 2 : index
    %c0_343 = arith.constant 0 : index
    %c0_344 = arith.constant 0 : index
    %340 = vector.load %arg14[%c2_342, %c0_343, %c0_344] : memref<9x2x16xbf16, #tpu.memory_space<vmem>>, vector<1x2x16xbf16>
    %341 = vector.shape_cast %340 : vector<1x2x16xbf16> to vector<2x16xbf16>
    %c0_345 = arith.constant 0 : index
    %c2_346 = arith.constant 2 : index
    %342 = vector.load %arg25[%c0_345, %c2_346] : memref<16x326xbf16, #tpu.memory_space<vmem>>, vector<16x288xbf16>
    %cst_347 = arith.constant dense<0.000000e+00> : vector<2x288xf32>
    %343 = tpu.matmul %341, %342, %cst_347 {dimension_numbers = #tpu.dot_dimension_numbers<[1], [0], [0], [1], [0, 0, 1, 1], [], []>} : vector<2x16xbf16>, vector<16x288xbf16>, vector<2x288xf32> -> vector<2x288xf32>
    %344 = arith.addf %339, %343 : vector<2x288xf32>
    %c3_348 = arith.constant 3 : index
    %c0_349 = arith.constant 0 : index
    %c0_350 = arith.constant 0 : index
    %345 = vector.load %arg14[%c3_348, %c0_349, %c0_350] : memref<9x2x16xbf16, #tpu.memory_space<vmem>>, vector<1x2x16xbf16>
    %346 = vector.shape_cast %345 : vector<1x2x16xbf16> to vector<2x16xbf16>
    %c0_351 = arith.constant 0 : index
    %c18_352 = arith.constant 18 : index
    %347 = vector.load %arg25[%c0_351, %c18_352] : memref<16x326xbf16, #tpu.memory_space<vmem>>, vector<16x288xbf16>
    %cst_353 = arith.constant dense<0.000000e+00> : vector<2x288xf32>
    %348 = tpu.matmul %346, %347, %cst_353 {dimension_numbers = #tpu.dot_dimension_numbers<[1], [0], [0], [1], [0, 0, 1, 1], [], []>} : vector<2x16xbf16>, vector<16x288xbf16>, vector<2x288xf32> -> vector<2x288xf32>
    %349 = arith.addf %344, %348 : vector<2x288xf32>
    %c4_354 = arith.constant 4 : index
    %c0_355 = arith.constant 0 : index
    %c0_356 = arith.constant 0 : index
    %350 = vector.load %arg14[%c4_354, %c0_355, %c0_356] : memref<9x2x16xbf16, #tpu.memory_space<vmem>>, vector<1x2x16xbf16>
    %351 = vector.shape_cast %350 : vector<1x2x16xbf16> to vector<2x16xbf16>
    %c0_357 = arith.constant 0 : index
    %c19_358 = arith.constant 19 : index
    %352 = vector.load %arg25[%c0_357, %c19_358] : memref<16x326xbf16, #tpu.memory_space<vmem>>, vector<16x288xbf16>
    %cst_359 = arith.constant dense<0.000000e+00> : vector<2x288xf32>
    %353 = tpu.matmul %351, %352, %cst_359 {dimension_numbers = #tpu.dot_dimension_numbers<[1], [0], [0], [1], [0, 0, 1, 1], [], []>} : vector<2x16xbf16>, vector<16x288xbf16>, vector<2x288xf32> -> vector<2x288xf32>
    %354 = arith.addf %349, %353 : vector<2x288xf32>
    %c5_360 = arith.constant 5 : index
    %c0_361 = arith.constant 0 : index
    %c0_362 = arith.constant 0 : index
    %355 = vector.load %arg14[%c5_360, %c0_361, %c0_362] : memref<9x2x16xbf16, #tpu.memory_space<vmem>>, vector<1x2x16xbf16>
    %356 = vector.shape_cast %355 : vector<1x2x16xbf16> to vector<2x16xbf16>
    %c0_363 = arith.constant 0 : index
    %c20_364 = arith.constant 20 : index
    %357 = vector.load %arg25[%c0_363, %c20_364] : memref<16x326xbf16, #tpu.memory_space<vmem>>, vector<16x288xbf16>
    %cst_365 = arith.constant dense<0.000000e+00> : vector<2x288xf32>
    %358 = tpu.matmul %356, %357, %cst_365 {dimension_numbers = #tpu.dot_dimension_numbers<[1], [0], [0], [1], [0, 0, 1, 1], [], []>} : vector<2x16xbf16>, vector<16x288xbf16>, vector<2x288xf32> -> vector<2x288xf32>
    %359 = arith.addf %354, %358 : vector<2x288xf32>
    %c6_366 = arith.constant 6 : index
    %c0_367 = arith.constant 0 : index
    %c0_368 = arith.constant 0 : index
    %360 = vector.load %arg14[%c6_366, %c0_367, %c0_368] : memref<9x2x16xbf16, #tpu.memory_space<vmem>>, vector<1x2x16xbf16>
    %361 = vector.shape_cast %360 : vector<1x2x16xbf16> to vector<2x16xbf16>
    %c0_369 = arith.constant 0 : index
    %c36_370 = arith.constant 36 : index
    %362 = vector.load %arg25[%c0_369, %c36_370] : memref<16x326xbf16, #tpu.memory_space<vmem>>, vector<16x288xbf16>
    %cst_371 = arith.constant dense<0.000000e+00> : vector<2x288xf32>
    %363 = tpu.matmul %361, %362, %cst_371 {dimension_numbers = #tpu.dot_dimension_numbers<[1], [0], [0], [1], [0, 0, 1, 1], [], []>} : vector<2x16xbf16>, vector<16x288xbf16>, vector<2x288xf32> -> vector<2x288xf32>
    %364 = arith.addf %359, %363 : vector<2x288xf32>
    %c7_372 = arith.constant 7 : index
    %c0_373 = arith.constant 0 : index
    %c0_374 = arith.constant 0 : index
    %365 = vector.load %arg14[%c7_372, %c0_373, %c0_374] : memref<9x2x16xbf16, #tpu.memory_space<vmem>>, vector<1x2x16xbf16>
    %366 = vector.shape_cast %365 : vector<1x2x16xbf16> to vector<2x16xbf16>
    %c0_375 = arith.constant 0 : index
    %c37_376 = arith.constant 37 : index
    %367 = vector.load %arg25[%c0_375, %c37_376] : memref<16x326xbf16, #tpu.memory_space<vmem>>, vector<16x288xbf16>
    %cst_377 = arith.constant dense<0.000000e+00> : vector<2x288xf32>
    %368 = tpu.matmul %366, %367, %cst_377 {dimension_numbers = #tpu.dot_dimension_numbers<[1], [0], [0], [1], [0, 0, 1, 1], [], []>} : vector<2x16xbf16>, vector<16x288xbf16>, vector<2x288xf32> -> vector<2x288xf32>
    %369 = arith.addf %364, %368 : vector<2x288xf32>
    %c8_378 = arith.constant 8 : index
    %c0_379 = arith.constant 0 : index
    %c0_380 = arith.constant 0 : index
    %370 = vector.load %arg14[%c8_378, %c0_379, %c0_380] : memref<9x2x16xbf16, #tpu.memory_space<vmem>>, vector<1x2x16xbf16>
    %371 = vector.shape_cast %370 : vector<1x2x16xbf16> to vector<2x16xbf16>
    %c0_381 = arith.constant 0 : index
    %c38_382 = arith.constant 38 : index
    %372 = vector.load %arg25[%c0_381, %c38_382] : memref<16x326xbf16, #tpu.memory_space<vmem>>, vector<16x288xbf16>
    %cst_383 = arith.constant dense<0.000000e+00> : vector<2x288xf32>
    %373 = tpu.matmul %371, %372, %cst_383 {dimension_numbers = #tpu.dot_dimension_numbers<[1], [0], [0], [1], [0, 0, 1, 1], [], []>} : vector<2x16xbf16>, vector<16x288xbf16>, vector<2x288xf32> -> vector<2x288xf32>
    %374 = arith.addf %369, %373 : vector<2x288xf32>
    %c0_384 = arith.constant 0 : index
    %c0_385 = arith.constant 0 : index
    %375 = vector.load %arg15[%c0_384, %c0_385] : memref<2x1xf32, #tpu.memory_space<vmem>>, vector<2x1xf32>
    %376 = vector.broadcast %375 : vector<2x1xf32> to vector<2x288xf32>
    %377 = arith.addf %374, %376 : vector<2x288xf32>
    %c0_386 = arith.constant 0 : index
    %c0_387 = arith.constant 0 : index
    %c0_388 = arith.constant 0 : index
    %378 = vector.load %arg20[%c0_386, %c0_387, %c0_388] : memref<1x2x288xf32, #tpu.memory_space<vmem>>, vector<1x2x288xf32>
    %379 = vector.shape_cast %378 : vector<1x2x288xf32> to vector<2x288xf32>
    %380 = vector.shape_cast %377 : vector<2x288xf32> to vector<1x2x288xf32>
    tpu.vector_store %arg20[%c0_386, %c0_387, %c0_388], %380 {strides = array<i32>} : memref<1x2x288xf32, #tpu.memory_space<vmem>>, vector<1x2x288xf32>,
    return
  }
  func.func @transform_0(%arg0: i32) -> (i32, i32, i32) {
    %c0_i32 = arith.constant 0 : i32
    %c0_i32_0 = arith.constant 0 : i32
    %c0_i32_1 = arith.constant 0 : i32
    return %arg0, %c0_i32, %c0_i32_0 : i32, i32, i32
  }
  func.func @transform_1(%arg0: i32) -> (i32, i32, i32) {
    %c0_i32 = arith.constant 0 : i32
    %c0_i32_0 = arith.constant 0 : i32
    %c0_i32_1 = arith.constant 0 : i32
    %c0_i32_2 = arith.constant 0 : i32
    return %c0_i32, %c0_i32_0, %c0_i32_1 : i32, i32, i32
  }
  func.func @transform_2(%arg0: i32) -> (i32, i32) {
    %c0_i32 = arith.constant 0 : i32
    %c0_i32_0 = arith.constant 0 : i32
    %c0_i32_1 = arith.constant 0 : i32
    return %c0_i32, %c0_i32_0 : i32, i32
  }
  func.func @transform_3(%arg0: i32) -> (i32, i32, i32) {
    %c0_i32 = arith.constant 0 : i32
    %c0_i32_0 = arith.constant 0 : i32
    %c0_i32_1 = arith.constant 0 : i32
    %c0_i32_2 = arith.constant 0 : i32
    return %c0_i32, %c0_i32_0, %c0_i32_1 : i32, i32, i32
  }
  func.func @transform_4(%arg0: i32) -> (i32, i32) {
    %c0_i32 = arith.constant 0 : i32
    %c0_i32_0 = arith.constant 0 : i32
    %c0_i32_1 = arith.constant 0 : i32
    return %c0_i32, %c0_i32_0 : i32, i32
  }
  func.func @transform_5(%arg0: i32) -> (i32, i32, i32) {
    %c0_i32 = arith.constant 0 : i32
    %c0_i32_0 = arith.constant 0 : i32
    %c0_i32_1 = arith.constant 0 : i32
    %c0_i32_2 = arith.constant 0 : i32
    return %c0_i32, %c0_i32_0, %c0_i32_1 : i32, i32, i32
  }
  func.func @transform_6(%arg0: i32) -> (i32, i32) {
    %c0_i32 = arith.constant 0 : i32
    %c0_i32_0 = arith.constant 0 : i32
    %c0_i32_1 = arith.constant 0 : i32
    return %c0_i32, %c0_i32_0 : i32, i32
  }
  func.func @transform_7(%arg0: i32) -> (i32, i32, i32) {
    %c0_i32 = arith.constant 0 : i32
    %c0_i32_0 = arith.constant 0 : i32
    %c0_i32_1 = arith.constant 0 : i32
    %c0_i32_2 = arith.constant 0 : i32
    return %c0_i32, %c0_i32_0, %c0_i32_1 : i32, i32, i32
  }
  func.func @transform_8(%arg0: i32) -> (i32, i32) {
    %c0_i32 = arith.constant 0 : i32
    %c0_i32_0 = arith.constant 0 : i32
    %c0_i32_1 = arith.constant 0 : i32
    return %c0_i32, %c0_i32_0 : i32, i32
  }
  func.func @transform_9(%arg0: i32) -> (i32, i32) {
    %c0_i32 = arith.constant 0 : i32
    %c0_i32_0 = arith.constant 0 : i32
    %c0_i32_1 = arith.constant 0 : i32
    return %c0_i32, %c0_i32_0 : i32, i32
  }
  func.func @transform_10(%arg0: i32) -> (i32, i32) {
    %c0_i32 = arith.constant 0 : i32
    %c0_i32_0 = arith.constant 0 : i32
    %c0_i32_1 = arith.constant 0 : i32
    return %c0_i32, %c0_i32_0 : i32, i32
  }
  func.func @transform_11(%arg0: i32) -> (i32, i32, i32) {
    %c0_i32 = arith.constant 0 : i32
    %c0_i32_0 = arith.constant 0 : i32
    %c0_i32_1 = arith.constant 0 : i32
    %c0_i32_2 = arith.constant 0 : i32
    return %c0_i32, %c0_i32_0, %c0_i32_1 : i32, i32, i32
  }
  func.func @transform_12(%arg0: i32) -> (i32, i32) {
    %c0_i32 = arith.constant 0 : i32
    %c0_i32_0 = arith.constant 0 : i32
    %c0_i32_1 = arith.constant 0 : i32
    return %c0_i32, %c0_i32_0 : i32, i32
  }
  func.func @transform_13(%arg0: i32) -> (i32, i32, i32) {
    %c0_i32 = arith.constant 0 : i32
    %c0_i32_0 = arith.constant 0 : i32
    %c0_i32_1 = arith.constant 0 : i32
    %c0_i32_2 = arith.constant 0 : i32
    return %c0_i32, %c0_i32_0, %c0_i32_1 : i32, i32, i32
  }
  func.func @transform_14(%arg0: i32) -> (i32, i32) {
    %c0_i32 = arith.constant 0 : i32
    %c0_i32_0 = arith.constant 0 : i32
    %c0_i32_1 = arith.constant 0 : i32
    return %c0_i32, %c0_i32_0 : i32, i32
  }
  func.func @transform_15(%arg0: i32) -> (i32, i32) {
    %c0_i32 = arith.constant 0 : i32
    %c0_i32_0 = arith.constant 0 : i32
    %c0_i32_1 = arith.constant 0 : i32
    return %c0_i32, %c0_i32_0 : i32, i32
  }
  func.func @transform_16(%arg0: i32) -> (i32, i32) {
    %c0_i32 = arith.constant 0 : i32
    %c0_i32_0 = arith.constant 0 : i32
    %c0_i32_1 = arith.constant 0 : i32
    return %c0_i32, %c0_i32_0 : i32, i32
  }
  func.func @transform_17(%arg0: i32) -> (i32, i32) {
    %c0_i32 = arith.constant 0 : i32
    %c0_i32_0 = arith.constant 0 : i32
    %c0_i32_1 = arith.constant 0 : i32
    return %c0_i32, %c0_i32_0 : i32, i32
  }
  func.func @transform_18(%arg0: i32) -> (i32, i32) {
    %c0_i32 = arith.constant 0 : i32
    %c0_i32_0 = arith.constant 0 : i32
    %c0_i32_1 = arith.constant 0 : i32
    return %c0_i32, %c0_i32_0 : i32, i32
  }
  func.func @transform_19(%arg0: i32) -> (i32, i32, i32) {
    %c0_i32 = arith.constant 0 : i32
    %c0_i32_0 = arith.constant 0 : i32
    %c0_i32_1 = arith.constant 0 : i32
    return %arg0, %c0_i32, %c0_i32_0 : i32, i32, i32
  }
  func.func @transform_20(%arg0: i32) -> (i32, i32, i32) {
    %c0_i32 = arith.constant 0 : i32
    %c0_i32_0 = arith.constant 0 : i32
    %c0_i32_1 = arith.constant 0 : i32
    return %arg0, %c0_i32, %c0_i32_0 : i32, i32, i32
  }
}

</mosaic_0001>

<llo_original>
// kernel: unet_ld_forward.1
$region0: #{unet_ld_forward.1}
  #allocation0 [shape = 'u32[]', space=smem, size = 0x4, offset = 0x4, fixed_abs, tag = 'smem constant byte address 0x4 - core index']
  #allocation1 [shape = 'u32[144,128]{1,0:T(1,128)}', space=vmem, size = 0x12000, scoped, tag = 'internal scratch']
  #allocation2 [shape = 'bf16[32,326]{1,0:T(8,128)(2,1)}', space=vmem, size = 0x6000, scoped, tag = 'scratch operand']
  #allocation3 [shape = 'bf16[16,102]{1,0:T(8,128)(2,1)}', space=vmem, size = 0x1000, scoped, tag = 'scratch operand']
  #allocation4 [shape = 'bf16[32,102]{1,0:T(8,128)(2,1)}', space=vmem, size = 0x2000, scoped, tag = 'scratch operand']
  #allocation5 [shape = 'bf16[16,326]{1,0:T(8,128)(2,1)}', space=vmem, size = 0x3000, scoped, tag = 'scratch operand']
  %s0 = inlined_call_operand.vmem [shape: bf16[2,4,326], index: 0, kind: input, shape index: {}]
  %s1 = inlined_call_operand.vmem [shape: bf16[9,16,4], index: 1, kind: input, shape index: {}]
  %s2 = inlined_call_operand.vmem [shape: f32[16,1], index: 2, kind: input, shape index: {}]
  %s3 = inlined_call_operand.vmem [shape: bf16[9,16,16], index: 3, kind: input, shape index: {}]
  %s4 = inlined_call_operand.vmem [shape: f32[16,1], index: 4, kind: input, shape index: {}]
  %s5 = inlined_call_operand.vmem [shape: bf16[9,32,16], index: 5, kind: input, shape index: {}]
  %s6 = inlined_call_operand.vmem [shape: f32[32,1], index: 6, kind: input, shape index: {}]
  %s7 = inlined_call_operand.vmem [shape: bf16[9,32,32], index: 7, kind: input, shape index: {}]
  %s8 = inlined_call_operand.vmem [shape: f32[32,1], index: 8, kind: input, shape index: {}]
  %s9 = inlined_call_operand.vmem [shape: bf16[16,32], index: 9, kind: input, shape index: {}]
  %s10 = inlined_call_operand.vmem [shape: f32[16,1], index: 10, kind: input, shape index: {}]
  %s11 = inlined_call_operand.vmem [shape: bf16[9,16,32], index: 11, kind: input, shape index: {}]
  %s12 = inlined_call_operand.vmem [shape: f32[16,1], index: 12, kind: input, shape index: {}]
  %s13 = inlined_call_operand.vmem [shape: bf16[9,2,16], index: 13, kind: input, shape index: {}]
  %s14 = inlined_call_operand.vmem [shape: f32[2,1], index: 14, kind: input, shape index: {}]
  %s15 = inlined_call_operand.vmem [shape: f32[1,288], index: 15, kind: input, shape index: {}]
  %s16 = inlined_call_operand.vmem [shape: f32[1,80], index: 16, kind: input, shape index: {}]
  %s17 = inlined_call_operand.vmem [shape: f32[288,80], index: 17, kind: input, shape index: {}]
  %s18 = inlined_call_operand.vmem [shape: bf16[80,288], index: 18, kind: input, shape index: {}]
  %s19 = inlined_call_operand.vmem [shape: f32[2,2,288], index: 19, kind: output, shape index: {0}]
  %s20 = inlined_call_operand.vmem [shape: f32[2,32,80], index: 20, kind: output, shape index: {1}]
  %21 = xla_tuple %s19, %s20
  %s22 = sld [smem:[#allocation0]]
  $region117: #{unet_ld_forward.1} parent=0
    _
  %s24 = ssub.s32 1, %s22
  %s25 = scalar_select 0, %s24, %s22
  loop: start=0, step=1, limit=4
  $region2: #{unet_ld_forward.1} parent=0 // loop_pre_header
    _
  $region3: #{unet_ld_forward.1} parent=0 // loop_header
    %s27 = sphi 0, %s31
    %p28 = scmp.ge.s32.totalorder %s27, 4
    %s37 = sphi 0, %s39
    %s40 = sphi 0, %s37
    %s41 = sphi 0, %s40
    %s57 = sphi 0, %s41
    %s61 = sphi 0, %s61
    %s63 = sphi 0, %s61
    %s64 = sphi 0, %s63
    %s78 = sphi 0, %s64
    %s82 = sphi 0, %s82
    %s84 = sphi 0, %s82
    %s85 = sphi 0, %s84
    %s99 = sphi 0, %s85
    %s103 = sphi 0, %s103
    %s105 = sphi 0, %s103
    %s106 = sphi 0, %s105
    %s120 = sphi 0, %s106
    %s124 = sphi 0, %s124
    %s126 = sphi 0, %s124
    %s127 = sphi 0, %s126
    %s141 = sphi 0, %s127
    %s145 = sphi 0, %s145
    %s147 = sphi 0, %s145
    %s148 = sphi 0, %s147
    %s162 = sphi 0, %s148
    %s166 = sphi 0, %s166
    %s168 = sphi 0, %s166
    %s169 = sphi 0, %s168
    %s183 = sphi 0, %s169
    %s187 = sphi 0, %s187
    %s189 = sphi 0, %s187
    %s190 = sphi 0, %s189
    %s204 = sphi 0, %s190
    %s208 = sphi 0, %s208
    %s210 = sphi 0, %s208
    %s211 = sphi 0, %s210
    %s225 = sphi 0, %s211
    %s229 = sphi 0, %s229
    %s231 = sphi 0, %s229
    %s232 = sphi 0, %s231
    %s246 = sphi 0, %s232
    %s250 = sphi 0, %s250
    %s252 = sphi 0, %s250
    %s253 = sphi 0, %s252
    %s267 = sphi 0, %s253
    %s271 = sphi 0, %s271
    %s273 = sphi 0, %s271
    %s274 = sphi 0, %s273
    %s288 = sphi 0, %s274
    %s292 = sphi 0, %s292
    %s294 = sphi 0, %s292
    %s295 = sphi 0, %s294
    %s309 = sphi 0, %s295
    %s313 = sphi 0, %s313
    %s315 = sphi 0, %s313
    %s316 = sphi 0, %s315
    %s330 = sphi 0, %s316
    %s334 = sphi 0, %s334
    %s336 = sphi 0, %s334
    %s337 = sphi 0, %s336
    %s351 = sphi 0, %s337
    %s355 = sphi 0, %s355
    %s357 = sphi 0, %s355
    %s358 = sphi 0, %s357
    %s372 = sphi 0, %s358
    %s376 = sphi 0, %s376
    %s378 = sphi 0, %s376
    %s379 = sphi 0, %s378
    %s393 = sphi 0, %s379
    %s397 = sphi 0, %s397
    %s399 = sphi 0, %s397
    %s400 = sphi 0, %s399
    %s414 = sphi 0, %s400
    %s418 = sphi 0, %s418
    %s420 = sphi 0, %s418
    %s421 = sphi 0, %s420
    %s435 = sphi 0, %s421
    %s441 = sphi 0, %s443
    %s444 = sphi 0, %s441
    %s445 = sphi 0, %s444
    %s461 = sphi 0, %s445
    %s467 = sphi 0, %s469
    %s470 = sphi 0, %s467
    %s471 = sphi 0, %s470
    %s487 = sphi 0, %s471
  $region4: #{unet_ld_forward.1} parent=0 // loop_header_branch
    %30 = sbr.rel (%p28) target = $region8
  $region5: #{unet_ld_forward.1} parent=0 // loop_body
    %s32 = ssub.s32 %s27, 1
    %s33 = ssub.s32 %s27, 2
    %s34 = sadd.s32 %s27, 1
    %s35 = ssub.s32 %s27, %s34
    %p36 = scmp.eq.s32.totalorder %s35, 0
    %s38 = sadd.s32 %s37, 1
    %s39 = scalar_select %p36, %s37, %s38
    %p42 = pneg %p36
    %p43 = scmp.eq.s32.totalorder %s27, 1
    %p44 = por %p42, %p43
    %p45 = scmp.ne.s32.totalorder %s37, %s40
    %p46 = scmp.eq.s32.totalorder %s27, 0
    %p47 = por %p45, %p46
    %p48 = scmp.ne.s32.totalorder %s37, %s40
    %p49 = scmp.eq.s32.totalorder %s32, 1
    %p50 = por %p48, %p49
    %p51 = scmp.ne.s32.totalorder %s40, %s41
    %p52 = scmp.eq.s32.totalorder %s32, 0
    %p53 = por %p51, %p52
    %p54 = scmp.ne.s32.totalorder %s40, %s41
    %p55 = scmp.eq.s32.totalorder %s33, 1
    %p56 = por %p54, %p55
    %p58 = scmp.ne.s32.totalorder %s41, %s57
    %p59 = scmp.eq.s32.totalorder %s33, 0
    %p60 = por %p58, %p59
    %s62 = sadd.s32 %s61, 1
    %p65 = scmp.eq.s32.totalorder %s27, 1
    %p66 = scmp.ne.s32.totalorder %s61, %s63
    %p67 = scmp.eq.s32.totalorder %s27, 0
    %p68 = por %p66, %p67
    %p69 = scmp.ne.s32.totalorder %s61, %s63
    %p70 = scmp.eq.s32.totalorder %s32, 1
    %p71 = por %p69, %p70
    %p72 = scmp.ne.s32.totalorder %s63, %s64
    %p73 = scmp.eq.s32.totalorder %s32, 0
    %p74 = por %p72, %p73
    %p75 = scmp.ne.s32.totalorder %s63, %s64
    %p76 = scmp.eq.s32.totalorder %s33, 1
    %p77 = por %p75, %p76
    %p79 = scmp.ne.s32.totalorder %s64, %s78
    %p80 = scmp.eq.s32.totalorder %s33, 0
    %p81 = por %p79, %p80
    %s83 = sadd.s32 %s82, 1
    %p86 = scmp.eq.s32.totalorder %s27, 1
    %p87 = scmp.ne.s32.totalorder %s82, %s84
    %p88 = scmp.eq.s32.totalorder %s27, 0
    %p89 = por %p87, %p88
    %p90 = scmp.ne.s32.totalorder %s82, %s84
    %p91 = scmp.eq.s32.totalorder %s32, 1
    %p92 = por %p90, %p91
    %p93 = scmp.ne.s32.totalorder %s84, %s85
    %p94 = scmp.eq.s32.totalorder %s32, 0
    %p95 = por %p93, %p94
    %p96 = scmp.ne.s32.totalorder %s84, %s85
    %p97 = scmp.eq.s32.totalorder %s33, 1
    %p98 = por %p96, %p97
    %p100 = scmp.ne.s32.totalorder %s85, %s99
    %p101 = scmp.eq.s32.totalorder %s33, 0
    %p102 = por %p100, %p101
    %s104 = sadd.s32 %s103, 1
    %p107 = scmp.eq.s32.totalorder %s27, 1
    %p108 = scmp.ne.s32.totalorder %s103, %s105
    %p109 = scmp.eq.s32.totalorder %s27, 0
    %p110 = por %p108, %p109
    %p111 = scmp.ne.s32.totalorder %s103, %s105
    %p112 = scmp.eq.s32.totalorder %s32, 1
    %p113 = por %p111, %p112
    %p114 = scmp.ne.s32.totalorder %s105, %s106
    %p115 = scmp.eq.s32.totalorder %s32, 0
    %p116 = por %p114, %p115
    %p117 = scmp.ne.s32.totalorder %s105, %s106
    %p118 = scmp.eq.s32.totalorder %s33, 1
    %p119 = por %p117, %p118
    %p121 = scmp.ne.s32.totalorder %s106, %s120
    %p122 = scmp.eq.s32.totalorder %s33, 0
    %p123 = por %p121, %p122
    %s125 = sadd.s32 %s124, 1
    %p128 = scmp.eq.s32.totalorder %s27, 1
    %p129 = scmp.ne.s32.totalorder %s124, %s126
    %p130 = scmp.eq.s32.totalorder %s27, 0
    %p131 = por %p129, %p130
    %p132 = scmp.ne.s32.totalorder %s124, %s126
    %p133 = scmp.eq.s32.totalorder %s32, 1
    %p134 = por %p132, %p133
    %p135 = scmp.ne.s32.totalorder %s126, %s127
    %p136 = scmp.eq.s32.totalorder %s32, 0
    %p137 = por %p135, %p136
    %p138 = scmp.ne.s32.totalorder %s126, %s127
    %p139 = scmp.eq.s32.totalorder %s33, 1
    %p140 = por %p138, %p139
    %p142 = scmp.ne.s32.totalorder %s127, %s141
    %p143 = scmp.eq.s32.totalorder %s33, 0
    %p144 = por %p142, %p143
    %s146 = sadd.s32 %s145, 1
    %p149 = scmp.eq.s32.totalorder %s27, 1
    %p150 = scmp.ne.s32.totalorder %s145, %s147
    %p151 = scmp.eq.s32.totalorder %s27, 0
    %p152 = por %p150, %p151
    %p153 = scmp.ne.s32.totalorder %s145, %s147
    %p154 = scmp.eq.s32.totalorder %s32, 1
    %p155 = por %p153, %p154
    %p156 = scmp.ne.s32.totalorder %s147, %s148
    %p157 = scmp.eq.s32.totalorder %s32, 0
    %p158 = por %p156, %p157
    %p159 = scmp.ne.s32.totalorder %s147, %s148
    %p160 = scmp.eq.s32.totalorder %s33, 1
    %p161 = por %p159, %p160
    %p163 = scmp.ne.s32.totalorder %s148, %s162
    %p164 = scmp.eq.s32.totalorder %s33, 0
    %p165 = por %p163, %p164
    %s167 = sadd.s32 %s166, 1
    %p170 = scmp.eq.s32.totalorder %s27, 1
    %p171 = scmp.ne.s32.totalorder %s166, %s168
    %p172 = scmp.eq.s32.totalorder %s27, 0
    %p173 = por %p171, %p172
    %p174 = scmp.ne.s32.totalorder %s166, %s168
    %p175 = scmp.eq.s32.totalorder %s32, 1
    %p176 = por %p174, %p175
    %p177 = scmp.ne.s32.totalorder %s168, %s169
    %p178 = scmp.eq.s32.totalorder %s32, 0
    %p179 = por %p177, %p178
    %p180 = scmp.ne.s32.totalorder %s168, %s169
    %p181 = scmp.eq.s32.totalorder %s33, 1
    %p182 = por %p180, %p181
    %p184 = scmp.ne.s32.totalorder %s169, %s183
    %p185 = scmp.eq.s32.totalorder %s33, 0
    %p186 = por %p184, %p185
    %s188 = sadd.s32 %s187, 1
    %p191 = scmp.eq.s32.totalorder %s27, 1
    %p192 = scmp.ne.s32.totalorder %s187, %s189
    %p193 = scmp.eq.s32.totalorder %s27, 0
    %p194 = por %p192, %p193
    %p195 = scmp.ne.s32.totalorder %s187, %s189
    %p196 = scmp.eq.s32.totalorder %s32, 1
    %p197 = por %p195, %p196
    %p198 = scmp.ne.s32.totalorder %s189, %s190
    %p199 = scmp.eq.s32.totalorder %s32, 0
    %p200 = por %p198, %p199
    %p201 = scmp.ne.s32.totalorder %s189, %s190
    %p202 = scmp.eq.s32.totalorder %s33, 1
    %p203 = por %p201, %p202
    %p205 = scmp.ne.s32.totalorder %s190, %s204
    %p206 = scmp.eq.s32.totalorder %s33, 0
    %p207 = por %p205, %p206
    %s209 = sadd.s32 %s208, 1
    %p212 = scmp.eq.s32.totalorder %s27, 1
    %p213 = scmp.ne.s32.totalorder %s208, %s210
    %p214 = scmp.eq.s32.totalorder %s27, 0
    %p215 = por %p213, %p214
    %p216 = scmp.ne.s32.totalorder %s208, %s210
    %p217 = scmp.eq.s32.totalorder %s32, 1
    %p218 = por %p216, %p217
    %p219 = scmp.ne.s32.totalorder %s210, %s211
    %p220 = scmp.eq.s32.totalorder %s32, 0
    %p221 = por %p219, %p220
    %p222 = scmp.ne.s32.totalorder %s210, %s211
    %p223 = scmp.eq.s32.totalorder %s33, 1
    %p224 = por %p222, %p223
    %p226 = scmp.ne.s32.totalorder %s211, %s225
    %p227 = scmp.eq.s32.totalorder %s33, 0
    %p228 = por %p226, %p227
    %s230 = sadd.s32 %s229, 1
    %p233 = scmp.eq.s32.totalorder %s27, 1
    %p234 = scmp.ne.s32.totalorder %s229, %s231
    %p235 = scmp.eq.s32.totalorder %s27, 0
    %p236 = por %p234, %p235
    %p237 = scmp.ne.s32.totalorder %s229, %s231
    %p238 = scmp.eq.s32.totalorder %s32, 1
    %p239 = por %p237, %p238
    %p240 = scmp.ne.s32.totalorder %s231, %s232
    %p241 = scmp.eq.s32.totalorder %s32, 0
    %p242 = por %p240, %p241
    %p243 = scmp.ne.s32.totalorder %s231, %s232
    %p244 = scmp.eq.s32.totalorder %s33, 1
    %p245 = por %p243, %p244
    %p247 = scmp.ne.s32.totalorder %s232, %s246
    %p248 = scmp.eq.s32.totalorder %s33, 0
    %p249 = por %p247, %p248
    %s251 = sadd.s32 %s250, 1
    %p254 = scmp.eq.s32.totalorder %s27, 1
    %p255 = scmp.ne.s32.totalorder %s250, %s252
    %p256 = scmp.eq.s32.totalorder %s27, 0
    %p257 = por %p255, %p256
    %p258 = scmp.ne.s32.totalorder %s250, %s252
    %p259 = scmp.eq.s32.totalorder %s32, 1
    %p260 = por %p258, %p259
    %p261 = scmp.ne.s32.totalorder %s252, %s253
    %p262 = scmp.eq.s32.totalorder %s32, 0
    %p263 = por %p261, %p262
    %p264 = scmp.ne.s32.totalorder %s252, %s253
    %p265 = scmp.eq.s32.totalorder %s33, 1
    %p266 = por %p264, %p265
    %p268 = scmp.ne.s32.totalorder %s253, %s267
    %p269 = scmp.eq.s32.totalorder %s33, 0
    %p270 = por %p268, %p269
    %s272 = sadd.s32 %s271, 1
    %p275 = scmp.eq.s32.totalorder %s27, 1
    %p276 = scmp.ne.s32.totalorder %s271, %s273
    %p277 = scmp.eq.s32.totalorder %s27, 0
    %p278 = por %p276, %p277
    %p279 = scmp.ne.s32.totalorder %s271, %s273
    %p280 = scmp.eq.s32.totalorder %s32, 1
    %p281 = por %p279, %p280
    %p282 = scmp.ne.s32.totalorder %s273, %s274
    %p283 = scmp.eq.s32.totalorder %s32, 0
    %p284 = por %p282, %p283
    %p285 = scmp.ne.s32.totalorder %s273, %s274
    %p286 = scmp.eq.s32.totalorder %s33, 1
    %p287 = por %p285, %p286
    %p289 = scmp.ne.s32.totalorder %s274, %s288
    %p290 = scmp.eq.s32.totalorder %s33, 0
    %p291 = por %p289, %p290
    %s293 = sadd.s32 %s292, 1
    %p296 = scmp.eq.s32.totalorder %s27, 1
    %p297 = scmp.ne.s32.totalorder %s292, %s294
    %p298 = scmp.eq.s32.totalorder %s27, 0
    %p299 = por %p297, %p298
    %p300 = scmp.ne.s32.totalorder %s292, %s294
    %p301 = scmp.eq.s32.totalorder %s32, 1
    %p302 = por %p300, %p301
    %p303 = scmp.ne.s32.totalorder %s294, %s295
    %p304 = scmp.eq.s32.totalorder %s32, 0
    %p305 = por %p303, %p304
    %p306 = scmp.ne.s32.totalorder %s294, %s295
    %p307 = scmp.eq.s32.totalorder %s33, 1
    %p308 = por %p306, %p307
    %p310 = scmp.ne.s32.totalorder %s295, %s309
    %p311 = scmp.eq.s32.totalorder %s33, 0
    %p312 = por %p310, %p311
    %s314 = sadd.s32 %s313, 1
    %p317 = scmp.eq.s32.totalorder %s27, 1
    %p318 = scmp.ne.s32.totalorder %s313, %s315
    %p319 = scmp.eq.s32.totalorder %s27, 0
    %p320 = por %p318, %p319
    %p321 = scmp.ne.s32.totalorder %s313, %s315
    %p322 = scmp.eq.s32.totalorder %s32, 1
    %p323 = por %p321, %p322
    %p324 = scmp.ne.s32.totalorder %s315, %s316
    %p325 = scmp.eq.s32.totalorder %s32, 0
    %p326 = por %p324, %p325
    %p327 = scmp.ne.s32.totalorder %s315, %s316
    %p328 = scmp.eq.s32.totalorder %s33, 1
    %p329 = por %p327, %p328
    %p331 = scmp.ne.s32.totalorder %s316, %s330
    %p332 = scmp.eq.s32.totalorder %s33, 0
    %p333 = por %p331, %p332
    %s335 = sadd.s32 %s334, 1
    %p338 = scmp.eq.s32.totalorder %s27, 1
    %p339 = scmp.ne.s32.totalorder %s334, %s336
    %p340 = scmp.eq.s32.totalorder %s27, 0
    %p341 = por %p339, %p340
    %p342 = scmp.ne.s32.totalorder %s334, %s336
    %p343 = scmp.eq.s32.totalorder %s32, 1
    %p344 = por %p342, %p343
    %p345 = scmp.ne.s32.totalorder %s336, %s337
    %p346 = scmp.eq.s32.totalorder %s32, 0
    %p347 = por %p345, %p346
    %p348 = scmp.ne.s32.totalorder %s336, %s337
    %p349 = scmp.eq.s32.totalorder %s33, 1
    %p350 = por %p348, %p349
    %p352 = scmp.ne.s32.totalorder %s337, %s351
    %p353 = scmp.eq.s32.totalorder %s33, 0
    %p354 = por %p352, %p353
    %s356 = sadd.s32 %s355, 1
    %p359 = scmp.eq.s32.totalorder %s27, 1
    %p360 = scmp.ne.s32.totalorder %s355, %s357
    %p361 = scmp.eq.s32.totalorder %s27, 0
    %p362 = por %p360, %p361
    %p363 = scmp.ne.s32.totalorder %s355, %s357
    %p364 = scmp.eq.s32.totalorder %s32, 1
    %p365 = por %p363, %p364
    %p366 = scmp.ne.s32.totalorder %s357, %s358
    %p367 = scmp.eq.s32.totalorder %s32, 0
    %p368 = por %p366, %p367
    %p369 = scmp.ne.s32.totalorder %s357, %s358
    %p370 = scmp.eq.s32.totalorder %s33, 1
    %p371 = por %p369, %p370
    %p373 = scmp.ne.s32.totalorder %s358, %s372
    %p374 = scmp.eq.s32.totalorder %s33, 0
    %p375 = por %p373, %p374
    %s377 = sadd.s32 %s376, 1
    %p380 = scmp.eq.s32.totalorder %s27, 1
    %p381 = scmp.ne.s32.totalorder %s376, %s378
    %p382 = scmp.eq.s32.totalorder %s27, 0
    %p383 = por %p381, %p382
    %p384 = scmp.ne.s32.totalorder %s376, %s378
    %p385 = scmp.eq.s32.totalorder %s32, 1
    %p386 = por %p384, %p385
    %p387 = scmp.ne.s32.totalorder %s378, %s379
    %p388 = scmp.eq.s32.totalorder %s32, 0
    %p389 = por %p387, %p388
    %p390 = scmp.ne.s32.totalorder %s378, %s379
    %p391 = scmp.eq.s32.totalorder %s33, 1
    %p392 = por %p390, %p391
    %p394 = scmp.ne.s32.totalorder %s379, %s393
    %p395 = scmp.eq.s32.totalorder %s33, 0
    %p396 = por %p394, %p395
    %s398 = sadd.s32 %s397, 1
    %p401 = scmp.eq.s32.totalorder %s27, 1
    %p402 = scmp.ne.s32.totalorder %s397, %s399
    %p403 = scmp.eq.s32.totalorder %s27, 0
    %p404 = por %p402, %p403
    %p405 = scmp.ne.s32.totalorder %s397, %s399
    %p406 = scmp.eq.s32.totalorder %s32, 1
    %p407 = por %p405, %p406
    %p408 = scmp.ne.s32.totalorder %s399, %s400
    %p409 = scmp.eq.s32.totalorder %s32, 0
    %p410 = por %p408, %p409
    %p411 = scmp.ne.s32.totalorder %s399, %s400
    %p412 = scmp.eq.s32.totalorder %s33, 1
    %p413 = por %p411, %p412
    %p415 = scmp.ne.s32.totalorder %s400, %s414
    %p416 = scmp.eq.s32.totalorder %s33, 0
    %p417 = por %p415, %p416
    %s419 = sadd.s32 %s418, 1
    %p422 = scmp.eq.s32.totalorder %s27, 1
    %p423 = scmp.ne.s32.totalorder %s418, %s420
    %p424 = scmp.eq.s32.totalorder %s27, 0
    %p425 = por %p423, %p424
    %p426 = scmp.ne.s32.totalorder %s418, %s420
    %p427 = scmp.eq.s32.totalorder %s32, 1
    %p428 = por %p426, %p427
    %p429 = scmp.ne.s32.totalorder %s420, %s421
    %p430 = scmp.eq.s32.totalorder %s32, 0
    %p431 = por %p429, %p430
    %p432 = scmp.ne.s32.totalorder %s420, %s421
    %p433 = scmp.eq.s32.totalorder %s33, 1
    %p434 = por %p432, %p433
    %p436 = scmp.ne.s32.totalorder %s421, %s435
    %p437 = scmp.eq.s32.totalorder %s33, 0
    %p438 = por %p436, %p437
    %s439 = ssub.s32 %s27, %s34
    %p440 = scmp.eq.s32.totalorder %s439, 0
    %s442 = sadd.s32 %s441, 1
    %s443 = scalar_select %p440, %s441, %s442
    %p446 = pneg %p440
    %p447 = scmp.eq.s32.totalorder %s27, 1
    %p448 = por %p446, %p447
    %p449 = scmp.ne.s32.totalorder %s441, %s444
    %p450 = scmp.eq.s32.totalorder %s27, 0
    %p451 = por %p449, %p450
    %p452 = scmp.ne.s32.totalorder %s441, %s444
    %p453 = scmp.eq.s32.totalorder %s32, 1
    %p454 = por %p452, %p453
    %p455 = scmp.ne.s32.totalorder %s444, %s445
    %p456 = scmp.eq.s32.totalorder %s32, 0
    %p457 = por %p455, %p456
    %p458 = scmp.ne.s32.totalorder %s444, %s445
    %p459 = scmp.eq.s32.totalorder %s33, 1
    %p460 = por %p458, %p459
    %p462 = scmp.ne.s32.totalorder %s445, %s461
    %p463 = scmp.eq.s32.totalorder %s33, 0
    %p464 = por %p462, %p463
    %s465 = ssub.s32 %s27, %s34
    %p466 = scmp.eq.s32.totalorder %s465, 0
    %s468 = sadd.s32 %s467, 1
    %s469 = scalar_select %p466, %s467, %s468
    %p472 = pneg %p466
    %p473 = scmp.eq.s32.totalorder %s27, 1
    %p474 = por %p472, %p473
    %p475 = scmp.ne.s32.totalorder %s467, %s470
    %p476 = scmp.eq.s32.totalorder %s27, 0
    %p477 = por %p475, %p476
    %p478 = scmp.ne.s32.totalorder %s467, %s470
    %p479 = scmp.eq.s32.totalorder %s32, 1
    %p480 = por %p478, %p479
    %p481 = scmp.ne.s32.totalorder %s470, %s471
    %p482 = scmp.eq.s32.totalorder %s32, 0
    %p483 = por %p481, %p482
    %p484 = scmp.ne.s32.totalorder %s470, %s471
    %p485 = scmp.eq.s32.totalorder %s33, 1
    %p486 = por %p484, %p485
    %p488 = scmp.ne.s32.totalorder %s471, %s487
    %p489 = scmp.eq.s32.totalorder %s33, 0
    %p490 = por %p488, %p489
    %p491 = scmp.le.s32.totalorder 1, %s27
    %p492 = scmp.lt.s32.totalorder %s27, 3
    %p493 = pnand %p491, %p492
    %p494 = pneg %p493
    // Predicated region
    $region9: #{unet_ld_forward.1} parent=5 // pred_check
      _
    $region10: #{unet_ld_forward.1} parent=5 // pred_check_branch
      %496 = sbr.rel (%p493) target = $region12
    $region11: #{unet_ld_forward.1} parent=5 // pred_region
      %s497 = ssub.s32 %s27, 1
      // Predicated region
      $region13: #{unet_ld_forward.1} parent=11 // pred_check
        %p498 = pneg %p74
      $region14: #{unet_ld_forward.1} parent=11 // pred_check_branch
        %500 = sbr.rel (%p498) target = $region16
      $region15: #{unet_ld_forward.1} parent=11 // pred_region
        _
      $region16: #{unet_ld_forward.1} parent=11 // pred_fallthru
        _
      // Predicated region
      $region17: #{unet_ld_forward.1} parent=11 // pred_check
        %p501 = pneg %p95
      $region18: #{unet_ld_forward.1} parent=11 // pred_check_branch
        %503 = sbr.rel (%p501) target = $region20
      $region19: #{unet_ld_forward.1} parent=11 // pred_region
        _
      $region20: #{unet_ld_forward.1} parent=11 // pred_fallthru
        _
      // Predicated region
      $region21: #{unet_ld_forward.1} parent=11 // pred_check
        %p504 = pneg %p116
      $region22: #{unet_ld_forward.1} parent=11 // pred_check_branch
        %506 = sbr.rel (%p504) target = $region24
      $region23: #{unet_ld_forward.1} parent=11 // pred_region
        _
      $region24: #{unet_ld_forward.1} parent=11 // pred_fallthru
        _
      // Predicated region
      $region25: #{unet_ld_forward.1} parent=11 // pred_check
        %p507 = pneg %p137
      $region26: #{unet_ld_forward.1} parent=11 // pred_check_branch
        %509 = sbr.rel (%p507) target = $region28
      $region27: #{unet_ld_forward.1} parent=11 // pred_region
        _
      $region28: #{unet_ld_forward.1} parent=11 // pred_fallthru
        _
      // Predicated region
      $region29: #{unet_ld_forward.1} parent=11 // pred_check
        %p510 = pneg %p158
      $region30: #{unet_ld_forward.1} parent=11 // pred_check_branch
        %512 = sbr.rel (%p510) target = $region32
      $region31: #{unet_ld_forward.1} parent=11 // pred_region
        _
      $region32: #{unet_ld_forward.1} parent=11 // pred_fallthru
        _
      // Predicated region
      $region33: #{unet_ld_forward.1} parent=11 // pred_check
        %p513 = pneg %p179
      $region34: #{unet_ld_forward.1} parent=11 // pred_check_branch
        %515 = sbr.rel (%p513) target = $region36
      $region35: #{unet_ld_forward.1} parent=11 // pred_region
        _
      $region36: #{unet_ld_forward.1} parent=11 // pred_fallthru
        _
      // Predicated region
      $region37: #{unet_ld_forward.1} parent=11 // pred_check
        %p516 = pneg %p200
      $region38: #{unet_ld_forward.1} parent=11 // pred_check_branch
        %518 = sbr.rel (%p516) target = $region40
      $region39: #{unet_ld_forward.1} parent=11 // pred_region
        _
      $region40: #{unet_ld_forward.1} parent=11 // pred_fallthru
        _
      // Predicated region
      $region41: #{unet_ld_forward.1} parent=11 // pred_check
        %p519 = pneg %p221
      $region42: #{unet_ld_forward.1} parent=11 // pred_check_branch
        %521 = sbr.rel (%p519) target = $region44
      $region43: #{unet_ld_forward.1} parent=11 // pred_region
        _
      $region44: #{unet_ld_forward.1} parent=11 // pred_fallthru
        _
      // Predicated region
      $region45: #{unet_ld_forward.1} parent=11 // pred_check
        %p522 = pneg %p242
      $region46: #{unet_ld_forward.1} parent=11 // pred_check_branch
        %524 = sbr.rel (%p522) target = $region48
      $region47: #{unet_ld_forward.1} parent=11 // pred_region
        _
      $region48: #{unet_ld_forward.1} parent=11 // pred_fallthru
        _
      // Predicated region
      $region49: #{unet_ld_forward.1} parent=11 // pred_check
        %p525 = pneg %p263
      $region50: #{unet_ld_forward.1} parent=11 // pred_check_branch
        %527 = sbr.rel (%p525) target = $region52
      $region51: #{unet_ld_forward.1} parent=11 // pred_region
        _
      $region52: #{unet_ld_forward.1} parent=11 // pred_fallthru
        _
      // Predicated region
      $region53: #{unet_ld_forward.1} parent=11 // pred_check
        %p528 = pneg %p284
      $region54: #{unet_ld_forward.1} parent=11 // pred_check_branch
        %530 = sbr.rel (%p528) target = $region56
      $region55: #{unet_ld_forward.1} parent=11 // pred_region
        _
      $region56: #{unet_ld_forward.1} parent=11 // pred_fallthru
        _
      // Predicated region
      $region57: #{unet_ld_forward.1} parent=11 // pred_check
        %p531 = pneg %p305
      $region58: #{unet_ld_forward.1} parent=11 // pred_check_branch
        %533 = sbr.rel (%p531) target = $region60
      $region59: #{unet_ld_forward.1} parent=11 // pred_region
        _
      $region60: #{unet_ld_forward.1} parent=11 // pred_fallthru
        _
      // Predicated region
      $region61: #{unet_ld_forward.1} parent=11 // pred_check
        %p534 = pneg %p326
      $region62: #{unet_ld_forward.1} parent=11 // pred_check_branch
        %536 = sbr.rel (%p534) target = $region64
      $region63: #{unet_ld_forward.1} parent=11 // pred_region
        _
      $region64: #{unet_ld_forward.1} parent=11 // pred_fallthru
        _
      // Predicated region
      $region65: #{unet_ld_forward.1} parent=11 // pred_check
        %p537 = pneg %p347
      $region66: #{unet_ld_forward.1} parent=11 // pred_check_branch
        %539 = sbr.rel (%p537) target = $region68
      $region67: #{unet_ld_forward.1} parent=11 // pred_region
        _
      $region68: #{unet_ld_forward.1} parent=11 // pred_fallthru
        _
      // Predicated region
      $region69: #{unet_ld_forward.1} parent=11 // pred_check
        %p540 = pneg %p368
      $region70: #{unet_ld_forward.1} parent=11 // pred_check_branch
        %542 = sbr.rel (%p540) target = $region72
      $region71: #{unet_ld_forward.1} parent=11 // pred_region
        _
      $region72: #{unet_ld_forward.1} parent=11 // pred_fallthru
        _
      // Predicated region
      $region73: #{unet_ld_forward.1} parent=11 // pred_check
        %p543 = pneg %p389
      $region74: #{unet_ld_forward.1} parent=11 // pred_check_branch
        %545 = sbr.rel (%p543) target = $region76
      $region75: #{unet_ld_forward.1} parent=11 // pred_region
        _
      $region76: #{unet_ld_forward.1} parent=11 // pred_fallthru
        _
      // Predicated region
      $region77: #{unet_ld_forward.1} parent=11 // pred_check
        %p546 = pneg %p410
      $region78: #{unet_ld_forward.1} parent=11 // pred_check_branch
        %548 = sbr.rel (%p546) target = $region80
      $region79: #{unet_ld_forward.1} parent=11 // pred_region
        _
      $region80: #{unet_ld_forward.1} parent=11 // pred_fallthru
        _
      // Predicated region
      $region81: #{unet_ld_forward.1} parent=11 // pred_check
        %p549 = pneg %p431
      $region82: #{unet_ld_forward.1} parent=11 // pred_check_branch
        %551 = sbr.rel (%p549) target = $region84
      $region83: #{unet_ld_forward.1} parent=11 // pred_region
        _
      $region84: #{unet_ld_forward.1} parent=11 // pred_fallthru
        _
    $region12: #{unet_ld_forward.1} parent=5 // pred_fallthru
      _
    %p552 = scmp.lt.s32.totalorder %s27, 2
    // Predicated region
    $region85: #{unet_ld_forward.1} parent=5 // pred_check
      %p553 = pneg %p552
    $region86: #{unet_ld_forward.1} parent=5 // pred_check_branch
      %555 = sbr.rel (%p553) target = $region88
    $region87: #{unet_ld_forward.1} parent=5 // pred_region
      // Predicated region
      $region89: #{unet_ld_forward.1} parent=87 // pred_check
        %p556 = pneg %p47
      $region90: #{unet_ld_forward.1} parent=87 // pred_check_branch
        %558 = sbr.rel (%p556) target = $region92
      $region91: #{unet_ld_forward.1} parent=87 // pred_region
        %p559 = scmp.lt.s32.totalorder %s27, 1
        %s560 = scalar_select %p559, %s27, 1
        %s561 = smul.addr %s560, 3
        %s562 = smul.addr %s561, 2
        %s563 = scalar_lea.vmem %s0, %s562
      $region92: #{unet_ld_forward.1} parent=87 // pred_fallthru
        _
    $region88: #{unet_ld_forward.1} parent=5 // pred_fallthru
      _
    %p564 = scmp.le.s32.totalorder 1, %s27
    %p565 = scmp.lt.s32.totalorder %s27, 3
    %p566 = pnand %p564, %p565
    %p567 = pneg %p566
    // Predicated region
    $region93: #{unet_ld_forward.1} parent=5 // pred_check
      _
    $region94: #{unet_ld_forward.1} parent=5 // pred_check_branch
      %569 = sbr.rel (%p566) target = $region96
    $region95: #{unet_ld_forward.1} parent=5 // pred_region
      %s570 = ssub.s32 %s27, 1
      %p571 = scmp.lt.s32.totalorder %s32, 1
      %s572 = scalar_select %p571, %s32, 1
      %s573 = smul.addr %s572, 3
      %s574 = smul.addr %s573, 2
      %s575 = scalar_lea.vmem %s0, %s574
      %p576 = pneg %p53
      %p577 = pneg %p50
      %p578 = pneg %p74
      %p579 = pneg %p71
      %p580 = pneg %p95
      %p581 = pneg %p92
      %p582 = pneg %p116
      %p583 = pneg %p113
      %p584 = pneg %p137
      %p585 = pneg %p134
      %p586 = pneg %p158
      %p587 = pneg %p155
      %p588 = pneg %p179
      %p589 = pneg %p176
      %p590 = pneg %p200
      %p591 = pneg %p197
      %p592 = pneg %p221
      %p593 = pneg %p218
      %p594 = pneg %p242
      %p595 = pneg %p239
      %p596 = pneg %p263
      %p597 = pneg %p260
      %p598 = pneg %p284
      %p599 = pneg %p281
      %p600 = pneg %p305
      %p601 = pneg %p302
      %p602 = pneg %p326
      %p603 = pneg %p323
      %p604 = pneg %p347
      %p605 = pneg %p344
      %p606 = pneg %p368
      %p607 = pneg %p365
      %p608 = pneg %p389
      %p609 = pneg %p386
      %p610 = pneg %p410
      %p611 = pneg %p407
      %p612 = pneg %p431
      %p613 = pneg %p428
      %p614 = pneg %p457
      %p615 = pneg %p454
      %p616 = scmp.lt.s32.totalorder %s32, 1
      %s617 = scalar_select %p616, %s32, 1
      %s618 = smul.addr %s617, 3
      %s619 = smul.addr %s618, 2
      %s620 = scalar_lea.vmem %s19, %s619
      %p621 = pneg %p483
      %p622 = pneg %p480
      %p623 = scmp.lt.s32.totalorder %s32, 1
      %s624 = scalar_select %p623, %s32, 1
      %s625 = smul.addr %s624, 4
      %s626 = smul.addr %s625, 8
      %s627 = scalar_lea.vmem %s20, %s626
      %p628 = scmp.lt.s32.totalorder %s32, 1
      %s629 = scalar_select %p628, %s32, 1
      %s630 = smul.addr %s629, 3
      %s631 = smul.addr %s630, 2
      %s632 = scalar_lea.vmem %s0, %s631
      %p633 = scmp.lt.s32.totalorder %s32, 1
      %s634 = scalar_select %p633, %s32, 1
      %s635 = smul.addr %s634, 3
      %s636 = smul.addr %s635, 2
      %s637 = scalar_lea.vmem %s19, %s636
      %p638 = scmp.lt.s32.totalorder %s32, 1
      %s639 = scalar_select %p638, %s32, 1
      %s640 = smul.addr %s639, 4
      %s641 = smul.addr %s640, 8
      %s642 = scalar_lea.vmem %s20, %s641
      %v644 = vld [vmem:[%s15] sm:$0x7]
      %vm645 = vcmp.gt.f32.partialorder %v644, 0.5
      %v646 = vld [vmem:[%s16] sm:$0x1]
      %vm647 = vcmp.gt.f32.partialorder %v646, 0.5
      %vm648 = vcmask 150528
      %649 = vst.msk [vmem:[#allocation2] sm:$0xf] %vm648, 0
      %650 = vst.msk [vmem:[#allocation2 + $0xc] sm:$0xf] %vm648, 0
      %651 = vst.msk [vmem:[#allocation2 + $0x18] sm:$0xf] %vm648, 0
      %652 = vst.msk [vmem:[#allocation2 + $0x24] sm:$0xf] %vm648, 0
      %vm653 = vcmask 568728
      %654 = vst.msk [vmem:[#allocation2 + $0x8] sm:$0xf] %vm653, 0
      %655 = vst.msk [vmem:[#allocation2 + $0x14] sm:$0xf] %vm653, 0
      %656 = vst.msk [vmem:[#allocation2 + $0x20] sm:$0xf] %vm653, 0
      %657 = vst.msk [vmem:[#allocation2 + $0x2c] sm:$0xf] %vm653, 0
      %658 = vst.msk [vmem:[#allocation5] sm:$0xf] %vm648, 0
      %659 = vst.msk [vmem:[#allocation5 + $0xc] sm:$0xf] %vm648, 0
      %660 = vst.msk [vmem:[#allocation5 + $0x8] sm:$0xf] %vm653, 0
      %661 = vst.msk [vmem:[#allocation5 + $0x14] sm:$0xf] %vm653, 0
      %vm662 = vcmask 84992
      %663 = vst.msk [vmem:[#allocation3] sm:$0xf] %vm662, 0
      %664 = vst.msk [vmem:[#allocation3 + $0x4] sm:$0xf] %vm662, 0
      %vm665 = vcmask 831192
      %666 = vst.msk [vmem:[#allocation3] sm:$0xf] %vm665, 0
      %667 = vst.msk [vmem:[#allocation3 + $0x4] sm:$0xf] %vm665, 0
      %668 = vst.msk [vmem:[#allocation4] sm:$0xf] %vm662, 0
      %669 = vst.msk [vmem:[#allocation4 + $0x4] sm:$0xf] %vm662, 0
      %670 = vst.msk [vmem:[#allocation4 + $0x8] sm:$0xf] %vm662, 0
      %671 = vst.msk [vmem:[#allocation4 + $0xc] sm:$0xf] %vm662, 0
      %672 = vst.msk [vmem:[#allocation4] sm:$0xf] %vm665, 0
      %673 = vst.msk [vmem:[#allocation4 + $0x4] sm:$0xf] %vm665, 0
      %674 = vst.msk [vmem:[#allocation4 + $0x8] sm:$0xf] %vm665, 0
      %675 = vst.msk [vmem:[#allocation4 + $0xc] sm:$0xf] %vm665, 0
      %v676 = vld [vmem:[%s1] sm:$0xf]
      %v677 = vld [vmem:[%s1 + $0x4] sm:$0xf]
      %v678 = vld [vmem:[%s632] sm:$0x3f]
      %s679 = scalar_lea.vmem %s1, 8
      %v680 = vld [vmem:[%s679] sm:$0xf]
      %v681 = vld [vmem:[%s679 + $0x4] sm:$0xf]
      %v684 = vunpack.c.l.b16 %v680
      %v685 = vunpack.c.l.b16 %v681
      %v686 = vpack.c.b16 %v685, %v684
      %v688 = vcombine.high %v678, %v678
      %v690 = vunpack.c.l.s4 1983009808
      %v691 = vunpack.c.0.s8 %v690
      %v692 = vlaneseq
      %v693 = vshrl.u32 %v692, 7
      %v694 = vsub.s32 %v691, %v693
      %v695 = vrot.slane %v678, %v694
      %v697 = vunpack.c.l.s4 1983009808
      %v698 = vunpack.c.0.s8 %v697
      %v699 = vlaneseq
      %v700 = vshrl.u32 %v699, 7
      %v701 = vsub.s32 %v698, %v700
      %v702 = vrot.slane %v688, %v701
      %v703 = vcombine.high %v695, %v695
      %704 = vrot.lane.b32.xlu0 %v695, 127
      %v705 = vpop.permute.xlu0 %704
      %706 = vrot.lane.b32.xlu0 %v703, 127
      %v707 = vpop.permute.xlu0 %706
      %708 = vrot.lane.b32.xlu0 %v702, 127
      %v709 = vpop.permute.xlu0 %708
      %vm710 = vcmask 1039360
      %v711 = vsel %vm710, %v705, %v707
      %v712 = vsel %vm710, %v707, %v709
      %vm713 = vcmask 31744
      %v715 = vsel %vm713, %v686, 0
      %vm717 = vcmask 1041408
      %v719 = vsel %vm717, %v711, 0
      %v722 = vsel %vm717, %v712, 0
      %v725 = vsel %vm717, %v709, 0
      %727 = vmatprep.subr.bf16.mxu0 0
      %728 = vmatpush1.bf16.msra.mxu0 0
      %729 = vmatprep.subr.bf16.mxu0 0
      %730 = vmatpush1.bf16.msra.mxu0 0
      %731 = vmatprep.subr.bf16.mxu0 0
      %732 = vmatpush1.bf16.msra.mxu0 0
      %733 = vmatprep.subr.bf16.mxu0 0
      %734 = vmatpush1.bf16.msra.mxu0 0
      %735 = vmatprep.subr.bf16.mxu0 0
      %736 = vmatpush1.bf16.msra.mxu0 0
      %737 = vmatprep.subr.bf16.mxu0 0
      %738 = vmatpush1.bf16.msra.mxu0 0
      %739 = vmatprep.subr.bf16.mxu0 0
      %740 = vmatpush1.bf16.msra.mxu0 0
      %741 = vmatprep.subr.bf16.mxu0 %v722
      %742 = vmatpush1.bf16.msra.mxu0 %v719
      %743 = vmatprep.subr.bf16.mxu0 0
      %744 = vmatpush2.bf16.msra.mxu0 0
      %745 = vmatprep.subr.bf16.mxu0 0
      %746 = vmatpush2.bf16.msra.mxu0 0
      %747 = vmatprep.subr.bf16.mxu0 0
      %748 = vmatpush2.bf16.msra.mxu0 0
      %749 = vmatprep.subr.bf16.mxu0 0
      %750 = vmatpush2.bf16.msra.mxu0 0
      %751 = vmatprep.subr.bf16.mxu0 0
      %752 = vmatpush2.bf16.msra.mxu0 0
      %753 = vmatprep.subr.bf16.mxu0 0
      %754 = vmatpush2.bf16.msra.mxu0 0
      %755 = vmatprep.subr.bf16.mxu0 0
      %756 = vmatpush2.bf16.msra.mxu0 0
      %757 = vmatprep.subr.bf16.mxu0 0
      %758 = vmatpush2.bf16.msra.mxu0 0
      %759 = vmatprep.mubr.bf16.mxu0 0
      %760 = vmatmul.mubr.bf16.gmra.mxu0 %v715
      %v761 = vpop.f32.mrf.mxu0
      %v762 = vadd.f32 0.0, %v761
      %v763 = vpop.f32.mrf.mxu0
      %v764 = vadd.f32 0.0, %v763
      %v765 = vpop.f32.mrf.mxu0
      %v766 = vadd.f32 0.0, %v765
      %v767 = vpop.f32.mrf.mxu0
      %v768 = vadd.f32 0.0, %v767
      %769 = vdwg.mxu0
      %770 = vmatprep.subr.bf16.mxu0 0
      %771 = vmatpush1.bf16.msra.mxu0 0
      %772 = vmatprep.subr.bf16.mxu0 0
      %773 = vmatpush1.bf16.msra.mxu0 0
      %774 = vmatprep.subr.bf16.mxu0 0
      %775 = vmatpush1.bf16.msra.mxu0 0
      %776 = vmatprep.subr.bf16.mxu0 0
      %777 = vmatpush1.bf16.msra.mxu0 0
      %778 = vmatprep.subr.bf16.mxu0 0
      %779 = vmatpush1.bf16.msra.mxu0 0
      %780 = vmatprep.subr.bf16.mxu0 0
      %781 = vmatpush1.bf16.msra.mxu0 0
      %782 = vmatprep.subr.bf16.mxu0 0
      %783 = vmatpush1.bf16.msra.mxu0 0
      %784 = vmatprep.subr.bf16.mxu0 0
      %785 = vmatpush1.bf16.msra.mxu0 %v725
      %786 = vmatprep.subr.bf16.mxu0 0
      %787 = vmatpush2.bf16.msra.mxu0 0
      %788 = vmatprep.subr.bf16.mxu0 0
      %789 = vmatpush2.bf16.msra.mxu0 0
      %790 = vmatprep.subr.bf16.mxu0 0
      %791 = vmatpush2.bf16.msra.mxu0 0
      %792 = vmatprep.subr.bf16.mxu0 0
      %793 = vmatpush2.bf16.msra.mxu0 0
      %794 = vmatprep.subr.bf16.mxu0 0
      %795 = vmatpush2.bf16.msra.mxu0 0
      %796 = vmatprep.subr.bf16.mxu0 0
      %797 = vmatpush2.bf16.msra.mxu0 0
      %798 = vmatprep.subr.bf16.mxu0 0
      %799 = vmatpush2.bf16.msra.mxu0 0
      %800 = vmatprep.subr.bf16.mxu0 0
      %801 = vmatpush2.bf16.msra.mxu0 0
      %802 = vmatprep.mubr.bf16.mxu0 0
      %803 = vmatmul.mubr.bf16.gmra.mxu0 %v715
      %v804 = vpop.f32.mrf.mxu0
      %v805 = vadd.f32 0.0, %v804
      %v806 = vpop.f32.mrf.mxu0
      %v807 = vpop.f32.mrf.mxu0
      %v808 = vadd.f32 0.0, %v807
      %v809 = vpop.f32.mrf.mxu0
      %810 = vdwg.mxu0
      %v813 = vunpack.c.l.b16 %v676
      %v814 = vunpack.c.l.b16 %v677
      %v815 = vpack.c.b16 %v814, %v813
      %v817 = vsel %vm713, %v815, 0
      %v820 = vsel %vm717, %v695, 0
      %v823 = vsel %vm717, %v703, 0
      %v826 = vsel %vm717, %v702, 0
      %828 = vmatprep.subr.bf16.mxu0 0
      %829 = vmatpush1.bf16.msra.mxu0 0
      %830 = vmatprep.subr.bf16.mxu0 0
      %831 = vmatpush1.bf16.msra.mxu0 0
      %832 = vmatprep.subr.bf16.mxu0 0
      %833 = vmatpush1.bf16.msra.mxu0 0
      %834 = vmatprep.subr.bf16.mxu0 0
      %835 = vmatpush1.bf16.msra.mxu0 0
      %836 = vmatprep.subr.bf16.mxu0 0
      %837 = vmatpush1.bf16.msra.mxu0 0
      %838 = vmatprep.subr.bf16.mxu0 0
      %839 = vmatpush1.bf16.msra.mxu0 0
      %840 = vmatprep.subr.bf16.mxu0 0
      %841 = vmatpush1.bf16.msra.mxu0 0
      %842 = vmatprep.subr.bf16.mxu0 %v823
      %843 = vmatpush1.bf16.msra.mxu0 %v820
      %844 = vmatprep.subr.bf16.mxu0 0
      %845 = vmatpush2.bf16.msra.mxu0 0
      %846 = vmatprep.subr.bf16.mxu0 0
      %847 = vmatpush2.bf16.msra.mxu0 0
      %848 = vmatprep.subr.bf16.mxu0 0
      %849 = vmatpush2.bf16.msra.mxu0 0
      %850 = vmatprep.subr.bf16.mxu0 0
      %851 = vmatpush2.bf16.msra.mxu0 0
      %852 = vmatprep.subr.bf16.mxu0 0
      %853 = vmatpush2.bf16.msra.mxu0 0
      %854 = vmatprep.subr.bf16.mxu0 0
      %855 = vmatpush2.bf16.msra.mxu0 0
      %856 = vmatprep.subr.bf16.mxu0 0
      %857 = vmatpush2.bf16.msra.mxu0 0
      %858 = vmatprep.subr.bf16.mxu0 0
      %859 = vmatpush2.bf16.msra.mxu0 0
      %860 = vmatprep.mubr.bf16.mxu0 0
      %861 = vmatmul.mubr.bf16.gmra.mxu0 %v817
      %v862 = vpop.f32.mrf.mxu0
      %v863 = vadd.f32 %v762, %v862
      %v864 = vpop.f32.mrf.mxu0
      %v865 = vadd.f32 %v764, %v864
      %v866 = vpop.f32.mrf.mxu0
      %v867 = vadd.f32 %v766, %v866
      %v868 = vpop.f32.mrf.mxu0
      %v869 = vadd.f32 %v768, %v868
      %870 = vdwg.mxu0
      %871 = vmatprep.subr.bf16.mxu0 0
      %872 = vmatpush1.bf16.msra.mxu0 0
      %873 = vmatprep.subr.bf16.mxu0 0
      %874 = vmatpush1.bf16.msra.mxu0 0
      %875 = vmatprep.subr.bf16.mxu0 0
      %876 = vmatpush1.bf16.msra.mxu0 0
      %877 = vmatprep.subr.bf16.mxu0 0
      %878 = vmatpush1.bf16.msra.mxu0 0
      %879 = vmatprep.subr.bf16.mxu0 0
      %880 = vmatpush1.bf16.msra.mxu0 0
      %881 = vmatprep.subr.bf16.mxu0 0
      %882 = vmatpush1.bf16.msra.mxu0 0
      %883 = vmatprep.subr.bf16.mxu0 0
      %884 = vmatpush1.bf16.msra.mxu0 0
      %885 = vmatprep.subr.bf16.mxu0 0
      %886 = vmatpush1.bf16.msra.mxu0 %v826
      %887 = vmatprep.subr.bf16.mxu0 0
      %888 = vmatpush2.bf16.msra.mxu0 0
      %889 = vmatprep.subr.bf16.mxu0 0
      %890 = vmatpush2.bf16.msra.mxu0 0
      %891 = vmatprep.subr.bf16.mxu0 0
      %892 = vmatpush2.bf16.msra.mxu0 0
      %893 = vmatprep.subr.bf16.mxu0 0
      %894 = vmatpush2.bf16.msra.mxu0 0
      %895 = vmatprep.subr.bf16.mxu0 0
      %896 = vmatpush2.bf16.msra.mxu0 0
      %897 = vmatprep.subr.bf16.mxu0 0
      %898 = vmatpush2.bf16.msra.mxu0 0
      %899 = vmatprep.subr.bf16.mxu0 0
      %900 = vmatpush2.bf16.msra.mxu0 0
      %901 = vmatprep.subr.bf16.mxu0 0
      %902 = vmatpush2.bf16.msra.mxu0 0
      %903 = vmatprep.mubr.bf16.mxu0 0
      %904 = vmatmul.mubr.bf16.gmra.mxu0 %v817
      %v905 = vpop.f32.mrf.mxu0
      %v906 = vadd.f32 %v805, %v905
      %v907 = vpop.f32.mrf.mxu0
      %v908 = vpop.f32.mrf.mxu0
      %v909 = vadd.f32 %v808, %v908
      %v910 = vpop.f32.mrf.mxu0
      %911 = vdwg.mxu0
      %s912 = scalar_lea.vmem %s1, 16
      %v913 = vld [vmem:[%s912] sm:$0xf]
      %v914 = vld [vmem:[%s912 + $0x4] sm:$0xf]
      %v915 = vld [vmem:[%s632] sm:$0x3f]
      %v918 = vunpack.c.l.b16 %v913
      %v919 = vunpack.c.l.b16 %v914
      %v920 = vpack.c.b16 %v919, %v918
      %v922 = vcombine.high %v915, %v915
      %v924 = vunpack.c.l.s4 1983009808
      %v925 = vunpack.c.0.s8 %v924
      %v926 = vlaneseq
      %v927 = vshrl.u32 %v926, 7
      %v928 = vsub.s32 %v925, %v927
      %v929 = vrot.slane %v915, %v928
      %v931 = vunpack.c.l.s4 1983009808
      %v932 = vunpack.c.0.s8 %v931
      %v933 = vlaneseq
      %v934 = vshrl.u32 %v933, 7
      %v935 = vsub.s32 %v932, %v934
      %v936 = vrot.slane %v922, %v935
      %v937 = vcombine.high %v929, %v929
      %938 = vrot.lane.b32.xlu0 %v929, 126
      %v939 = vpop.permute.xlu0 %938
      %940 = vrot.lane.b32.xlu0 %v937, 126
      %v941 = vpop.permute.xlu0 %940
      %942 = vrot.lane.b32.xlu0 %v936, 126
      %v943 = vpop.permute.xlu0 %942
      %vm944 = vcmask 1031168
      %v945 = vsel %vm944, %v939, %v941
      %v946 = vsel %vm944, %v941, %v943
      %v948 = vsel %vm713, %v920, 0
      %v951 = vsel %vm717, %v945, 0
      %v954 = vsel %vm717, %v946, 0
      %v957 = vsel %vm717, %v943, 0
      %959 = vmatprep.subr.bf16.mxu0 0
      %960 = vmatpush1.bf16.msra.mxu0 0
      %961 = vmatprep.subr.bf16.mxu0 0
      %962 = vmatpush1.bf16.msra.mxu0 0
      %963 = vmatprep.subr.bf16.mxu0 0
      %964 = vmatpush1.bf16.msra.mxu0 0
      %965 = vmatprep.subr.bf16.mxu0 0
      %966 = vmatpush1.bf16.msra.mxu0 0
      %967 = vmatprep.subr.bf16.mxu0 0
      %968 = vmatpush1.bf16.msra.mxu0 0
      %969 = vmatprep.subr.bf16.mxu0 0
      %970 = vmatpush1.bf16.msra.mxu0 0
      %971 = vmatprep.subr.bf16.mxu0 0
      %972 = vmatpush1.bf16.msra.mxu0 0
      %973 = vmatprep.subr.bf16.mxu0 %v954
      %974 = vmatpush1.bf16.msra.mxu0 %v951
      %975 = vmatprep.subr.bf16.mxu0 0
      %976 = vmatpush2.bf16.msra.mxu0 0
      %977 = vmatprep.subr.bf16.mxu0 0
      %978 = vmatpush2.bf16.msra.mxu0 0
      %979 = vmatprep.subr.bf16.mxu0 0
      %980 = vmatpush2.bf16.msra.mxu0 0
      %981 = vmatprep.subr.bf16.mxu0 0
      %982 = vmatpush2.bf16.msra.mxu0 0
      %983 = vmatprep.subr.bf16.mxu0 0
      %984 = vmatpush2.bf16.msra.mxu0 0
      %985 = vmatprep.subr.bf16.mxu0 0
      %986 = vmatpush2.bf16.msra.mxu0 0
      %987 = vmatprep.subr.bf16.mxu0 0
      %988 = vmatpush2.bf16.msra.mxu0 0
      %989 = vmatprep.subr.bf16.mxu0 0
      %990 = vmatpush2.bf16.msra.mxu0 0
      %991 = vmatprep.mubr.bf16.mxu0 0
      %992 = vmatmul.mubr.bf16.gmra.mxu0 %v948
      %v993 = vpop.f32.mrf.mxu0
      %v994 = vadd.f32 0.0, %v993
      %v995 = vpop.f32.mrf.mxu0
      %v996 = vadd.f32 0.0, %v995
      %v997 = vpop.f32.mrf.mxu0
      %v998 = vadd.f32 0.0, %v997
      %v999 = vpop.f32.mrf.mxu0
      %v1000 = vadd.f32 0.0, %v999
      %1001 = vdwg.mxu0
      %1002 = vmatprep.subr.bf16.mxu0 0
      %1003 = vmatpush1.bf16.msra.mxu0 0
      %1004 = vmatprep.subr.bf16.mxu0 0
      %1005 = vmatpush1.bf16.msra.mxu0 0
      %1006 = vmatprep.subr.bf16.mxu0 0
      %1007 = vmatpush1.bf16.msra.mxu0 0
      %1008 = vmatprep.subr.bf16.mxu0 0
      %1009 = vmatpush1.bf16.msra.mxu0 0
      %1010 = vmatprep.subr.bf16.mxu0 0
      %1011 = vmatpush1.bf16.msra.mxu0 0
      %1012 = vmatprep.subr.bf16.mxu0 0
      %1013 = vmatpush1.bf16.msra.mxu0 0
      %1014 = vmatprep.subr.bf16.mxu0 0
      %1015 = vmatpush1.bf16.msra.mxu0 0
      %1016 = vmatprep.subr.bf16.mxu0 0
      %1017 = vmatpush1.bf16.msra.mxu0 %v957
      %1018 = vmatprep.subr.bf16.mxu0 0
      %1019 = vmatpush2.bf16.msra.mxu0 0
      %1020 = vmatprep.subr.bf16.mxu0 0
      %1021 = vmatpush2.bf16.msra.mxu0 0
      %1022 = vmatprep.subr.bf16.mxu0 0
      %1023 = vmatpush2.bf16.msra.mxu0 0
      %1024 = vmatprep.subr.bf16.mxu0 0
      %1025 = vmatpush2.bf16.msra.mxu0 0
      %1026 = vmatprep.subr.bf16.mxu0 0
      %1027 = vmatpush2.bf16.msra.mxu0 0
      %1028 = vmatprep.subr.bf16.mxu0 0
      %1029 = vmatpush2.bf16.msra.mxu0 0
      %1030 = vmatprep.subr.bf16.mxu0 0
      %1031 = vmatpush2.bf16.msra.mxu0 0
      %1032 = vmatprep.subr.bf16.mxu0 0
      %1033 = vmatpush2.bf16.msra.mxu0 0
      %1034 = vmatprep.mubr.bf16.mxu0 0
      %1035 = vmatmul.mubr.bf16.gmra.mxu0 %v948
      %v1036 = vpop.f32.mrf.mxu0
      %v1037 = vadd.f32 0.0, %v1036
      %v1038 = vpop.f32.mrf.mxu0
      %v1039 = vpop.f32.mrf.mxu0
      %v1040 = vadd.f32 0.0, %v1039
      %v1041 = vpop.f32.mrf.mxu0
      %1042 = vdwg.mxu0
      %v1043 = vadd.f32 %v863, %v994
      %v1044 = vadd.f32 %v865, %v996
      %v1045 = vadd.f32 %v906, %v1037
      %v1046 = vadd.f32 %v867, %v998
      %v1047 = vadd.f32 %v869, %v1000
      %v1048 = vadd.f32 %v909, %v1040
      %s1049 = scalar_lea.vmem %s1, 24
      %v1050 = vld [vmem:[%s1049] sm:$0xf]
      %v1051 = vld [vmem:[%s1049 + $0x4] sm:$0xf]
      %v1052 = vld [vmem:[%s632] sm:$0x3f]
      %v1055 = vunpack.c.l.b16 %v1050
      %v1056 = vunpack.c.l.b16 %v1051
      %v1057 = vpack.c.b16 %v1056, %v1055
      %v1059 = vcombine.high %v1052, %v1052
      %v1061 = vunpack.c.l.s4 1983009808
      %v1062 = vunpack.c.0.s8 %v1061
      %v1063 = vlaneseq
      %v1064 = vshrl.u32 %v1063, 7
      %v1065 = vsub.s32 %v1062, %v1064
      %v1066 = vrot.slane %v1052, %v1065
      %v1068 = vunpack.c.l.s4 1983009808
      %v1069 = vunpack.c.0.s8 %v1068
      %v1070 = vlaneseq
      %v1071 = vshrl.u32 %v1070, 7
      %v1072 = vsub.s32 %v1069, %v1071
      %v1073 = vrot.slane %v1059, %v1072
      %v1074 = vcombine.high %v1066, %v1066
      %1075 = vrot.lane.b32.xlu0 %v1066, 110
      %v1076 = vpop.permute.xlu0 %1075
      %1077 = vrot.lane.b32.xlu0 %v1074, 110
      %v1078 = vpop.permute.xlu0 %1077
      %1079 = vrot.lane.b32.xlu0 %v1073, 110
      %v1080 = vpop.permute.xlu0 %1079
      %vm1081 = vcmask 900096
      %v1082 = vsel %vm1081, %v1076, %v1078
      %v1083 = vsel %vm1081, %v1078, %v1080
      %v1085 = vsel %vm713, %v1057, 0
      %v1088 = vsel %vm717, %v1082, 0
      %v1091 = vsel %vm717, %v1083, 0
      %v1094 = vsel %vm717, %v1080, 0
      %1096 = vmatprep.subr.bf16.mxu0 0
      %1097 = vmatpush1.bf16.msra.mxu0 0
      %1098 = vmatprep.subr.bf16.mxu0 0
      %1099 = vmatpush1.bf16.msra.mxu0 0
      %1100 = vmatprep.subr.bf16.mxu0 0
      %1101 = vmatpush1.bf16.msra.mxu0 0
      %1102 = vmatprep.subr.bf16.mxu0 0
      %1103 = vmatpush1.bf16.msra.mxu0 0
      %1104 = vmatprep.subr.bf16.mxu0 0
      %1105 = vmatpush1.bf16.msra.mxu0 0
      %1106 = vmatprep.subr.bf16.mxu0 0
      %1107 = vmatpush1.bf16.msra.mxu0 0
      %1108 = vmatprep.subr.bf16.mxu0 0
      %1109 = vmatpush1.bf16.msra.mxu0 0
      %1110 = vmatprep.subr.bf16.mxu0 %v1091
      %1111 = vmatpush1.bf16.msra.mxu0 %v1088
      %1112 = vmatprep.subr.bf16.mxu0 0
      %1113 = vmatpush2.bf16.msra.mxu0 0
      %1114 = vmatprep.subr.bf16.mxu0 0
      %1115 = vmatpush2.bf16.msra.mxu0 0
      %1116 = vmatprep.subr.bf16.mxu0 0
      %1117 = vmatpush2.bf16.msra.mxu0 0
      %1118 = vmatprep.subr.bf16.mxu0 0
      %1119 = vmatpush2.bf16.msra.mxu0 0
      %1120 = vmatprep.subr.bf16.mxu0 0
      %1121 = vmatpush2.bf16.msra.mxu0 0
      %1122 = vmatprep.subr.bf16.mxu0 0
      %1123 = vmatpush2.bf16.msra.mxu0 0
      %1124 = vmatprep.subr.bf16.mxu0 0
      %1125 = vmatpush2.bf16.msra.mxu0 0
      %1126 = vmatprep.subr.bf16.mxu0 0
      %1127 = vmatpush2.bf16.msra.mxu0 0
      %1128 = vmatprep.mubr.bf16.mxu0 0
      %1129 = vmatmul.mubr.bf16.gmra.mxu0 %v1085
      %v1130 = vpop.f32.mrf.mxu0
      %v1131 = vadd.f32 0.0, %v1130
      %v1132 = vpop.f32.mrf.mxu0
      %v1133 = vadd.f32 0.0, %v1132
      %v1134 = vpop.f32.mrf.mxu0
      %v1135 = vadd.f32 0.0, %v1134
      %v1136 = vpop.f32.mrf.mxu0
      %v1137 = vadd.f32 0.0, %v1136
      %1138 = vdwg.mxu0
      %1139 = vmatprep.subr.bf16.mxu0 0
      %1140 = vmatpush1.bf16.msra.mxu0 0
      %1141 = vmatprep.subr.bf16.mxu0 0
      %1142 = vmatpush1.bf16.msra.mxu0 0
      %1143 = vmatprep.subr.bf16.mxu0 0
      %1144 = vmatpush1.bf16.msra.mxu0 0
      %1145 = vmatprep.subr.bf16.mxu0 0
      %1146 = vmatpush1.bf16.msra.mxu0 0
      %1147 = vmatprep.subr.bf16.mxu0 0
      %1148 = vmatpush1.bf16.msra.mxu0 0
      %1149 = vmatprep.subr.bf16.mxu0 0
      %1150 = vmatpush1.bf16.msra.mxu0 0
      %1151 = vmatprep.subr.bf16.mxu0 0
      %1152 = vmatpush1.bf16.msra.mxu0 0
      %1153 = vmatprep.subr.bf16.mxu0 0
      %1154 = vmatpush1.bf16.msra.mxu0 %v1094
      %1155 = vmatprep.subr.bf16.mxu0 0
      %1156 = vmatpush2.bf16.msra.mxu0 0
      %1157 = vmatprep.subr.bf16.mxu0 0
      %1158 = vmatpush2.bf16.msra.mxu0 0
      %1159 = vmatprep.subr.bf16.mxu0 0
      %1160 = vmatpush2.bf16.msra.mxu0 0
      %1161 = vmatprep.subr.bf16.mxu0 0
      %1162 = vmatpush2.bf16.msra.mxu0 0
      %1163 = vmatprep.subr.bf16.mxu0 0
      %1164 = vmatpush2.bf16.msra.mxu0 0
      %1165 = vmatprep.subr.bf16.mxu0 0
      %1166 = vmatpush2.bf16.msra.mxu0 0
      %1167 = vmatprep.subr.bf16.mxu0 0
      %1168 = vmatpush2.bf16.msra.mxu0 0
      %1169 = vmatprep.subr.bf16.mxu0 0
      %1170 = vmatpush2.bf16.msra.mxu0 0
      %1171 = vmatprep.mubr.bf16.mxu0 0
      %1172 = vmatmul.mubr.bf16.gmra.mxu0 %v1085
      %v1173 = vpop.f32.mrf.mxu0
      %v1174 = vadd.f32 0.0, %v1173
      %v1175 = vpop.f32.mrf.mxu0
      %v1176 = vpop.f32.mrf.mxu0
      %v1177 = vadd.f32 0.0, %v1176
      %v1178 = vpop.f32.mrf.mxu0
      %1179 = vdwg.mxu0
      %v1180 = vadd.f32 %v1043, %v1131
      %v1181 = vadd.f32 %v1044, %v1133
      %v1182 = vadd.f32 %v1045, %v1174
      %v1183 = vadd.f32 %v1046, %v1135
      %v1184 = vadd.f32 %v1047, %v1137
      %v1185 = vadd.f32 %v1048, %v1177
      %s1186 = scalar_lea.vmem %s1, 32
      %v1187 = vld [vmem:[%s1186] sm:$0xf]
      %v1188 = vld [vmem:[%s1186 + $0x4] sm:$0xf]
      %v1189 = vld [vmem:[%s632] sm:$0x3f]
      %v1192 = vunpack.c.l.b16 %v1187
      %v1193 = vunpack.c.l.b16 %v1188
      %v1194 = vpack.c.b16 %v1193, %v1192
      %v1196 = vcombine.high %v1189, %v1189
      %v1198 = vunpack.c.l.s4 1983009808
      %v1199 = vunpack.c.0.s8 %v1198
      %v1200 = vlaneseq
      %v1201 = vshrl.u32 %v1200, 7
      %v1202 = vsub.s32 %v1199, %v1201
      %v1203 = vrot.slane %v1189, %v1202
      %v1205 = vunpack.c.l.s4 1983009808
      %v1206 = vunpack.c.0.s8 %v1205
      %v1207 = vlaneseq
      %v1208 = vshrl.u32 %v1207, 7
      %v1209 = vsub.s32 %v1206, %v1208
      %v1210 = vrot.slane %v1196, %v1209
      %v1211 = vcombine.high %v1203, %v1203
      %1212 = vrot.lane.b32.xlu0 %v1203, 109
      %v1213 = vpop.permute.xlu0 %1212
      %1214 = vrot.lane.b32.xlu0 %v1211, 109
      %v1215 = vpop.permute.xlu0 %1214
      %1216 = vrot.lane.b32.xlu0 %v1210, 109
      %v1217 = vpop.permute.xlu0 %1216
      %vm1218 = vcmask 891904
      %v1219 = vsel %vm1218, %v1213, %v1215
      %v1220 = vsel %vm1218, %v1215, %v1217
      %v1222 = vsel %vm713, %v1194, 0
      %v1225 = vsel %vm717, %v1219, 0
      %v1228 = vsel %vm717, %v1220, 0
      %v1231 = vsel %vm717, %v1217, 0
      %1233 = vmatprep.subr.bf16.mxu0 0
      %1234 = vmatpush1.bf16.msra.mxu0 0
      %1235 = vmatprep.subr.bf16.mxu0 0
      %1236 = vmatpush1.bf16.msra.mxu0 0
      %1237 = vmatprep.subr.bf16.mxu0 0
      %1238 = vmatpush1.bf16.msra.mxu0 0
      %1239 = vmatprep.subr.bf16.mxu0 0
      %1240 = vmatpush1.bf16.msra.mxu0 0
      %1241 = vmatprep.subr.bf16.mxu0 0
      %1242 = vmatpush1.bf16.msra.mxu0 0
      %1243 = vmatprep.subr.bf16.mxu0 0
      %1244 = vmatpush1.bf16.msra.mxu0 0
      %1245 = vmatprep.subr.bf16.mxu0 0
      %1246 = vmatpush1.bf16.msra.mxu0 0
      %1247 = vmatprep.subr.bf16.mxu0 %v1228
      %1248 = vmatpush1.bf16.msra.mxu0 %v1225
      %1249 = vmatprep.subr.bf16.mxu0 0
      %1250 = vmatpush2.bf16.msra.mxu0 0
      %1251 = vmatprep.subr.bf16.mxu0 0
      %1252 = vmatpush2.bf16.msra.mxu0 0
      %1253 = vmatprep.subr.bf16.mxu0 0
      %1254 = vmatpush2.bf16.msra.mxu0 0
      %1255 = vmatprep.subr.bf16.mxu0 0
      %1256 = vmatpush2.bf16.msra.mxu0 0
      %1257 = vmatprep.subr.bf16.mxu0 0
      %1258 = vmatpush2.bf16.msra.mxu0 0
      %1259 = vmatprep.subr.bf16.mxu0 0
      %1260 = vmatpush2.bf16.msra.mxu0 0
      %1261 = vmatprep.subr.bf16.mxu0 0
      %1262 = vmatpush2.bf16.msra.mxu0 0
      %1263 = vmatprep.subr.bf16.mxu0 0
      %1264 = vmatpush2.bf16.msra.mxu0 0
      %1265 = vmatprep.mubr.bf16.mxu0 0
      %1266 = vmatmul.mubr.bf16.gmra.mxu0 %v1222
      %v1267 = vpop.f32.mrf.mxu0
      %v1268 = vadd.f32 0.0, %v1267
      %v1269 = vpop.f32.mrf.mxu0
      %v1270 = vadd.f32 0.0, %v1269
      %v1271 = vpop.f32.mrf.mxu0
      %v1272 = vadd.f32 0.0, %v1271
      %v1273 = vpop.f32.mrf.mxu0
      %v1274 = vadd.f32 0.0, %v1273
      %1275 = vdwg.mxu0
      %1276 = vmatprep.subr.bf16.mxu0 0
      %1277 = vmatpush1.bf16.msra.mxu0 0
      %1278 = vmatprep.subr.bf16.mxu0 0
      %1279 = vmatpush1.bf16.msra.mxu0 0
      %1280 = vmatprep.subr.bf16.mxu0 0
      %1281 = vmatpush1.bf16.msra.mxu0 0
      %1282 = vmatprep.subr.bf16.mxu0 0
      %1283 = vmatpush1.bf16.msra.mxu0 0
      %1284 = vmatprep.subr.bf16.mxu0 0
      %1285 = vmatpush1.bf16.msra.mxu0 0
      %1286 = vmatprep.subr.bf16.mxu0 0
      %1287 = vmatpush1.bf16.msra.mxu0 0
      %1288 = vmatprep.subr.bf16.mxu0 0
      %1289 = vmatpush1.bf16.msra.mxu0 0
      %1290 = vmatprep.subr.bf16.mxu0 0
      %1291 = vmatpush1.bf16.msra.mxu0 %v1231
      %1292 = vmatprep.subr.bf16.mxu0 0
      %1293 = vmatpush2.bf16.msra.mxu0 0
      %1294 = vmatprep.subr.bf16.mxu0 0
      %1295 = vmatpush2.bf16.msra.mxu0 0
      %1296 = vmatprep.subr.bf16.mxu0 0
      %1297 = vmatpush2.bf16.msra.mxu0 0
      %1298 = vmatprep.subr.bf16.mxu0 0
      %1299 = vmatpush2.bf16.msra.mxu0 0
      %1300 = vmatprep.subr.bf16.mxu0 0
      %1301 = vmatpush2.bf16.msra.mxu0 0
      %1302 = vmatprep.subr.bf16.mxu0 0
      %1303 = vmatpush2.bf16.msra.mxu0 0
      %1304 = vmatprep.subr.bf16.mxu0 0
      %1305 = vmatpush2.bf16.msra.mxu0 0
      %1306 = vmatprep.subr.bf16.mxu0 0
      %1307 = vmatpush2.bf16.msra.mxu0 0
      %1308 = vmatprep.mubr.bf16.mxu0 0
      %1309 = vmatmul.mubr.bf16.gmra.mxu0 %v1222
      %v1310 = vpop.f32.mrf.mxu0
      %v1311 = vadd.f32 0.0, %v1310
      %v1312 = vpop.f32.mrf.mxu0
      %v1313 = vpop.f32.mrf.mxu0
      %v1314 = vadd.f32 0.0, %v1313
      %v1315 = vpop.f32.mrf.mxu0
      %1316 = vdwg.mxu0
      %v1317 = vadd.f32 %v1180, %v1268
      %v1318 = vadd.f32 %v1181, %v1270
      %v1319 = vadd.f32 %v1182, %v1311
      %v1320 = vadd.f32 %v1183, %v1272
      %v1321 = vadd.f32 %v1184, %v1274
      %v1322 = vadd.f32 %v1185, %v1314
      %s1323 = scalar_lea.vmem %s1, 40
      %v1324 = vld [vmem:[%s1323] sm:$0xf]
      %v1325 = vld [vmem:[%s1323 + $0x4] sm:$0xf]
      %v1326 = vld [vmem:[%s632] sm:$0x3f]
      %v1329 = vunpack.c.l.b16 %v1324
      %v1330 = vunpack.c.l.b16 %v1325
      %v1331 = vpack.c.b16 %v1330, %v1329
      %v1333 = vcombine.high %v1326, %v1326
      %v1335 = vunpack.c.l.s4 1983009808
      %v1336 = vunpack.c.0.s8 %v1335
      %v1337 = vlaneseq
      %v1338 = vshrl.u32 %v1337, 7
      %v1339 = vsub.s32 %v1336, %v1338
      %v1340 = vrot.slane %v1326, %v1339
      %v1342 = vunpack.c.l.s4 1983009808
      %v1343 = vunpack.c.0.s8 %v1342
      %v1344 = vlaneseq
      %v1345 = vshrl.u32 %v1344, 7
      %v1346 = vsub.s32 %v1343, %v1345
      %v1347 = vrot.slane %v1333, %v1346
      %v1348 = vcombine.high %v1340, %v1340
      %1349 = vrot.lane.b32.xlu0 %v1340, 108
      %v1350 = vpop.permute.xlu0 %1349
      %1351 = vrot.lane.b32.xlu0 %v1348, 108
      %v1352 = vpop.permute.xlu0 %1351
      %1353 = vrot.lane.b32.xlu0 %v1347, 108
      %v1354 = vpop.permute.xlu0 %1353
      %vm1355 = vcmask 883712
      %v1356 = vsel %vm1355, %v1350, %v1352
      %v1357 = vsel %vm1355, %v1352, %v1354
      %v1359 = vsel %vm713, %v1331, 0
      %v1362 = vsel %vm717, %v1356, 0
      %v1365 = vsel %vm717, %v1357, 0
      %v1368 = vsel %vm717, %v1354, 0
      %1370 = vmatprep.subr.bf16.mxu0 0
      %1371 = vmatpush1.bf16.msra.mxu0 0
      %1372 = vmatprep.subr.bf16.mxu0 0
      %1373 = vmatpush1.bf16.msra.mxu0 0
      %1374 = vmatprep.subr.bf16.mxu0 0
      %1375 = vmatpush1.bf16.msra.mxu0 0
      %1376 = vmatprep.subr.bf16.mxu0 0
      %1377 = vmatpush1.bf16.msra.mxu0 0
      %1378 = vmatprep.subr.bf16.mxu0 0
      %1379 = vmatpush1.bf16.msra.mxu0 0
      %1380 = vmatprep.subr.bf16.mxu0 0
      %1381 = vmatpush1.bf16.msra.mxu0 0
      %1382 = vmatprep.subr.bf16.mxu0 0
      %1383 = vmatpush1.bf16.msra.mxu0 0
      %1384 = vmatprep.subr.bf16.mxu0 %v1365
      %1385 = vmatpush1.bf16.msra.mxu0 %v1362
      %1386 = vmatprep.subr.bf16.mxu0 0
      %1387 = vmatpush2.bf16.msra.mxu0 0
      %1388 = vmatprep.subr.bf16.mxu0 0
      %1389 = vmatpush2.bf16.msra.mxu0 0
      %1390 = vmatprep.subr.bf16.mxu0 0
      %1391 = vmatpush2.bf16.msra.mxu0 0
      %1392 = vmatprep.subr.bf16.mxu0 0
      %1393 = vmatpush2.bf16.msra.mxu0 0
      %1394 = vmatprep.subr.bf16.mxu0 0
      %1395 = vmatpush2.bf16.msra.mxu0 0
      %1396 = vmatprep.subr.bf16.mxu0 0
      %1397 = vmatpush2.bf16.msra.mxu0 0
      %1398 = vmatprep.subr.bf16.mxu0 0
      %1399 = vmatpush2.bf16.msra.mxu0 0
      %1400 = vmatprep.subr.bf16.mxu0 0
      %1401 = vmatpush2.bf16.msra.mxu0 0
      %1402 = vmatprep.mubr.bf16.mxu0 0
      %1403 = vmatmul.mubr.bf16.gmra.mxu0 %v1359
      %v1404 = vpop.f32.mrf.mxu0
      %v1405 = vadd.f32 0.0, %v1404
      %v1406 = vpop.f32.mrf.mxu0
      %v1407 = vadd.f32 0.0, %v1406
      %v1408 = vpop.f32.mrf.mxu0
      %v1409 = vadd.f32 0.0, %v1408
      %v1410 = vpop.f32.mrf.mxu0
      %v1411 = vadd.f32 0.0, %v1410
      %1412 = vdwg.mxu0
      %1413 = vmatprep.subr.bf16.mxu0 0
      %1414 = vmatpush1.bf16.msra.mxu0 0
      %1415 = vmatprep.subr.bf16.mxu0 0
      %1416 = vmatpush1.bf16.msra.mxu0 0
      %1417 = vmatprep.subr.bf16.mxu0 0
      %1418 = vmatpush1.bf16.msra.mxu0 0
      %1419 = vmatprep.subr.bf16.mxu0 0
      %1420 = vmatpush1.bf16.msra.mxu0 0
      %1421 = vmatprep.subr.bf16.mxu0 0
      %1422 = vmatpush1.bf16.msra.mxu0 0
      %1423 = vmatprep.subr.bf16.mxu0 0
      %1424 = vmatpush1.bf16.msra.mxu0 0
      %1425 = vmatprep.subr.bf16.mxu0 0
      %1426 = vmatpush1.bf16.msra.mxu0 0
      %1427 = vmatprep.subr.bf16.mxu0 0
      %1428 = vmatpush1.bf16.msra.mxu0 %v1368
      %1429 = vmatprep.subr.bf16.mxu0 0
      %1430 = vmatpush2.bf16.msra.mxu0 0
      %1431 = vmatprep.subr.bf16.mxu0 0
      %1432 = vmatpush2.bf16.msra.mxu0 0
      %1433 = vmatprep.subr.bf16.mxu0 0
      %1434 = vmatpush2.bf16.msra.mxu0 0
      %1435 = vmatprep.subr.bf16.mxu0 0
      %1436 = vmatpush2.bf16.msra.mxu0 0
      %1437 = vmatprep.subr.bf16.mxu0 0
      %1438 = vmatpush2.bf16.msra.mxu0 0
      %1439 = vmatprep.subr.bf16.mxu0 0
      %1440 = vmatpush2.bf16.msra.mxu0 0
      %1441 = vmatprep.subr.bf16.mxu0 0
      %1442 = vmatpush2.bf16.msra.mxu0 0
      %1443 = vmatprep.subr.bf16.mxu0 0
      %1444 = vmatpush2.bf16.msra.mxu0 0
      %1445 = vmatprep.mubr.bf16.mxu0 0
      %1446 = vmatmul.mubr.bf16.gmra.mxu0 %v1359
      %v1447 = vpop.f32.mrf.mxu0
      %v1448 = vadd.f32 0.0, %v1447
      %v1449 = vpop.f32.mrf.mxu0
      %v1450 = vpop.f32.mrf.mxu0
      %v1451 = vadd.f32 0.0, %v1450
      %v1452 = vpop.f32.mrf.mxu0
      %1453 = vdwg.mxu0
      %v1454 = vadd.f32 %v1317, %v1405
      %v1455 = vadd.f32 %v1318, %v1407
      %v1456 = vadd.f32 %v1319, %v1448
      %v1457 = vadd.f32 %v1320, %v1409
      %v1458 = vadd.f32 %v1321, %v1411
      %v1459 = vadd.f32 %v1322, %v1451
      %s1460 = scalar_lea.vmem %s1, 48
      %v1461 = vld [vmem:[%s1460] sm:$0xf]
      %v1462 = vld [vmem:[%s1460 + $0x4] sm:$0xf]
      %v1463 = vld [vmem:[%s632] sm:$0x3f]
      %v1466 = vunpack.c.l.b16 %v1461
      %v1467 = vunpack.c.l.b16 %v1462
      %v1468 = vpack.c.b16 %v1467, %v1466
      %v1470 = vcombine.high %v1463, %v1463
      %v1472 = vunpack.c.l.s4 1983009808
      %v1473 = vunpack.c.0.s8 %v1472
      %v1474 = vlaneseq
      %v1475 = vshrl.u32 %v1474, 7
      %v1476 = vsub.s32 %v1473, %v1475
      %v1477 = vrot.slane %v1463, %v1476
      %v1479 = vunpack.c.l.s4 1983009808
      %v1480 = vunpack.c.0.s8 %v1479
      %v1481 = vlaneseq
      %v1482 = vshrl.u32 %v1481, 7
      %v1483 = vsub.s32 %v1480, %v1482
      %v1484 = vrot.slane %v1470, %v1483
      %v1485 = vcombine.high %v1477, %v1477
      %1486 = vrot.lane.b32.xlu0 %v1477, 92
      %v1487 = vpop.permute.xlu0 %1486
      %1488 = vrot.lane.b32.xlu0 %v1485, 92
      %v1489 = vpop.permute.xlu0 %1488
      %1490 = vrot.lane.b32.xlu0 %v1484, 92
      %v1491 = vpop.permute.xlu0 %1490
      %vm1492 = vcmask 752640
      %v1493 = vsel %vm1492, %v1487, %v1489
      %v1494 = vsel %vm1492, %v1489, %v1491
      %v1496 = vsel %vm713, %v1468, 0
      %v1499 = vsel %vm717, %v1493, 0
      %v1502 = vsel %vm717, %v1494, 0
      %v1505 = vsel %vm717, %v1491, 0
      %1507 = vmatprep.subr.bf16.mxu0 0
      %1508 = vmatpush1.bf16.msra.mxu0 0
      %1509 = vmatprep.subr.bf16.mxu0 0
      %1510 = vmatpush1.bf16.msra.mxu0 0
      %1511 = vmatprep.subr.bf16.mxu0 0
      %1512 = vmatpush1.bf16.msra.mxu0 0
      %1513 = vmatprep.subr.bf16.mxu0 0
      %1514 = vmatpush1.bf16.msra.mxu0 0
      %1515 = vmatprep.subr.bf16.mxu0 0
      %1516 = vmatpush1.bf16.msra.mxu0 0
      %1517 = vmatprep.subr.bf16.mxu0 0
      %1518 = vmatpush1.bf16.msra.mxu0 0
      %1519 = vmatprep.subr.bf16.mxu0 0
      %1520 = vmatpush1.bf16.msra.mxu0 0
      %1521 = vmatprep.subr.bf16.mxu0 %v1502
      %1522 = vmatpush1.bf16.msra.mxu0 %v1499
      %1523 = vmatprep.subr.bf16.mxu0 0
      %1524 = vmatpush2.bf16.msra.mxu0 0
      %1525 = vmatprep.subr.bf16.mxu0 0
      %1526 = vmatpush2.bf16.msra.mxu0 0
      %1527 = vmatprep.subr.bf16.mxu0 0
      %1528 = vmatpush2.bf16.msra.mxu0 0
      %1529 = vmatprep.subr.bf16.mxu0 0
      %1530 = vmatpush2.bf16.msra.mxu0 0
      %1531 = vmatprep.subr.bf16.mxu0 0
      %1532 = vmatpush2.bf16.msra.mxu0 0
      %1533 = vmatprep.subr.bf16.mxu0 0
      %1534 = vmatpush2.bf16.msra.mxu0 0
      %1535 = vmatprep.subr.bf16.mxu0 0
      %1536 = vmatpush2.bf16.msra.mxu0 0
      %1537 = vmatprep.subr.bf16.mxu0 0
      %1538 = vmatpush2.bf16.msra.mxu0 0
      %1539 = vmatprep.mubr.bf16.mxu0 0
      %1540 = vmatmul.mubr.bf16.gmra.mxu0 %v1496
      %v1541 = vpop.f32.mrf.mxu0
      %v1542 = vadd.f32 0.0, %v1541
      %v1543 = vpop.f32.mrf.mxu0
      %v1544 = vadd.f32 0.0, %v1543
      %v1545 = vpop.f32.mrf.mxu0
      %v1546 = vadd.f32 0.0, %v1545
      %v1547 = vpop.f32.mrf.mxu0
      %v1548 = vadd.f32 0.0, %v1547
      %1549 = vdwg.mxu0
      %1550 = vmatprep.subr.bf16.mxu0 0
      %1551 = vmatpush1.bf16.msra.mxu0 0
      %1552 = vmatprep.subr.bf16.mxu0 0
      %1553 = vmatpush1.bf16.msra.mxu0 0
      %1554 = vmatprep.subr.bf16.mxu0 0
      %1555 = vmatpush1.bf16.msra.mxu0 0
      %1556 = vmatprep.subr.bf16.mxu0 0
      %1557 = vmatpush1.bf16.msra.mxu0 0
      %1558 = vmatprep.subr.bf16.mxu0 0
      %1559 = vmatpush1.bf16.msra.mxu0 0
      %1560 = vmatprep.subr.bf16.mxu0 0
      %1561 = vmatpush1.bf16.msra.mxu0 0
      %1562 = vmatprep.subr.bf16.mxu0 0
      %1563 = vmatpush1.bf16.msra.mxu0 0
      %1564 = vmatprep.subr.bf16.mxu0 0
      %1565 = vmatpush1.bf16.msra.mxu0 %v1505
      %1566 = vmatprep.subr.bf16.mxu0 0
      %1567 = vmatpush2.bf16.msra.mxu0 0
      %1568 = vmatprep.subr.bf16.mxu0 0
      %1569 = vmatpush2.bf16.msra.mxu0 0
      %1570 = vmatprep.subr.bf16.mxu0 0
      %1571 = vmatpush2.bf16.msra.mxu0 0
      %1572 = vmatprep.subr.bf16.mxu0 0
      %1573 = vmatpush2.bf16.msra.mxu0 0
      %1574 = vmatprep.subr.bf16.mxu0 0
      %1575 = vmatpush2.bf16.msra.mxu0 0
      %1576 = vmatprep.subr.bf16.mxu0 0
      %1577 = vmatpush2.bf16.msra.mxu0 0
      %1578 = vmatprep.subr.bf16.mxu0 0
      %1579 = vmatpush2.bf16.msra.mxu0 0
      %1580 = vmatprep.subr.bf16.mxu0 0
      %1581 = vmatpush2.bf16.msra.mxu0 0
      %1582 = vmatprep.mubr.bf16.mxu0 0
      %1583 = vmatmul.mubr.bf16.gmra.mxu0 %v1496
      %v1584 = vpop.f32.mrf.mxu0
      %v1585 = vadd.f32 0.0, %v1584
      %v1586 = vpop.f32.mrf.mxu0
      %v1587 = vpop.f32.mrf.mxu0
      %v1588 = vadd.f32 0.0, %v1587
      %v1589 = vpop.f32.mrf.mxu0
      %1590 = vdwg.mxu0
      %v1591 = vadd.f32 %v1454, %v1542
      %v1592 = vadd.f32 %v1455, %v1544
      %v1593 = vadd.f32 %v1456, %v1585
      %v1594 = vadd.f32 %v1457, %v1546
      %v1595 = vadd.f32 %v1458, %v1548
      %v1596 = vadd.f32 %v1459, %v1588
      %s1597 = scalar_lea.vmem %s1, 56
      %v1598 = vld [vmem:[%s1597] sm:$0xf]
      %v1599 = vld [vmem:[%s1597 + $0x4] sm:$0xf]
      %v1600 = vld [vmem:[%s632] sm:$0x3f]
      %v1603 = vunpack.c.l.b16 %v1598
      %v1604 = vunpack.c.l.b16 %v1599
      %v1605 = vpack.c.b16 %v1604, %v1603
      %v1607 = vcombine.high %v1600, %v1600
      %v1609 = vunpack.c.l.s4 1983009808
      %v1610 = vunpack.c.0.s8 %v1609
      %v1611 = vlaneseq
      %v1612 = vshrl.u32 %v1611, 7
      %v1613 = vsub.s32 %v1610, %v1612
      %v1614 = vrot.slane %v1600, %v1613
      %v1616 = vunpack.c.l.s4 1983009808
      %v1617 = vunpack.c.0.s8 %v1616
      %v1618 = vlaneseq
      %v1619 = vshrl.u32 %v1618, 7
      %v1620 = vsub.s32 %v1617, %v1619
      %v1621 = vrot.slane %v1607, %v1620
      %v1622 = vcombine.high %v1614, %v1614
      %1623 = vrot.lane.b32.xlu0 %v1614, 91
      %v1624 = vpop.permute.xlu0 %1623
      %1625 = vrot.lane.b32.xlu0 %v1622, 91
      %v1626 = vpop.permute.xlu0 %1625
      %1627 = vrot.lane.b32.xlu0 %v1621, 91
      %v1628 = vpop.permute.xlu0 %1627
      %vm1629 = vcmask 744448
      %v1630 = vsel %vm1629, %v1624, %v1626
      %v1631 = vsel %vm1629, %v1626, %v1628
      %v1633 = vsel %vm713, %v1605, 0
      %v1636 = vsel %vm717, %v1630, 0
      %v1639 = vsel %vm717, %v1631, 0
      %v1642 = vsel %vm717, %v1628, 0
      %1644 = vmatprep.subr.bf16.mxu0 0
      %1645 = vmatpush1.bf16.msra.mxu0 0
      %1646 = vmatprep.subr.bf16.mxu0 0
      %1647 = vmatpush1.bf16.msra.mxu0 0
      %1648 = vmatprep.subr.bf16.mxu0 0
      %1649 = vmatpush1.bf16.msra.mxu0 0
      %1650 = vmatprep.subr.bf16.mxu0 0
      %1651 = vmatpush1.bf16.msra.mxu0 0
      %1652 = vmatprep.subr.bf16.mxu0 0
      %1653 = vmatpush1.bf16.msra.mxu0 0
      %1654 = vmatprep.subr.bf16.mxu0 0
      %1655 = vmatpush1.bf16.msra.mxu0 0
      %1656 = vmatprep.subr.bf16.mxu0 0
      %1657 = vmatpush1.bf16.msra.mxu0 0
      %1658 = vmatprep.subr.bf16.mxu0 %v1639
      %1659 = vmatpush1.bf16.msra.mxu0 %v1636
      %1660 = vmatprep.subr.bf16.mxu0 0
      %1661 = vmatpush2.bf16.msra.mxu0 0
      %1662 = vmatprep.subr.bf16.mxu0 0
      %1663 = vmatpush2.bf16.msra.mxu0 0
      %1664 = vmatprep.subr.bf16.mxu0 0
      %1665 = vmatpush2.bf16.msra.mxu0 0
      %1666 = vmatprep.subr.bf16.mxu0 0
      %1667 = vmatpush2.bf16.msra.mxu0 0
      %1668 = vmatprep.subr.bf16.mxu0 0
      %1669 = vmatpush2.bf16.msra.mxu0 0
      %1670 = vmatprep.subr.bf16.mxu0 0
      %1671 = vmatpush2.bf16.msra.mxu0 0
      %1672 = vmatprep.subr.bf16.mxu0 0
      %1673 = vmatpush2.bf16.msra.mxu0 0
      %1674 = vmatprep.subr.bf16.mxu0 0
      %1675 = vmatpush2.bf16.msra.mxu0 0
      %1676 = vmatprep.mubr.bf16.mxu0 0
      %1677 = vmatmul.mubr.bf16.gmra.mxu0 %v1633
      %v1678 = vpop.f32.mrf.mxu0
      %v1679 = vadd.f32 0.0, %v1678
      %v1680 = vpop.f32.mrf.mxu0
      %v1681 = vadd.f32 0.0, %v1680
      %v1682 = vpop.f32.mrf.mxu0
      %v1683 = vadd.f32 0.0, %v1682
      %v1684 = vpop.f32.mrf.mxu0
      %v1685 = vadd.f32 0.0, %v1684
      %1686 = vdwg.mxu0
      %1687 = vmatprep.subr.bf16.mxu0 0
      %1688 = vmatpush1.bf16.msra.mxu0 0
      %1689 = vmatprep.subr.bf16.mxu0 0
      %1690 = vmatpush1.bf16.msra.mxu0 0
      %1691 = vmatprep.subr.bf16.mxu0 0
      %1692 = vmatpush1.bf16.msra.mxu0 0
      %1693 = vmatprep.subr.bf16.mxu0 0
      %1694 = vmatpush1.bf16.msra.mxu0 0
      %1695 = vmatprep.subr.bf16.mxu0 0
      %1696 = vmatpush1.bf16.msra.mxu0 0
      %1697 = vmatprep.subr.bf16.mxu0 0
      %1698 = vmatpush1.bf16.msra.mxu0 0
      %1699 = vmatprep.subr.bf16.mxu0 0
      %1700 = vmatpush1.bf16.msra.mxu0 0
      %1701 = vmatprep.subr.bf16.mxu0 0
      %1702 = vmatpush1.bf16.msra.mxu0 %v1642
      %1703 = vmatprep.subr.bf16.mxu0 0
      %1704 = vmatpush2.bf16.msra.mxu0 0
      %1705 = vmatprep.subr.bf16.mxu0 0
      %1706 = vmatpush2.bf16.msra.mxu0 0
      %1707 = vmatprep.subr.bf16.mxu0 0
      %1708 = vmatpush2.bf16.msra.mxu0 0
      %1709 = vmatprep.subr.bf16.mxu0 0
      %1710 = vmatpush2.bf16.msra.mxu0 0
      %1711 = vmatprep.subr.bf16.mxu0 0
      %1712 = vmatpush2.bf16.msra.mxu0 0
      %1713 = vmatprep.subr.bf16.mxu0 0
      %1714 = vmatpush2.bf16.msra.mxu0 0
      %1715 = vmatprep.subr.bf16.mxu0 0
      %1716 = vmatpush2.bf16.msra.mxu0 0
      %1717 = vmatprep.subr.bf16.mxu0 0
      %1718 = vmatpush2.bf16.msra.mxu0 0
      %1719 = vmatprep.mubr.bf16.mxu0 0
      %1720 = vmatmul.mubr.bf16.gmra.mxu0 %v1633
      %v1721 = vpop.f32.mrf.mxu0
      %v1722 = vadd.f32 0.0, %v1721
      %v1723 = vpop.f32.mrf.mxu0
      %v1724 = vpop.f32.mrf.mxu0
      %v1725 = vadd.f32 0.0, %v1724
      %v1726 = vpop.f32.mrf.mxu0
      %1727 = vdwg.mxu0
      %v1728 = vadd.f32 %v1591, %v1679
      %v1729 = vadd.f32 %v1592, %v1681
      %v1730 = vadd.f32 %v1593, %v1722
      %v1731 = vadd.f32 %v1594, %v1683
      %v1732 = vadd.f32 %v1595, %v1685
      %v1733 = vadd.f32 %v1596, %v1725
      %s1734 = scalar_lea.vmem %s1, 64
      %v1735 = vld [vmem:[%s1734] sm:$0xf]
      %v1736 = vld [vmem:[%s1734 + $0x4] sm:$0xf]
      %v1737 = vld [vmem:[%s632] sm:$0x3f]
      %v1740 = vunpack.c.l.b16 %v1735
      %v1741 = vunpack.c.l.b16 %v1736
      %v1742 = vpack.c.b16 %v1741, %v1740
      %v1744 = vcombine.high %v1737, %v1737
      %v1746 = vunpack.c.l.s4 1983009808
      %v1747 = vunpack.c.0.s8 %v1746
      %v1748 = vlaneseq
      %v1749 = vshrl.u32 %v1748, 7
      %v1750 = vsub.s32 %v1747, %v1749
      %v1751 = vrot.slane %v1737, %v1750
      %v1753 = vunpack.c.l.s4 1983009808
      %v1754 = vunpack.c.0.s8 %v1753
      %v1755 = vlaneseq
      %v1756 = vshrl.u32 %v1755, 7
      %v1757 = vsub.s32 %v1754, %v1756
      %v1758 = vrot.slane %v1744, %v1757
      %v1759 = vcombine.high %v1751, %v1751
      %1760 = vrot.lane.b32.xlu0 %v1751, 90
      %v1761 = vpop.permute.xlu0 %1760
      %1762 = vrot.lane.b32.xlu0 %v1759, 90
      %v1763 = vpop.permute.xlu0 %1762
      %1764 = vrot.lane.b32.xlu0 %v1758, 90
      %v1765 = vpop.permute.xlu0 %1764
      %vm1766 = vcmask 736256
      %v1767 = vsel %vm1766, %v1761, %v1763
      %v1768 = vsel %vm1766, %v1763, %v1765
      %v1770 = vsel %vm713, %v1742, 0
      %v1773 = vsel %vm717, %v1767, 0
      %v1776 = vsel %vm717, %v1768, 0
      %v1779 = vsel %vm717, %v1765, 0
      %1781 = vmatprep.subr.bf16.mxu0 0
      %1782 = vmatpush1.bf16.msra.mxu0 0
      %1783 = vmatprep.subr.bf16.mxu0 0
      %1784 = vmatpush1.bf16.msra.mxu0 0
      %1785 = vmatprep.subr.bf16.mxu0 0
      %1786 = vmatpush1.bf16.msra.mxu0 0
      %1787 = vmatprep.subr.bf16.mxu0 0
      %1788 = vmatpush1.bf16.msra.mxu0 0
      %1789 = vmatprep.subr.bf16.mxu0 0
      %1790 = vmatpush1.bf16.msra.mxu0 0
      %1791 = vmatprep.subr.bf16.mxu0 0
      %1792 = vmatpush1.bf16.msra.mxu0 0
      %1793 = vmatprep.subr.bf16.mxu0 0
      %1794 = vmatpush1.bf16.msra.mxu0 0
      %1795 = vmatprep.subr.bf16.mxu0 %v1776
      %1796 = vmatpush1.bf16.msra.mxu0 %v1773
      %1797 = vmatprep.subr.bf16.mxu0 0
      %1798 = vmatpush2.bf16.msra.mxu0 0
      %1799 = vmatprep.subr.bf16.mxu0 0
      %1800 = vmatpush2.bf16.msra.mxu0 0
      %1801 = vmatprep.subr.bf16.mxu0 0
      %1802 = vmatpush2.bf16.msra.mxu0 0
      %1803 = vmatprep.subr.bf16.mxu0 0
      %1804 = vmatpush2.bf16.msra.mxu0 0
      %1805 = vmatprep.subr.bf16.mxu0 0
      %1806 = vmatpush2.bf16.msra.mxu0 0
      %1807 = vmatprep.subr.bf16.mxu0 0
      %1808 = vmatpush2.bf16.msra.mxu0 0
      %1809 = vmatprep.subr.bf16.mxu0 0
      %1810 = vmatpush2.bf16.msra.mxu0 0
      %1811 = vmatprep.subr.bf16.mxu0 0
      %1812 = vmatpush2.bf16.msra.mxu0 0
      %1813 = vmatprep.mubr.bf16.mxu0 0
      %1814 = vmatmul.mubr.bf16.gmra.mxu0 %v1770
      %v1815 = vpop.f32.mrf.mxu0
      %v1816 = vadd.f32 0.0, %v1815
      %v1817 = vpop.f32.mrf.mxu0
      %v1818 = vadd.f32 0.0, %v1817
      %v1819 = vpop.f32.mrf.mxu0
      %v1820 = vadd.f32 0.0, %v1819
      %v1821 = vpop.f32.mrf.mxu0
      %v1822 = vadd.f32 0.0, %v1821
      %1823 = vdwg.mxu0
      %1824 = vmatprep.subr.bf16.mxu0 0
      %1825 = vmatpush1.bf16.msra.mxu0 0
      %1826 = vmatprep.subr.bf16.mxu0 0
      %1827 = vmatpush1.bf16.msra.mxu0 0
      %1828 = vmatprep.subr.bf16.mxu0 0
      %1829 = vmatpush1.bf16.msra.mxu0 0
      %1830 = vmatprep.subr.bf16.mxu0 0
      %1831 = vmatpush1.bf16.msra.mxu0 0
      %1832 = vmatprep.subr.bf16.mxu0 0
      %1833 = vmatpush1.bf16.msra.mxu0 0
      %1834 = vmatprep.subr.bf16.mxu0 0
      %1835 = vmatpush1.bf16.msra.mxu0 0
      %1836 = vmatprep.subr.bf16.mxu0 0
      %1837 = vmatpush1.bf16.msra.mxu0 0
      %1838 = vmatprep.subr.bf16.mxu0 0
      %1839 = vmatpush1.bf16.msra.mxu0 %v1779
      %1840 = vmatprep.subr.bf16.mxu0 0
      %1841 = vmatpush2.bf16.msra.mxu0 0
      %1842 = vmatprep.subr.bf16.mxu0 0
      %1843 = vmatpush2.bf16.msra.mxu0 0
      %1844 = vmatprep.subr.bf16.mxu0 0
      %1845 = vmatpush2.bf16.msra.mxu0 0
      %1846 = vmatprep.subr.bf16.mxu0 0
      %1847 = vmatpush2.bf16.msra.mxu0 0
      %1848 = vmatprep.subr.bf16.mxu0 0
      %1849 = vmatpush2.bf16.msra.mxu0 0
      %1850 = vmatprep.subr.bf16.mxu0 0
      %1851 = vmatpush2.bf16.msra.mxu0 0
      %1852 = vmatprep.subr.bf16.mxu0 0
      %1853 = vmatpush2.bf16.msra.mxu0 0
      %1854 = vmatprep.subr.bf16.mxu0 0
      %1855 = vmatpush2.bf16.msra.mxu0 0
      %1856 = vmatprep.mubr.bf16.mxu0 0
      %1857 = vmatmul.mubr.bf16.gmra.mxu0 %v1770
      %v1858 = vpop.f32.mrf.mxu0
      %v1859 = vadd.f32 0.0, %v1858
      %v1860 = vpop.f32.mrf.mxu0
      %v1861 = vpop.f32.mrf.mxu0
      %v1862 = vadd.f32 0.0, %v1861
      %v1863 = vpop.f32.mrf.mxu0
      %1864 = vdwg.mxu0
      %v1865 = vadd.f32 %v1728, %v1816
      %v1866 = vadd.f32 %v1729, %v1818
      %v1867 = vadd.f32 %v1730, %v1859
      %v1868 = vadd.f32 %v1731, %v1820
      %v1869 = vadd.f32 %v1732, %v1822
      %v1870 = vadd.f32 %v1733, %v1862
      %v1871 = vld [vmem:[%s2] sm:$0xff]
      %v1872 = vld [vmem:[%s2 + $0x8] sm:$0xff]
      %1874 = vset.pattern.permute.xlu0 0
      %1875 = vperm.xlu0 %1874, %v1871
      %v1876 = vpop.permute.xlu0 %1875
      %1879 = vset.pattern.permute.xlu0 0
      %1880 = vperm.xlu0 %1879, %v1872
      %v1881 = vpop.permute.xlu0 %1880
      %v1883 = vadd.f32 %v1865, %v1876
      %v1884 = vadd.f32 %v1866, %v1876
      %v1885 = vadd.f32 %v1867, %v1876
      %v1886 = vadd.f32 %v1868, %v1881
      %v1887 = vadd.f32 %v1869, %v1881
      %v1888 = vadd.f32 %v1870, %v1881
      %vm1889 = vcmp.ge.f32.partialorder %v1883, 0.0
      %vm1890 = vcmp.ge.f32.partialorder %v1884, 0.0
      %vm1891 = vcmp.ge.f32.partialorder %v1885, 0.0
      %vm1892 = vcmp.ge.f32.partialorder %v1886, 0.0
      %vm1893 = vcmp.ge.f32.partialorder %v1887, 0.0
      %vm1894 = vcmp.ge.f32.partialorder %v1888, 0.0
      %v1895 = vmul.f32 %v1883, 0.01
      %v1896 = vmul.f32 %v1884, 0.01
      %v1897 = vmul.f32 %v1885, 0.01
      %v1898 = vmul.f32 %v1886, 0.01
      %v1899 = vmul.f32 %v1887, 0.01
      %v1900 = vmul.f32 %v1888, 0.01
      %v1901 = vsel %vm1889, %v1883, %v1895
      %v1902 = vsel %vm1890, %v1884, %v1896
      %v1903 = vsel %vm1891, %v1885, %v1897
      %v1904 = vsel %vm1892, %v1886, %v1898
      %v1905 = vsel %vm1893, %v1887, %v1899
      %v1906 = vsel %vm1894, %v1888, %v1900
      %v1907 = vsel %vm645, 1, 0
      %v1908 = vlaneseq
      %v1909 = vshrl.u32 %v1908, 7
      %v1910 = vsub.s32 0, %v1909
      %v1911 = vrot.slane %v1907, %v1910
      %v1912 = vlaneseq
      %v1913 = vshrl.u32 %v1912, 7
      %v1914 = vsub.s32 1, %v1913
      %v1915 = vrot.slane %v1907, %v1914
      %v1916 = vlaneseq
      %v1917 = vshrl.u32 %v1916, 7
      %v1918 = vsub.s32 2, %v1917
      %v1919 = vrot.slane %v1907, %v1918
      %vm1920 = vcmp.eq.s32.totalorder %v1911, 1
      %vm1921 = vcmp.eq.s32.totalorder %v1915, 1
      %vm1922 = vcmp.eq.s32.totalorder %v1919, 1
      %v1923 = vsel %vm1920, %v1901, 0.0
      %v1924 = vsel %vm1921, %v1902, 0.0
      %v1925 = vsel %vm1922, %v1903, 0.0
      %v1926 = vsel %vm1920, %v1904, 0.0
      %v1927 = vsel %vm1921, %v1905, 0.0
      %v1928 = vsel %vm1922, %v1906, 0.0
      %v1929 = vpack.c.bf16 %v1926, %v1923
      %v1930 = vpack.c.bf16 %v1927, %v1924
      %v1931 = vpack.c.bf16 %v1928, %v1925
      %v1935 = vunpack.c.l.b16 %v1929
      %v1936 = vunpack.c.l.b16 %v1930
      %v1937 = vunpack.c.l.b16 %v1931
      %v1938 = vunpack.c.h.b16 %v1929
      %v1939 = vunpack.c.h.b16 %v1930
      %v1940 = vunpack.c.h.b16 %v1931
      %v1941 = vpack.c.b16 %v1936, %v1935
      %v1942 = vpack.c.b16 %v1937, %v1937
      %v1943 = vpack.c.b16 %v1939, %v1938
      %v1944 = vpack.c.b16 %v1940, %v1940
      %1945 = vrot.lane.b32.xlu0 %v1941, 19
      %v1946 = vpop.permute.xlu0 %1945
      %1947 = vrot.lane.b32.xlu0 %v1942, 19
      %v1948 = vpop.permute.xlu0 %1947
      %1949 = vrot.lane.b32.xlu0 %v1943, 19
      %v1950 = vpop.permute.xlu0 %1949
      %1951 = vrot.lane.b32.xlu0 %v1944, 19
      %v1952 = vpop.permute.xlu0 %1951
      %v1953 = vrot.slane %v1946, 4
      %v1954 = vrot.slane %v1950, 4
      %vm1955 = vcmask 154624
      %v1956 = vsel %vm1955, %v1953, %v1946
      %v1957 = vsel %vm1955, %v1953, %v1948
      %v1958 = vsel %vm1955, %v1954, %v1950
      %v1959 = vsel %vm1955, %v1954, %v1952
      %vm1964 = vcmask 1043608
      %vm1965 = vcmask 1047556
      %vm1966 = vmor %vm1965, %vm1964
      %1967 = vst.msk [vmem:[#allocation2 + $0x18] sm:$0xff] %vm1966, %v1956
      %vm1968 = vcmask 412672
      %1969 = vst.msk [vmem:[#allocation2 + $0x20] sm:$0xf] %vm1968, %v1957
      %1970 = vst.msk [vmem:[#allocation2 + $0x24] sm:$0xff] %vm1966, %v1958
      %1971 = vst.msk [vmem:[#allocation2 + $0x2c] sm:$0xf] %vm1968, %v1959
      %v1972 = vld [vmem:[%s3] sm:$0xf]
      %v1973 = vld [vmem:[%s3 + $0x4] sm:$0xf]
      %v1974 = vld [vmem:[#allocation2 + $0x18] sm:$0xff]
      %v1975 = vld [vmem:[#allocation2 + $0x20] sm:$0xf]
      %v1976 = vld [vmem:[#allocation2 + $0x24] sm:$0xff]
      %v1977 = vld [vmem:[#allocation2 + $0x2c] sm:$0xf]
      %s1978 = scalar_lea.vmem %s3, 8
      %v1979 = vld [vmem:[%s1978] sm:$0xf]
      %v1980 = vld [vmem:[%s1978 + $0x4] sm:$0xf]
      %v1983 = vunpack.c.l.b16 %v1979
      %v1984 = vunpack.c.l.b16 %v1980
      %v1985 = vpack.c.b16 %v1984, %v1983
      %v1990 = vunpack.c.l.b16 %v1974
      %v1991 = vunpack.c.h.b16 %v1974
      %v1992 = vunpack.c.l.b16 %v1975
      %v1993 = vunpack.c.l.b16 %v1976
      %v1994 = vunpack.c.h.b16 %v1976
      %v1995 = vunpack.c.l.b16 %v1977
      %v1996 = vpack.c.b16 %v1993, %v1990
      %v1997 = vpack.c.b16 %v1994, %v1991
      %v1998 = vpack.c.b16 %v1995, %v1992
      %1999 = vrot.lane.b32.xlu0 %v1996, 127
      %v2000 = vpop.permute.xlu0 %1999
      %2001 = vrot.lane.b32.xlu0 %v1997, 127
      %v2002 = vpop.permute.xlu0 %2001
      %2003 = vrot.lane.b32.xlu0 %v1998, 127
      %v2004 = vpop.permute.xlu0 %2003
      %v2005 = vsel %vm710, %v2000, %v2002
      %v2006 = vsel %vm710, %v2002, %v2004
      %vm2010 = vcmask 130048
      %v2012 = vsel %vm2010, %v1985, 0
      %2014 = vmatprep.subr.bf16.mxu0 0
      %2015 = vmatpush1.bf16.msra.mxu0 0
      %2016 = vmatprep.subr.bf16.mxu0 0
      %2017 = vmatpush1.bf16.msra.mxu0 0
      %2018 = vmatprep.subr.bf16.mxu0 0
      %2019 = vmatpush1.bf16.msra.mxu0 0
      %2020 = vmatprep.subr.bf16.mxu0 0
      %2021 = vmatpush1.bf16.msra.mxu0 0
      %2022 = vmatprep.subr.bf16.mxu0 0
      %2023 = vmatpush1.bf16.msra.mxu0 0
      %2024 = vmatprep.subr.bf16.mxu0 0
      %2025 = vmatpush1.bf16.msra.mxu0 0
      %2026 = vmatprep.subr.bf16.mxu0 0
      %2027 = vmatpush1.bf16.msra.mxu0 0
      %2028 = vmatprep.subr.bf16.mxu0 %v2006
      %2029 = vmatpush1.bf16.msra.mxu0 %v2005
      %2030 = vmatprep.subr.bf16.mxu0 0
      %2031 = vmatpush2.bf16.msra.mxu0 0
      %2032 = vmatprep.subr.bf16.mxu0 0
      %2033 = vmatpush2.bf16.msra.mxu0 0
      %2034 = vmatprep.subr.bf16.mxu0 0
      %2035 = vmatpush2.bf16.msra.mxu0 0
      %2036 = vmatprep.subr.bf16.mxu0 0
      %2037 = vmatpush2.bf16.msra.mxu0 0
      %2038 = vmatprep.subr.bf16.mxu0 0
      %2039 = vmatpush2.bf16.msra.mxu0 0
      %2040 = vmatprep.subr.bf16.mxu0 0
      %2041 = vmatpush2.bf16.msra.mxu0 0
      %2042 = vmatprep.subr.bf16.mxu0 0
      %2043 = vmatpush2.bf16.msra.mxu0 0
      %2044 = vmatprep.subr.bf16.mxu0 0
      %2045 = vmatpush2.bf16.msra.mxu0 0
      %2046 = vmatprep.mubr.bf16.mxu0 0
      %2047 = vmatmul.mubr.bf16.gmra.mxu0 %v2012
      %v2048 = vpop.f32.mrf.mxu0
      %v2049 = vadd.f32 0.0, %v2048
      %v2050 = vpop.f32.mrf.mxu0
      %v2051 = vadd.f32 0.0, %v2050
      %v2052 = vpop.f32.mrf.mxu0
      %v2053 = vadd.f32 0.0, %v2052
      %v2054 = vpop.f32.mrf.mxu0
      %v2055 = vadd.f32 0.0, %v2054
      %2056 = vdwg.mxu0
      %2057 = vmatprep.subr.bf16.mxu0 0
      %2058 = vmatpush1.bf16.msra.mxu0 0
      %2059 = vmatprep.subr.bf16.mxu0 0
      %2060 = vmatpush1.bf16.msra.mxu0 0
      %2061 = vmatprep.subr.bf16.mxu0 0
      %2062 = vmatpush1.bf16.msra.mxu0 0
      %2063 = vmatprep.subr.bf16.mxu0 0
      %2064 = vmatpush1.bf16.msra.mxu0 0
      %2065 = vmatprep.subr.bf16.mxu0 0
      %2066 = vmatpush1.bf16.msra.mxu0 0
      %2067 = vmatprep.subr.bf16.mxu0 0
      %2068 = vmatpush1.bf16.msra.mxu0 0
      %2069 = vmatprep.subr.bf16.mxu0 0
      %2070 = vmatpush1.bf16.msra.mxu0 0
      %2071 = vmatprep.subr.bf16.mxu0 0
      %2072 = vmatpush1.bf16.msra.mxu0 %v2004
      %2073 = vmatprep.subr.bf16.mxu0 0
      %2074 = vmatpush2.bf16.msra.mxu0 0
      %2075 = vmatprep.subr.bf16.mxu0 0
      %2076 = vmatpush2.bf16.msra.mxu0 0
      %2077 = vmatprep.subr.bf16.mxu0 0
      %2078 = vmatpush2.bf16.msra.mxu0 0
      %2079 = vmatprep.subr.bf16.mxu0 0
      %2080 = vmatpush2.bf16.msra.mxu0 0
      %2081 = vmatprep.subr.bf16.mxu0 0
      %2082 = vmatpush2.bf16.msra.mxu0 0
      %2083 = vmatprep.subr.bf16.mxu0 0
      %2084 = vmatpush2.bf16.msra.mxu0 0
      %2085 = vmatprep.subr.bf16.mxu0 0
      %2086 = vmatpush2.bf16.msra.mxu0 0
      %2087 = vmatprep.subr.bf16.mxu0 0
      %2088 = vmatpush2.bf16.msra.mxu0 0
      %2089 = vmatprep.mubr.bf16.mxu0 0
      %2090 = vmatmul.mubr.bf16.gmra.mxu0 %v2012
      %v2091 = vpop.f32.mrf.mxu0
      %v2092 = vadd.f32 0.0, %v2091
      %v2093 = vpop.f32.mrf.mxu0
      %v2094 = vpop.f32.mrf.mxu0
      %v2095 = vadd.f32 0.0, %v2094
      %v2096 = vpop.f32.mrf.mxu0
      %2097 = vdwg.mxu0
      %v2100 = vunpack.c.l.b16 %v1972
      %v2101 = vunpack.c.l.b16 %v1973
      %v2102 = vpack.c.b16 %v2101, %v2100
      %v2107 = vsel %vm2010, %v2102, 0
      %2109 = vmatprep.subr.bf16.mxu0 0
      %2110 = vmatpush1.bf16.msra.mxu0 0
      %2111 = vmatprep.subr.bf16.mxu0 0
      %2112 = vmatpush1.bf16.msra.mxu0 0
      %2113 = vmatprep.subr.bf16.mxu0 0
      %2114 = vmatpush1.bf16.msra.mxu0 0
      %2115 = vmatprep.subr.bf16.mxu0 0
      %2116 = vmatpush1.bf16.msra.mxu0 0
      %2117 = vmatprep.subr.bf16.mxu0 0
      %2118 = vmatpush1.bf16.msra.mxu0 0
      %2119 = vmatprep.subr.bf16.mxu0 0
      %2120 = vmatpush1.bf16.msra.mxu0 0
      %2121 = vmatprep.subr.bf16.mxu0 0
      %2122 = vmatpush1.bf16.msra.mxu0 0
      %2123 = vmatprep.subr.bf16.mxu0 %v1997
      %2124 = vmatpush1.bf16.msra.mxu0 %v1996
      %2125 = vmatprep.subr.bf16.mxu0 0
      %2126 = vmatpush2.bf16.msra.mxu0 0
      %2127 = vmatprep.subr.bf16.mxu0 0
      %2128 = vmatpush2.bf16.msra.mxu0 0
      %2129 = vmatprep.subr.bf16.mxu0 0
      %2130 = vmatpush2.bf16.msra.mxu0 0
      %2131 = vmatprep.subr.bf16.mxu0 0
      %2132 = vmatpush2.bf16.msra.mxu0 0
      %2133 = vmatprep.subr.bf16.mxu0 0
      %2134 = vmatpush2.bf16.msra.mxu0 0
      %2135 = vmatprep.subr.bf16.mxu0 0
      %2136 = vmatpush2.bf16.msra.mxu0 0
      %2137 = vmatprep.subr.bf16.mxu0 0
      %2138 = vmatpush2.bf16.msra.mxu0 0
      %2139 = vmatprep.subr.bf16.mxu0 0
      %2140 = vmatpush2.bf16.msra.mxu0 0
      %2141 = vmatprep.mubr.bf16.mxu0 0
      %2142 = vmatmul.mubr.bf16.gmra.mxu0 %v2107
      %v2143 = vpop.f32.mrf.mxu0
      %v2144 = vadd.f32 %v2049, %v2143
      %v2145 = vpop.f32.mrf.mxu0
      %v2146 = vadd.f32 %v2051, %v2145
      %v2147 = vpop.f32.mrf.mxu0
      %v2148 = vadd.f32 %v2053, %v2147
      %v2149 = vpop.f32.mrf.mxu0
      %v2150 = vadd.f32 %v2055, %v2149
      %2151 = vdwg.mxu0
      %2152 = vmatprep.subr.bf16.mxu0 0
      %2153 = vmatpush1.bf16.msra.mxu0 0
      %2154 = vmatprep.subr.bf16.mxu0 0
      %2155 = vmatpush1.bf16.msra.mxu0 0
      %2156 = vmatprep.subr.bf16.mxu0 0
      %2157 = vmatpush1.bf16.msra.mxu0 0
      %2158 = vmatprep.subr.bf16.mxu0 0
      %2159 = vmatpush1.bf16.msra.mxu0 0
      %2160 = vmatprep.subr.bf16.mxu0 0
      %2161 = vmatpush1.bf16.msra.mxu0 0
      %2162 = vmatprep.subr.bf16.mxu0 0
      %2163 = vmatpush1.bf16.msra.mxu0 0
      %2164 = vmatprep.subr.bf16.mxu0 0
      %2165 = vmatpush1.bf16.msra.mxu0 0
      %2166 = vmatprep.subr.bf16.mxu0 0
      %2167 = vmatpush1.bf16.msra.mxu0 %v1998
      %2168 = vmatprep.subr.bf16.mxu0 0
      %2169 = vmatpush2.bf16.msra.mxu0 0
      %2170 = vmatprep.subr.bf16.mxu0 0
      %2171 = vmatpush2.bf16.msra.mxu0 0
      %2172 = vmatprep.subr.bf16.mxu0 0
      %2173 = vmatpush2.bf16.msra.mxu0 0
      %2174 = vmatprep.subr.bf16.mxu0 0
      %2175 = vmatpush2.bf16.msra.mxu0 0
      %2176 = vmatprep.subr.bf16.mxu0 0
      %2177 = vmatpush2.bf16.msra.mxu0 0
      %2178 = vmatprep.subr.bf16.mxu0 0
      %2179 = vmatpush2.bf16.msra.mxu0 0
      %2180 = vmatprep.subr.bf16.mxu0 0
      %2181 = vmatpush2.bf16.msra.mxu0 0
      %2182 = vmatprep.subr.bf16.mxu0 0
      %2183 = vmatpush2.bf16.msra.mxu0 0
      %2184 = vmatprep.mubr.bf16.mxu0 0
      %2185 = vmatmul.mubr.bf16.gmra.mxu0 %v2107
      %v2186 = vpop.f32.mrf.mxu0
      %v2187 = vadd.f32 %v2092, %v2186
      %v2188 = vpop.f32.mrf.mxu0
      %v2189 = vpop.f32.mrf.mxu0
      %v2190 = vadd.f32 %v2095, %v2189
      %v2191 = vpop.f32.mrf.mxu0
      %2192 = vdwg.mxu0
      %s2193 = scalar_lea.vmem %s3, 16
      %v2194 = vld [vmem:[%s2193] sm:$0xf]
      %v2195 = vld [vmem:[%s2193 + $0x4] sm:$0xf]
      %v2198 = vunpack.c.l.b16 %v2194
      %v2199 = vunpack.c.l.b16 %v2195
      %v2200 = vpack.c.b16 %v2199, %v2198
      %2201 = vrot.lane.b32.xlu0 %v1996, 126
      %v2202 = vpop.permute.xlu0 %2201
      %2203 = vrot.lane.b32.xlu0 %v1997, 126
      %v2204 = vpop.permute.xlu0 %2203
      %2205 = vrot.lane.b32.xlu0 %v1998, 126
      %v2206 = vpop.permute.xlu0 %2205
      %v2207 = vsel %vm944, %v2202, %v2204
      %v2208 = vsel %vm944, %v2204, %v2206
      %v2213 = vsel %vm2010, %v2200, 0
      %2215 = vmatprep.subr.bf16.mxu0 0
      %2216 = vmatpush1.bf16.msra.mxu0 0
      %2217 = vmatprep.subr.bf16.mxu0 0
      %2218 = vmatpush1.bf16.msra.mxu0 0
      %2219 = vmatprep.subr.bf16.mxu0 0
      %2220 = vmatpush1.bf16.msra.mxu0 0
      %2221 = vmatprep.subr.bf16.mxu0 0
      %2222 = vmatpush1.bf16.msra.mxu0 0
      %2223 = vmatprep.subr.bf16.mxu0 0
      %2224 = vmatpush1.bf16.msra.mxu0 0
      %2225 = vmatprep.subr.bf16.mxu0 0
      %2226 = vmatpush1.bf16.msra.mxu0 0
      %2227 = vmatprep.subr.bf16.mxu0 0
      %2228 = vmatpush1.bf16.msra.mxu0 0
      %2229 = vmatprep.subr.bf16.mxu0 %v2208
      %2230 = vmatpush1.bf16.msra.mxu0 %v2207
      %2231 = vmatprep.subr.bf16.mxu0 0
      %2232 = vmatpush2.bf16.msra.mxu0 0
      %2233 = vmatprep.subr.bf16.mxu0 0
      %2234 = vmatpush2.bf16.msra.mxu0 0
      %2235 = vmatprep.subr.bf16.mxu0 0
      %2236 = vmatpush2.bf16.msra.mxu0 0
      %2237 = vmatprep.subr.bf16.mxu0 0
      %2238 = vmatpush2.bf16.msra.mxu0 0
      %2239 = vmatprep.subr.bf16.mxu0 0
      %2240 = vmatpush2.bf16.msra.mxu0 0
      %2241 = vmatprep.subr.bf16.mxu0 0
      %2242 = vmatpush2.bf16.msra.mxu0 0
      %2243 = vmatprep.subr.bf16.mxu0 0
      %2244 = vmatpush2.bf16.msra.mxu0 0
      %2245 = vmatprep.subr.bf16.mxu0 0
      %2246 = vmatpush2.bf16.msra.mxu0 0
      %2247 = vmatprep.mubr.bf16.mxu0 0
      %2248 = vmatmul.mubr.bf16.gmra.mxu0 %v2213
      %v2249 = vpop.f32.mrf.mxu0
      %v2250 = vadd.f32 0.0, %v2249
      %v2251 = vpop.f32.mrf.mxu0
      %v2252 = vadd.f32 0.0, %v2251
      %v2253 = vpop.f32.mrf.mxu0
      %v2254 = vadd.f32 0.0, %v2253
      %v2255 = vpop.f32.mrf.mxu0
      %v2256 = vadd.f32 0.0, %v2255
      %2257 = vdwg.mxu0
      %2258 = vmatprep.subr.bf16.mxu0 0
      %2259 = vmatpush1.bf16.msra.mxu0 0
      %2260 = vmatprep.subr.bf16.mxu0 0
      %2261 = vmatpush1.bf16.msra.mxu0 0
      %2262 = vmatprep.subr.bf16.mxu0 0
      %2263 = vmatpush1.bf16.msra.mxu0 0
      %2264 = vmatprep.subr.bf16.mxu0 0
      %2265 = vmatpush1.bf16.msra.mxu0 0
      %2266 = vmatprep.subr.bf16.mxu0 0
      %2267 = vmatpush1.bf16.msra.mxu0 0
      %2268 = vmatprep.subr.bf16.mxu0 0
      %2269 = vmatpush1.bf16.msra.mxu0 0
      %2270 = vmatprep.subr.bf16.mxu0 0
      %2271 = vmatpush1.bf16.msra.mxu0 0
      %2272 = vmatprep.subr.bf16.mxu0 0
      %2273 = vmatpush1.bf16.msra.mxu0 %v2206
      %2274 = vmatprep.subr.bf16.mxu0 0
      %2275 = vmatpush2.bf16.msra.mxu0 0
      %2276 = vmatprep.subr.bf16.mxu0 0
      %2277 = vmatpush2.bf16.msra.mxu0 0
      %2278 = vmatprep.subr.bf16.mxu0 0
      %2279 = vmatpush2.bf16.msra.mxu0 0
      %2280 = vmatprep.subr.bf16.mxu0 0
      %2281 = vmatpush2.bf16.msra.mxu0 0
      %2282 = vmatprep.subr.bf16.mxu0 0
      %2283 = vmatpush2.bf16.msra.mxu0 0
      %2284 = vmatprep.subr.bf16.mxu0 0
      %2285 = vmatpush2.bf16.msra.mxu0 0
      %2286 = vmatprep.subr.bf16.mxu0 0
      %2287 = vmatpush2.bf16.msra.mxu0 0
      %2288 = vmatprep.subr.bf16.mxu0 0
      %2289 = vmatpush2.bf16.msra.mxu0 0
      %2290 = vmatprep.mubr.bf16.mxu0 0
      %2291 = vmatmul.mubr.bf16.gmra.mxu0 %v2213
      %v2292 = vpop.f32.mrf.mxu0
      %v2293 = vadd.f32 0.0, %v2292
      %v2294 = vpop.f32.mrf.mxu0
      %v2295 = vpop.f32.mrf.mxu0
      %v2296 = vadd.f32 0.0, %v2295
      %v2297 = vpop.f32.mrf.mxu0
      %2298 = vdwg.mxu0
      %v2299 = vadd.f32 %v2144, %v2250
      %v2300 = vadd.f32 %v2146, %v2252
      %v2301 = vadd.f32 %v2187, %v2293
      %v2302 = vadd.f32 %v2148, %v2254
      %v2303 = vadd.f32 %v2150, %v2256
      %v2304 = vadd.f32 %v2190, %v2296
      %s2305 = scalar_lea.vmem %s3, 24
      %v2306 = vld [vmem:[%s2305] sm:$0xf]
      %v2307 = vld [vmem:[%s2305 + $0x4] sm:$0xf]
      %v2310 = vunpack.c.l.b16 %v2306
      %v2311 = vunpack.c.l.b16 %v2307
      %v2312 = vpack.c.b16 %v2311, %v2310
      %2313 = vrot.lane.b32.xlu0 %v1996, 110
      %v2314 = vpop.permute.xlu0 %2313
      %2315 = vrot.lane.b32.xlu0 %v1997, 110
      %v2316 = vpop.permute.xlu0 %2315
      %2317 = vrot.lane.b32.xlu0 %v1998, 110
      %v2318 = vpop.permute.xlu0 %2317
      %v2319 = vsel %vm1081, %v2314, %v2316
      %v2320 = vsel %vm1081, %v2316, %v2318
      %v2325 = vsel %vm2010, %v2312, 0
      %2327 = vmatprep.subr.bf16.mxu0 0
      %2328 = vmatpush1.bf16.msra.mxu0 0
      %2329 = vmatprep.subr.bf16.mxu0 0
      %2330 = vmatpush1.bf16.msra.mxu0 0
      %2331 = vmatprep.subr.bf16.mxu0 0
      %2332 = vmatpush1.bf16.msra.mxu0 0
      %2333 = vmatprep.subr.bf16.mxu0 0
      %2334 = vmatpush1.bf16.msra.mxu0 0
      %2335 = vmatprep.subr.bf16.mxu0 0
      %2336 = vmatpush1.bf16.msra.mxu0 0
      %2337 = vmatprep.subr.bf16.mxu0 0
      %2338 = vmatpush1.bf16.msra.mxu0 0
      %2339 = vmatprep.subr.bf16.mxu0 0
      %2340 = vmatpush1.bf16.msra.mxu0 0
      %2341 = vmatprep.subr.bf16.mxu0 %v2320
      %2342 = vmatpush1.bf16.msra.mxu0 %v2319
      %2343 = vmatprep.subr.bf16.mxu0 0
      %2344 = vmatpush2.bf16.msra.mxu0 0
      %2345 = vmatprep.subr.bf16.mxu0 0
      %2346 = vmatpush2.bf16.msra.mxu0 0
      %2347 = vmatprep.subr.bf16.mxu0 0
      %2348 = vmatpush2.bf16.msra.mxu0 0
      %2349 = vmatprep.subr.bf16.mxu0 0
      %2350 = vmatpush2.bf16.msra.mxu0 0
      %2351 = vmatprep.subr.bf16.mxu0 0
      %2352 = vmatpush2.bf16.msra.mxu0 0
      %2353 = vmatprep.subr.bf16.mxu0 0
      %2354 = vmatpush2.bf16.msra.mxu0 0
      %2355 = vmatprep.subr.bf16.mxu0 0
      %2356 = vmatpush2.bf16.msra.mxu0 0
      %2357 = vmatprep.subr.bf16.mxu0 0
      %2358 = vmatpush2.bf16.msra.mxu0 0
      %2359 = vmatprep.mubr.bf16.mxu0 0
      %2360 = vmatmul.mubr.bf16.gmra.mxu0 %v2325
      %v2361 = vpop.f32.mrf.mxu0
      %v2362 = vadd.f32 0.0, %v2361
      %v2363 = vpop.f32.mrf.mxu0
      %v2364 = vadd.f32 0.0, %v2363
      %v2365 = vpop.f32.mrf.mxu0
      %v2366 = vadd.f32 0.0, %v2365
      %v2367 = vpop.f32.mrf.mxu0
      %v2368 = vadd.f32 0.0, %v2367
      %2369 = vdwg.mxu0
      %2370 = vmatprep.subr.bf16.mxu0 0
      %2371 = vmatpush1.bf16.msra.mxu0 0
      %2372 = vmatprep.subr.bf16.mxu0 0
      %2373 = vmatpush1.bf16.msra.mxu0 0
      %2374 = vmatprep.subr.bf16.mxu0 0
      %2375 = vmatpush1.bf16.msra.mxu0 0
      %2376 = vmatprep.subr.bf16.mxu0 0
      %2377 = vmatpush1.bf16.msra.mxu0 0
      %2378 = vmatprep.subr.bf16.mxu0 0
      %2379 = vmatpush1.bf16.msra.mxu0 0
      %2380 = vmatprep.subr.bf16.mxu0 0
      %2381 = vmatpush1.bf16.msra.mxu0 0
      %2382 = vmatprep.subr.bf16.mxu0 0
      %2383 = vmatpush1.bf16.msra.mxu0 0
      %2384 = vmatprep.subr.bf16.mxu0 0
      %2385 = vmatpush1.bf16.msra.mxu0 %v2318
      %2386 = vmatprep.subr.bf16.mxu0 0
      %2387 = vmatpush2.bf16.msra.mxu0 0
      %2388 = vmatprep.subr.bf16.mxu0 0
      %2389 = vmatpush2.bf16.msra.mxu0 0
      %2390 = vmatprep.subr.bf16.mxu0 0
      %2391 = vmatpush2.bf16.msra.mxu0 0
      %2392 = vmatprep.subr.bf16.mxu0 0
      %2393 = vmatpush2.bf16.msra.mxu0 0
      %2394 = vmatprep.subr.bf16.mxu0 0
      %2395 = vmatpush2.bf16.msra.mxu0 0
      %2396 = vmatprep.subr.bf16.mxu0 0
      %2397 = vmatpush2.bf16.msra.mxu0 0
      %2398 = vmatprep.subr.bf16.mxu0 0
      %2399 = vmatpush2.bf16.msra.mxu0 0
      %2400 = vmatprep.subr.bf16.mxu0 0
      %2401 = vmatpush2.bf16.msra.mxu0 0
      %2402 = vmatprep.mubr.bf16.mxu0 0
      %2403 = vmatmul.mubr.bf16.gmra.mxu0 %v2325
      %v2404 = vpop.f32.mrf.mxu0
      %v2405 = vadd.f32 0.0, %v2404
      %v2406 = vpop.f32.mrf.mxu0
      %v2407 = vpop.f32.mrf.mxu0
      %v2408 = vadd.f32 0.0, %v2407
      %v2409 = vpop.f32.mrf.mxu0
      %2410 = vdwg.mxu0
      %v2411 = vadd.f32 %v2299, %v2362
      %v2412 = vadd.f32 %v2300, %v2364
      %v2413 = vadd.f32 %v2301, %v2405
      %v2414 = vadd.f32 %v2302, %v2366
      %v2415 = vadd.f32 %v2303, %v2368
      %v2416 = vadd.f32 %v2304, %v2408
      %s2417 = scalar_lea.vmem %s3, 32
      %v2418 = vld [vmem:[%s2417] sm:$0xf]
      %v2419 = vld [vmem:[%s2417 + $0x4] sm:$0xf]
      %v2422 = vunpack.c.l.b16 %v2418
      %v2423 = vunpack.c.l.b16 %v2419
      %v2424 = vpack.c.b16 %v2423, %v2422
      %2425 = vrot.lane.b32.xlu0 %v1996, 109
      %v2426 = vpop.permute.xlu0 %2425
      %2427 = vrot.lane.b32.xlu0 %v1997, 109
      %v2428 = vpop.permute.xlu0 %2427
      %2429 = vrot.lane.b32.xlu0 %v1998, 109
      %v2430 = vpop.permute.xlu0 %2429
      %v2431 = vsel %vm1218, %v2426, %v2428
      %v2432 = vsel %vm1218, %v2428, %v2430
      %v2437 = vsel %vm2010, %v2424, 0
      %2439 = vmatprep.subr.bf16.mxu0 0
      %2440 = vmatpush1.bf16.msra.mxu0 0
      %2441 = vmatprep.subr.bf16.mxu0 0
      %2442 = vmatpush1.bf16.msra.mxu0 0
      %2443 = vmatprep.subr.bf16.mxu0 0
      %2444 = vmatpush1.bf16.msra.mxu0 0
      %2445 = vmatprep.subr.bf16.mxu0 0
      %2446 = vmatpush1.bf16.msra.mxu0 0
      %2447 = vmatprep.subr.bf16.mxu0 0
      %2448 = vmatpush1.bf16.msra.mxu0 0
      %2449 = vmatprep.subr.bf16.mxu0 0
      %2450 = vmatpush1.bf16.msra.mxu0 0
      %2451 = vmatprep.subr.bf16.mxu0 0
      %2452 = vmatpush1.bf16.msra.mxu0 0
      %2453 = vmatprep.subr.bf16.mxu0 %v2432
      %2454 = vmatpush1.bf16.msra.mxu0 %v2431
      %2455 = vmatprep.subr.bf16.mxu0 0
      %2456 = vmatpush2.bf16.msra.mxu0 0
      %2457 = vmatprep.subr.bf16.mxu0 0
      %2458 = vmatpush2.bf16.msra.mxu0 0
      %2459 = vmatprep.subr.bf16.mxu0 0
      %2460 = vmatpush2.bf16.msra.mxu0 0
      %2461 = vmatprep.subr.bf16.mxu0 0
      %2462 = vmatpush2.bf16.msra.mxu0 0
      %2463 = vmatprep.subr.bf16.mxu0 0
      %2464 = vmatpush2.bf16.msra.mxu0 0
      %2465 = vmatprep.subr.bf16.mxu0 0
      %2466 = vmatpush2.bf16.msra.mxu0 0
      %2467 = vmatprep.subr.bf16.mxu0 0
      %2468 = vmatpush2.bf16.msra.mxu0 0
      %2469 = vmatprep.subr.bf16.mxu0 0
      %2470 = vmatpush2.bf16.msra.mxu0 0
      %2471 = vmatprep.mubr.bf16.mxu0 0
      %2472 = vmatmul.mubr.bf16.gmra.mxu0 %v2437
      %v2473 = vpop.f32.mrf.mxu0
      %v2474 = vadd.f32 0.0, %v2473
      %v2475 = vpop.f32.mrf.mxu0
      %v2476 = vadd.f32 0.0, %v2475
      %v2477 = vpop.f32.mrf.mxu0
      %v2478 = vadd.f32 0.0, %v2477
      %v2479 = vpop.f32.mrf.mxu0
      %v2480 = vadd.f32 0.0, %v2479
      %2481 = vdwg.mxu0
      %2482 = vmatprep.subr.bf16.mxu0 0
      %2483 = vmatpush1.bf16.msra.mxu0 0
      %2484 = vmatprep.subr.bf16.mxu0 0
      %2485 = vmatpush1.bf16.msra.mxu0 0
      %2486 = vmatprep.subr.bf16.mxu0 0
      %2487 = vmatpush1.bf16.msra.mxu0 0
      %2488 = vmatprep.subr.bf16.mxu0 0
      %2489 = vmatpush1.bf16.msra.mxu0 0
      %2490 = vmatprep.subr.bf16.mxu0 0
      %2491 = vmatpush1.bf16.msra.mxu0 0
      %2492 = vmatprep.subr.bf16.mxu0 0
      %2493 = vmatpush1.bf16.msra.mxu0 0
      %2494 = vmatprep.subr.bf16.mxu0 0
      %2495 = vmatpush1.bf16.msra.mxu0 0
      %2496 = vmatprep.subr.bf16.mxu0 0
      %2497 = vmatpush1.bf16.msra.mxu0 %v2430
      %2498 = vmatprep.subr.bf16.mxu0 0
      %2499 = vmatpush2.bf16.msra.mxu0 0
      %2500 = vmatprep.subr.bf16.mxu0 0
      %2501 = vmatpush2.bf16.msra.mxu0 0
      %2502 = vmatprep.subr.bf16.mxu0 0
      %2503 = vmatpush2.bf16.msra.mxu0 0
      %2504 = vmatprep.subr.bf16.mxu0 0
      %2505 = vmatpush2.bf16.msra.mxu0 0
      %2506 = vmatprep.subr.bf16.mxu0 0
      %2507 = vmatpush2.bf16.msra.mxu0 0
      %2508 = vmatprep.subr.bf16.mxu0 0
      %2509 = vmatpush2.bf16.msra.mxu0 0
      %2510 = vmatprep.subr.bf16.mxu0 0
      %2511 = vmatpush2.bf16.msra.mxu0 0
      %2512 = vmatprep.subr.bf16.mxu0 0
      %2513 = vmatpush2.bf16.msra.mxu0 0
      %2514 = vmatprep.mubr.bf16.mxu0 0
      %2515 = vmatmul.mubr.bf16.gmra.mxu0 %v2437
      %v2516 = vpop.f32.mrf.mxu0
      %v2517 = vadd.f32 0.0, %v2516
      %v2518 = vpop.f32.mrf.mxu0
      %v2519 = vpop.f32.mrf.mxu0
      %v2520 = vadd.f32 0.0, %v2519
      %v2521 = vpop.f32.mrf.mxu0
      %2522 = vdwg.mxu0
      %v2523 = vadd.f32 %v2411, %v2474
      %v2524 = vadd.f32 %v2412, %v2476
      %v2525 = vadd.f32 %v2413, %v2517
      %v2526 = vadd.f32 %v2414, %v2478
      %v2527 = vadd.f32 %v2415, %v2480
      %v2528 = vadd.f32 %v2416, %v2520
      %s2529 = scalar_lea.vmem %s3, 40
      %v2530 = vld [vmem:[%s2529] sm:$0xf]
      %v2531 = vld [vmem:[%s2529 + $0x4] sm:$0xf]
      %v2534 = vunpack.c.l.b16 %v2530
      %v2535 = vunpack.c.l.b16 %v2531
      %v2536 = vpack.c.b16 %v2535, %v2534
      %2537 = vrot.lane.b32.xlu0 %v1996, 108
      %v2538 = vpop.permute.xlu0 %2537
      %2539 = vrot.lane.b32.xlu0 %v1997, 108
      %v2540 = vpop.permute.xlu0 %2539
      %2541 = vrot.lane.b32.xlu0 %v1998, 108
      %v2542 = vpop.permute.xlu0 %2541
      %v2543 = vsel %vm1355, %v2538, %v2540
      %v2544 = vsel %vm1355, %v2540, %v2542
      %v2549 = vsel %vm2010, %v2536, 0
      %2551 = vmatprep.subr.bf16.mxu0 0
      %2552 = vmatpush1.bf16.msra.mxu0 0
      %2553 = vmatprep.subr.bf16.mxu0 0
      %2554 = vmatpush1.bf16.msra.mxu0 0
      %2555 = vmatprep.subr.bf16.mxu0 0
      %2556 = vmatpush1.bf16.msra.mxu0 0
      %2557 = vmatprep.subr.bf16.mxu0 0
      %2558 = vmatpush1.bf16.msra.mxu0 0
      %2559 = vmatprep.subr.bf16.mxu0 0
      %2560 = vmatpush1.bf16.msra.mxu0 0
      %2561 = vmatprep.subr.bf16.mxu0 0
      %2562 = vmatpush1.bf16.msra.mxu0 0
      %2563 = vmatprep.subr.bf16.mxu0 0
      %2564 = vmatpush1.bf16.msra.mxu0 0
      %2565 = vmatprep.subr.bf16.mxu0 %v2544
      %2566 = vmatpush1.bf16.msra.mxu0 %v2543
      %2567 = vmatprep.subr.bf16.mxu0 0
      %2568 = vmatpush2.bf16.msra.mxu0 0
      %2569 = vmatprep.subr.bf16.mxu0 0
      %2570 = vmatpush2.bf16.msra.mxu0 0
      %2571 = vmatprep.subr.bf16.mxu0 0
      %2572 = vmatpush2.bf16.msra.mxu0 0
      %2573 = vmatprep.subr.bf16.mxu0 0
      %2574 = vmatpush2.bf16.msra.mxu0 0
      %2575 = vmatprep.subr.bf16.mxu0 0
      %2576 = vmatpush2.bf16.msra.mxu0 0
      %2577 = vmatprep.subr.bf16.mxu0 0
      %2578 = vmatpush2.bf16.msra.mxu0 0
      %2579 = vmatprep.subr.bf16.mxu0 0
      %2580 = vmatpush2.bf16.msra.mxu0 0
      %2581 = vmatprep.subr.bf16.mxu0 0
      %2582 = vmatpush2.bf16.msra.mxu0 0
      %2583 = vmatprep.mubr.bf16.mxu0 0
      %2584 = vmatmul.mubr.bf16.gmra.mxu0 %v2549
      %v2585 = vpop.f32.mrf.mxu0
      %v2586 = vadd.f32 0.0, %v2585
      %v2587 = vpop.f32.mrf.mxu0
      %v2588 = vadd.f32 0.0, %v2587
      %v2589 = vpop.f32.mrf.mxu0
      %v2590 = vadd.f32 0.0, %v2589
      %v2591 = vpop.f32.mrf.mxu0
      %v2592 = vadd.f32 0.0, %v2591
      %2593 = vdwg.mxu0
      %2594 = vmatprep.subr.bf16.mxu0 0
      %2595 = vmatpush1.bf16.msra.mxu0 0
      %2596 = vmatprep.subr.bf16.mxu0 0
      %2597 = vmatpush1.bf16.msra.mxu0 0
      %2598 = vmatprep.subr.bf16.mxu0 0
      %2599 = vmatpush1.bf16.msra.mxu0 0
      %2600 = vmatprep.subr.bf16.mxu0 0
      %2601 = vmatpush1.bf16.msra.mxu0 0
      %2602 = vmatprep.subr.bf16.mxu0 0
      %2603 = vmatpush1.bf16.msra.mxu0 0
      %2604 = vmatprep.subr.bf16.mxu0 0
      %2605 = vmatpush1.bf16.msra.mxu0 0
      %2606 = vmatprep.subr.bf16.mxu0 0
      %2607 = vmatpush1.bf16.msra.mxu0 0
      %2608 = vmatprep.subr.bf16.mxu0 0
      %2609 = vmatpush1.bf16.msra.mxu0 %v2542
      %2610 = vmatprep.subr.bf16.mxu0 0
      %2611 = vmatpush2.bf16.msra.mxu0 0
      %2612 = vmatprep.subr.bf16.mxu0 0
      %2613 = vmatpush2.bf16.msra.mxu0 0
      %2614 = vmatprep.subr.bf16.mxu0 0
      %2615 = vmatpush2.bf16.msra.mxu0 0
      %2616 = vmatprep.subr.bf16.mxu0 0
      %2617 = vmatpush2.bf16.msra.mxu0 0
      %2618 = vmatprep.subr.bf16.mxu0 0
      %2619 = vmatpush2.bf16.msra.mxu0 0
      %2620 = vmatprep.subr.bf16.mxu0 0
      %2621 = vmatpush2.bf16.msra.mxu0 0
      %2622 = vmatprep.subr.bf16.mxu0 0
      %2623 = vmatpush2.bf16.msra.mxu0 0
      %2624 = vmatprep.subr.bf16.mxu0 0
      %2625 = vmatpush2.bf16.msra.mxu0 0
      %2626 = vmatprep.mubr.bf16.mxu0 0
      %2627 = vmatmul.mubr.bf16.gmra.mxu0 %v2549
      %v2628 = vpop.f32.mrf.mxu0
      %v2629 = vadd.f32 0.0, %v2628
      %v2630 = vpop.f32.mrf.mxu0
      %v2631 = vpop.f32.mrf.mxu0
      %v2632 = vadd.f32 0.0, %v2631
      %v2633 = vpop.f32.mrf.mxu0
      %2634 = vdwg.mxu0
      %v2635 = vadd.f32 %v2523, %v2586
      %v2636 = vadd.f32 %v2524, %v2588
      %v2637 = vadd.f32 %v2525, %v2629
      %v2638 = vadd.f32 %v2526, %v2590
      %v2639 = vadd.f32 %v2527, %v2592
      %v2640 = vadd.f32 %v2528, %v2632
      %s2641 = scalar_lea.vmem %s3, 48
      %v2642 = vld [vmem:[%s2641] sm:$0xf]
      %v2643 = vld [vmem:[%s2641 + $0x4] sm:$0xf]
      %v2646 = vunpack.c.l.b16 %v2642
      %v2647 = vunpack.c.l.b16 %v2643
      %v2648 = vpack.c.b16 %v2647, %v2646
      %2649 = vrot.lane.b32.xlu0 %v1996, 92
      %v2650 = vpop.permute.xlu0 %2649
      %2651 = vrot.lane.b32.xlu0 %v1997, 92
      %v2652 = vpop.permute.xlu0 %2651
      %2653 = vrot.lane.b32.xlu0 %v1998, 92
      %v2654 = vpop.permute.xlu0 %2653
      %v2655 = vsel %vm1492, %v2650, %v2652
      %v2656 = vsel %vm1492, %v2652, %v2654
      %v2661 = vsel %vm2010, %v2648, 0
      %2663 = vmatprep.subr.bf16.mxu0 0
      %2664 = vmatpush1.bf16.msra.mxu0 0
      %2665 = vmatprep.subr.bf16.mxu0 0
      %2666 = vmatpush1.bf16.msra.mxu0 0
      %2667 = vmatprep.subr.bf16.mxu0 0
      %2668 = vmatpush1.bf16.msra.mxu0 0
      %2669 = vmatprep.subr.bf16.mxu0 0
      %2670 = vmatpush1.bf16.msra.mxu0 0
      %2671 = vmatprep.subr.bf16.mxu0 0
      %2672 = vmatpush1.bf16.msra.mxu0 0
      %2673 = vmatprep.subr.bf16.mxu0 0
      %2674 = vmatpush1.bf16.msra.mxu0 0
      %2675 = vmatprep.subr.bf16.mxu0 0
      %2676 = vmatpush1.bf16.msra.mxu0 0
      %2677 = vmatprep.subr.bf16.mxu0 %v2656
      %2678 = vmatpush1.bf16.msra.mxu0 %v2655
      %2679 = vmatprep.subr.bf16.mxu0 0
      %2680 = vmatpush2.bf16.msra.mxu0 0
      %2681 = vmatprep.subr.bf16.mxu0 0
      %2682 = vmatpush2.bf16.msra.mxu0 0
      %2683 = vmatprep.subr.bf16.mxu0 0
      %2684 = vmatpush2.bf16.msra.mxu0 0
      %2685 = vmatprep.subr.bf16.mxu0 0
      %2686 = vmatpush2.bf16.msra.mxu0 0
      %2687 = vmatprep.subr.bf16.mxu0 0
      %2688 = vmatpush2.bf16.msra.mxu0 0
      %2689 = vmatprep.subr.bf16.mxu0 0
      %2690 = vmatpush2.bf16.msra.mxu0 0
      %2691 = vmatprep.subr.bf16.mxu0 0
      %2692 = vmatpush2.bf16.msra.mxu0 0
      %2693 = vmatprep.subr.bf16.mxu0 0
      %2694 = vmatpush2.bf16.msra.mxu0 0
      %2695 = vmatprep.mubr.bf16.mxu0 0
      %2696 = vmatmul.mubr.bf16.gmra.mxu0 %v2661
      %v2697 = vpop.f32.mrf.mxu0
      %v2698 = vadd.f32 0.0, %v2697
      %v2699 = vpop.f32.mrf.mxu0
      %v2700 = vadd.f32 0.0, %v2699
      %v2701 = vpop.f32.mrf.mxu0
      %v2702 = vadd.f32 0.0, %v2701
      %v2703 = vpop.f32.mrf.mxu0
      %v2704 = vadd.f32 0.0, %v2703
      %2705 = vdwg.mxu0
      %2706 = vmatprep.subr.bf16.mxu0 0
      %2707 = vmatpush1.bf16.msra.mxu0 0
      %2708 = vmatprep.subr.bf16.mxu0 0
      %2709 = vmatpush1.bf16.msra.mxu0 0
      %2710 = vmatprep.subr.bf16.mxu0 0
      %2711 = vmatpush1.bf16.msra.mxu0 0
      %2712 = vmatprep.subr.bf16.mxu0 0
      %2713 = vmatpush1.bf16.msra.mxu0 0
      %2714 = vmatprep.subr.bf16.mxu0 0
      %2715 = vmatpush1.bf16.msra.mxu0 0
      %2716 = vmatprep.subr.bf16.mxu0 0
      %2717 = vmatpush1.bf16.msra.mxu0 0
      %2718 = vmatprep.subr.bf16.mxu0 0
      %2719 = vmatpush1.bf16.msra.mxu0 0
      %2720 = vmatprep.subr.bf16.mxu0 0
      %2721 = vmatpush1.bf16.msra.mxu0 %v2654
      %2722 = vmatprep.subr.bf16.mxu0 0
      %2723 = vmatpush2.bf16.msra.mxu0 0
      %2724 = vmatprep.subr.bf16.mxu0 0
      %2725 = vmatpush2.bf16.msra.mxu0 0
      %2726 = vmatprep.subr.bf16.mxu0 0
      %2727 = vmatpush2.bf16.msra.mxu0 0
      %2728 = vmatprep.subr.bf16.mxu0 0
      %2729 = vmatpush2.bf16.msra.mxu0 0
      %2730 = vmatprep.subr.bf16.mxu0 0
      %2731 = vmatpush2.bf16.msra.mxu0 0
      %2732 = vmatprep.subr.bf16.mxu0 0
      %2733 = vmatpush2.bf16.msra.mxu0 0
      %2734 = vmatprep.subr.bf16.mxu0 0
      %2735 = vmatpush2.bf16.msra.mxu0 0
      %2736 = vmatprep.subr.bf16.mxu0 0
      %2737 = vmatpush2.bf16.msra.mxu0 0
      %2738 = vmatprep.mubr.bf16.mxu0 0
      %2739 = vmatmul.mubr.bf16.gmra.mxu0 %v2661
      %v2740 = vpop.f32.mrf.mxu0
      %v2741 = vadd.f32 0.0, %v2740
      %v2742 = vpop.f32.mrf.mxu0
      %v2743 = vpop.f32.mrf.mxu0
      %v2744 = vadd.f32 0.0, %v2743
      %v2745 = vpop.f32.mrf.mxu0
      %2746 = vdwg.mxu0
      %v2747 = vadd.f32 %v2635, %v2698
      %v2748 = vadd.f32 %v2636, %v2700
      %v2749 = vadd.f32 %v2637, %v2741
      %v2750 = vadd.f32 %v2638, %v2702
      %v2751 = vadd.f32 %v2639, %v2704
      %v2752 = vadd.f32 %v2640, %v2744
      %s2753 = scalar_lea.vmem %s3, 56
      %v2754 = vld [vmem:[%s2753] sm:$0xf]
      %v2755 = vld [vmem:[%s2753 + $0x4] sm:$0xf]
      %v2758 = vunpack.c.l.b16 %v2754
      %v2759 = vunpack.c.l.b16 %v2755
      %v2760 = vpack.c.b16 %v2759, %v2758
      %2761 = vrot.lane.b32.xlu0 %v1996, 91
      %v2762 = vpop.permute.xlu0 %2761
      %2763 = vrot.lane.b32.xlu0 %v1997, 91
      %v2764 = vpop.permute.xlu0 %2763
      %2765 = vrot.lane.b32.xlu0 %v1998, 91
      %v2766 = vpop.permute.xlu0 %2765
      %v2767 = vsel %vm1629, %v2762, %v2764
      %v2768 = vsel %vm1629, %v2764, %v2766
      %v2773 = vsel %vm2010, %v2760, 0
      %2775 = vmatprep.subr.bf16.mxu0 0
      %2776 = vmatpush1.bf16.msra.mxu0 0
      %2777 = vmatprep.subr.bf16.mxu0 0
      %2778 = vmatpush1.bf16.msra.mxu0 0
      %2779 = vmatprep.subr.bf16.mxu0 0
      %2780 = vmatpush1.bf16.msra.mxu0 0
      %2781 = vmatprep.subr.bf16.mxu0 0
      %2782 = vmatpush1.bf16.msra.mxu0 0
      %2783 = vmatprep.subr.bf16.mxu0 0
      %2784 = vmatpush1.bf16.msra.mxu0 0
      %2785 = vmatprep.subr.bf16.mxu0 0
      %2786 = vmatpush1.bf16.msra.mxu0 0
      %2787 = vmatprep.subr.bf16.mxu0 0
      %2788 = vmatpush1.bf16.msra.mxu0 0
      %2789 = vmatprep.subr.bf16.mxu0 %v2768
      %2790 = vmatpush1.bf16.msra.mxu0 %v2767
      %2791 = vmatprep.subr.bf16.mxu0 0
      %2792 = vmatpush2.bf16.msra.mxu0 0
      %2793 = vmatprep.subr.bf16.mxu0 0
      %2794 = vmatpush2.bf16.msra.mxu0 0
      %2795 = vmatprep.subr.bf16.mxu0 0
      %2796 = vmatpush2.bf16.msra.mxu0 0
      %2797 = vmatprep.subr.bf16.mxu0 0
      %2798 = vmatpush2.bf16.msra.mxu0 0
      %2799 = vmatprep.subr.bf16.mxu0 0
      %2800 = vmatpush2.bf16.msra.mxu0 0
      %2801 = vmatprep.subr.bf16.mxu0 0
      %2802 = vmatpush2.bf16.msra.mxu0 0
      %2803 = vmatprep.subr.bf16.mxu0 0
      %2804 = vmatpush2.bf16.msra.mxu0 0
      %2805 = vmatprep.subr.bf16.mxu0 0
      %2806 = vmatpush2.bf16.msra.mxu0 0
      %2807 = vmatprep.mubr.bf16.mxu0 0
      %2808 = vmatmul.mubr.bf16.gmra.mxu0 %v2773
      %v2809 = vpop.f32.mrf.mxu0
      %v2810 = vadd.f32 0.0, %v2809
      %v2811 = vpop.f32.mrf.mxu0
      %v2812 = vadd.f32 0.0, %v2811
      %v2813 = vpop.f32.mrf.mxu0
      %v2814 = vadd.f32 0.0, %v2813
      %v2815 = vpop.f32.mrf.mxu0
      %v2816 = vadd.f32 0.0, %v2815
      %2817 = vdwg.mxu0
      %2818 = vmatprep.subr.bf16.mxu0 0
      %2819 = vmatpush1.bf16.msra.mxu0 0
      %2820 = vmatprep.subr.bf16.mxu0 0
      %2821 = vmatpush1.bf16.msra.mxu0 0
      %2822 = vmatprep.subr.bf16.mxu0 0
      %2823 = vmatpush1.bf16.msra.mxu0 0
      %2824 = vmatprep.subr.bf16.mxu0 0
      %2825 = vmatpush1.bf16.msra.mxu0 0
      %2826 = vmatprep.subr.bf16.mxu0 0
      %2827 = vmatpush1.bf16.msra.mxu0 0
      %2828 = vmatprep.subr.bf16.mxu0 0
      %2829 = vmatpush1.bf16.msra.mxu0 0
      %2830 = vmatprep.subr.bf16.mxu0 0
      %2831 = vmatpush1.bf16.msra.mxu0 0
      %2832 = vmatprep.subr.bf16.mxu0 0
      %2833 = vmatpush1.bf16.msra.mxu0 %v2766
      %2834 = vmatprep.subr.bf16.mxu0 0
      %2835 = vmatpush2.bf16.msra.mxu0 0
      %2836 = vmatprep.subr.bf16.mxu0 0
      %2837 = vmatpush2.bf16.msra.mxu0 0
      %2838 = vmatprep.subr.bf16.mxu0 0
      %2839 = vmatpush2.bf16.msra.mxu0 0
      %2840 = vmatprep.subr.bf16.mxu0 0
      %2841 = vmatpush2.bf16.msra.mxu0 0
      %2842 = vmatprep.subr.bf16.mxu0 0
      %2843 = vmatpush2.bf16.msra.mxu0 0
      %2844 = vmatprep.subr.bf16.mxu0 0
      %2845 = vmatpush2.bf16.msra.mxu0 0
      %2846 = vmatprep.subr.bf16.mxu0 0
      %2847 = vmatpush2.bf16.msra.mxu0 0
      %2848 = vmatprep.subr.bf16.mxu0 0
      %2849 = vmatpush2.bf16.msra.mxu0 0
      %2850 = vmatprep.mubr.bf16.mxu0 0
      %2851 = vmatmul.mubr.bf16.gmra.mxu0 %v2773
      %v2852 = vpop.f32.mrf.mxu0
      %v2853 = vadd.f32 0.0, %v2852
      %v2854 = vpop.f32.mrf.mxu0
      %v2855 = vpop.f32.mrf.mxu0
      %v2856 = vadd.f32 0.0, %v2855
      %v2857 = vpop.f32.mrf.mxu0
      %2858 = vdwg.mxu0
      %v2859 = vadd.f32 %v2747, %v2810
      %v2860 = vadd.f32 %v2748, %v2812
      %v2861 = vadd.f32 %v2749, %v2853
      %v2862 = vadd.f32 %v2750, %v2814
      %v2863 = vadd.f32 %v2751, %v2816
      %v2864 = vadd.f32 %v2752, %v2856
      %s2865 = scalar_lea.vmem %s3, 64
      %v2866 = vld [vmem:[%s2865] sm:$0xf]
      %v2867 = vld [vmem:[%s2865 + $0x4] sm:$0xf]
      %v2870 = vunpack.c.l.b16 %v2866
      %v2871 = vunpack.c.l.b16 %v2867
      %v2872 = vpack.c.b16 %v2871, %v2870
      %2873 = vrot.lane.b32.xlu0 %v1996, 90
      %v2874 = vpop.permute.xlu0 %2873
      %2875 = vrot.lane.b32.xlu0 %v1997, 90
      %v2876 = vpop.permute.xlu0 %2875
      %2877 = vrot.lane.b32.xlu0 %v1998, 90
      %v2878 = vpop.permute.xlu0 %2877
      %v2879 = vsel %vm1766, %v2874, %v2876
      %v2880 = vsel %vm1766, %v2876, %v2878
      %v2885 = vsel %vm2010, %v2872, 0
      %2887 = vmatprep.subr.bf16.mxu0 0
      %2888 = vmatpush1.bf16.msra.mxu0 0
      %2889 = vmatprep.subr.bf16.mxu0 0
      %2890 = vmatpush1.bf16.msra.mxu0 0
      %2891 = vmatprep.subr.bf16.mxu0 0
      %2892 = vmatpush1.bf16.msra.mxu0 0
      %2893 = vmatprep.subr.bf16.mxu0 0
      %2894 = vmatpush1.bf16.msra.mxu0 0
      %2895 = vmatprep.subr.bf16.mxu0 0
      %2896 = vmatpush1.bf16.msra.mxu0 0
      %2897 = vmatprep.subr.bf16.mxu0 0
      %2898 = vmatpush1.bf16.msra.mxu0 0
      %2899 = vmatprep.subr.bf16.mxu0 0
      %2900 = vmatpush1.bf16.msra.mxu0 0
      %2901 = vmatprep.subr.bf16.mxu0 %v2880
      %2902 = vmatpush1.bf16.msra.mxu0 %v2879
      %2903 = vmatprep.subr.bf16.mxu0 0
      %2904 = vmatpush2.bf16.msra.mxu0 0
      %2905 = vmatprep.subr.bf16.mxu0 0
      %2906 = vmatpush2.bf16.msra.mxu0 0
      %2907 = vmatprep.subr.bf16.mxu0 0
      %2908 = vmatpush2.bf16.msra.mxu0 0
      %2909 = vmatprep.subr.bf16.mxu0 0
      %2910 = vmatpush2.bf16.msra.mxu0 0
      %2911 = vmatprep.subr.bf16.mxu0 0
      %2912 = vmatpush2.bf16.msra.mxu0 0
      %2913 = vmatprep.subr.bf16.mxu0 0
      %2914 = vmatpush2.bf16.msra.mxu0 0
      %2915 = vmatprep.subr.bf16.mxu0 0
      %2916 = vmatpush2.bf16.msra.mxu0 0
      %2917 = vmatprep.subr.bf16.mxu0 0
      %2918 = vmatpush2.bf16.msra.mxu0 0
      %2919 = vmatprep.mubr.bf16.mxu0 0
      %2920 = vmatmul.mubr.bf16.gmra.mxu0 %v2885
      %v2921 = vpop.f32.mrf.mxu0
      %v2922 = vadd.f32 0.0, %v2921
      %v2923 = vpop.f32.mrf.mxu0
      %v2924 = vadd.f32 0.0, %v2923
      %v2925 = vpop.f32.mrf.mxu0
      %v2926 = vadd.f32 0.0, %v2925
      %v2927 = vpop.f32.mrf.mxu0
      %v2928 = vadd.f32 0.0, %v2927
      %2929 = vdwg.mxu0
      %2930 = vmatprep.subr.bf16.mxu0 0
      %2931 = vmatpush1.bf16.msra.mxu0 0
      %2932 = vmatprep.subr.bf16.mxu0 0
      %2933 = vmatpush1.bf16.msra.mxu0 0
      %2934 = vmatprep.subr.bf16.mxu0 0
      %2935 = vmatpush1.bf16.msra.mxu0 0
      %2936 = vmatprep.subr.bf16.mxu0 0
      %2937 = vmatpush1.bf16.msra.mxu0 0
      %2938 = vmatprep.subr.bf16.mxu0 0
      %2939 = vmatpush1.bf16.msra.mxu0 0
      %2940 = vmatprep.subr.bf16.mxu0 0
      %2941 = vmatpush1.bf16.msra.mxu0 0
      %2942 = vmatprep.subr.bf16.mxu0 0
      %2943 = vmatpush1.bf16.msra.mxu0 0
      %2944 = vmatprep.subr.bf16.mxu0 0
      %2945 = vmatpush1.bf16.msra.mxu0 %v2878
      %2946 = vmatprep.subr.bf16.mxu0 0
      %2947 = vmatpush2.bf16.msra.mxu0 0
      %2948 = vmatprep.subr.bf16.mxu0 0
      %2949 = vmatpush2.bf16.msra.mxu0 0
      %2950 = vmatprep.subr.bf16.mxu0 0
      %2951 = vmatpush2.bf16.msra.mxu0 0
      %2952 = vmatprep.subr.bf16.mxu0 0
      %2953 = vmatpush2.bf16.msra.mxu0 0
      %2954 = vmatprep.subr.bf16.mxu0 0
      %2955 = vmatpush2.bf16.msra.mxu0 0
      %2956 = vmatprep.subr.bf16.mxu0 0
      %2957 = vmatpush2.bf16.msra.mxu0 0
      %2958 = vmatprep.subr.bf16.mxu0 0
      %2959 = vmatpush2.bf16.msra.mxu0 0
      %2960 = vmatprep.subr.bf16.mxu0 0
      %2961 = vmatpush2.bf16.msra.mxu0 0
      %2962 = vmatprep.mubr.bf16.mxu0 0
      %2963 = vmatmul.mubr.bf16.gmra.mxu0 %v2885
      %v2964 = vpop.f32.mrf.mxu0
      %v2965 = vadd.f32 0.0, %v2964
      %v2966 = vpop.f32.mrf.mxu0
      %v2967 = vpop.f32.mrf.mxu0
      %v2968 = vadd.f32 0.0, %v2967
      %v2969 = vpop.f32.mrf.mxu0
      %2970 = vdwg.mxu0
      %v2971 = vadd.f32 %v2859, %v2922
      %v2972 = vadd.f32 %v2860, %v2924
      %v2973 = vadd.f32 %v2861, %v2965
      %v2974 = vadd.f32 %v2862, %v2926
      %v2975 = vadd.f32 %v2863, %v2928
      %v2976 = vadd.f32 %v2864, %v2968
      %v2977 = vld [vmem:[%s17] sm:$0xff]
      %v2978 = vld [vmem:[%s17 + $0x8] sm:$0xff]
      %v2979 = vld [vmem:[%s17 + $0x10] sm:$0xff]
      %v2980 = vld [vmem:[%s17 + $0x18] sm:$0xff]
      %v2981 = vld [vmem:[%s17 + $0x20] sm:$0xff]
      %v2982 = vld [vmem:[%s17 + $0x28] sm:$0xff]
      %v2983 = vld [vmem:[%s17 + $0x30] sm:$0xff]
      %v2984 = vld [vmem:[%s17 + $0x38] sm:$0xff]
      %v2985 = vld [vmem:[%s17 + $0x40] sm:$0xff]
      %v2986 = vld [vmem:[%s17 + $0x48] sm:$0xff]
      %v2987 = vld [vmem:[%s17 + $0x50] sm:$0xff]
      %v2988 = vld [vmem:[%s17 + $0x58] sm:$0xff]
      %v2989 = vld [vmem:[%s17 + $0x60] sm:$0xff]
      %v2990 = vld [vmem:[%s17 + $0x68] sm:$0xff]
      %v2991 = vld [vmem:[%s17 + $0x70] sm:$0xff]
      %v2992 = vld [vmem:[%s17 + $0x78] sm:$0xff]
      %v2993 = vld [vmem:[%s17 + $0x80] sm:$0xff]
      %v2994 = vld [vmem:[%s17 + $0x88] sm:$0xff]
      %v2995 = vld [vmem:[%s17 + $0x90] sm:$0xff]
      %v2996 = vld [vmem:[%s17 + $0x98] sm:$0xff]
      %v2997 = vld [vmem:[%s17 + $0xa0] sm:$0xff]
      %v2998 = vld [vmem:[%s17 + $0xa8] sm:$0xff]
      %v2999 = vld [vmem:[%s17 + $0xb0] sm:$0xff]
      %v3000 = vld [vmem:[%s17 + $0xb8] sm:$0xff]
      %v3001 = vld [vmem:[%s17 + $0xc0] sm:$0xff]
      %v3002 = vld [vmem:[%s17 + $0xc8] sm:$0xff]
      %v3003 = vld [vmem:[%s17 + $0xd0] sm:$0xff]
      %v3004 = vld [vmem:[%s17 + $0xd8] sm:$0xff]
      %v3005 = vld [vmem:[%s17 + $0xe0] sm:$0xff]
      %v3006 = vld [vmem:[%s17 + $0xe8] sm:$0xff]
      %v3007 = vld [vmem:[%s17 + $0xf0] sm:$0xff]
      %v3008 = vld [vmem:[%s17 + $0xf8] sm:$0xff]
      %v3009 = vld [vmem:[%s17 + $0x100] sm:$0xff]
      %v3010 = vld [vmem:[%s17 + $0x108] sm:$0xff]
      %v3011 = vld [vmem:[%s17 + $0x110] sm:$0xff]
      %v3012 = vld [vmem:[%s17 + $0x118] sm:$0xff]
      %v3013 = vld [vmem:[%s4] sm:$0xff]
      %v3014 = vld [vmem:[%s4 + $0x8] sm:$0xff]
      %3016 = vset.pattern.permute.xlu0 0
      %3017 = vperm.xlu0 %3016, %v3013
      %v3018 = vpop.permute.xlu0 %3017
      %3021 = vset.pattern.permute.xlu0 0
      %3022 = vperm.xlu0 %3021, %v3014
      %v3023 = vpop.permute.xlu0 %3022
      %vm3025 = vcmask 261120
      %v3027 = vsel %vm3025, %v2973, 0
      %v3030 = vsel %vm3025, %v2976, 0
      %3032 = vmatprep.subr.mxu0 0.0
      %3033 = vmatpush1.msra.mxu0 %v2992
      %3034 = vmatprep.subr.mxu0 0.0
      %3035 = vmatpush1.msra.mxu0 %v2991
      %3036 = vmatprep.subr.mxu0 0.0
      %3037 = vmatpush1.msra.mxu0 %v2990
      %3038 = vmatprep.subr.mxu0 0.0
      %3039 = vmatpush1.msra.mxu0 %v2989
      %3040 = vmatprep.subr.mxu0 0.0
      %3041 = vmatpush1.msra.mxu0 %v2988
      %3042 = vmatprep.subr.mxu0 0.0
      %3043 = vmatpush1.msra.mxu0 %v2987
      %3044 = vmatprep.subr.mxu0 0.0
      %3045 = vmatpush1.msra.mxu0 %v2986
      %3046 = vmatprep.subr.mxu0 0.0
      %3047 = vmatpush1.msra.mxu0 %v2985
      %3048 = vmatprep.subr.mxu0 0.0
      %3049 = vmatpush1.msra.mxu0 %v2984
      %3050 = vmatprep.subr.mxu0 0.0
      %3051 = vmatpush1.msra.mxu0 %v2983
      %3052 = vmatprep.subr.mxu0 0.0
      %3053 = vmatpush1.msra.mxu0 %v2982
      %3054 = vmatprep.subr.mxu0 0.0
      %3055 = vmatpush1.msra.mxu0 %v2981
      %3056 = vmatprep.subr.mxu0 0.0
      %3057 = vmatpush1.msra.mxu0 %v2980
      %3058 = vmatprep.subr.mxu0 0.0
      %3059 = vmatpush1.msra.mxu0 %v2979
      %3060 = vmatprep.subr.mxu0 0.0
      %3061 = vmatpush1.msra.mxu0 %v2978
      %3062 = vmatprep.subr.mxu0 0.0
      %3063 = vmatpush1.msra.mxu0 %v2977
      %3064 = vmatprep.subr.mxu0 0.0
      %3065 = vmatpush2.msra.mxu0 %v3008
      %3066 = vmatprep.subr.mxu0 0.0
      %3067 = vmatpush2.msra.mxu0 %v3007
      %3068 = vmatprep.subr.mxu0 0.0
      %3069 = vmatpush2.msra.mxu0 %v3006
      %3070 = vmatprep.subr.mxu0 0.0
      %3071 = vmatpush2.msra.mxu0 %v3005
      %3072 = vmatprep.subr.mxu0 0.0
      %3073 = vmatpush2.msra.mxu0 %v3004
      %3074 = vmatprep.subr.mxu0 0.0
      %3075 = vmatpush2.msra.mxu0 %v3003
      %3076 = vmatprep.subr.mxu0 0.0
      %3077 = vmatpush2.msra.mxu0 %v3002
      %3078 = vmatprep.subr.mxu0 0.0
      %3079 = vmatpush2.msra.mxu0 %v3001
      %3080 = vmatprep.subr.mxu0 0.0
      %3081 = vmatpush2.msra.mxu0 %v3000
      %3082 = vmatprep.subr.mxu0 0.0
      %3083 = vmatpush2.msra.mxu0 %v2999
      %3084 = vmatprep.subr.mxu0 0.0
      %3085 = vmatpush2.msra.mxu0 %v2998
      %3086 = vmatprep.subr.mxu0 0.0
      %3087 = vmatpush2.msra.mxu0 %v2997
      %3088 = vmatprep.subr.mxu0 0.0
      %3089 = vmatpush2.msra.mxu0 %v2996
      %3090 = vmatprep.subr.mxu0 0.0
      %3091 = vmatpush2.msra.mxu0 %v2995
      %3092 = vmatprep.subr.mxu0 0.0
      %3093 = vmatpush2.msra.mxu0 %v2994
      %3094 = vmatprep.subr.mxu0 0.0
      %3095 = vmatpush2.msra.mxu0 %v2993
      %3096 = vmatprep.mubr.f32.mxu0 %v2972
      %3097 = vmatmul.mubr.f32.gmra.mxu0 %v2971
      %v3098 = vpop.f32.mrf.mxu0
      %v3099 = vadd.f32 %v3018, %v3098
      %v3100 = vpop.f32.mrf.mxu0
      %3101 = vmatprep.mubr.f32.mxu0 %v2975
      %3102 = vmatmul.mubr.f32.gmra.mxu0 %v2974
      %v3103 = vpop.f32.mrf.mxu0
      %v3104 = vadd.f32 %v3023, %v3103
      %v3105 = vpop.f32.mrf.mxu0
      %3106 = vdwg.mxu0
      %3107 = vmatprep.subr.mxu0 0.0
      %3108 = vmatpush1.msra.mxu0 0.0
      %3109 = vmatprep.subr.mxu0 0.0
      %3110 = vmatpush1.msra.mxu0 0.0
      %3111 = vmatprep.subr.mxu0 0.0
      %3112 = vmatpush1.msra.mxu0 0.0
      %3113 = vmatprep.subr.mxu0 0.0
      %3114 = vmatpush1.msra.mxu0 0.0
      %3115 = vmatprep.subr.mxu0 0.0
      %3116 = vmatpush1.msra.mxu0 0.0
      %3117 = vmatprep.subr.mxu0 0.0
      %3118 = vmatpush1.msra.mxu0 0.0
      %3119 = vmatprep.subr.mxu0 0.0
      %3120 = vmatpush1.msra.mxu0 0.0
      %3121 = vmatprep.subr.mxu0 0.0
      %3122 = vmatpush1.msra.mxu0 0.0
      %3123 = vmatprep.subr.mxu0 0.0
      %3124 = vmatpush1.msra.mxu0 0.0
      %3125 = vmatprep.subr.mxu0 0.0
      %3126 = vmatpush1.msra.mxu0 0.0
      %3127 = vmatprep.subr.mxu0 0.0
      %3128 = vmatpush1.msra.mxu0 0.0
      %3129 = vmatprep.subr.mxu0 0.0
      %3130 = vmatpush1.msra.mxu0 0.0
      %3131 = vmatprep.subr.mxu0 0.0
      %3132 = vmatpush1.msra.mxu0 %v3012
      %3133 = vmatprep.subr.mxu0 0.0
      %3134 = vmatpush1.msra.mxu0 %v3011
      %3135 = vmatprep.subr.mxu0 0.0
      %3136 = vmatpush1.msra.mxu0 %v3010
      %3137 = vmatprep.subr.mxu0 0.0
      %3138 = vmatpush1.msra.mxu0 %v3009
      %3139 = vmatprep.subr.mxu0 0.0
      %3140 = vmatpush2.msra.mxu0 0.0
      %3141 = vmatprep.subr.mxu0 0.0
      %3142 = vmatpush2.msra.mxu0 0.0
      %3143 = vmatprep.subr.mxu0 0.0
      %3144 = vmatpush2.msra.mxu0 0.0
      %3145 = vmatprep.subr.mxu0 0.0
      %3146 = vmatpush2.msra.mxu0 0.0
      %3147 = vmatprep.subr.mxu0 0.0
      %3148 = vmatpush2.msra.mxu0 0.0
      %3149 = vmatprep.subr.mxu0 0.0
      %3150 = vmatpush2.msra.mxu0 0.0
      %3151 = vmatprep.subr.mxu0 0.0
      %3152 = vmatpush2.msra.mxu0 0.0
      %3153 = vmatprep.subr.mxu0 0.0
      %3154 = vmatpush2.msra.mxu0 0.0
      %3155 = vmatprep.subr.mxu0 0.0
      %3156 = vmatpush2.msra.mxu0 0.0
      %3157 = vmatprep.subr.mxu0 0.0
      %3158 = vmatpush2.msra.mxu0 0.0
      %3159 = vmatprep.subr.mxu0 0.0
      %3160 = vmatpush2.msra.mxu0 0.0
      %3161 = vmatprep.subr.mxu0 0.0
      %3162 = vmatpush2.msra.mxu0 0.0
      %3163 = vmatprep.subr.mxu0 0.0
      %3164 = vmatpush2.msra.mxu0 0.0
      %3165 = vmatprep.subr.mxu0 0.0
      %3166 = vmatpush2.msra.mxu0 0.0
      %3167 = vmatprep.subr.mxu0 0.0
      %3168 = vmatpush2.msra.mxu0 0.0
      %3169 = vmatprep.subr.mxu0 0.0
      %3170 = vmatpush2.msra.mxu0 0.0
      %3171 = vmatprep.mubr.f32.mxu0 0.0
      %3172 = vmatmul.mubr.f32.gmra.mxu0 %v3027
      %v3173 = vpop.f32.mrf.mxu0
      %v3174 = vadd.f32 %v3099, %v3173
      %v3175 = vpop.f32.mrf.mxu0
      %3176 = vmatprep.mubr.f32.mxu0 0.0
      %3177 = vmatmul.mubr.f32.gmra.mxu0 %v3030
      %v3178 = vpop.f32.mrf.mxu0
      %v3179 = vadd.f32 %v3104, %v3178
      %v3180 = vpop.f32.mrf.mxu0
      %3181 = vdwg.mxu0
      %vm3182 = vcmp.ge.f32.partialorder %v3174, 0.0
      %vm3183 = vcmp.ge.f32.partialorder %v3179, 0.0
      %v3184 = vmul.f32 %v3174, 0.01
      %v3185 = vmul.f32 %v3179, 0.01
      %v3186 = vsel %vm3182, %v3174, %v3184
      %v3187 = vsel %vm3183, %v3179, %v3185
      %v3188 = vsel %vm647, 1, 0
      %v3189 = vlaneseq
      %v3190 = vshrl.u32 %v3189, 7
      %v3191 = vsub.s32 0, %v3190
      %v3192 = vrot.slane %v3188, %v3191
      %vm3193 = vcmp.eq.s32.totalorder %v3192, 1
      %v3194 = vsel %vm3193, %v3186, 0.0
      %v3195 = vsel %vm3193, %v3187, 0.0
      %v3196 = vpack.c.bf16 %v3195, %v3194
      %v3198 = vunpack.c.l.b16 %v3196
      %v3199 = vunpack.c.h.b16 %v3196
      %v3200 = vpack.c.b16 %v3198, %v3198
      %v3201 = vpack.c.b16 %v3199, %v3199
      %3202 = vrot.lane.b32.xlu0 %v3200, 11
      %v3203 = vpop.permute.xlu0 %3202
      %3204 = vrot.lane.b32.xlu0 %v3201, 11
      %v3205 = vpop.permute.xlu0 %3204
      %vm3208 = vcmask 740440
      %3209 = vst.msk [vmem:[#allocation3] sm:$0xf] %vm3208, %v3203
      %3210 = vst.msk [vmem:[#allocation3 + $0x4] sm:$0xf] %vm3208, %v3205
      %v3211 = vld [vmem:[%s5] sm:$0xf]
      %v3212 = vld [vmem:[%s5 + $0x4] sm:$0xf]
      %v3213 = vld [vmem:[%s5 + $0x8] sm:$0xf]
      %v3214 = vld [vmem:[%s5 + $0xc] sm:$0xf]
      %v3215 = vld [vmem:[#allocation3] sm:$0xf]
      %v3216 = vld [vmem:[#allocation3 + $0x4] sm:$0xf]
      %s3217 = scalar_lea.vmem %s5, 16
      %v3218 = vld [vmem:[%s3217] sm:$0xf]
      %v3219 = vld [vmem:[%s3217 + $0x4] sm:$0xf]
      %v3220 = vld [vmem:[%s3217 + $0x8] sm:$0xf]
      %v3221 = vld [vmem:[%s3217 + $0xc] sm:$0xf]
      %v3226 = vunpack.c.l.b16 %v3218
      %v3227 = vunpack.c.l.b16 %v3219
      %v3228 = vunpack.c.l.b16 %v3220
      %v3229 = vunpack.c.l.b16 %v3221
      %v3230 = vpack.c.b16 %v3227, %v3226
      %v3231 = vpack.c.b16 %v3229, %v3228
      %v3234 = vunpack.c.l.b16 %v3215
      %v3235 = vunpack.c.l.b16 %v3216
      %v3236 = vpack.c.b16 %v3235, %v3234
      %3237 = vrot.lane.b32.xlu0 %v3236, 127
      %v3238 = vpop.permute.xlu0 %3237
      %v3241 = vsel %vm2010, %v3230, 0
      %v3244 = vsel %vm2010, %v3231, 0
      %3246 = vmatprep.subr.bf16.mxu0 0
      %3247 = vmatpush1.bf16.msra.mxu0 0
      %3248 = vmatprep.subr.bf16.mxu0 0
      %3249 = vmatpush1.bf16.msra.mxu0 0
      %3250 = vmatprep.subr.bf16.mxu0 0
      %3251 = vmatpush1.bf16.msra.mxu0 0
      %3252 = vmatprep.subr.bf16.mxu0 0
      %3253 = vmatpush1.bf16.msra.mxu0 0
      %3254 = vmatprep.subr.bf16.mxu0 0
      %3255 = vmatpush1.bf16.msra.mxu0 0
      %3256 = vmatprep.subr.bf16.mxu0 0
      %3257 = vmatpush1.bf16.msra.mxu0 0
      %3258 = vmatprep.subr.bf16.mxu0 0
      %3259 = vmatpush1.bf16.msra.mxu0 0
      %3260 = vmatprep.subr.bf16.mxu0 0
      %3261 = vmatpush1.bf16.msra.mxu0 %v3238
      %3262 = vmatprep.subr.bf16.mxu0 0
      %3263 = vmatpush2.bf16.msra.mxu0 0
      %3264 = vmatprep.subr.bf16.mxu0 0
      %3265 = vmatpush2.bf16.msra.mxu0 0
      %3266 = vmatprep.subr.bf16.mxu0 0
      %3267 = vmatpush2.bf16.msra.mxu0 0
      %3268 = vmatprep.subr.bf16.mxu0 0
      %3269 = vmatpush2.bf16.msra.mxu0 0
      %3270 = vmatprep.subr.bf16.mxu0 0
      %3271 = vmatpush2.bf16.msra.mxu0 0
      %3272 = vmatprep.subr.bf16.mxu0 0
      %3273 = vmatpush2.bf16.msra.mxu0 0
      %3274 = vmatprep.subr.bf16.mxu0 0
      %3275 = vmatpush2.bf16.msra.mxu0 0
      %3276 = vmatprep.subr.bf16.mxu0 0
      %3277 = vmatpush2.bf16.msra.mxu0 0
      %3278 = vmatprep.mubr.bf16.mxu0 0
      %3279 = vmatmul.mubr.bf16.gmra.mxu0 %v3241
      %v3280 = vpop.f32.mrf.mxu0
      %v3281 = vadd.f32 0.0, %v3280
      %v3282 = vpop.f32.mrf.mxu0
      %v3283 = vpop.f32.mrf.mxu0
      %v3284 = vadd.f32 0.0, %v3283
      %v3285 = vpop.f32.mrf.mxu0
      %3286 = vmatprep.mubr.bf16.mxu0 0
      %3287 = vmatmul.mubr.bf16.gmra.mxu0 %v3244
      %v3288 = vpop.f32.mrf.mxu0
      %v3289 = vadd.f32 0.0, %v3288
      %v3290 = vpop.f32.mrf.mxu0
      %v3291 = vpop.f32.mrf.mxu0
      %v3292 = vadd.f32 0.0, %v3291
      %v3293 = vpop.f32.mrf.mxu0
      %3294 = vdwg.mxu0
      %v3299 = vunpack.c.l.b16 %v3211
      %v3300 = vunpack.c.l.b16 %v3212
      %v3301 = vunpack.c.l.b16 %v3213
      %v3302 = vunpack.c.l.b16 %v3214
      %v3303 = vpack.c.b16 %v3300, %v3299
      %v3304 = vpack.c.b16 %v3302, %v3301
      %v3307 = vsel %vm2010, %v3303, 0
      %v3310 = vsel %vm2010, %v3304, 0
      %3312 = vmatprep.subr.bf16.mxu0 0
      %3313 = vmatpush1.bf16.msra.mxu0 0
      %3314 = vmatprep.subr.bf16.mxu0 0
      %3315 = vmatpush1.bf16.msra.mxu0 0
      %3316 = vmatprep.subr.bf16.mxu0 0
      %3317 = vmatpush1.bf16.msra.mxu0 0
      %3318 = vmatprep.subr.bf16.mxu0 0
      %3319 = vmatpush1.bf16.msra.mxu0 0
      %3320 = vmatprep.subr.bf16.mxu0 0
      %3321 = vmatpush1.bf16.msra.mxu0 0
      %3322 = vmatprep.subr.bf16.mxu0 0
      %3323 = vmatpush1.bf16.msra.mxu0 0
      %3324 = vmatprep.subr.bf16.mxu0 0
      %3325 = vmatpush1.bf16.msra.mxu0 0
      %3326 = vmatprep.subr.bf16.mxu0 0
      %3327 = vmatpush1.bf16.msra.mxu0 %v3236
      %3328 = vmatprep.subr.bf16.mxu0 0
      %3329 = vmatpush2.bf16.msra.mxu0 0
      %3330 = vmatprep.subr.bf16.mxu0 0
      %3331 = vmatpush2.bf16.msra.mxu0 0
      %3332 = vmatprep.subr.bf16.mxu0 0
      %3333 = vmatpush2.bf16.msra.mxu0 0
      %3334 = vmatprep.subr.bf16.mxu0 0
      %3335 = vmatpush2.bf16.msra.mxu0 0
      %3336 = vmatprep.subr.bf16.mxu0 0
      %3337 = vmatpush2.bf16.msra.mxu0 0
      %3338 = vmatprep.subr.bf16.mxu0 0
      %3339 = vmatpush2.bf16.msra.mxu0 0
      %3340 = vmatprep.subr.bf16.mxu0 0
      %3341 = vmatpush2.bf16.msra.mxu0 0
      %3342 = vmatprep.subr.bf16.mxu0 0
      %3343 = vmatpush2.bf16.msra.mxu0 0
      %3344 = vmatprep.mubr.bf16.mxu0 0
      %3345 = vmatmul.mubr.bf16.gmra.mxu0 %v3307
      %v3346 = vpop.f32.mrf.mxu0
      %v3347 = vadd.f32 %v3281, %v3346
      %v3348 = vpop.f32.mrf.mxu0
      %v3349 = vpop.f32.mrf.mxu0
      %v3350 = vadd.f32 %v3284, %v3349
      %v3351 = vpop.f32.mrf.mxu0
      %3352 = vmatprep.mubr.bf16.mxu0 0
      %3353 = vmatmul.mubr.bf16.gmra.mxu0 %v3310
      %v3354 = vpop.f32.mrf.mxu0
      %v3355 = vadd.f32 %v3289, %v3354
      %v3356 = vpop.f32.mrf.mxu0
      %v3357 = vpop.f32.mrf.mxu0
      %v3358 = vadd.f32 %v3292, %v3357
      %v3359 = vpop.f32.mrf.mxu0
      %3360 = vdwg.mxu0
      %s3361 = scalar_lea.vmem %s5, 32
      %v3362 = vld [vmem:[%s3361] sm:$0xf]
      %v3363 = vld [vmem:[%s3361 + $0x4] sm:$0xf]
      %v3364 = vld [vmem:[%s3361 + $0x8] sm:$0xf]
      %v3365 = vld [vmem:[%s3361 + $0xc] sm:$0xf]
      %v3370 = vunpack.c.l.b16 %v3362
      %v3371 = vunpack.c.l.b16 %v3363
      %v3372 = vunpack.c.l.b16 %v3364
      %v3373 = vunpack.c.l.b16 %v3365
      %v3374 = vpack.c.b16 %v3371, %v3370
      %v3375 = vpack.c.b16 %v3373, %v3372
      %3376 = vrot.lane.b32.xlu0 %v3236, 126
      %v3377 = vpop.permute.xlu0 %3376
      %v3380 = vsel %vm2010, %v3374, 0
      %v3383 = vsel %vm2010, %v3375, 0
      %3385 = vmatprep.subr.bf16.mxu0 0
      %3386 = vmatpush1.bf16.msra.mxu0 0
      %3387 = vmatprep.subr.bf16.mxu0 0
      %3388 = vmatpush1.bf16.msra.mxu0 0
      %3389 = vmatprep.subr.bf16.mxu0 0
      %3390 = vmatpush1.bf16.msra.mxu0 0
      %3391 = vmatprep.subr.bf16.mxu0 0
      %3392 = vmatpush1.bf16.msra.mxu0 0
      %3393 = vmatprep.subr.bf16.mxu0 0
      %3394 = vmatpush1.bf16.msra.mxu0 0
      %3395 = vmatprep.subr.bf16.mxu0 0
      %3396 = vmatpush1.bf16.msra.mxu0 0
      %3397 = vmatprep.subr.bf16.mxu0 0
      %3398 = vmatpush1.bf16.msra.mxu0 0
      %3399 = vmatprep.subr.bf16.mxu0 0
      %3400 = vmatpush1.bf16.msra.mxu0 %v3377
      %3401 = vmatprep.subr.bf16.mxu0 0
      %3402 = vmatpush2.bf16.msra.mxu0 0
      %3403 = vmatprep.subr.bf16.mxu0 0
      %3404 = vmatpush2.bf16.msra.mxu0 0
      %3405 = vmatprep.subr.bf16.mxu0 0
      %3406 = vmatpush2.bf16.msra.mxu0 0
      %3407 = vmatprep.subr.bf16.mxu0 0
      %3408 = vmatpush2.bf16.msra.mxu0 0
      %3409 = vmatprep.subr.bf16.mxu0 0
      %3410 = vmatpush2.bf16.msra.mxu0 0
      %3411 = vmatprep.subr.bf16.mxu0 0
      %3412 = vmatpush2.bf16.msra.mxu0 0
      %3413 = vmatprep.subr.bf16.mxu0 0
      %3414 = vmatpush2.bf16.msra.mxu0 0
      %3415 = vmatprep.subr.bf16.mxu0 0
      %3416 = vmatpush2.bf16.msra.mxu0 0
      %3417 = vmatprep.mubr.bf16.mxu0 0
      %3418 = vmatmul.mubr.bf16.gmra.mxu0 %v3380
      %v3419 = vpop.f32.mrf.mxu0
      %v3420 = vadd.f32 0.0, %v3419
      %v3421 = vpop.f32.mrf.mxu0
      %v3422 = vpop.f32.mrf.mxu0
      %v3423 = vadd.f32 0.0, %v3422
      %v3424 = vpop.f32.mrf.mxu0
      %3425 = vmatprep.mubr.bf16.mxu0 0
      %3426 = vmatmul.mubr.bf16.gmra.mxu0 %v3383
      %v3427 = vpop.f32.mrf.mxu0
      %v3428 = vadd.f32 0.0, %v3427
      %v3429 = vpop.f32.mrf.mxu0
      %v3430 = vpop.f32.mrf.mxu0
      %v3431 = vadd.f32 0.0, %v3430
      %v3432 = vpop.f32.mrf.mxu0
      %3433 = vdwg.mxu0
      %v3434 = vadd.f32 %v3347, %v3420
      %v3435 = vadd.f32 %v3350, %v3423
      %v3436 = vadd.f32 %v3355, %v3428
      %v3437 = vadd.f32 %v3358, %v3431
      %s3438 = scalar_lea.vmem %s5, 48
      %v3439 = vld [vmem:[%s3438] sm:$0xf]
      %v3440 = vld [vmem:[%s3438 + $0x4] sm:$0xf]
      %v3441 = vld [vmem:[%s3438 + $0x8] sm:$0xf]
      %v3442 = vld [vmem:[%s3438 + $0xc] sm:$0xf]
      %v3447 = vunpack.c.l.b16 %v3439
      %v3448 = vunpack.c.l.b16 %v3440
      %v3449 = vunpack.c.l.b16 %v3441
      %v3450 = vunpack.c.l.b16 %v3442
      %v3451 = vpack.c.b16 %v3448, %v3447
      %v3452 = vpack.c.b16 %v3450, %v3449
      %3453 = vrot.lane.b32.xlu0 %v3236, 118
      %v3454 = vpop.permute.xlu0 %3453
      %v3457 = vsel %vm2010, %v3451, 0
      %v3460 = vsel %vm2010, %v3452, 0
      %3462 = vmatprep.subr.bf16.mxu0 0
      %3463 = vmatpush1.bf16.msra.mxu0 0
      %3464 = vmatprep.subr.bf16.mxu0 0
      %3465 = vmatpush1.bf16.msra.mxu0 0
      %3466 = vmatprep.subr.bf16.mxu0 0
      %3467 = vmatpush1.bf16.msra.mxu0 0
      %3468 = vmatprep.subr.bf16.mxu0 0
      %3469 = vmatpush1.bf16.msra.mxu0 0
      %3470 = vmatprep.subr.bf16.mxu0 0
      %3471 = vmatpush1.bf16.msra.mxu0 0
      %3472 = vmatprep.subr.bf16.mxu0 0
      %3473 = vmatpush1.bf16.msra.mxu0 0
      %3474 = vmatprep.subr.bf16.mxu0 0
      %3475 = vmatpush1.bf16.msra.mxu0 0
      %3476 = vmatprep.subr.bf16.mxu0 0
      %3477 = vmatpush1.bf16.msra.mxu0 %v3454
      %3478 = vmatprep.subr.bf16.mxu0 0
      %3479 = vmatpush2.bf16.msra.mxu0 0
      %3480 = vmatprep.subr.bf16.mxu0 0
      %3481 = vmatpush2.bf16.msra.mxu0 0
      %3482 = vmatprep.subr.bf16.mxu0 0
      %3483 = vmatpush2.bf16.msra.mxu0 0
      %3484 = vmatprep.subr.bf16.mxu0 0
      %3485 = vmatpush2.bf16.msra.mxu0 0
      %3486 = vmatprep.subr.bf16.mxu0 0
      %3487 = vmatpush2.bf16.msra.mxu0 0
      %3488 = vmatprep.subr.bf16.mxu0 0
      %3489 = vmatpush2.bf16.msra.mxu0 0
      %3490 = vmatprep.subr.bf16.mxu0 0
      %3491 = vmatpush2.bf16.msra.mxu0 0
      %3492 = vmatprep.subr.bf16.mxu0 0
      %3493 = vmatpush2.bf16.msra.mxu0 0
      %3494 = vmatprep.mubr.bf16.mxu0 0
      %3495 = vmatmul.mubr.bf16.gmra.mxu0 %v3457
      %v3496 = vpop.f32.mrf.mxu0
      %v3497 = vadd.f32 0.0, %v3496
      %v3498 = vpop.f32.mrf.mxu0
      %v3499 = vpop.f32.mrf.mxu0
      %v3500 = vadd.f32 0.0, %v3499
      %v3501 = vpop.f32.mrf.mxu0
      %3502 = vmatprep.mubr.bf16.mxu0 0
      %3503 = vmatmul.mubr.bf16.gmra.mxu0 %v3460
      %v3504 = vpop.f32.mrf.mxu0
      %v3505 = vadd.f32 0.0, %v3504
      %v3506 = vpop.f32.mrf.mxu0
      %v3507 = vpop.f32.mrf.mxu0
      %v3508 = vadd.f32 0.0, %v3507
      %v3509 = vpop.f32.mrf.mxu0
      %3510 = vdwg.mxu0
      %v3511 = vadd.f32 %v3434, %v3497
      %v3512 = vadd.f32 %v3435, %v3500
      %v3513 = vadd.f32 %v3436, %v3505
      %v3514 = vadd.f32 %v3437, %v3508
      %s3515 = scalar_lea.vmem %s5, 64
      %v3516 = vld [vmem:[%s3515] sm:$0xf]
      %v3517 = vld [vmem:[%s3515 + $0x4] sm:$0xf]
      %v3518 = vld [vmem:[%s3515 + $0x8] sm:$0xf]
      %v3519 = vld [vmem:[%s3515 + $0xc] sm:$0xf]
      %v3524 = vunpack.c.l.b16 %v3516
      %v3525 = vunpack.c.l.b16 %v3517
      %v3526 = vunpack.c.l.b16 %v3518
      %v3527 = vunpack.c.l.b16 %v3519
      %v3528 = vpack.c.b16 %v3525, %v3524
      %v3529 = vpack.c.b16 %v3527, %v3526
      %3530 = vrot.lane.b32.xlu0 %v3236, 117
      %v3531 = vpop.permute.xlu0 %3530
      %v3534 = vsel %vm2010, %v3528, 0
      %v3537 = vsel %vm2010, %v3529, 0
      %3539 = vmatprep.subr.bf16.mxu0 0
      %3540 = vmatpush1.bf16.msra.mxu0 0
      %3541 = vmatprep.subr.bf16.mxu0 0
      %3542 = vmatpush1.bf16.msra.mxu0 0
      %3543 = vmatprep.subr.bf16.mxu0 0
      %3544 = vmatpush1.bf16.msra.mxu0 0
      %3545 = vmatprep.subr.bf16.mxu0 0
      %3546 = vmatpush1.bf16.msra.mxu0 0
      %3547 = vmatprep.subr.bf16.mxu0 0
      %3548 = vmatpush1.bf16.msra.mxu0 0
      %3549 = vmatprep.subr.bf16.mxu0 0
      %3550 = vmatpush1.bf16.msra.mxu0 0
      %3551 = vmatprep.subr.bf16.mxu0 0
      %3552 = vmatpush1.bf16.msra.mxu0 0
      %3553 = vmatprep.subr.bf16.mxu0 0
      %3554 = vmatpush1.bf16.msra.mxu0 %v3531
      %3555 = vmatprep.subr.bf16.mxu0 0
      %3556 = vmatpush2.bf16.msra.mxu0 0
      %3557 = vmatprep.subr.bf16.mxu0 0
      %3558 = vmatpush2.bf16.msra.mxu0 0
      %3559 = vmatprep.subr.bf16.mxu0 0
      %3560 = vmatpush2.bf16.msra.mxu0 0
      %3561 = vmatprep.subr.bf16.mxu0 0
      %3562 = vmatpush2.bf16.msra.mxu0 0
      %3563 = vmatprep.subr.bf16.mxu0 0
      %3564 = vmatpush2.bf16.msra.mxu0 0
      %3565 = vmatprep.subr.bf16.mxu0 0
      %3566 = vmatpush2.bf16.msra.mxu0 0
      %3567 = vmatprep.subr.bf16.mxu0 0
      %3568 = vmatpush2.bf16.msra.mxu0 0
      %3569 = vmatprep.subr.bf16.mxu0 0
      %3570 = vmatpush2.bf16.msra.mxu0 0
      %3571 = vmatprep.mubr.bf16.mxu0 0
      %3572 = vmatmul.mubr.bf16.gmra.mxu0 %v3534
      %v3573 = vpop.f32.mrf.mxu0
      %v3574 = vadd.f32 0.0, %v3573
      %v3575 = vpop.f32.mrf.mxu0
      %v3576 = vpop.f32.mrf.mxu0
      %v3577 = vadd.f32 0.0, %v3576
      %v3578 = vpop.f32.mrf.mxu0
      %3579 = vmatprep.mubr.bf16.mxu0 0
      %3580 = vmatmul.mubr.bf16.gmra.mxu0 %v3537
      %v3581 = vpop.f32.mrf.mxu0
      %v3582 = vadd.f32 0.0, %v3581
      %v3583 = vpop.f32.mrf.mxu0
      %v3584 = vpop.f32.mrf.mxu0
      %v3585 = vadd.f32 0.0, %v3584
      %v3586 = vpop.f32.mrf.mxu0
      %3587 = vdwg.mxu0
      %v3588 = vadd.f32 %v3511, %v3574
      %v3589 = vadd.f32 %v3512, %v3577
      %v3590 = vadd.f32 %v3513, %v3582
      %v3591 = vadd.f32 %v3514, %v3585
      %s3592 = scalar_lea.vmem %s5, 80
      %v3593 = vld [vmem:[%s3592] sm:$0xf]
      %v3594 = vld [vmem:[%s3592 + $0x4] sm:$0xf]
      %v3595 = vld [vmem:[%s3592 + $0x8] sm:$0xf]
      %v3596 = vld [vmem:[%s3592 + $0xc] sm:$0xf]
      %v3601 = vunpack.c.l.b16 %v3593
      %v3602 = vunpack.c.l.b16 %v3594
      %v3603 = vunpack.c.l.b16 %v3595
      %v3604 = vunpack.c.l.b16 %v3596
      %v3605 = vpack.c.b16 %v3602, %v3601
      %v3606 = vpack.c.b16 %v3604, %v3603
      %3607 = vrot.lane.b32.xlu0 %v3236, 116
      %v3608 = vpop.permute.xlu0 %3607
      %v3611 = vsel %vm2010, %v3605, 0
      %v3614 = vsel %vm2010, %v3606, 0
      %3616 = vmatprep.subr.bf16.mxu0 0
      %3617 = vmatpush1.bf16.msra.mxu0 0
      %3618 = vmatprep.subr.bf16.mxu0 0
      %3619 = vmatpush1.bf16.msra.mxu0 0
      %3620 = vmatprep.subr.bf16.mxu0 0
      %3621 = vmatpush1.bf16.msra.mxu0 0
      %3622 = vmatprep.subr.bf16.mxu0 0
      %3623 = vmatpush1.bf16.msra.mxu0 0
      %3624 = vmatprep.subr.bf16.mxu0 0
      %3625 = vmatpush1.bf16.msra.mxu0 0
      %3626 = vmatprep.subr.bf16.mxu0 0
      %3627 = vmatpush1.bf16.msra.mxu0 0
      %3628 = vmatprep.subr.bf16.mxu0 0
      %3629 = vmatpush1.bf16.msra.mxu0 0
      %3630 = vmatprep.subr.bf16.mxu0 0
      %3631 = vmatpush1.bf16.msra.mxu0 %v3608
      %3632 = vmatprep.subr.bf16.mxu0 0
      %3633 = vmatpush2.bf16.msra.mxu0 0
      %3634 = vmatprep.subr.bf16.mxu0 0
      %3635 = vmatpush2.bf16.msra.mxu0 0
      %3636 = vmatprep.subr.bf16.mxu0 0
      %3637 = vmatpush2.bf16.msra.mxu0 0
      %3638 = vmatprep.subr.bf16.mxu0 0
      %3639 = vmatpush2.bf16.msra.mxu0 0
      %3640 = vmatprep.subr.bf16.mxu0 0
      %3641 = vmatpush2.bf16.msra.mxu0 0
      %3642 = vmatprep.subr.bf16.mxu0 0
      %3643 = vmatpush2.bf16.msra.mxu0 0
      %3644 = vmatprep.subr.bf16.mxu0 0
      %3645 = vmatpush2.bf16.msra.mxu0 0
      %3646 = vmatprep.subr.bf16.mxu0 0
      %3647 = vmatpush2.bf16.msra.mxu0 0
      %3648 = vmatprep.mubr.bf16.mxu0 0
      %3649 = vmatmul.mubr.bf16.gmra.mxu0 %v3611
      %v3650 = vpop.f32.mrf.mxu0
      %v3651 = vadd.f32 0.0, %v3650
      %v3652 = vpop.f32.mrf.mxu0
      %v3653 = vpop.f32.mrf.mxu0
      %v3654 = vadd.f32 0.0, %v3653
      %v3655 = vpop.f32.mrf.mxu0
      %3656 = vmatprep.mubr.bf16.mxu0 0
      %3657 = vmatmul.mubr.bf16.gmra.mxu0 %v3614
      %v3658 = vpop.f32.mrf.mxu0
      %v3659 = vadd.f32 0.0, %v3658
      %v3660 = vpop.f32.mrf.mxu0
      %v3661 = vpop.f32.mrf.mxu0
      %v3662 = vadd.f32 0.0, %v3661
      %v3663 = vpop.f32.mrf.mxu0
      %3664 = vdwg.mxu0
      %v3665 = vadd.f32 %v3588, %v3651
      %v3666 = vadd.f32 %v3589, %v3654
      %v3667 = vadd.f32 %v3590, %v3659
      %v3668 = vadd.f32 %v3591, %v3662
      %s3669 = scalar_lea.vmem %s5, 96
      %v3670 = vld [vmem:[%s3669] sm:$0xf]
      %v3671 = vld [vmem:[%s3669 + $0x4] sm:$0xf]
      %v3672 = vld [vmem:[%s3669 + $0x8] sm:$0xf]
      %v3673 = vld [vmem:[%s3669 + $0xc] sm:$0xf]
      %v3678 = vunpack.c.l.b16 %v3670
      %v3679 = vunpack.c.l.b16 %v3671
      %v3680 = vunpack.c.l.b16 %v3672
      %v3681 = vunpack.c.l.b16 %v3673
      %v3682 = vpack.c.b16 %v3679, %v3678
      %v3683 = vpack.c.b16 %v3681, %v3680
      %3684 = vrot.lane.b32.xlu0 %v3236, 108
      %v3685 = vpop.permute.xlu0 %3684
      %v3688 = vsel %vm2010, %v3682, 0
      %v3691 = vsel %vm2010, %v3683, 0
      %3693 = vmatprep.subr.bf16.mxu0 0
      %3694 = vmatpush1.bf16.msra.mxu0 0
      %3695 = vmatprep.subr.bf16.mxu0 0
      %3696 = vmatpush1.bf16.msra.mxu0 0
      %3697 = vmatprep.subr.bf16.mxu0 0
      %3698 = vmatpush1.bf16.msra.mxu0 0
      %3699 = vmatprep.subr.bf16.mxu0 0
      %3700 = vmatpush1.bf16.msra.mxu0 0
      %3701 = vmatprep.subr.bf16.mxu0 0
      %3702 = vmatpush1.bf16.msra.mxu0 0
      %3703 = vmatprep.subr.bf16.mxu0 0
      %3704 = vmatpush1.bf16.msra.mxu0 0
      %3705 = vmatprep.subr.bf16.mxu0 0
      %3706 = vmatpush1.bf16.msra.mxu0 0
      %3707 = vmatprep.subr.bf16.mxu0 0
      %3708 = vmatpush1.bf16.msra.mxu0 %v3685
      %3709 = vmatprep.subr.bf16.mxu0 0
      %3710 = vmatpush2.bf16.msra.mxu0 0
      %3711 = vmatprep.subr.bf16.mxu0 0
      %3712 = vmatpush2.bf16.msra.mxu0 0
      %3713 = vmatprep.subr.bf16.mxu0 0
      %3714 = vmatpush2.bf16.msra.mxu0 0
      %3715 = vmatprep.subr.bf16.mxu0 0
      %3716 = vmatpush2.bf16.msra.mxu0 0
      %3717 = vmatprep.subr.bf16.mxu0 0
      %3718 = vmatpush2.bf16.msra.mxu0 0
      %3719 = vmatprep.subr.bf16.mxu0 0
      %3720 = vmatpush2.bf16.msra.mxu0 0
      %3721 = vmatprep.subr.bf16.mxu0 0
      %3722 = vmatpush2.bf16.msra.mxu0 0
      %3723 = vmatprep.subr.bf16.mxu0 0
      %3724 = vmatpush2.bf16.msra.mxu0 0
      %3725 = vmatprep.mubr.bf16.mxu0 0
      %3726 = vmatmul.mubr.bf16.gmra.mxu0 %v3688
      %v3727 = vpop.f32.mrf.mxu0
      %v3728 = vadd.f32 0.0, %v3727
      %v3729 = vpop.f32.mrf.mxu0
      %v3730 = vpop.f32.mrf.mxu0
      %v3731 = vadd.f32 0.0, %v3730
      %v3732 = vpop.f32.mrf.mxu0
      %3733 = vmatprep.mubr.bf16.mxu0 0
      %3734 = vmatmul.mubr.bf16.gmra.mxu0 %v3691
      %v3735 = vpop.f32.mrf.mxu0
      %v3736 = vadd.f32 0.0, %v3735
      %v3737 = vpop.f32.mrf.mxu0
      %v3738 = vpop.f32.mrf.mxu0
      %v3739 = vadd.f32 0.0, %v3738
      %v3740 = vpop.f32.mrf.mxu0
      %3741 = vdwg.mxu0
      %v3742 = vadd.f32 %v3665, %v3728
      %v3743 = vadd.f32 %v3666, %v3731
      %v3744 = vadd.f32 %v3667, %v3736
      %v3745 = vadd.f32 %v3668, %v3739
      %s3746 = scalar_lea.vmem %s5, 112
      %v3747 = vld [vmem:[%s3746] sm:$0xf]
      %v3748 = vld [vmem:[%s3746 + $0x4] sm:$0xf]
      %v3749 = vld [vmem:[%s3746 + $0x8] sm:$0xf]
      %v3750 = vld [vmem:[%s3746 + $0xc] sm:$0xf]
      %v3755 = vunpack.c.l.b16 %v3747
      %v3756 = vunpack.c.l.b16 %v3748
      %v3757 = vunpack.c.l.b16 %v3749
      %v3758 = vunpack.c.l.b16 %v3750
      %v3759 = vpack.c.b16 %v3756, %v3755
      %v3760 = vpack.c.b16 %v3758, %v3757
      %3761 = vrot.lane.b32.xlu0 %v3236, 107
      %v3762 = vpop.permute.xlu0 %3761
      %v3765 = vsel %vm2010, %v3759, 0
      %v3768 = vsel %vm2010, %v3760, 0
      %3770 = vmatprep.subr.bf16.mxu0 0
      %3771 = vmatpush1.bf16.msra.mxu0 0
      %3772 = vmatprep.subr.bf16.mxu0 0
      %3773 = vmatpush1.bf16.msra.mxu0 0
      %3774 = vmatprep.subr.bf16.mxu0 0
      %3775 = vmatpush1.bf16.msra.mxu0 0
      %3776 = vmatprep.subr.bf16.mxu0 0
      %3777 = vmatpush1.bf16.msra.mxu0 0
      %3778 = vmatprep.subr.bf16.mxu0 0
      %3779 = vmatpush1.bf16.msra.mxu0 0
      %3780 = vmatprep.subr.bf16.mxu0 0
      %3781 = vmatpush1.bf16.msra.mxu0 0
      %3782 = vmatprep.subr.bf16.mxu0 0
      %3783 = vmatpush1.bf16.msra.mxu0 0
      %3784 = vmatprep.subr.bf16.mxu0 0
      %3785 = vmatpush1.bf16.msra.mxu0 %v3762
      %3786 = vmatprep.subr.bf16.mxu0 0
      %3787 = vmatpush2.bf16.msra.mxu0 0
      %3788 = vmatprep.subr.bf16.mxu0 0
      %3789 = vmatpush2.bf16.msra.mxu0 0
      %3790 = vmatprep.subr.bf16.mxu0 0
      %3791 = vmatpush2.bf16.msra.mxu0 0
      %3792 = vmatprep.subr.bf16.mxu0 0
      %3793 = vmatpush2.bf16.msra.mxu0 0
      %3794 = vmatprep.subr.bf16.mxu0 0
      %3795 = vmatpush2.bf16.msra.mxu0 0
      %3796 = vmatprep.subr.bf16.mxu0 0
      %3797 = vmatpush2.bf16.msra.mxu0 0
      %3798 = vmatprep.subr.bf16.mxu0 0
      %3799 = vmatpush2.bf16.msra.mxu0 0
      %3800 = vmatprep.subr.bf16.mxu0 0
      %3801 = vmatpush2.bf16.msra.mxu0 0
      %3802 = vmatprep.mubr.bf16.mxu0 0
      %3803 = vmatmul.mubr.bf16.gmra.mxu0 %v3765
      %v3804 = vpop.f32.mrf.mxu0
      %v3805 = vadd.f32 0.0, %v3804
      %v3806 = vpop.f32.mrf.mxu0
      %v3807 = vpop.f32.mrf.mxu0
      %v3808 = vadd.f32 0.0, %v3807
      %v3809 = vpop.f32.mrf.mxu0
      %3810 = vmatprep.mubr.bf16.mxu0 0
      %3811 = vmatmul.mubr.bf16.gmra.mxu0 %v3768
      %v3812 = vpop.f32.mrf.mxu0
      %v3813 = vadd.f32 0.0, %v3812
      %v3814 = vpop.f32.mrf.mxu0
      %v3815 = vpop.f32.mrf.mxu0
      %v3816 = vadd.f32 0.0, %v3815
      %v3817 = vpop.f32.mrf.mxu0
      %3818 = vdwg.mxu0
      %v3819 = vadd.f32 %v3742, %v3805
      %v3820 = vadd.f32 %v3743, %v3808
      %v3821 = vadd.f32 %v3744, %v3813
      %v3822 = vadd.f32 %v3745, %v3816
      %s3823 = scalar_lea.vmem %s5, 128
      %v3824 = vld [vmem:[%s3823] sm:$0xf]
      %v3825 = vld [vmem:[%s3823 + $0x4] sm:$0xf]
      %v3826 = vld [vmem:[%s3823 + $0x8] sm:$0xf]
      %v3827 = vld [vmem:[%s3823 + $0xc] sm:$0xf]
      %v3832 = vunpack.c.l.b16 %v3824
      %v3833 = vunpack.c.l.b16 %v3825
      %v3834 = vunpack.c.l.b16 %v3826
      %v3835 = vunpack.c.l.b16 %v3827
      %v3836 = vpack.c.b16 %v3833, %v3832
      %v3837 = vpack.c.b16 %v3835, %v3834
      %3838 = vrot.lane.b32.xlu0 %v3236, 106
      %v3839 = vpop.permute.xlu0 %3838
      %v3842 = vsel %vm2010, %v3836, 0
      %v3845 = vsel %vm2010, %v3837, 0
      %3847 = vmatprep.subr.bf16.mxu0 0
      %3848 = vmatpush1.bf16.msra.mxu0 0
      %3849 = vmatprep.subr.bf16.mxu0 0
      %3850 = vmatpush1.bf16.msra.mxu0 0
      %3851 = vmatprep.subr.bf16.mxu0 0
      %3852 = vmatpush1.bf16.msra.mxu0 0
      %3853 = vmatprep.subr.bf16.mxu0 0
      %3854 = vmatpush1.bf16.msra.mxu0 0
      %3855 = vmatprep.subr.bf16.mxu0 0
      %3856 = vmatpush1.bf16.msra.mxu0 0
      %3857 = vmatprep.subr.bf16.mxu0 0
      %3858 = vmatpush1.bf16.msra.mxu0 0
      %3859 = vmatprep.subr.bf16.mxu0 0
      %3860 = vmatpush1.bf16.msra.mxu0 0
      %3861 = vmatprep.subr.bf16.mxu0 0
      %3862 = vmatpush1.bf16.msra.mxu0 %v3839
      %3863 = vmatprep.subr.bf16.mxu0 0
      %3864 = vmatpush2.bf16.msra.mxu0 0
      %3865 = vmatprep.subr.bf16.mxu0 0
      %3866 = vmatpush2.bf16.msra.mxu0 0
      %3867 = vmatprep.subr.bf16.mxu0 0
      %3868 = vmatpush2.bf16.msra.mxu0 0
      %3869 = vmatprep.subr.bf16.mxu0 0
      %3870 = vmatpush2.bf16.msra.mxu0 0
      %3871 = vmatprep.subr.bf16.mxu0 0
      %3872 = vmatpush2.bf16.msra.mxu0 0
      %3873 = vmatprep.subr.bf16.mxu0 0
      %3874 = vmatpush2.bf16.msra.mxu0 0
      %3875 = vmatprep.subr.bf16.mxu0 0
      %3876 = vmatpush2.bf16.msra.mxu0 0
      %3877 = vmatprep.subr.bf16.mxu0 0
      %3878 = vmatpush2.bf16.msra.mxu0 0
      %3879 = vmatprep.mubr.bf16.mxu0 0
      %3880 = vmatmul.mubr.bf16.gmra.mxu0 %v3842
      %v3881 = vpop.f32.mrf.mxu0
      %v3882 = vadd.f32 0.0, %v3881
      %v3883 = vpop.f32.mrf.mxu0
      %v3884 = vpop.f32.mrf.mxu0
      %v3885 = vadd.f32 0.0, %v3884
      %v3886 = vpop.f32.mrf.mxu0
      %3887 = vmatprep.mubr.bf16.mxu0 0
      %3888 = vmatmul.mubr.bf16.gmra.mxu0 %v3845
      %v3889 = vpop.f32.mrf.mxu0
      %v3890 = vadd.f32 0.0, %v3889
      %v3891 = vpop.f32.mrf.mxu0
      %v3892 = vpop.f32.mrf.mxu0
      %v3893 = vadd.f32 0.0, %v3892
      %v3894 = vpop.f32.mrf.mxu0
      %3895 = vdwg.mxu0
      %v3896 = vadd.f32 %v3819, %v3882
      %v3897 = vadd.f32 %v3820, %v3885
      %v3898 = vadd.f32 %v3821, %v3890
      %v3899 = vadd.f32 %v3822, %v3893
      %v3900 = vld [vmem:[%s6] sm:$0xff]
      %v3901 = vld [vmem:[%s6 + $0x8] sm:$0xff]
      %v3902 = vld [vmem:[%s6 + $0x10] sm:$0xff]
      %v3903 = vld [vmem:[%s6 + $0x18] sm:$0xff]
      %3905 = vset.pattern.permute.xlu0 0
      %3906 = vperm.xlu0 %3905, %v3900
      %v3907 = vpop.permute.xlu0 %3906
      %3910 = vset.pattern.permute.xlu0 0
      %3911 = vperm.xlu0 %3910, %v3901
      %v3912 = vpop.permute.xlu0 %3911
      %3915 = vset.pattern.permute.xlu0 0
      %3916 = vperm.xlu0 %3915, %v3902
      %v3917 = vpop.permute.xlu0 %3916
      %3920 = vset.pattern.permute.xlu0 0
      %3921 = vperm.xlu0 %3920, %v3903
      %v3922 = vpop.permute.xlu0 %3921
      %v3924 = vadd.f32 %v3896, %v3907
      %v3925 = vadd.f32 %v3897, %v3912
      %v3926 = vadd.f32 %v3898, %v3917
      %v3927 = vadd.f32 %v3899, %v3922
      %vm3928 = vcmp.ge.f32.partialorder %v3924, 0.0
      %vm3929 = vcmp.ge.f32.partialorder %v3925, 0.0
      %vm3930 = vcmp.ge.f32.partialorder %v3926, 0.0
      %vm3931 = vcmp.ge.f32.partialorder %v3927, 0.0
      %v3932 = vmul.f32 %v3924, 0.01
      %v3933 = vmul.f32 %v3925, 0.01
      %v3934 = vmul.f32 %v3926, 0.01
      %v3935 = vmul.f32 %v3927, 0.01
      %v3936 = vsel %vm3928, %v3924, %v3932
      %v3937 = vsel %vm3929, %v3925, %v3933
      %v3938 = vsel %vm3930, %v3926, %v3934
      %v3939 = vsel %vm3931, %v3927, %v3935
      %v3940 = vsel %vm3193, %v3936, 0.0
      %v3941 = vsel %vm3193, %v3937, 0.0
      %v3942 = vsel %vm3193, %v3938, 0.0
      %v3943 = vsel %vm3193, %v3939, 0.0
      %v3944 = vpack.c.bf16 %v3941, %v3940
      %v3945 = vpack.c.bf16 %v3943, %v3942
      %v3948 = vunpack.c.l.b16 %v3944
      %v3949 = vunpack.c.h.b16 %v3944
      %v3950 = vunpack.c.l.b16 %v3945
      %v3951 = vunpack.c.h.b16 %v3945
      %v3952 = vpack.c.b16 %v3948, %v3948
      %v3953 = vpack.c.b16 %v3949, %v3949
      %v3954 = vpack.c.b16 %v3950, %v3950
      %v3955 = vpack.c.b16 %v3951, %v3951
      %3956 = vrot.lane.b32.xlu0 %v3952, 11
      %v3957 = vpop.permute.xlu0 %3956
      %3958 = vrot.lane.b32.xlu0 %v3953, 11
      %v3959 = vpop.permute.xlu0 %3958
      %3960 = vrot.lane.b32.xlu0 %v3954, 11
      %v3961 = vpop.permute.xlu0 %3960
      %3962 = vrot.lane.b32.xlu0 %v3955, 11
      %v3963 = vpop.permute.xlu0 %3962
      %3968 = vst.msk [vmem:[#allocation4] sm:$0xf] %vm3208, %v3957
      %3969 = vst.msk [vmem:[#allocation4 + $0x4] sm:$0xf] %vm3208, %v3959
      %3970 = vst.msk [vmem:[#allocation4 + $0x8] sm:$0xf] %vm3208, %v3961
      %3971 = vst.msk [vmem:[#allocation4 + $0xc] sm:$0xf] %vm3208, %v3963
      %v3972 = vld [vmem:[%s7] sm:$0xf]
      %v3973 = vld [vmem:[%s7 + $0x4] sm:$0xf]
      %v3974 = vld [vmem:[%s7 + $0x8] sm:$0xf]
      %v3975 = vld [vmem:[%s7 + $0xc] sm:$0xf]
      %v3976 = vld [vmem:[#allocation4] sm:$0xf]
      %v3977 = vld [vmem:[#allocation4 + $0x4] sm:$0xf]
      %v3978 = vld [vmem:[#allocation4 + $0x8] sm:$0xf]
      %v3979 = vld [vmem:[#allocation4 + $0xc] sm:$0xf]
      %s3980 = scalar_lea.vmem %s7, 16
      %v3981 = vld [vmem:[%s3980] sm:$0xf]
      %v3982 = vld [vmem:[%s3980 + $0x4] sm:$0xf]
      %v3983 = vld [vmem:[%s3980 + $0x8] sm:$0xf]
      %v3984 = vld [vmem:[%s3980 + $0xc] sm:$0xf]
      %v3989 = vunpack.c.l.b16 %v3981
      %v3990 = vunpack.c.l.b16 %v3982
      %v3991 = vunpack.c.l.b16 %v3983
      %v3992 = vunpack.c.l.b16 %v3984
      %v3993 = vpack.c.b16 %v3990, %v3989
      %v3994 = vpack.c.b16 %v3992, %v3991
      %v3999 = vunpack.c.l.b16 %v3976
      %v4000 = vunpack.c.l.b16 %v3977
      %v4001 = vunpack.c.l.b16 %v3978
      %v4002 = vunpack.c.l.b16 %v3979
      %v4003 = vpack.c.b16 %v4000, %v3999
      %v4004 = vpack.c.b16 %v4002, %v4001
      %4005 = vrot.lane.b32.xlu0 %v4003, 127
      %v4006 = vpop.permute.xlu0 %4005
      %4007 = vrot.lane.b32.xlu0 %v4004, 127
      %v4008 = vpop.permute.xlu0 %4007
      %v4012 = vsel %vm3025, %v3993, 0
      %v4015 = vsel %vm3025, %v3994, 0
      %4017 = vmatprep.subr.bf16.mxu0 0
      %4018 = vmatpush1.bf16.msra.mxu0 0
      %4019 = vmatprep.subr.bf16.mxu0 0
      %4020 = vmatpush1.bf16.msra.mxu0 0
      %4021 = vmatprep.subr.bf16.mxu0 0
      %4022 = vmatpush1.bf16.msra.mxu0 0
      %4023 = vmatprep.subr.bf16.mxu0 0
      %4024 = vmatpush1.bf16.msra.mxu0 0
      %4025 = vmatprep.subr.bf16.mxu0 0
      %4026 = vmatpush1.bf16.msra.mxu0 0
      %4027 = vmatprep.subr.bf16.mxu0 0
      %4028 = vmatpush1.bf16.msra.mxu0 0
      %4029 = vmatprep.subr.bf16.mxu0 0
      %4030 = vmatpush1.bf16.msra.mxu0 %v4008
      %4031 = vmatprep.subr.bf16.mxu0 0
      %4032 = vmatpush1.bf16.msra.mxu0 %v4006
      %4033 = vmatprep.subr.bf16.mxu0 0
      %4034 = vmatpush2.bf16.msra.mxu0 0
      %4035 = vmatprep.subr.bf16.mxu0 0
      %4036 = vmatpush2.bf16.msra.mxu0 0
      %4037 = vmatprep.subr.bf16.mxu0 0
      %4038 = vmatpush2.bf16.msra.mxu0 0
      %4039 = vmatprep.subr.bf16.mxu0 0
      %4040 = vmatpush2.bf16.msra.mxu0 0
      %4041 = vmatprep.subr.bf16.mxu0 0
      %4042 = vmatpush2.bf16.msra.mxu0 0
      %4043 = vmatprep.subr.bf16.mxu0 0
      %4044 = vmatpush2.bf16.msra.mxu0 0
      %4045 = vmatprep.subr.bf16.mxu0 0
      %4046 = vmatpush2.bf16.msra.mxu0 0
      %4047 = vmatprep.subr.bf16.mxu0 0
      %4048 = vmatpush2.bf16.msra.mxu0 0
      %4049 = vmatprep.mubr.bf16.mxu0 0
      %4050 = vmatmul.mubr.bf16.gmra.mxu0 %v4012
      %v4051 = vpop.f32.mrf.mxu0
      %v4052 = vadd.f32 0.0, %v4051
      %v4053 = vpop.f32.mrf.mxu0
      %v4054 = vpop.f32.mrf.mxu0
      %v4055 = vadd.f32 0.0, %v4054
      %v4056 = vpop.f32.mrf.mxu0
      %4057 = vmatprep.mubr.bf16.mxu0 0
      %4058 = vmatmul.mubr.bf16.gmra.mxu0 %v4015
      %v4059 = vpop.f32.mrf.mxu0
      %v4060 = vadd.f32 0.0, %v4059
      %v4061 = vpop.f32.mrf.mxu0
      %v4062 = vpop.f32.mrf.mxu0
      %v4063 = vadd.f32 0.0, %v4062
      %v4064 = vpop.f32.mrf.mxu0
      %4065 = vdwg.mxu0
      %v4070 = vunpack.c.l.b16 %v3972
      %v4071 = vunpack.c.l.b16 %v3973
      %v4072 = vunpack.c.l.b16 %v3974
      %v4073 = vunpack.c.l.b16 %v3975
      %v4074 = vpack.c.b16 %v4071, %v4070
      %v4075 = vpack.c.b16 %v4073, %v4072
      %v4079 = vsel %vm3025, %v4074, 0
      %v4082 = vsel %vm3025, %v4075, 0
      %4084 = vmatprep.subr.bf16.mxu0 0
      %4085 = vmatpush1.bf16.msra.mxu0 0
      %4086 = vmatprep.subr.bf16.mxu0 0
      %4087 = vmatpush1.bf16.msra.mxu0 0
      %4088 = vmatprep.subr.bf16.mxu0 0
      %4089 = vmatpush1.bf16.msra.mxu0 0
      %4090 = vmatprep.subr.bf16.mxu0 0
      %4091 = vmatpush1.bf16.msra.mxu0 0
      %4092 = vmatprep.subr.bf16.mxu0 0
      %4093 = vmatpush1.bf16.msra.mxu0 0
      %4094 = vmatprep.subr.bf16.mxu0 0
      %4095 = vmatpush1.bf16.msra.mxu0 0
      %4096 = vmatprep.subr.bf16.mxu0 0
      %4097 = vmatpush1.bf16.msra.mxu0 %v4004
      %4098 = vmatprep.subr.bf16.mxu0 0
      %4099 = vmatpush1.bf16.msra.mxu0 %v4003
      %4100 = vmatprep.subr.bf16.mxu0 0
      %4101 = vmatpush2.bf16.msra.mxu0 0
      %4102 = vmatprep.subr.bf16.mxu0 0
      %4103 = vmatpush2.bf16.msra.mxu0 0
      %4104 = vmatprep.subr.bf16.mxu0 0
      %4105 = vmatpush2.bf16.msra.mxu0 0
      %4106 = vmatprep.subr.bf16.mxu0 0
      %4107 = vmatpush2.bf16.msra.mxu0 0
      %4108 = vmatprep.subr.bf16.mxu0 0
      %4109 = vmatpush2.bf16.msra.mxu0 0
      %4110 = vmatprep.subr.bf16.mxu0 0
      %4111 = vmatpush2.bf16.msra.mxu0 0
      %4112 = vmatprep.subr.bf16.mxu0 0
      %4113 = vmatpush2.bf16.msra.mxu0 0
      %4114 = vmatprep.subr.bf16.mxu0 0
      %4115 = vmatpush2.bf16.msra.mxu0 0
      %4116 = vmatprep.mubr.bf16.mxu0 0
      %4117 = vmatmul.mubr.bf16.gmra.mxu0 %v4079
      %v4118 = vpop.f32.mrf.mxu0
      %v4119 = vadd.f32 %v4052, %v4118
      %v4120 = vpop.f32.mrf.mxu0
      %v4121 = vpop.f32.mrf.mxu0
      %v4122 = vadd.f32 %v4055, %v4121
      %v4123 = vpop.f32.mrf.mxu0
      %4124 = vmatprep.mubr.bf16.mxu0 0
      %4125 = vmatmul.mubr.bf16.gmra.mxu0 %v4082
      %v4126 = vpop.f32.mrf.mxu0
      %v4127 = vadd.f32 %v4060, %v4126
      %v4128 = vpop.f32.mrf.mxu0
      %v4129 = vpop.f32.mrf.mxu0
      %v4130 = vadd.f32 %v4063, %v4129
      %v4131 = vpop.f32.mrf.mxu0
      %4132 = vdwg.mxu0
      %s4133 = scalar_lea.vmem %s7, 32
      %v4134 = vld [vmem:[%s4133] sm:$0xf]
      %v4135 = vld [vmem:[%s4133 + $0x4] sm:$0xf]
      %v4136 = vld [vmem:[%s4133 + $0x8] sm:$0xf]
      %v4137 = vld [vmem:[%s4133 + $0xc] sm:$0xf]
      %v4142 = vunpack.c.l.b16 %v4134
      %v4143 = vunpack.c.l.b16 %v4135
      %v4144 = vunpack.c.l.b16 %v4136
      %v4145 = vunpack.c.l.b16 %v4137
      %v4146 = vpack.c.b16 %v4143, %v4142
      %v4147 = vpack.c.b16 %v4145, %v4144
      %4148 = vrot.lane.b32.xlu0 %v4003, 126
      %v4149 = vpop.permute.xlu0 %4148
      %4150 = vrot.lane.b32.xlu0 %v4004, 126
      %v4151 = vpop.permute.xlu0 %4150
      %v4155 = vsel %vm3025, %v4146, 0
      %v4158 = vsel %vm3025, %v4147, 0
      %4160 = vmatprep.subr.bf16.mxu0 0
      %4161 = vmatpush1.bf16.msra.mxu0 0
      %4162 = vmatprep.subr.bf16.mxu0 0
      %4163 = vmatpush1.bf16.msra.mxu0 0
      %4164 = vmatprep.subr.bf16.mxu0 0
      %4165 = vmatpush1.bf16.msra.mxu0 0
      %4166 = vmatprep.subr.bf16.mxu0 0
      %4167 = vmatpush1.bf16.msra.mxu0 0
      %4168 = vmatprep.subr.bf16.mxu0 0
      %4169 = vmatpush1.bf16.msra.mxu0 0
      %4170 = vmatprep.subr.bf16.mxu0 0
      %4171 = vmatpush1.bf16.msra.mxu0 0
      %4172 = vmatprep.subr.bf16.mxu0 0
      %4173 = vmatpush1.bf16.msra.mxu0 %v4151
      %4174 = vmatprep.subr.bf16.mxu0 0
      %4175 = vmatpush1.bf16.msra.mxu0 %v4149
      %4176 = vmatprep.subr.bf16.mxu0 0
      %4177 = vmatpush2.bf16.msra.mxu0 0
      %4178 = vmatprep.subr.bf16.mxu0 0
      %4179 = vmatpush2.bf16.msra.mxu0 0
      %4180 = vmatprep.subr.bf16.mxu0 0
      %4181 = vmatpush2.bf16.msra.mxu0 0
      %4182 = vmatprep.subr.bf16.mxu0 0
      %4183 = vmatpush2.bf16.msra.mxu0 0
      %4184 = vmatprep.subr.bf16.mxu0 0
      %4185 = vmatpush2.bf16.msra.mxu0 0
      %4186 = vmatprep.subr.bf16.mxu0 0
      %4187 = vmatpush2.bf16.msra.mxu0 0
      %4188 = vmatprep.subr.bf16.mxu0 0
      %4189 = vmatpush2.bf16.msra.mxu0 0
      %4190 = vmatprep.subr.bf16.mxu0 0
      %4191 = vmatpush2.bf16.msra.mxu0 0
      %4192 = vmatprep.mubr.bf16.mxu0 0
      %4193 = vmatmul.mubr.bf16.gmra.mxu0 %v4155
      %v4194 = vpop.f32.mrf.mxu0
      %v4195 = vadd.f32 0.0, %v4194
      %v4196 = vpop.f32.mrf.mxu0
      %v4197 = vpop.f32.mrf.mxu0
      %v4198 = vadd.f32 0.0, %v4197
      %v4199 = vpop.f32.mrf.mxu0
      %4200 = vmatprep.mubr.bf16.mxu0 0
      %4201 = vmatmul.mubr.bf16.gmra.mxu0 %v4158
      %v4202 = vpop.f32.mrf.mxu0
      %v4203 = vadd.f32 0.0, %v4202
      %v4204 = vpop.f32.mrf.mxu0
      %v4205 = vpop.f32.mrf.mxu0
      %v4206 = vadd.f32 0.0, %v4205
      %v4207 = vpop.f32.mrf.mxu0
      %4208 = vdwg.mxu0
      %v4209 = vadd.f32 %v4119, %v4195
      %v4210 = vadd.f32 %v4122, %v4198
      %v4211 = vadd.f32 %v4127, %v4203
      %v4212 = vadd.f32 %v4130, %v4206
      %s4213 = scalar_lea.vmem %s7, 48
      %v4214 = vld [vmem:[%s4213] sm:$0xf]
      %v4215 = vld [vmem:[%s4213 + $0x4] sm:$0xf]
      %v4216 = vld [vmem:[%s4213 + $0x8] sm:$0xf]
      %v4217 = vld [vmem:[%s4213 + $0xc] sm:$0xf]
      %v4222 = vunpack.c.l.b16 %v4214
      %v4223 = vunpack.c.l.b16 %v4215
      %v4224 = vunpack.c.l.b16 %v4216
      %v4225 = vunpack.c.l.b16 %v4217
      %v4226 = vpack.c.b16 %v4223, %v4222
      %v4227 = vpack.c.b16 %v4225, %v4224
      %4228 = vrot.lane.b32.xlu0 %v4003, 118
      %v4229 = vpop.permute.xlu0 %4228
      %4230 = vrot.lane.b32.xlu0 %v4004, 118
      %v4231 = vpop.permute.xlu0 %4230
      %v4235 = vsel %vm3025, %v4226, 0
      %v4238 = vsel %vm3025, %v4227, 0
      %4240 = vmatprep.subr.bf16.mxu0 0
      %4241 = vmatpush1.bf16.msra.mxu0 0
      %4242 = vmatprep.subr.bf16.mxu0 0
      %4243 = vmatpush1.bf16.msra.mxu0 0
      %4244 = vmatprep.subr.bf16.mxu0 0
      %4245 = vmatpush1.bf16.msra.mxu0 0
      %4246 = vmatprep.subr.bf16.mxu0 0
      %4247 = vmatpush1.bf16.msra.mxu0 0
      %4248 = vmatprep.subr.bf16.mxu0 0
      %4249 = vmatpush1.bf16.msra.mxu0 0
      %4250 = vmatprep.subr.bf16.mxu0 0
      %4251 = vmatpush1.bf16.msra.mxu0 0
      %4252 = vmatprep.subr.bf16.mxu0 0
      %4253 = vmatpush1.bf16.msra.mxu0 %v4231
      %4254 = vmatprep.subr.bf16.mxu0 0
      %4255 = vmatpush1.bf16.msra.mxu0 %v4229
      %4256 = vmatprep.subr.bf16.mxu0 0
      %4257 = vmatpush2.bf16.msra.mxu0 0
      %4258 = vmatprep.subr.bf16.mxu0 0
      %4259 = vmatpush2.bf16.msra.mxu0 0
      %4260 = vmatprep.subr.bf16.mxu0 0
      %4261 = vmatpush2.bf16.msra.mxu0 0
      %4262 = vmatprep.subr.bf16.mxu0 0
      %4263 = vmatpush2.bf16.msra.mxu0 0
      %4264 = vmatprep.subr.bf16.mxu0 0
      %4265 = vmatpush2.bf16.msra.mxu0 0
      %4266 = vmatprep.subr.bf16.mxu0 0
      %4267 = vmatpush2.bf16.msra.mxu0 0
      %4268 = vmatprep.subr.bf16.mxu0 0
      %4269 = vmatpush2.bf16.msra.mxu0 0
      %4270 = vmatprep.subr.bf16.mxu0 0
      %4271 = vmatpush2.bf16.msra.mxu0 0
      %4272 = vmatprep.mubr.bf16.mxu0 0
      %4273 = vmatmul.mubr.bf16.gmra.mxu0 %v4235
      %v4274 = vpop.f32.mrf.mxu0
      %v4275 = vadd.f32 0.0, %v4274
      %v4276 = vpop.f32.mrf.mxu0
      %v4277 = vpop.f32.mrf.mxu0
      %v4278 = vadd.f32 0.0, %v4277
      %v4279 = vpop.f32.mrf.mxu0
      %4280 = vmatprep.mubr.bf16.mxu0 0
      %4281 = vmatmul.mubr.bf16.gmra.mxu0 %v4238
      %v4282 = vpop.f32.mrf.mxu0
      %v4283 = vadd.f32 0.0, %v4282
      %v4284 = vpop.f32.mrf.mxu0
      %v4285 = vpop.f32.mrf.mxu0
      %v4286 = vadd.f32 0.0, %v4285
      %v4287 = vpop.f32.mrf.mxu0
      %4288 = vdwg.mxu0
      %v4289 = vadd.f32 %v4209, %v4275
      %v4290 = vadd.f32 %v4210, %v4278
      %v4291 = vadd.f32 %v4211, %v4283
      %v4292 = vadd.f32 %v4212, %v4286
      %s4293 = scalar_lea.vmem %s7, 64
      %v4294 = vld [vmem:[%s4293] sm:$0xf]
      %v4295 = vld [vmem:[%s4293 + $0x4] sm:$0xf]
      %v4296 = vld [vmem:[%s4293 + $0x8] sm:$0xf]
      %v4297 = vld [vmem:[%s4293 + $0xc] sm:$0xf]
      %v4302 = vunpack.c.l.b16 %v4294
      %v4303 = vunpack.c.l.b16 %v4295
      %v4304 = vunpack.c.l.b16 %v4296
      %v4305 = vunpack.c.l.b16 %v4297
      %v4306 = vpack.c.b16 %v4303, %v4302
      %v4307 = vpack.c.b16 %v4305, %v4304
      %4308 = vrot.lane.b32.xlu0 %v4003, 117
      %v4309 = vpop.permute.xlu0 %4308
      %4310 = vrot.lane.b32.xlu0 %v4004, 117
      %v4311 = vpop.permute.xlu0 %4310
      %v4315 = vsel %vm3025, %v4306, 0
      %v4318 = vsel %vm3025, %v4307, 0
      %4320 = vmatprep.subr.bf16.mxu0 0
      %4321 = vmatpush1.bf16.msra.mxu0 0
      %4322 = vmatprep.subr.bf16.mxu0 0
      %4323 = vmatpush1.bf16.msra.mxu0 0
      %4324 = vmatprep.subr.bf16.mxu0 0
      %4325 = vmatpush1.bf16.msra.mxu0 0
      %4326 = vmatprep.subr.bf16.mxu0 0
      %4327 = vmatpush1.bf16.msra.mxu0 0
      %4328 = vmatprep.subr.bf16.mxu0 0
      %4329 = vmatpush1.bf16.msra.mxu0 0
      %4330 = vmatprep.subr.bf16.mxu0 0
      %4331 = vmatpush1.bf16.msra.mxu0 0
      %4332 = vmatprep.subr.bf16.mxu0 0
      %4333 = vmatpush1.bf16.msra.mxu0 %v4311
      %4334 = vmatprep.subr.bf16.mxu0 0
      %4335 = vmatpush1.bf16.msra.mxu0 %v4309
      %4336 = vmatprep.subr.bf16.mxu0 0
      %4337 = vmatpush2.bf16.msra.mxu0 0
      %4338 = vmatprep.subr.bf16.mxu0 0
      %4339 = vmatpush2.bf16.msra.mxu0 0
      %4340 = vmatprep.subr.bf16.mxu0 0
      %4341 = vmatpush2.bf16.msra.mxu0 0
      %4342 = vmatprep.subr.bf16.mxu0 0
      %4343 = vmatpush2.bf16.msra.mxu0 0
      %4344 = vmatprep.subr.bf16.mxu0 0
      %4345 = vmatpush2.bf16.msra.mxu0 0
      %4346 = vmatprep.subr.bf16.mxu0 0
      %4347 = vmatpush2.bf16.msra.mxu0 0
      %4348 = vmatprep.subr.bf16.mxu0 0
      %4349 = vmatpush2.bf16.msra.mxu0 0
      %4350 = vmatprep.subr.bf16.mxu0 0
      %4351 = vmatpush2.bf16.msra.mxu0 0
      %4352 = vmatprep.mubr.bf16.mxu0 0
      %4353 = vmatmul.mubr.bf16.gmra.mxu0 %v4315
      %v4354 = vpop.f32.mrf.mxu0
      %v4355 = vadd.f32 0.0, %v4354
      %v4356 = vpop.f32.mrf.mxu0
      %v4357 = vpop.f32.mrf.mxu0
      %v4358 = vadd.f32 0.0, %v4357
      %v4359 = vpop.f32.mrf.mxu0
      %4360 = vmatprep.mubr.bf16.mxu0 0
      %4361 = vmatmul.mubr.bf16.gmra.mxu0 %v4318
      %v4362 = vpop.f32.mrf.mxu0
      %v4363 = vadd.f32 0.0, %v4362
      %v4364 = vpop.f32.mrf.mxu0
      %v4365 = vpop.f32.mrf.mxu0
      %v4366 = vadd.f32 0.0, %v4365
      %v4367 = vpop.f32.mrf.mxu0
      %4368 = vdwg.mxu0
      %v4369 = vadd.f32 %v4289, %v4355
      %v4370 = vadd.f32 %v4290, %v4358
      %v4371 = vadd.f32 %v4291, %v4363
      %v4372 = vadd.f32 %v4292, %v4366
      %s4373 = scalar_lea.vmem %s7, 80
      %v4374 = vld [vmem:[%s4373] sm:$0xf]
      %v4375 = vld [vmem:[%s4373 + $0x4] sm:$0xf]
      %v4376 = vld [vmem:[%s4373 + $0x8] sm:$0xf]
      %v4377 = vld [vmem:[%s4373 + $0xc] sm:$0xf]
      %v4382 = vunpack.c.l.b16 %v4374
      %v4383 = vunpack.c.l.b16 %v4375
      %v4384 = vunpack.c.l.b16 %v4376
      %v4385 = vunpack.c.l.b16 %v4377
      %v4386 = vpack.c.b16 %v4383, %v4382
      %v4387 = vpack.c.b16 %v4385, %v4384
      %4388 = vrot.lane.b32.xlu0 %v4003, 116
      %v4389 = vpop.permute.xlu0 %4388
      %4390 = vrot.lane.b32.xlu0 %v4004, 116
      %v4391 = vpop.permute.xlu0 %4390
      %v4395 = vsel %vm3025, %v4386, 0
      %v4398 = vsel %vm3025, %v4387, 0
      %4400 = vmatprep.subr.bf16.mxu0 0
      %4401 = vmatpush1.bf16.msra.mxu0 0
      %4402 = vmatprep.subr.bf16.mxu0 0
      %4403 = vmatpush1.bf16.msra.mxu0 0
      %4404 = vmatprep.subr.bf16.mxu0 0
      %4405 = vmatpush1.bf16.msra.mxu0 0
      %4406 = vmatprep.subr.bf16.mxu0 0
      %4407 = vmatpush1.bf16.msra.mxu0 0
      %4408 = vmatprep.subr.bf16.mxu0 0
      %4409 = vmatpush1.bf16.msra.mxu0 0
      %4410 = vmatprep.subr.bf16.mxu0 0
      %4411 = vmatpush1.bf16.msra.mxu0 0
      %4412 = vmatprep.subr.bf16.mxu0 0
      %4413 = vmatpush1.bf16.msra.mxu0 %v4391
      %4414 = vmatprep.subr.bf16.mxu0 0
      %4415 = vmatpush1.bf16.msra.mxu0 %v4389
      %4416 = vmatprep.subr.bf16.mxu0 0
      %4417 = vmatpush2.bf16.msra.mxu0 0
      %4418 = vmatprep.subr.bf16.mxu0 0
      %4419 = vmatpush2.bf16.msra.mxu0 0
      %4420 = vmatprep.subr.bf16.mxu0 0
      %4421 = vmatpush2.bf16.msra.mxu0 0
      %4422 = vmatprep.subr.bf16.mxu0 0
      %4423 = vmatpush2.bf16.msra.mxu0 0
      %4424 = vmatprep.subr.bf16.mxu0 0
      %4425 = vmatpush2.bf16.msra.mxu0 0
      %4426 = vmatprep.subr.bf16.mxu0 0
      %4427 = vmatpush2.bf16.msra.mxu0 0
      %4428 = vmatprep.subr.bf16.mxu0 0
      %4429 = vmatpush2.bf16.msra.mxu0 0
      %4430 = vmatprep.subr.bf16.mxu0 0
      %4431 = vmatpush2.bf16.msra.mxu0 0
      %4432 = vmatprep.mubr.bf16.mxu0 0
      %4433 = vmatmul.mubr.bf16.gmra.mxu0 %v4395
      %v4434 = vpop.f32.mrf.mxu0
      %v4435 = vadd.f32 0.0, %v4434
      %v4436 = vpop.f32.mrf.mxu0
      %v4437 = vpop.f32.mrf.mxu0
      %v4438 = vadd.f32 0.0, %v4437
      %v4439 = vpop.f32.mrf.mxu0
      %4440 = vmatprep.mubr.bf16.mxu0 0
      %4441 = vmatmul.mubr.bf16.gmra.mxu0 %v4398
      %v4442 = vpop.f32.mrf.mxu0
      %v4443 = vadd.f32 0.0, %v4442
      %v4444 = vpop.f32.mrf.mxu0
      %v4445 = vpop.f32.mrf.mxu0
      %v4446 = vadd.f32 0.0, %v4445
      %v4447 = vpop.f32.mrf.mxu0
      %4448 = vdwg.mxu0
      %v4449 = vadd.f32 %v4369, %v4435
      %v4450 = vadd.f32 %v4370, %v4438
      %v4451 = vadd.f32 %v4371, %v4443
      %v4452 = vadd.f32 %v4372, %v4446
      %s4453 = scalar_lea.vmem %s7, 96
      %v4454 = vld [vmem:[%s4453] sm:$0xf]
      %v4455 = vld [vmem:[%s4453 + $0x4] sm:$0xf]
      %v4456 = vld [vmem:[%s4453 + $0x8] sm:$0xf]
      %v4457 = vld [vmem:[%s4453 + $0xc] sm:$0xf]
      %v4462 = vunpack.c.l.b16 %v4454
      %v4463 = vunpack.c.l.b16 %v4455
      %v4464 = vunpack.c.l.b16 %v4456
      %v4465 = vunpack.c.l.b16 %v4457
      %v4466 = vpack.c.b16 %v4463, %v4462
      %v4467 = vpack.c.b16 %v4465, %v4464
      %4468 = vrot.lane.b32.xlu0 %v4003, 108
      %v4469 = vpop.permute.xlu0 %4468
      %4470 = vrot.lane.b32.xlu0 %v4004, 108
      %v4471 = vpop.permute.xlu0 %4470
      %v4475 = vsel %vm3025, %v4466, 0
      %v4478 = vsel %vm3025, %v4467, 0
      %4480 = vmatprep.subr.bf16.mxu0 0
      %4481 = vmatpush1.bf16.msra.mxu0 0
      %4482 = vmatprep.subr.bf16.mxu0 0
      %4483 = vmatpush1.bf16.msra.mxu0 0
      %4484 = vmatprep.subr.bf16.mxu0 0
      %4485 = vmatpush1.bf16.msra.mxu0 0
      %4486 = vmatprep.subr.bf16.mxu0 0
      %4487 = vmatpush1.bf16.msra.mxu0 0
      %4488 = vmatprep.subr.bf16.mxu0 0
      %4489 = vmatpush1.bf16.msra.mxu0 0
      %4490 = vmatprep.subr.bf16.mxu0 0
      %4491 = vmatpush1.bf16.msra.mxu0 0
      %4492 = vmatprep.subr.bf16.mxu0 0
      %4493 = vmatpush1.bf16.msra.mxu0 %v4471
      %4494 = vmatprep.subr.bf16.mxu0 0
      %4495 = vmatpush1.bf16.msra.mxu0 %v4469
      %4496 = vmatprep.subr.bf16.mxu0 0
      %4497 = vmatpush2.bf16.msra.mxu0 0
      %4498 = vmatprep.subr.bf16.mxu0 0
      %4499 = vmatpush2.bf16.msra.mxu0 0
      %4500 = vmatprep.subr.bf16.mxu0 0
      %4501 = vmatpush2.bf16.msra.mxu0 0
      %4502 = vmatprep.subr.bf16.mxu0 0
      %4503 = vmatpush2.bf16.msra.mxu0 0
      %4504 = vmatprep.subr.bf16.mxu0 0
      %4505 = vmatpush2.bf16.msra.mxu0 0
      %4506 = vmatprep.subr.bf16.mxu0 0
      %4507 = vmatpush2.bf16.msra.mxu0 0
      %4508 = vmatprep.subr.bf16.mxu0 0
      %4509 = vmatpush2.bf16.msra.mxu0 0
      %4510 = vmatprep.subr.bf16.mxu0 0
      %4511 = vmatpush2.bf16.msra.mxu0 0
      %4512 = vmatprep.mubr.bf16.mxu0 0
      %4513 = vmatmul.mubr.bf16.gmra.mxu0 %v4475
      %v4514 = vpop.f32.mrf.mxu0
      %v4515 = vadd.f32 0.0, %v4514
      %v4516 = vpop.f32.mrf.mxu0
      %v4517 = vpop.f32.mrf.mxu0
      %v4518 = vadd.f32 0.0, %v4517
      %v4519 = vpop.f32.mrf.mxu0
      %4520 = vmatprep.mubr.bf16.mxu0 0
      %4521 = vmatmul.mubr.bf16.gmra.mxu0 %v4478
      %v4522 = vpop.f32.mrf.mxu0
      %v4523 = vadd.f32 0.0, %v4522
      %v4524 = vpop.f32.mrf.mxu0
      %v4525 = vpop.f32.mrf.mxu0
      %v4526 = vadd.f32 0.0, %v4525
      %v4527 = vpop.f32.mrf.mxu0
      %4528 = vdwg.mxu0
      %v4529 = vadd.f32 %v4449, %v4515
      %v4530 = vadd.f32 %v4450, %v4518
      %v4531 = vadd.f32 %v4451, %v4523
      %v4532 = vadd.f32 %v4452, %v4526
      %s4533 = scalar_lea.vmem %s7, 112
      %v4534 = vld [vmem:[%s4533] sm:$0xf]
      %v4535 = vld [vmem:[%s4533 + $0x4] sm:$0xf]
      %v4536 = vld [vmem:[%s4533 + $0x8] sm:$0xf]
      %v4537 = vld [vmem:[%s4533 + $0xc] sm:$0xf]
      %v4542 = vunpack.c.l.b16 %v4534
      %v4543 = vunpack.c.l.b16 %v4535
      %v4544 = vunpack.c.l.b16 %v4536
      %v4545 = vunpack.c.l.b16 %v4537
      %v4546 = vpack.c.b16 %v4543, %v4542
      %v4547 = vpack.c.b16 %v4545, %v4544
      %4548 = vrot.lane.b32.xlu0 %v4003, 107
      %v4549 = vpop.permute.xlu0 %4548
      %4550 = vrot.lane.b32.xlu0 %v4004, 107
      %v4551 = vpop.permute.xlu0 %4550
      %v4555 = vsel %vm3025, %v4546, 0
      %v4558 = vsel %vm3025, %v4547, 0
      %4560 = vmatprep.subr.bf16.mxu0 0
      %4561 = vmatpush1.bf16.msra.mxu0 0
      %4562 = vmatprep.subr.bf16.mxu0 0
      %4563 = vmatpush1.bf16.msra.mxu0 0
      %4564 = vmatprep.subr.bf16.mxu0 0
      %4565 = vmatpush1.bf16.msra.mxu0 0
      %4566 = vmatprep.subr.bf16.mxu0 0
      %4567 = vmatpush1.bf16.msra.mxu0 0
      %4568 = vmatprep.subr.bf16.mxu0 0
      %4569 = vmatpush1.bf16.msra.mxu0 0
      %4570 = vmatprep.subr.bf16.mxu0 0
      %4571 = vmatpush1.bf16.msra.mxu0 0
      %4572 = vmatprep.subr.bf16.mxu0 0
      %4573 = vmatpush1.bf16.msra.mxu0 %v4551
      %4574 = vmatprep.subr.bf16.mxu0 0
      %4575 = vmatpush1.bf16.msra.mxu0 %v4549
      %4576 = vmatprep.subr.bf16.mxu0 0
      %4577 = vmatpush2.bf16.msra.mxu0 0
      %4578 = vmatprep.subr.bf16.mxu0 0
      %4579 = vmatpush2.bf16.msra.mxu0 0
      %4580 = vmatprep.subr.bf16.mxu0 0
      %4581 = vmatpush2.bf16.msra.mxu0 0
      %4582 = vmatprep.subr.bf16.mxu0 0
      %4583 = vmatpush2.bf16.msra.mxu0 0
      %4584 = vmatprep.subr.bf16.mxu0 0
      %4585 = vmatpush2.bf16.msra.mxu0 0
      %4586 = vmatprep.subr.bf16.mxu0 0
      %4587 = vmatpush2.bf16.msra.mxu0 0
      %4588 = vmatprep.subr.bf16.mxu0 0
      %4589 = vmatpush2.bf16.msra.mxu0 0
      %4590 = vmatprep.subr.bf16.mxu0 0
      %4591 = vmatpush2.bf16.msra.mxu0 0
      %4592 = vmatprep.mubr.bf16.mxu0 0
      %4593 = vmatmul.mubr.bf16.gmra.mxu0 %v4555
      %v4594 = vpop.f32.mrf.mxu0
      %v4595 = vadd.f32 0.0, %v4594
      %v4596 = vpop.f32.mrf.mxu0
      %v4597 = vpop.f32.mrf.mxu0
      %v4598 = vadd.f32 0.0, %v4597
      %v4599 = vpop.f32.mrf.mxu0
      %4600 = vmatprep.mubr.bf16.mxu0 0
      %4601 = vmatmul.mubr.bf16.gmra.mxu0 %v4558
      %v4602 = vpop.f32.mrf.mxu0
      %v4603 = vadd.f32 0.0, %v4602
      %v4604 = vpop.f32.mrf.mxu0
      %v4605 = vpop.f32.mrf.mxu0
      %v4606 = vadd.f32 0.0, %v4605
      %v4607 = vpop.f32.mrf.mxu0
      %4608 = vdwg.mxu0
      %v4609 = vadd.f32 %v4529, %v4595
      %v4610 = vadd.f32 %v4530, %v4598
      %v4611 = vadd.f32 %v4531, %v4603
      %v4612 = vadd.f32 %v4532, %v4606
      %s4613 = scalar_lea.vmem %s7, 128
      %v4614 = vld [vmem:[%s4613] sm:$0xf]
      %v4615 = vld [vmem:[%s4613 + $0x4] sm:$0xf]
      %v4616 = vld [vmem:[%s4613 + $0x8] sm:$0xf]
      %v4617 = vld [vmem:[%s4613 + $0xc] sm:$0xf]
      %v4622 = vunpack.c.l.b16 %v4614
      %v4623 = vunpack.c.l.b16 %v4615
      %v4624 = vunpack.c.l.b16 %v4616
      %v4625 = vunpack.c.l.b16 %v4617
      %v4626 = vpack.c.b16 %v4623, %v4622
      %v4627 = vpack.c.b16 %v4625, %v4624
      %4628 = vrot.lane.b32.xlu0 %v4003, 106
      %v4629 = vpop.permute.xlu0 %4628
      %4630 = vrot.lane.b32.xlu0 %v4004, 106
      %v4631 = vpop.permute.xlu0 %4630
      %v4635 = vsel %vm3025, %v4626, 0
      %v4638 = vsel %vm3025, %v4627, 0
      %4640 = vmatprep.subr.bf16.mxu0 0
      %4641 = vmatpush1.bf16.msra.mxu0 0
      %4642 = vmatprep.subr.bf16.mxu0 0
      %4643 = vmatpush1.bf16.msra.mxu0 0
      %4644 = vmatprep.subr.bf16.mxu0 0
      %4645 = vmatpush1.bf16.msra.mxu0 0
      %4646 = vmatprep.subr.bf16.mxu0 0
      %4647 = vmatpush1.bf16.msra.mxu0 0
      %4648 = vmatprep.subr.bf16.mxu0 0
      %4649 = vmatpush1.bf16.msra.mxu0 0
      %4650 = vmatprep.subr.bf16.mxu0 0
      %4651 = vmatpush1.bf16.msra.mxu0 0
      %4652 = vmatprep.subr.bf16.mxu0 0
      %4653 = vmatpush1.bf16.msra.mxu0 %v4631
      %4654 = vmatprep.subr.bf16.mxu0 0
      %4655 = vmatpush1.bf16.msra.mxu0 %v4629
      %4656 = vmatprep.subr.bf16.mxu0 0
      %4657 = vmatpush2.bf16.msra.mxu0 0
      %4658 = vmatprep.subr.bf16.mxu0 0
      %4659 = vmatpush2.bf16.msra.mxu0 0
      %4660 = vmatprep.subr.bf16.mxu0 0
      %4661 = vmatpush2.bf16.msra.mxu0 0
      %4662 = vmatprep.subr.bf16.mxu0 0
      %4663 = vmatpush2.bf16.msra.mxu0 0
      %4664 = vmatprep.subr.bf16.mxu0 0
      %4665 = vmatpush2.bf16.msra.mxu0 0
      %4666 = vmatprep.subr.bf16.mxu0 0
      %4667 = vmatpush2.bf16.msra.mxu0 0
      %4668 = vmatprep.subr.bf16.mxu0 0
      %4669 = vmatpush2.bf16.msra.mxu0 0
      %4670 = vmatprep.subr.bf16.mxu0 0
      %4671 = vmatpush2.bf16.msra.mxu0 0
      %4672 = vmatprep.mubr.bf16.mxu0 0
      %4673 = vmatmul.mubr.bf16.gmra.mxu0 %v4635
      %v4674 = vpop.f32.mrf.mxu0
      %v4675 = vadd.f32 0.0, %v4674
      %v4676 = vpop.f32.mrf.mxu0
      %v4677 = vpop.f32.mrf.mxu0
      %v4678 = vadd.f32 0.0, %v4677
      %v4679 = vpop.f32.mrf.mxu0
      %4680 = vmatprep.mubr.bf16.mxu0 0
      %4681 = vmatmul.mubr.bf16.gmra.mxu0 %v4638
      %v4682 = vpop.f32.mrf.mxu0
      %v4683 = vadd.f32 0.0, %v4682
      %v4684 = vpop.f32.mrf.mxu0
      %v4685 = vpop.f32.mrf.mxu0
      %v4686 = vadd.f32 0.0, %v4685
      %v4687 = vpop.f32.mrf.mxu0
      %4688 = vdwg.mxu0
      %v4689 = vadd.f32 %v4609, %v4675
      %v4690 = vadd.f32 %v4610, %v4678
      %v4691 = vadd.f32 %v4611, %v4683
      %v4692 = vadd.f32 %v4612, %v4686
      %v4693 = vld [vmem:[%s8] sm:$0xff]
      %v4694 = vld [vmem:[%s8 + $0x8] sm:$0xff]
      %v4695 = vld [vmem:[%s8 + $0x10] sm:$0xff]
      %v4696 = vld [vmem:[%s8 + $0x18] sm:$0xff]
      %4698 = vset.pattern.permute.xlu0 0
      %4699 = vperm.xlu0 %4698, %v4693
      %v4700 = vpop.permute.xlu0 %4699
      %4703 = vset.pattern.permute.xlu0 0
      %4704 = vperm.xlu0 %4703, %v4694
      %v4705 = vpop.permute.xlu0 %4704
      %4708 = vset.pattern.permute.xlu0 0
      %4709 = vperm.xlu0 %4708, %v4695
      %v4710 = vpop.permute.xlu0 %4709
      %4713 = vset.pattern.permute.xlu0 0
      %4714 = vperm.xlu0 %4713, %v4696
      %v4715 = vpop.permute.xlu0 %4714
      %v4717 = vadd.f32 %v4689, %v4700
      %v4718 = vadd.f32 %v4690, %v4705
      %v4719 = vadd.f32 %v4691, %v4710
      %v4720 = vadd.f32 %v4692, %v4715
      %vm4721 = vcmp.ge.f32.partialorder %v4717, 0.0
      %vm4722 = vcmp.ge.f32.partialorder %v4718, 0.0
      %vm4723 = vcmp.ge.f32.partialorder %v4719, 0.0
      %vm4724 = vcmp.ge.f32.partialorder %v4720, 0.0
      %v4725 = vmul.f32 %v4717, 0.01
      %v4726 = vmul.f32 %v4718, 0.01
      %v4727 = vmul.f32 %v4719, 0.01
      %v4728 = vmul.f32 %v4720, 0.01
      %v4729 = vsel %vm4721, %v4717, %v4725
      %v4730 = vsel %vm4722, %v4718, %v4726
      %v4731 = vsel %vm4723, %v4719, %v4727
      %v4732 = vsel %vm4724, %v4720, %v4728
      %vm4733 = vcmask 654336
      %4734 = vst.msk [vmem:[%s642] sm:$0xff] %vm4733, %v4729
      %4735 = vst.msk [vmem:[%s642 + $0x8] sm:$0xff] %vm4733, %v4730
      %4736 = vst.msk [vmem:[%s642 + $0x10] sm:$0xff] %vm4733, %v4731
      %4737 = vst.msk [vmem:[%s642 + $0x18] sm:$0xff] %vm4733, %v4732
      %v4738 = vld [vmem:[%s9] sm:$0xf]
      %v4739 = vld [vmem:[%s9 + $0x4] sm:$0xf]
      %v4740 = vpack.c.bf16 %v4730, %v4729
      %v4741 = vpack.c.bf16 %v4732, %v4731
      %v4744 = vunpack.c.l.b16 %v4738
      %v4745 = vunpack.c.l.b16 %v4739
      %v4746 = vpack.c.b16 %v4745, %v4744
      %v4748 = vsel %vm3025, %v4746, 0
      %4750 = vmatprep.subr.bf16.mxu0 0
      %4751 = vmatpush1.bf16.msra.mxu0 0
      %4752 = vmatprep.subr.bf16.mxu0 0
      %4753 = vmatpush1.bf16.msra.mxu0 0
      %4754 = vmatprep.subr.bf16.mxu0 0
      %4755 = vmatpush1.bf16.msra.mxu0 0
      %4756 = vmatprep.subr.bf16.mxu0 0
      %4757 = vmatpush1.bf16.msra.mxu0 0
      %4758 = vmatprep.subr.bf16.mxu0 0
      %4759 = vmatpush1.bf16.msra.mxu0 0
      %4760 = vmatprep.subr.bf16.mxu0 0
      %4761 = vmatpush1.bf16.msra.mxu0 0
      %4762 = vmatprep.subr.bf16.mxu0 0
      %4763 = vmatpush1.bf16.msra.mxu0 %v4741
      %4764 = vmatprep.subr.bf16.mxu0 0
      %4765 = vmatpush1.bf16.msra.mxu0 %v4740
      %4766 = vmatprep.subr.bf16.mxu0 0
      %4767 = vmatpush2.bf16.msra.mxu0 0
      %4768 = vmatprep.subr.bf16.mxu0 0
      %4769 = vmatpush2.bf16.msra.mxu0 0
      %4770 = vmatprep.subr.bf16.mxu0 0
      %4771 = vmatpush2.bf16.msra.mxu0 0
      %4772 = vmatprep.subr.bf16.mxu0 0
      %4773 = vmatpush2.bf16.msra.mxu0 0
      %4774 = vmatprep.subr.bf16.mxu0 0
      %4775 = vmatpush2.bf16.msra.mxu0 0
      %4776 = vmatprep.subr.bf16.mxu0 0
      %4777 = vmatpush2.bf16.msra.mxu0 0
      %4778 = vmatprep.subr.bf16.mxu0 0
      %4779 = vmatpush2.bf16.msra.mxu0 0
      %4780 = vmatprep.subr.bf16.mxu0 0
      %4781 = vmatpush2.bf16.msra.mxu0 0
      %4782 = vmatprep.mubr.bf16.mxu0 0
      %4783 = vmatmul.mubr.bf16.gmra.mxu0 %v4748
      %v4784 = vpop.f32.mrf.mxu0
      %v4785 = vadd.f32 0.0, %v4784
      %v4786 = vpop.f32.mrf.mxu0
      %v4787 = vpop.f32.mrf.mxu0
      %v4788 = vadd.f32 0.0, %v4787
      %v4789 = vpop.f32.mrf.mxu0
      %4790 = vdwg.mxu0
      %v4791 = vpack.c.bf16 %v4788, %v4785
      %v4792 = vld [vmem:[%s18] sm:$0xff]
      %v4793 = vld [vmem:[%s18 + $0x8] sm:$0xf]
      %v4794 = vld [vmem:[%s18 + $0xc] sm:$0xff]
      %v4795 = vld [vmem:[%s18 + $0x14] sm:$0xf]
      %v4796 = vld [vmem:[%s18 + $0x18] sm:$0xff]
      %v4797 = vld [vmem:[%s18 + $0x20] sm:$0xf]
      %v4798 = vld [vmem:[%s18 + $0x24] sm:$0xff]
      %v4799 = vld [vmem:[%s18 + $0x2c] sm:$0xf]
      %v4800 = vld [vmem:[%s18 + $0x30] sm:$0xff]
      %v4801 = vld [vmem:[%s18 + $0x38] sm:$0xf]
      %v4802 = vld [vmem:[%s18 + $0x3c] sm:$0xff]
      %v4803 = vld [vmem:[%s18 + $0x44] sm:$0xf]
      %v4804 = vld [vmem:[%s18 + $0x48] sm:$0xff]
      %v4805 = vld [vmem:[%s18 + $0x50] sm:$0xf]
      %v4806 = vld [vmem:[%s18 + $0x54] sm:$0xff]
      %v4807 = vld [vmem:[%s18 + $0x5c] sm:$0xf]
      %v4808 = vld [vmem:[%s18 + $0x60] sm:$0xff]
      %v4809 = vld [vmem:[%s18 + $0x68] sm:$0xf]
      %v4810 = vld [vmem:[%s18 + $0x6c] sm:$0xff]
      %v4811 = vld [vmem:[%s18 + $0x74] sm:$0xf]
      %v4812 = vld [vmem:[%s10] sm:$0xff]
      %v4813 = vld [vmem:[%s10 + $0x8] sm:$0xff]
      %4815 = vset.pattern.permute.xlu0 0
      %4816 = vperm.xlu0 %4815, %v4812
      %v4817 = vpop.permute.xlu0 %4816
      %4820 = vset.pattern.permute.xlu0 0
      %4821 = vperm.xlu0 %4820, %v4813
      %v4822 = vpop.permute.xlu0 %4821
      %v4844 = vunpack.c.l.b16 %v4792
      %v4845 = vunpack.c.h.b16 %v4792
      %v4846 = vunpack.c.l.b16 %v4793
      %v4847 = vunpack.c.l.b16 %v4794
      %v4848 = vunpack.c.h.b16 %v4794
      %v4849 = vunpack.c.l.b16 %v4795
      %v4850 = vunpack.c.l.b16 %v4796
      %v4851 = vunpack.c.h.b16 %v4796
      %v4852 = vunpack.c.l.b16 %v4797
      %v4853 = vunpack.c.l.b16 %v4798
      %v4854 = vunpack.c.h.b16 %v4798
      %v4855 = vunpack.c.l.b16 %v4799
      %v4856 = vunpack.c.l.b16 %v4800
      %v4857 = vunpack.c.h.b16 %v4800
      %v4858 = vunpack.c.l.b16 %v4801
      %v4859 = vunpack.c.l.b16 %v4802
      %v4860 = vunpack.c.h.b16 %v4802
      %v4861 = vunpack.c.l.b16 %v4803
      %v4862 = vunpack.c.l.b16 %v4804
      %v4863 = vunpack.c.h.b16 %v4804
      %v4864 = vunpack.c.l.b16 %v4805
      %v4865 = vunpack.c.l.b16 %v4806
      %v4866 = vunpack.c.h.b16 %v4806
      %v4867 = vunpack.c.l.b16 %v4807
      %v4868 = vunpack.c.l.b16 %v4808
      %v4869 = vunpack.c.h.b16 %v4808
      %v4870 = vunpack.c.l.b16 %v4809
      %v4871 = vunpack.c.l.b16 %v4810
      %v4872 = vunpack.c.h.b16 %v4810
      %v4873 = vunpack.c.l.b16 %v4811
      %v4874 = vpack.c.b16 %v4847, %v4844
      %v4875 = vpack.c.b16 %v4848, %v4845
      %v4876 = vpack.c.b16 %v4849, %v4846
      %v4877 = vpack.c.b16 %v4853, %v4850
      %v4878 = vpack.c.b16 %v4854, %v4851
      %v4879 = vpack.c.b16 %v4855, %v4852
      %v4880 = vpack.c.b16 %v4859, %v4856
      %v4881 = vpack.c.b16 %v4860, %v4857
      %v4882 = vpack.c.b16 %v4861, %v4858
      %v4883 = vpack.c.b16 %v4865, %v4862
      %v4884 = vpack.c.b16 %v4866, %v4863
      %v4885 = vpack.c.b16 %v4867, %v4864
      %v4886 = vpack.c.b16 %v4871, %v4868
      %v4887 = vpack.c.b16 %v4872, %v4869
      %v4888 = vpack.c.b16 %v4873, %v4870
      %v4905 = vsel %vm4733, %v4791, 0
      %4907 = vmatprep.subr.bf16.mxu0 0
      %4908 = vmatpush1.bf16.msra.mxu0 0
      %4909 = vmatprep.subr.bf16.mxu0 0
      %4910 = vmatpush1.bf16.msra.mxu0 0
      %4911 = vmatprep.subr.bf16.mxu0 0
      %4912 = vmatpush1.bf16.msra.mxu0 0
      %4913 = vmatprep.subr.bf16.mxu0 %v4887
      %4914 = vmatpush1.bf16.msra.mxu0 %v4886
      %4915 = vmatprep.subr.bf16.mxu0 %v4884
      %4916 = vmatpush1.bf16.msra.mxu0 %v4883
      %4917 = vmatprep.subr.bf16.mxu0 %v4881
      %4918 = vmatpush1.bf16.msra.mxu0 %v4880
      %4919 = vmatprep.subr.bf16.mxu0 %v4878
      %4920 = vmatpush1.bf16.msra.mxu0 %v4877
      %4921 = vmatprep.subr.bf16.mxu0 %v4875
      %4922 = vmatpush1.bf16.msra.mxu0 %v4874
      %4923 = vmatprep.subr.bf16.mxu0 0
      %4924 = vmatpush2.bf16.msra.mxu0 0
      %4925 = vmatprep.subr.bf16.mxu0 0
      %4926 = vmatpush2.bf16.msra.mxu0 0
      %4927 = vmatprep.subr.bf16.mxu0 0
      %4928 = vmatpush2.bf16.msra.mxu0 0
      %4929 = vmatprep.subr.bf16.mxu0 0
      %4930 = vmatpush2.bf16.msra.mxu0 0
      %4931 = vmatprep.subr.bf16.mxu0 0
      %4932 = vmatpush2.bf16.msra.mxu0 0
      %4933 = vmatprep.subr.bf16.mxu0 0
      %4934 = vmatpush2.bf16.msra.mxu0 0
      %4935 = vmatprep.subr.bf16.mxu0 0
      %4936 = vmatpush2.bf16.msra.mxu0 0
      %4937 = vmatprep.subr.bf16.mxu0 0
      %4938 = vmatpush2.bf16.msra.mxu0 0
      %4939 = vmatprep.mubr.bf16.mxu0 0
      %4940 = vmatmul.mubr.bf16.gmra.mxu0 %v4905
      %v4941 = vpop.f32.mrf.mxu0
      %v4942 = vadd.f32 %v4817, %v4941
      %v4943 = vpop.f32.mrf.mxu0
      %v4944 = vadd.f32 %v4817, %v4943
      %v4945 = vpop.f32.mrf.mxu0
      %v4946 = vadd.f32 %v4822, %v4945
      %v4947 = vpop.f32.mrf.mxu0
      %v4948 = vadd.f32 %v4822, %v4947
      %4949 = vdwg.mxu0
      %4950 = vmatprep.subr.bf16.mxu0 0
      %4951 = vmatpush1.bf16.msra.mxu0 0
      %4952 = vmatprep.subr.bf16.mxu0 0
      %4953 = vmatpush1.bf16.msra.mxu0 0
      %4954 = vmatprep.subr.bf16.mxu0 0
      %4955 = vmatpush1.bf16.msra.mxu0 0
      %4956 = vmatprep.subr.bf16.mxu0 0
      %4957 = vmatpush1.bf16.msra.mxu0 %v4888
      %4958 = vmatprep.subr.bf16.mxu0 0
      %4959 = vmatpush1.bf16.msra.mxu0 %v4885
      %4960 = vmatprep.subr.bf16.mxu0 0
      %4961 = vmatpush1.bf16.msra.mxu0 %v4882
      %4962 = vmatprep.subr.bf16.mxu0 0
      %4963 = vmatpush1.bf16.msra.mxu0 %v4879
      %4964 = vmatprep.subr.bf16.mxu0 0
      %4965 = vmatpush1.bf16.msra.mxu0 %v4876
      %4966 = vmatprep.subr.bf16.mxu0 0
      %4967 = vmatpush2.bf16.msra.mxu0 0
      %4968 = vmatprep.subr.bf16.mxu0 0
      %4969 = vmatpush2.bf16.msra.mxu0 0
      %4970 = vmatprep.subr.bf16.mxu0 0
      %4971 = vmatpush2.bf16.msra.mxu0 0
      %4972 = vmatprep.subr.bf16.mxu0 0
      %4973 = vmatpush2.bf16.msra.mxu0 0
      %4974 = vmatprep.subr.bf16.mxu0 0
      %4975 = vmatpush2.bf16.msra.mxu0 0
      %4976 = vmatprep.subr.bf16.mxu0 0
      %4977 = vmatpush2.bf16.msra.mxu0 0
      %4978 = vmatprep.subr.bf16.mxu0 0
      %4979 = vmatpush2.bf16.msra.mxu0 0
      %4980 = vmatprep.subr.bf16.mxu0 0
      %4981 = vmatpush2.bf16.msra.mxu0 0
      %4982 = vmatprep.mubr.bf16.mxu0 0
      %4983 = vmatmul.mubr.bf16.gmra.mxu0 %v4905
      %v4984 = vpop.f32.mrf.mxu0
      %v4985 = vadd.f32 %v4817, %v4984
      %v4986 = vpop.f32.mrf.mxu0
      %v4987 = vpop.f32.mrf.mxu0
      %v4988 = vadd.f32 %v4822, %v4987
      %v4989 = vpop.f32.mrf.mxu0
      %4990 = vdwg.mxu0
      %v4991 = vsel %vm1920, %v4942, 0.0
      %v4992 = vsel %vm1921, %v4944, 0.0
      %v4993 = vsel %vm1922, %v4985, 0.0
      %v4994 = vsel %vm1920, %v4946, 0.0
      %v4995 = vsel %vm1921, %v4948, 0.0
      %v4996 = vsel %vm1922, %v4988, 0.0
      %v4997 = vpack.c.bf16 %v4994, %v4991
      %v4998 = vpack.c.bf16 %v4995, %v4992
      %v4999 = vpack.c.bf16 %v4996, %v4993
      %v5003 = vunpack.c.l.b16 %v4997
      %v5004 = vunpack.c.l.b16 %v4998
      %v5005 = vunpack.c.l.b16 %v4999
      %v5006 = vunpack.c.h.b16 %v4997
      %v5007 = vunpack.c.h.b16 %v4998
      %v5008 = vunpack.c.h.b16 %v4999
      %v5009 = vpack.c.b16 %v5004, %v5003
      %v5010 = vpack.c.b16 %v5005, %v5005
      %v5011 = vpack.c.b16 %v5007, %v5006
      %v5012 = vpack.c.b16 %v5008, %v5008
      %5013 = vrot.lane.b32.xlu0 %v5009, 19
      %v5014 = vpop.permute.xlu0 %5013
      %5015 = vrot.lane.b32.xlu0 %v5010, 19
      %v5016 = vpop.permute.xlu0 %5015
      %5017 = vrot.lane.b32.xlu0 %v5011, 19
      %v5018 = vpop.permute.xlu0 %5017
      %5019 = vrot.lane.b32.xlu0 %v5012, 19
      %v5020 = vpop.permute.xlu0 %5019
      %v5021 = vrot.slane %v5014, 4
      %v5022 = vrot.slane %v5018, 4
      %v5023 = vsel %vm1955, %v5021, %v5014
      %v5024 = vsel %vm1955, %v5021, %v5016
      %v5025 = vsel %vm1955, %v5022, %v5018
      %v5026 = vsel %vm1955, %v5022, %v5020
      %5031 = vst.msk [vmem:[#allocation2] sm:$0xff] %vm1966, %v5023
      %5032 = vst.msk [vmem:[#allocation2 + $0x8] sm:$0xf] %vm1968, %v5024
      %5033 = vst.msk [vmem:[#allocation2 + $0xc] sm:$0xff] %vm1966, %v5025
      %5034 = vst.msk [vmem:[#allocation2 + $0x14] sm:$0xf] %vm1968, %v5026
      %v5035 = vld [vmem:[%s11] sm:$0xf]
      %v5036 = vld [vmem:[%s11 + $0x4] sm:$0xf]
      %v5037 = vld [vmem:[#allocation2] sm:$0xff]
      %v5038 = vld [vmem:[#allocation2 + $0x8] sm:$0xf]
      %v5039 = vld [vmem:[#allocation2 + $0xc] sm:$0xff]
      %v5040 = vld [vmem:[#allocation2 + $0x14] sm:$0xf]
      %v5041 = vld [vmem:[#allocation2 + $0x18] sm:$0xff]
      %v5042 = vld [vmem:[#allocation2 + $0x20] sm:$0xf]
      %v5043 = vld [vmem:[#allocation2 + $0x24] sm:$0xff]
      %v5044 = vld [vmem:[#allocation2 + $0x2c] sm:$0xf]
      %s5045 = scalar_lea.vmem %s11, 8
      %v5046 = vld [vmem:[%s5045] sm:$0xf]
      %v5047 = vld [vmem:[%s5045 + $0x4] sm:$0xf]
      %v5050 = vunpack.c.l.b16 %v5046
      %v5051 = vunpack.c.l.b16 %v5047
      %v5052 = vpack.c.b16 %v5051, %v5050
      %v5061 = vunpack.c.l.b16 %v5037
      %v5062 = vunpack.c.h.b16 %v5037
      %v5063 = vunpack.c.l.b16 %v5038
      %v5064 = vunpack.c.l.b16 %v5039
      %v5065 = vunpack.c.h.b16 %v5039
      %v5066 = vunpack.c.l.b16 %v5040
      %v5067 = vunpack.c.l.b16 %v5041
      %v5068 = vunpack.c.h.b16 %v5041
      %v5069 = vunpack.c.l.b16 %v5042
      %v5070 = vunpack.c.l.b16 %v5043
      %v5071 = vunpack.c.h.b16 %v5043
      %v5072 = vunpack.c.l.b16 %v5044
      %v5073 = vpack.c.b16 %v5064, %v5061
      %v5074 = vpack.c.b16 %v5065, %v5062
      %v5075 = vpack.c.b16 %v5066, %v5063
      %v5076 = vpack.c.b16 %v5070, %v5067
      %v5077 = vpack.c.b16 %v5071, %v5068
      %v5078 = vpack.c.b16 %v5072, %v5069
      %5079 = vrot.lane.b32.xlu0 %v5073, 127
      %v5080 = vpop.permute.xlu0 %5079
      %5081 = vrot.lane.b32.xlu0 %v5074, 127
      %v5082 = vpop.permute.xlu0 %5081
      %5083 = vrot.lane.b32.xlu0 %v5075, 127
      %v5084 = vpop.permute.xlu0 %5083
      %5085 = vrot.lane.b32.xlu0 %v5076, 127
      %v5086 = vpop.permute.xlu0 %5085
      %5087 = vrot.lane.b32.xlu0 %v5077, 127
      %v5088 = vpop.permute.xlu0 %5087
      %5089 = vrot.lane.b32.xlu0 %v5078, 127
      %v5090 = vpop.permute.xlu0 %5089
      %v5091 = vsel %vm710, %v5080, %v5082
      %v5092 = vsel %vm710, %v5082, %v5084
      %v5093 = vsel %vm710, %v5086, %v5088
      %v5094 = vsel %vm710, %v5088, %v5090
      %v5102 = vsel %vm3025, %v5052, 0
      %5104 = vmatprep.subr.bf16.mxu0 0
      %5105 = vmatpush1.bf16.msra.mxu0 0
      %5106 = vmatprep.subr.bf16.mxu0 0
      %5107 = vmatpush1.bf16.msra.mxu0 0
      %5108 = vmatprep.subr.bf16.mxu0 0
      %5109 = vmatpush1.bf16.msra.mxu0 0
      %5110 = vmatprep.subr.bf16.mxu0 0
      %5111 = vmatpush1.bf16.msra.mxu0 0
      %5112 = vmatprep.subr.bf16.mxu0 0
      %5113 = vmatpush1.bf16.msra.mxu0 0
      %5114 = vmatprep.subr.bf16.mxu0 0
      %5115 = vmatpush1.bf16.msra.mxu0 0
      %5116 = vmatprep.subr.bf16.mxu0 %v5094
      %5117 = vmatpush1.bf16.msra.mxu0 %v5093
      %5118 = vmatprep.subr.bf16.mxu0 %v5092
      %5119 = vmatpush1.bf16.msra.mxu0 %v5091
      %5120 = vmatprep.subr.bf16.mxu0 0
      %5121 = vmatpush2.bf16.msra.mxu0 0
      %5122 = vmatprep.subr.bf16.mxu0 0
      %5123 = vmatpush2.bf16.msra.mxu0 0
      %5124 = vmatprep.subr.bf16.mxu0 0
      %5125 = vmatpush2.bf16.msra.mxu0 0
      %5126 = vmatprep.subr.bf16.mxu0 0
      %5127 = vmatpush2.bf16.msra.mxu0 0
      %5128 = vmatprep.subr.bf16.mxu0 0
      %5129 = vmatpush2.bf16.msra.mxu0 0
      %5130 = vmatprep.subr.bf16.mxu0 0
      %5131 = vmatpush2.bf16.msra.mxu0 0
      %5132 = vmatprep.subr.bf16.mxu0 0
      %5133 = vmatpush2.bf16.msra.mxu0 0
      %5134 = vmatprep.subr.bf16.mxu0 0
      %5135 = vmatpush2.bf16.msra.mxu0 0
      %5136 = vmatprep.mubr.bf16.mxu0 0
      %5137 = vmatmul.mubr.bf16.gmra.mxu0 %v5102
      %v5138 = vpop.f32.mrf.mxu0
      %v5139 = vadd.f32 0.0, %v5138
      %v5140 = vpop.f32.mrf.mxu0
      %v5141 = vadd.f32 0.0, %v5140
      %v5142 = vpop.f32.mrf.mxu0
      %v5143 = vadd.f32 0.0, %v5142
      %v5144 = vpop.f32.mrf.mxu0
      %v5145 = vadd.f32 0.0, %v5144
      %5146 = vdwg.mxu0
      %5147 = vmatprep.subr.bf16.mxu0 0
      %5148 = vmatpush1.bf16.msra.mxu0 0
      %5149 = vmatprep.subr.bf16.mxu0 0
      %5150 = vmatpush1.bf16.msra.mxu0 0
      %5151 = vmatprep.subr.bf16.mxu0 0
      %5152 = vmatpush1.bf16.msra.mxu0 0
      %5153 = vmatprep.subr.bf16.mxu0 0
      %5154 = vmatpush1.bf16.msra.mxu0 0
      %5155 = vmatprep.subr.bf16.mxu0 0
      %5156 = vmatpush1.bf16.msra.mxu0 0
      %5157 = vmatprep.subr.bf16.mxu0 0
      %5158 = vmatpush1.bf16.msra.mxu0 0
      %5159 = vmatprep.subr.bf16.mxu0 0
      %5160 = vmatpush1.bf16.msra.mxu0 %v5090
      %5161 = vmatprep.subr.bf16.mxu0 0
      %5162 = vmatpush1.bf16.msra.mxu0 %v5084
      %5163 = vmatprep.subr.bf16.mxu0 0
      %5164 = vmatpush2.bf16.msra.mxu0 0
      %5165 = vmatprep.subr.bf16.mxu0 0
      %5166 = vmatpush2.bf16.msra.mxu0 0
      %5167 = vmatprep.subr.bf16.mxu0 0
      %5168 = vmatpush2.bf16.msra.mxu0 0
      %5169 = vmatprep.subr.bf16.mxu0 0
      %5170 = vmatpush2.bf16.msra.mxu0 0
      %5171 = vmatprep.subr.bf16.mxu0 0
      %5172 = vmatpush2.bf16.msra.mxu0 0
      %5173 = vmatprep.subr.bf16.mxu0 0
      %5174 = vmatpush2.bf16.msra.mxu0 0
      %5175 = vmatprep.subr.bf16.mxu0 0
      %5176 = vmatpush2.bf16.msra.mxu0 0
      %5177 = vmatprep.subr.bf16.mxu0 0
      %5178 = vmatpush2.bf16.msra.mxu0 0
      %5179 = vmatprep.mubr.bf16.mxu0 0
      %5180 = vmatmul.mubr.bf16.gmra.mxu0 %v5102
      %v5181 = vpop.f32.mrf.mxu0
      %v5182 = vadd.f32 0.0, %v5181
      %v5183 = vpop.f32.mrf.mxu0
      %v5184 = vpop.f32.mrf.mxu0
      %v5185 = vadd.f32 0.0, %v5184
      %v5186 = vpop.f32.mrf.mxu0
      %5187 = vdwg.mxu0
      %v5190 = vunpack.c.l.b16 %v5035
      %v5191 = vunpack.c.l.b16 %v5036
      %v5192 = vpack.c.b16 %v5191, %v5190
      %v5200 = vsel %vm3025, %v5192, 0
      %5202 = vmatprep.subr.bf16.mxu0 0
      %5203 = vmatpush1.bf16.msra.mxu0 0
      %5204 = vmatprep.subr.bf16.mxu0 0
      %5205 = vmatpush1.bf16.msra.mxu0 0
      %5206 = vmatprep.subr.bf16.mxu0 0
      %5207 = vmatpush1.bf16.msra.mxu0 0
      %5208 = vmatprep.subr.bf16.mxu0 0
      %5209 = vmatpush1.bf16.msra.mxu0 0
      %5210 = vmatprep.subr.bf16.mxu0 0
      %5211 = vmatpush1.bf16.msra.mxu0 0
      %5212 = vmatprep.subr.bf16.mxu0 0
      %5213 = vmatpush1.bf16.msra.mxu0 0
      %5214 = vmatprep.subr.bf16.mxu0 %v5077
      %5215 = vmatpush1.bf16.msra.mxu0 %v5076
      %5216 = vmatprep.subr.bf16.mxu0 %v5074
      %5217 = vmatpush1.bf16.msra.mxu0 %v5073
      %5218 = vmatprep.subr.bf16.mxu0 0
      %5219 = vmatpush2.bf16.msra.mxu0 0
      %5220 = vmatprep.subr.bf16.mxu0 0
      %5221 = vmatpush2.bf16.msra.mxu0 0
      %5222 = vmatprep.subr.bf16.mxu0 0
      %5223 = vmatpush2.bf16.msra.mxu0 0
      %5224 = vmatprep.subr.bf16.mxu0 0
      %5225 = vmatpush2.bf16.msra.mxu0 0
      %5226 = vmatprep.subr.bf16.mxu0 0
      %5227 = vmatpush2.bf16.msra.mxu0 0
      %5228 = vmatprep.subr.bf16.mxu0 0
      %5229 = vmatpush2.bf16.msra.mxu0 0
      %5230 = vmatprep.subr.bf16.mxu0 0
      %5231 = vmatpush2.bf16.msra.mxu0 0
      %5232 = vmatprep.subr.bf16.mxu0 0
      %5233 = vmatpush2.bf16.msra.mxu0 0
      %5234 = vmatprep.mubr.bf16.mxu0 0
      %5235 = vmatmul.mubr.bf16.gmra.mxu0 %v5200
      %v5236 = vpop.f32.mrf.mxu0
      %v5237 = vadd.f32 %v5139, %v5236
      %v5238 = vpop.f32.mrf.mxu0
      %v5239 = vadd.f32 %v5141, %v5238
      %v5240 = vpop.f32.mrf.mxu0
      %v5241 = vadd.f32 %v5143, %v5240
      %v5242 = vpop.f32.mrf.mxu0
      %v5243 = vadd.f32 %v5145, %v5242
      %5244 = vdwg.mxu0
      %5245 = vmatprep.subr.bf16.mxu0 0
      %5246 = vmatpush1.bf16.msra.mxu0 0
      %5247 = vmatprep.subr.bf16.mxu0 0
      %5248 = vmatpush1.bf16.msra.mxu0 0
      %5249 = vmatprep.subr.bf16.mxu0 0
      %5250 = vmatpush1.bf16.msra.mxu0 0
      %5251 = vmatprep.subr.bf16.mxu0 0
      %5252 = vmatpush1.bf16.msra.mxu0 0
      %5253 = vmatprep.subr.bf16.mxu0 0
      %5254 = vmatpush1.bf16.msra.mxu0 0
      %5255 = vmatprep.subr.bf16.mxu0 0
      %5256 = vmatpush1.bf16.msra.mxu0 0
      %5257 = vmatprep.subr.bf16.mxu0 0
      %5258 = vmatpush1.bf16.msra.mxu0 %v5078
      %5259 = vmatprep.subr.bf16.mxu0 0
      %5260 = vmatpush1.bf16.msra.mxu0 %v5075
      %5261 = vmatprep.subr.bf16.mxu0 0
      %5262 = vmatpush2.bf16.msra.mxu0 0
      %5263 = vmatprep.subr.bf16.mxu0 0
      %5264 = vmatpush2.bf16.msra.mxu0 0
      %5265 = vmatprep.subr.bf16.mxu0 0
      %5266 = vmatpush2.bf16.msra.mxu0 0
      %5267 = vmatprep.subr.bf16.mxu0 0
      %5268 = vmatpush2.bf16.msra.mxu0 0
      %5269 = vmatprep.subr.bf16.mxu0 0
      %5270 = vmatpush2.bf16.msra.mxu0 0
      %5271 = vmatprep.subr.bf16.mxu0 0
      %5272 = vmatpush2.bf16.msra.mxu0 0
      %5273 = vmatprep.subr.bf16.mxu0 0
      %5274 = vmatpush2.bf16.msra.mxu0 0
      %5275 = vmatprep.subr.bf16.mxu0 0
      %5276 = vmatpush2.bf16.msra.mxu0 0
      %5277 = vmatprep.mubr.bf16.mxu0 0
      %5278 = vmatmul.mubr.bf16.gmra.mxu0 %v5200
      %v5279 = vpop.f32.mrf.mxu0
      %v5280 = vadd.f32 %v5182, %v5279
      %v5281 = vpop.f32.mrf.mxu0
      %v5282 = vpop.f32.mrf.mxu0
      %v5283 = vadd.f32 %v5185, %v5282
      %v5284 = vpop.f32.mrf.mxu0
      %5285 = vdwg.mxu0
      %s5286 = scalar_lea.vmem %s11, 16
      %v5287 = vld [vmem:[%s5286] sm:$0xf]
      %v5288 = vld [vmem:[%s5286 + $0x4] sm:$0xf]
      %v5291 = vunpack.c.l.b16 %v5287
      %v5292 = vunpack.c.l.b16 %v5288
      %v5293 = vpack.c.b16 %v5292, %v5291
      %5294 = vrot.lane.b32.xlu0 %v5073, 126
      %v5295 = vpop.permute.xlu0 %5294
      %5296 = vrot.lane.b32.xlu0 %v5074, 126
      %v5297 = vpop.permute.xlu0 %5296
      %5298 = vrot.lane.b32.xlu0 %v5075, 126
      %v5299 = vpop.permute.xlu0 %5298
      %5300 = vrot.lane.b32.xlu0 %v5076, 126
      %v5301 = vpop.permute.xlu0 %5300
      %5302 = vrot.lane.b32.xlu0 %v5077, 126
      %v5303 = vpop.permute.xlu0 %5302
      %5304 = vrot.lane.b32.xlu0 %v5078, 126
      %v5305 = vpop.permute.xlu0 %5304
      %v5306 = vsel %vm944, %v5295, %v5297
      %v5307 = vsel %vm944, %v5297, %v5299
      %v5308 = vsel %vm944, %v5301, %v5303
      %v5309 = vsel %vm944, %v5303, %v5305
      %v5317 = vsel %vm3025, %v5293, 0
      %5319 = vmatprep.subr.bf16.mxu0 0
      %5320 = vmatpush1.bf16.msra.mxu0 0
      %5321 = vmatprep.subr.bf16.mxu0 0
      %5322 = vmatpush1.bf16.msra.mxu0 0
      %5323 = vmatprep.subr.bf16.mxu0 0
      %5324 = vmatpush1.bf16.msra.mxu0 0
      %5325 = vmatprep.subr.bf16.mxu0 0
      %5326 = vmatpush1.bf16.msra.mxu0 0
      %5327 = vmatprep.subr.bf16.mxu0 0
      %5328 = vmatpush1.bf16.msra.mxu0 0
      %5329 = vmatprep.subr.bf16.mxu0 0
      %5330 = vmatpush1.bf16.msra.mxu0 0
      %5331 = vmatprep.subr.bf16.mxu0 %v5309
      %5332 = vmatpush1.bf16.msra.mxu0 %v5308
      %5333 = vmatprep.subr.bf16.mxu0 %v5307
      %5334 = vmatpush1.bf16.msra.mxu0 %v5306
      %5335 = vmatprep.subr.bf16.mxu0 0
      %5336 = vmatpush2.bf16.msra.mxu0 0
      %5337 = vmatprep.subr.bf16.mxu0 0
      %5338 = vmatpush2.bf16.msra.mxu0 0
      %5339 = vmatprep.subr.bf16.mxu0 0
      %5340 = vmatpush2.bf16.msra.mxu0 0
      %5341 = vmatprep.subr.bf16.mxu0 0
      %5342 = vmatpush2.bf16.msra.mxu0 0
      %5343 = vmatprep.subr.bf16.mxu0 0
      %5344 = vmatpush2.bf16.msra.mxu0 0
      %5345 = vmatprep.subr.bf16.mxu0 0
      %5346 = vmatpush2.bf16.msra.mxu0 0
      %5347 = vmatprep.subr.bf16.mxu0 0
      %5348 = vmatpush2.bf16.msra.mxu0 0
      %5349 = vmatprep.subr.bf16.mxu0 0
      %5350 = vmatpush2.bf16.msra.mxu0 0
      %5351 = vmatprep.mubr.bf16.mxu0 0
      %5352 = vmatmul.mubr.bf16.gmra.mxu0 %v5317
      %v5353 = vpop.f32.mrf.mxu0
      %v5354 = vadd.f32 0.0, %v5353
      %v5355 = vpop.f32.mrf.mxu0
      %v5356 = vadd.f32 0.0, %v5355
      %v5357 = vpop.f32.mrf.mxu0
      %v5358 = vadd.f32 0.0, %v5357
      %v5359 = vpop.f32.mrf.mxu0
      %v5360 = vadd.f32 0.0, %v5359
      %5361 = vdwg.mxu0
      %5362 = vmatprep.subr.bf16.mxu0 0
      %5363 = vmatpush1.bf16.msra.mxu0 0
      %5364 = vmatprep.subr.bf16.mxu0 0
      %5365 = vmatpush1.bf16.msra.mxu0 0
      %5366 = vmatprep.subr.bf16.mxu0 0
      %5367 = vmatpush1.bf16.msra.mxu0 0
      %5368 = vmatprep.subr.bf16.mxu0 0
      %5369 = vmatpush1.bf16.msra.mxu0 0
      %5370 = vmatprep.subr.bf16.mxu0 0
      %5371 = vmatpush1.bf16.msra.mxu0 0
      %5372 = vmatprep.subr.bf16.mxu0 0
      %5373 = vmatpush1.bf16.msra.mxu0 0
      %5374 = vmatprep.subr.bf16.mxu0 0
      %5375 = vmatpush1.bf16.msra.mxu0 %v5305
      %5376 = vmatprep.subr.bf16.mxu0 0
      %5377 = vmatpush1.bf16.msra.mxu0 %v5299
      %5378 = vmatprep.subr.bf16.mxu0 0
      %5379 = vmatpush2.bf16.msra.mxu0 0
      %5380 = vmatprep.subr.bf16.mxu0 0
      %5381 = vmatpush2.bf16.msra.mxu0 0
      %5382 = vmatprep.subr.bf16.mxu0 0
      %5383 = vmatpush2.bf16.msra.mxu0 0
      %5384 = vmatprep.subr.bf16.mxu0 0
      %5385 = vmatpush2.bf16.msra.mxu0 0
      %5386 = vmatprep.subr.bf16.mxu0 0
      %5387 = vmatpush2.bf16.msra.mxu0 0
      %5388 = vmatprep.subr.bf16.mxu0 0
      %5389 = vmatpush2.bf16.msra.mxu0 0
      %5390 = vmatprep.subr.bf16.mxu0 0
      %5391 = vmatpush2.bf16.msra.mxu0 0
      %5392 = vmatprep.subr.bf16.mxu0 0
      %5393 = vmatpush2.bf16.msra.mxu0 0
      %5394 = vmatprep.mubr.bf16.mxu0 0
      %5395 = vmatmul.mubr.bf16.gmra.mxu0 %v5317
      %v5396 = vpop.f32.mrf.mxu0
      %v5397 = vadd.f32 0.0, %v5396
      %v5398 = vpop.f32.mrf.mxu0
      %v5399 = vpop.f32.mrf.mxu0
      %v5400 = vadd.f32 0.0, %v5399
      %v5401 = vpop.f32.mrf.mxu0
      %5402 = vdwg.mxu0
      %v5403 = vadd.f32 %v5237, %v5354
      %v5404 = vadd.f32 %v5239, %v5356
      %v5405 = vadd.f32 %v5280, %v5397
      %v5406 = vadd.f32 %v5241, %v5358
      %v5407 = vadd.f32 %v5243, %v5360
      %v5408 = vadd.f32 %v5283, %v5400
      %s5409 = scalar_lea.vmem %s11, 24
      %v5410 = vld [vmem:[%s5409] sm:$0xf]
      %v5411 = vld [vmem:[%s5409 + $0x4] sm:$0xf]
      %v5414 = vunpack.c.l.b16 %v5410
      %v5415 = vunpack.c.l.b16 %v5411
      %v5416 = vpack.c.b16 %v5415, %v5414
      %5417 = vrot.lane.b32.xlu0 %v5073, 110
      %v5418 = vpop.permute.xlu0 %5417
      %5419 = vrot.lane.b32.xlu0 %v5074, 110
      %v5420 = vpop.permute.xlu0 %5419
      %5421 = vrot.lane.b32.xlu0 %v5075, 110
      %v5422 = vpop.permute.xlu0 %5421
      %5423 = vrot.lane.b32.xlu0 %v5076, 110
      %v5424 = vpop.permute.xlu0 %5423
      %5425 = vrot.lane.b32.xlu0 %v5077, 110
      %v5426 = vpop.permute.xlu0 %5425
      %5427 = vrot.lane.b32.xlu0 %v5078, 110
      %v5428 = vpop.permute.xlu0 %5427
      %v5429 = vsel %vm1081, %v5418, %v5420
      %v5430 = vsel %vm1081, %v5420, %v5422
      %v5431 = vsel %vm1081, %v5424, %v5426
      %v5432 = vsel %vm1081, %v5426, %v5428
      %v5440 = vsel %vm3025, %v5416, 0
      %5442 = vmatprep.subr.bf16.mxu0 0
      %5443 = vmatpush1.bf16.msra.mxu0 0
      %5444 = vmatprep.subr.bf16.mxu0 0
      %5445 = vmatpush1.bf16.msra.mxu0 0
      %5446 = vmatprep.subr.bf16.mxu0 0
      %5447 = vmatpush1.bf16.msra.mxu0 0
      %5448 = vmatprep.subr.bf16.mxu0 0
      %5449 = vmatpush1.bf16.msra.mxu0 0
      %5450 = vmatprep.subr.bf16.mxu0 0
      %5451 = vmatpush1.bf16.msra.mxu0 0
      %5452 = vmatprep.subr.bf16.mxu0 0
      %5453 = vmatpush1.bf16.msra.mxu0 0
      %5454 = vmatprep.subr.bf16.mxu0 %v5432
      %5455 = vmatpush1.bf16.msra.mxu0 %v5431
      %5456 = vmatprep.subr.bf16.mxu0 %v5430
      %5457 = vmatpush1.bf16.msra.mxu0 %v5429
      %5458 = vmatprep.subr.bf16.mxu0 0
      %5459 = vmatpush2.bf16.msra.mxu0 0
      %5460 = vmatprep.subr.bf16.mxu0 0
      %5461 = vmatpush2.bf16.msra.mxu0 0
      %5462 = vmatprep.subr.bf16.mxu0 0
      %5463 = vmatpush2.bf16.msra.mxu0 0
      %5464 = vmatprep.subr.bf16.mxu0 0
      %5465 = vmatpush2.bf16.msra.mxu0 0
      %5466 = vmatprep.subr.bf16.mxu0 0
      %5467 = vmatpush2.bf16.msra.mxu0 0
      %5468 = vmatprep.subr.bf16.mxu0 0
      %5469 = vmatpush2.bf16.msra.mxu0 0
      %5470 = vmatprep.subr.bf16.mxu0 0
      %5471 = vmatpush2.bf16.msra.mxu0 0
      %5472 = vmatprep.subr.bf16.mxu0 0
      %5473 = vmatpush2.bf16.msra.mxu0 0
      %5474 = vmatprep.mubr.bf16.mxu0 0
      %5475 = vmatmul.mubr.bf16.gmra.mxu0 %v5440
      %v5476 = vpop.f32.mrf.mxu0
      %v5477 = vadd.f32 0.0, %v5476
      %v5478 = vpop.f32.mrf.mxu0
      %v5479 = vadd.f32 0.0, %v5478
      %v5480 = vpop.f32.mrf.mxu0
      %v5481 = vadd.f32 0.0, %v5480
      %v5482 = vpop.f32.mrf.mxu0
      %v5483 = vadd.f32 0.0, %v5482
      %5484 = vdwg.mxu0
      %5485 = vmatprep.subr.bf16.mxu0 0
      %5486 = vmatpush1.bf16.msra.mxu0 0
      %5487 = vmatprep.subr.bf16.mxu0 0
      %5488 = vmatpush1.bf16.msra.mxu0 0
      %5489 = vmatprep.subr.bf16.mxu0 0
      %5490 = vmatpush1.bf16.msra.mxu0 0
      %5491 = vmatprep.subr.bf16.mxu0 0
      %5492 = vmatpush1.bf16.msra.mxu0 0
      %5493 = vmatprep.subr.bf16.mxu0 0
      %5494 = vmatpush1.bf16.msra.mxu0 0
      %5495 = vmatprep.subr.bf16.mxu0 0
      %5496 = vmatpush1.bf16.msra.mxu0 0
      %5497 = vmatprep.subr.bf16.mxu0 0
      %5498 = vmatpush1.bf16.msra.mxu0 %v5428
      %5499 = vmatprep.subr.bf16.mxu0 0
      %5500 = vmatpush1.bf16.msra.mxu0 %v5422
      %5501 = vmatprep.subr.bf16.mxu0 0
      %5502 = vmatpush2.bf16.msra.mxu0 0
      %5503 = vmatprep.subr.bf16.mxu0 0
      %5504 = vmatpush2.bf16.msra.mxu0 0
      %5505 = vmatprep.subr.bf16.mxu0 0
      %5506 = vmatpush2.bf16.msra.mxu0 0
      %5507 = vmatprep.subr.bf16.mxu0 0
      %5508 = vmatpush2.bf16.msra.mxu0 0
      %5509 = vmatprep.subr.bf16.mxu0 0
      %5510 = vmatpush2.bf16.msra.mxu0 0
      %5511 = vmatprep.subr.bf16.mxu0 0
      %5512 = vmatpush2.bf16.msra.mxu0 0
      %5513 = vmatprep.subr.bf16.mxu0 0
      %5514 = vmatpush2.bf16.msra.mxu0 0
      %5515 = vmatprep.subr.bf16.mxu0 0
      %5516 = vmatpush2.bf16.msra.mxu0 0
      %5517 = vmatprep.mubr.bf16.mxu0 0
      %5518 = vmatmul.mubr.bf16.gmra.mxu0 %v5440
      %v5519 = vpop.f32.mrf.mxu0
      %v5520 = vadd.f32 0.0, %v5519
      %v5521 = vpop.f32.mrf.mxu0
      %v5522 = vpop.f32.mrf.mxu0
      %v5523 = vadd.f32 0.0, %v5522
      %v5524 = vpop.f32.mrf.mxu0
      %5525 = vdwg.mxu0
      %v5526 = vadd.f32 %v5403, %v5477
      %v5527 = vadd.f32 %v5404, %v5479
      %v5528 = vadd.f32 %v5405, %v5520
      %v5529 = vadd.f32 %v5406, %v5481
      %v5530 = vadd.f32 %v5407, %v5483
      %v5531 = vadd.f32 %v5408, %v5523
      %s5532 = scalar_lea.vmem %s11, 32
      %v5533 = vld [vmem:[%s5532] sm:$0xf]
      %v5534 = vld [vmem:[%s5532 + $0x4] sm:$0xf]
      %v5537 = vunpack.c.l.b16 %v5533
      %v5538 = vunpack.c.l.b16 %v5534
      %v5539 = vpack.c.b16 %v5538, %v5537
      %5540 = vrot.lane.b32.xlu0 %v5073, 109
      %v5541 = vpop.permute.xlu0 %5540
      %5542 = vrot.lane.b32.xlu0 %v5074, 109
      %v5543 = vpop.permute.xlu0 %5542
      %5544 = vrot.lane.b32.xlu0 %v5075, 109
      %v5545 = vpop.permute.xlu0 %5544
      %5546 = vrot.lane.b32.xlu0 %v5076, 109
      %v5547 = vpop.permute.xlu0 %5546
      %5548 = vrot.lane.b32.xlu0 %v5077, 109
      %v5549 = vpop.permute.xlu0 %5548
      %5550 = vrot.lane.b32.xlu0 %v5078, 109
      %v5551 = vpop.permute.xlu0 %5550
      %v5552 = vsel %vm1218, %v5541, %v5543
      %v5553 = vsel %vm1218, %v5543, %v5545
      %v5554 = vsel %vm1218, %v5547, %v5549
      %v5555 = vsel %vm1218, %v5549, %v5551
      %v5563 = vsel %vm3025, %v5539, 0
      %5565 = vmatprep.subr.bf16.mxu0 0
      %5566 = vmatpush1.bf16.msra.mxu0 0
      %5567 = vmatprep.subr.bf16.mxu0 0
      %5568 = vmatpush1.bf16.msra.mxu0 0
      %5569 = vmatprep.subr.bf16.mxu0 0
      %5570 = vmatpush1.bf16.msra.mxu0 0
      %5571 = vmatprep.subr.bf16.mxu0 0
      %5572 = vmatpush1.bf16.msra.mxu0 0
      %5573 = vmatprep.subr.bf16.mxu0 0
      %5574 = vmatpush1.bf16.msra.mxu0 0
      %5575 = vmatprep.subr.bf16.mxu0 0
      %5576 = vmatpush1.bf16.msra.mxu0 0
      %5577 = vmatprep.subr.bf16.mxu0 %v5555
      %5578 = vmatpush1.bf16.msra.mxu0 %v5554
      %5579 = vmatprep.subr.bf16.mxu0 %v5553
      %5580 = vmatpush1.bf16.msra.mxu0 %v5552
      %5581 = vmatprep.subr.bf16.mxu0 0
      %5582 = vmatpush2.bf16.msra.mxu0 0
      %5583 = vmatprep.subr.bf16.mxu0 0
      %5584 = vmatpush2.bf16.msra.mxu0 0
      %5585 = vmatprep.subr.bf16.mxu0 0
      %5586 = vmatpush2.bf16.msra.mxu0 0
      %5587 = vmatprep.subr.bf16.mxu0 0
      %5588 = vmatpush2.bf16.msra.mxu0 0
      %5589 = vmatprep.subr.bf16.mxu0 0
      %5590 = vmatpush2.bf16.msra.mxu0 0
      %5591 = vmatprep.subr.bf16.mxu0 0
      %5592 = vmatpush2.bf16.msra.mxu0 0
      %5593 = vmatprep.subr.bf16.mxu0 0
      %5594 = vmatpush2.bf16.msra.mxu0 0
      %5595 = vmatprep.subr.bf16.mxu0 0
      %5596 = vmatpush2.bf16.msra.mxu0 0
      %5597 = vmatprep.mubr.bf16.mxu0 0
      %5598 = vmatmul.mubr.bf16.gmra.mxu0 %v5563
      %v5599 = vpop.f32.mrf.mxu0
      %v5600 = vadd.f32 0.0, %v5599
      %v5601 = vpop.f32.mrf.mxu0
      %v5602 = vadd.f32 0.0, %v5601
      %v5603 = vpop.f32.mrf.mxu0
      %v5604 = vadd.f32 0.0, %v5603
      %v5605 = vpop.f32.mrf.mxu0
      %v5606 = vadd.f32 0.0, %v5605
      %5607 = vdwg.mxu0
      %5608 = vmatprep.subr.bf16.mxu0 0
      %5609 = vmatpush1.bf16.msra.mxu0 0
      %5610 = vmatprep.subr.bf16.mxu0 0
      %5611 = vmatpush1.bf16.msra.mxu0 0
      %5612 = vmatprep.subr.bf16.mxu0 0
      %5613 = vmatpush1.bf16.msra.mxu0 0
      %5614 = vmatprep.subr.bf16.mxu0 0
      %5615 = vmatpush1.bf16.msra.mxu0 0
      %5616 = vmatprep.subr.bf16.mxu0 0
      %5617 = vmatpush1.bf16.msra.mxu0 0
      %5618 = vmatprep.subr.bf16.mxu0 0
      %5619 = vmatpush1.bf16.msra.mxu0 0
      %5620 = vmatprep.subr.bf16.mxu0 0
      %5621 = vmatpush1.bf16.msra.mxu0 %v5551
      %5622 = vmatprep.subr.bf16.mxu0 0
      %5623 = vmatpush1.bf16.msra.mxu0 %v5545
      %5624 = vmatprep.subr.bf16.mxu0 0
      %5625 = vmatpush2.bf16.msra.mxu0 0
      %5626 = vmatprep.subr.bf16.mxu0 0
      %5627 = vmatpush2.bf16.msra.mxu0 0
      %5628 = vmatprep.subr.bf16.mxu0 0
      %5629 = vmatpush2.bf16.msra.mxu0 0
      %5630 = vmatprep.subr.bf16.mxu0 0
      %5631 = vmatpush2.bf16.msra.mxu0 0
      %5632 = vmatprep.subr.bf16.mxu0 0
      %5633 = vmatpush2.bf16.msra.mxu0 0
      %5634 = vmatprep.subr.bf16.mxu0 0
      %5635 = vmatpush2.bf16.msra.mxu0 0
      %5636 = vmatprep.subr.bf16.mxu0 0
      %5637 = vmatpush2.bf16.msra.mxu0 0
      %5638 = vmatprep.subr.bf16.mxu0 0
      %5639 = vmatpush2.bf16.msra.mxu0 0
      %5640 = vmatprep.mubr.bf16.mxu0 0
      %5641 = vmatmul.mubr.bf16.gmra.mxu0 %v5563
      %v5642 = vpop.f32.mrf.mxu0
      %v5643 = vadd.f32 0.0, %v5642
      %v5644 = vpop.f32.mrf.mxu0
      %v5645 = vpop.f32.mrf.mxu0
      %v5646 = vadd.f32 0.0, %v5645
      %v5647 = vpop.f32.mrf.mxu0
      %5648 = vdwg.mxu0
      %v5649 = vadd.f32 %v5526, %v5600
      %v5650 = vadd.f32 %v5527, %v5602
      %v5651 = vadd.f32 %v5528, %v5643
      %v5652 = vadd.f32 %v5529, %v5604
      %v5653 = vadd.f32 %v5530, %v5606
      %v5654 = vadd.f32 %v5531, %v5646
      %s5655 = scalar_lea.vmem %s11, 40
      %v5656 = vld [vmem:[%s5655] sm:$0xf]
      %v5657 = vld [vmem:[%s5655 + $0x4] sm:$0xf]
      %v5660 = vunpack.c.l.b16 %v5656
      %v5661 = vunpack.c.l.b16 %v5657
      %v5662 = vpack.c.b16 %v5661, %v5660
      %5663 = vrot.lane.b32.xlu0 %v5073, 108
      %v5664 = vpop.permute.xlu0 %5663
      %5665 = vrot.lane.b32.xlu0 %v5074, 108
      %v5666 = vpop.permute.xlu0 %5665
      %5667 = vrot.lane.b32.xlu0 %v5075, 108
      %v5668 = vpop.permute.xlu0 %5667
      %5669 = vrot.lane.b32.xlu0 %v5076, 108
      %v5670 = vpop.permute.xlu0 %5669
      %5671 = vrot.lane.b32.xlu0 %v5077, 108
      %v5672 = vpop.permute.xlu0 %5671
      %5673 = vrot.lane.b32.xlu0 %v5078, 108
      %v5674 = vpop.permute.xlu0 %5673
      %v5675 = vsel %vm1355, %v5664, %v5666
      %v5676 = vsel %vm1355, %v5666, %v5668
      %v5677 = vsel %vm1355, %v5670, %v5672
      %v5678 = vsel %vm1355, %v5672, %v5674
      %v5686 = vsel %vm3025, %v5662, 0
      %5688 = vmatprep.subr.bf16.mxu0 0
      %5689 = vmatpush1.bf16.msra.mxu0 0
      %5690 = vmatprep.subr.bf16.mxu0 0
      %5691 = vmatpush1.bf16.msra.mxu0 0
      %5692 = vmatprep.subr.bf16.mxu0 0
      %5693 = vmatpush1.bf16.msra.mxu0 0
      %5694 = vmatprep.subr.bf16.mxu0 0
      %5695 = vmatpush1.bf16.msra.mxu0 0
      %5696 = vmatprep.subr.bf16.mxu0 0
      %5697 = vmatpush1.bf16.msra.mxu0 0
      %5698 = vmatprep.subr.bf16.mxu0 0
      %5699 = vmatpush1.bf16.msra.mxu0 0
      %5700 = vmatprep.subr.bf16.mxu0 %v5678
      %5701 = vmatpush1.bf16.msra.mxu0 %v5677
      %5702 = vmatprep.subr.bf16.mxu0 %v5676
      %5703 = vmatpush1.bf16.msra.mxu0 %v5675
      %5704 = vmatprep.subr.bf16.mxu0 0
      %5705 = vmatpush2.bf16.msra.mxu0 0
      %5706 = vmatprep.subr.bf16.mxu0 0
      %5707 = vmatpush2.bf16.msra.mxu0 0
      %5708 = vmatprep.subr.bf16.mxu0 0
      %5709 = vmatpush2.bf16.msra.mxu0 0
      %5710 = vmatprep.subr.bf16.mxu0 0
      %5711 = vmatpush2.bf16.msra.mxu0 0
      %5712 = vmatprep.subr.bf16.mxu0 0
      %5713 = vmatpush2.bf16.msra.mxu0 0
      %5714 = vmatprep.subr.bf16.mxu0 0
      %5715 = vmatpush2.bf16.msra.mxu0 0
      %5716 = vmatprep.subr.bf16.mxu0 0
      %5717 = vmatpush2.bf16.msra.mxu0 0
      %5718 = vmatprep.subr.bf16.mxu0 0
      %5719 = vmatpush2.bf16.msra.mxu0 0
      %5720 = vmatprep.mubr.bf16.mxu0 0
      %5721 = vmatmul.mubr.bf16.gmra.mxu0 %v5686
      %v5722 = vpop.f32.mrf.mxu0
      %v5723 = vadd.f32 0.0, %v5722
      %v5724 = vpop.f32.mrf.mxu0
      %v5725 = vadd.f32 0.0, %v5724
      %v5726 = vpop.f32.mrf.mxu0
      %v5727 = vadd.f32 0.0, %v5726
      %v5728 = vpop.f32.mrf.mxu0
      %v5729 = vadd.f32 0.0, %v5728
      %5730 = vdwg.mxu0
      %5731 = vmatprep.subr.bf16.mxu0 0
      %5732 = vmatpush1.bf16.msra.mxu0 0
      %5733 = vmatprep.subr.bf16.mxu0 0
      %5734 = vmatpush1.bf16.msra.mxu0 0
      %5735 = vmatprep.subr.bf16.mxu0 0
      %5736 = vmatpush1.bf16.msra.mxu0 0
      %5737 = vmatprep.subr.bf16.mxu0 0
      %5738 = vmatpush1.bf16.msra.mxu0 0
      %5739 = vmatprep.subr.bf16.mxu0 0
      %5740 = vmatpush1.bf16.msra.mxu0 0
      %5741 = vmatprep.subr.bf16.mxu0 0
      %5742 = vmatpush1.bf16.msra.mxu0 0
      %5743 = vmatprep.subr.bf16.mxu0 0
      %5744 = vmatpush1.bf16.msra.mxu0 %v5674
      %5745 = vmatprep.subr.bf16.mxu0 0
      %5746 = vmatpush1.bf16.msra.mxu0 %v5668
      %5747 = vmatprep.subr.bf16.mxu0 0
      %5748 = vmatpush2.bf16.msra.mxu0 0
      %5749 = vmatprep.subr.bf16.mxu0 0
      %5750 = vmatpush2.bf16.msra.mxu0 0
      %5751 = vmatprep.subr.bf16.mxu0 0
      %5752 = vmatpush2.bf16.msra.mxu0 0
      %5753 = vmatprep.subr.bf16.mxu0 0
      %5754 = vmatpush2.bf16.msra.mxu0 0
      %5755 = vmatprep.subr.bf16.mxu0 0
      %5756 = vmatpush2.bf16.msra.mxu0 0
      %5757 = vmatprep.subr.bf16.mxu0 0
      %5758 = vmatpush2.bf16.msra.mxu0 0
      %5759 = vmatprep.subr.bf16.mxu0 0
      %5760 = vmatpush2.bf16.msra.mxu0 0
      %5761 = vmatprep.subr.bf16.mxu0 0
      %5762 = vmatpush2.bf16.msra.mxu0 0
      %5763 = vmatprep.mubr.bf16.mxu0 0
      %5764 = vmatmul.mubr.bf16.gmra.mxu0 %v5686
      %v5765 = vpop.f32.mrf.mxu0
      %v5766 = vadd.f32 0.0, %v5765
      %v5767 = vpop.f32.mrf.mxu0
      %v5768 = vpop.f32.mrf.mxu0
      %v5769 = vadd.f32 0.0, %v5768
      %v5770 = vpop.f32.mrf.mxu0
      %5771 = vdwg.mxu0
      %v5772 = vadd.f32 %v5649, %v5723
      %v5773 = vadd.f32 %v5650, %v5725
      %v5774 = vadd.f32 %v5651, %v5766
      %v5775 = vadd.f32 %v5652, %v5727
      %v5776 = vadd.f32 %v5653, %v5729
      %v5777 = vadd.f32 %v5654, %v5769
      %s5778 = scalar_lea.vmem %s11, 48
      %v5779 = vld [vmem:[%s5778] sm:$0xf]
      %v5780 = vld [vmem:[%s5778 + $0x4] sm:$0xf]
      %v5783 = vunpack.c.l.b16 %v5779
      %v5784 = vunpack.c.l.b16 %v5780
      %v5785 = vpack.c.b16 %v5784, %v5783
      %5786 = vrot.lane.b32.xlu0 %v5073, 92
      %v5787 = vpop.permute.xlu0 %5786
      %5788 = vrot.lane.b32.xlu0 %v5074, 92
      %v5789 = vpop.permute.xlu0 %5788
      %5790 = vrot.lane.b32.xlu0 %v5075, 92
      %v5791 = vpop.permute.xlu0 %5790
      %5792 = vrot.lane.b32.xlu0 %v5076, 92
      %v5793 = vpop.permute.xlu0 %5792
      %5794 = vrot.lane.b32.xlu0 %v5077, 92
      %v5795 = vpop.permute.xlu0 %5794
      %5796 = vrot.lane.b32.xlu0 %v5078, 92
      %v5797 = vpop.permute.xlu0 %5796
      %v5798 = vsel %vm1492, %v5787, %v5789
      %v5799 = vsel %vm1492, %v5789, %v5791
      %v5800 = vsel %vm1492, %v5793, %v5795
      %v5801 = vsel %vm1492, %v5795, %v5797
      %v5809 = vsel %vm3025, %v5785, 0
      %5811 = vmatprep.subr.bf16.mxu0 0
      %5812 = vmatpush1.bf16.msra.mxu0 0
      %5813 = vmatprep.subr.bf16.mxu0 0
      %5814 = vmatpush1.bf16.msra.mxu0 0
      %5815 = vmatprep.subr.bf16.mxu0 0
      %5816 = vmatpush1.bf16.msra.mxu0 0
      %5817 = vmatprep.subr.bf16.mxu0 0
      %5818 = vmatpush1.bf16.msra.mxu0 0
      %5819 = vmatprep.subr.bf16.mxu0 0
      %5820 = vmatpush1.bf16.msra.mxu0 0
      %5821 = vmatprep.subr.bf16.mxu0 0
      %5822 = vmatpush1.bf16.msra.mxu0 0
      %5823 = vmatprep.subr.bf16.mxu0 %v5801
      %5824 = vmatpush1.bf16.msra.mxu0 %v5800
      %5825 = vmatprep.subr.bf16.mxu0 %v5799
      %5826 = vmatpush1.bf16.msra.mxu0 %v5798
      %5827 = vmatprep.subr.bf16.mxu0 0
      %5828 = vmatpush2.bf16.msra.mxu0 0
      %5829 = vmatprep.subr.bf16.mxu0 0
      %5830 = vmatpush2.bf16.msra.mxu0 0
      %5831 = vmatprep.subr.bf16.mxu0 0
      %5832 = vmatpush2.bf16.msra.mxu0 0
      %5833 = vmatprep.subr.bf16.mxu0 0
      %5834 = vmatpush2.bf16.msra.mxu0 0
      %5835 = vmatprep.subr.bf16.mxu0 0
      %5836 = vmatpush2.bf16.msra.mxu0 0
      %5837 = vmatprep.subr.bf16.mxu0 0
      %5838 = vmatpush2.bf16.msra.mxu0 0
      %5839 = vmatprep.subr.bf16.mxu0 0
      %5840 = vmatpush2.bf16.msra.mxu0 0
      %5841 = vmatprep.subr.bf16.mxu0 0
      %5842 = vmatpush2.bf16.msra.mxu0 0
      %5843 = vmatprep.mubr.bf16.mxu0 0
      %5844 = vmatmul.mubr.bf16.gmra.mxu0 %v5809
      %v5845 = vpop.f32.mrf.mxu0
      %v5846 = vadd.f32 0.0, %v5845
      %v5847 = vpop.f32.mrf.mxu0
      %v5848 = vadd.f32 0.0, %v5847
      %v5849 = vpop.f32.mrf.mxu0
      %v5850 = vadd.f32 0.0, %v5849
      %v5851 = vpop.f32.mrf.mxu0
      %v5852 = vadd.f32 0.0, %v5851
      %5853 = vdwg.mxu0
      %5854 = vmatprep.subr.bf16.mxu0 0
      %5855 = vmatpush1.bf16.msra.mxu0 0
      %5856 = vmatprep.subr.bf16.mxu0 0
      %5857 = vmatpush1.bf16.msra.mxu0 0
      %5858 = vmatprep.subr.bf16.mxu0 0
      %5859 = vmatpush1.bf16.msra.mxu0 0
      %5860 = vmatprep.subr.bf16.mxu0 0
      %5861 = vmatpush1.bf16.msra.mxu0 0
      %5862 = vmatprep.subr.bf16.mxu0 0
      %5863 = vmatpush1.bf16.msra.mxu0 0
      %5864 = vmatprep.subr.bf16.mxu0 0
      %5865 = vmatpush1.bf16.msra.mxu0 0
      %5866 = vmatprep.subr.bf16.mxu0 0
      %5867 = vmatpush1.bf16.msra.mxu0 %v5797
      %5868 = vmatprep.subr.bf16.mxu0 0
      %5869 = vmatpush1.bf16.msra.mxu0 %v5791
      %5870 = vmatprep.subr.bf16.mxu0 0
      %5871 = vmatpush2.bf16.msra.mxu0 0
      %5872 = vmatprep.subr.bf16.mxu0 0
      %5873 = vmatpush2.bf16.msra.mxu0 0
      %5874 = vmatprep.subr.bf16.mxu0 0
      %5875 = vmatpush2.bf16.msra.mxu0 0
      %5876 = vmatprep.subr.bf16.mxu0 0
      %5877 = vmatpush2.bf16.msra.mxu0 0
      %5878 = vmatprep.subr.bf16.mxu0 0
      %5879 = vmatpush2.bf16.msra.mxu0 0
      %5880 = vmatprep.subr.bf16.mxu0 0
      %5881 = vmatpush2.bf16.msra.mxu0 0
      %5882 = vmatprep.subr.bf16.mxu0 0
      %5883 = vmatpush2.bf16.msra.mxu0 0
      %5884 = vmatprep.subr.bf16.mxu0 0
      %5885 = vmatpush2.bf16.msra.mxu0 0
      %5886 = vmatprep.mubr.bf16.mxu0 0
      %5887 = vmatmul.mubr.bf16.gmra.mxu0 %v5809
      %v5888 = vpop.f32.mrf.mxu0
      %v5889 = vadd.f32 0.0, %v5888
      %v5890 = vpop.f32.mrf.mxu0
      %v5891 = vpop.f32.mrf.mxu0
      %v5892 = vadd.f32 0.0, %v5891
      %v5893 = vpop.f32.mrf.mxu0
      %5894 = vdwg.mxu0
      %v5895 = vadd.f32 %v5772, %v5846
      %v5896 = vadd.f32 %v5773, %v5848
      %v5897 = vadd.f32 %v5774, %v5889
      %v5898 = vadd.f32 %v5775, %v5850
      %v5899 = vadd.f32 %v5776, %v5852
      %v5900 = vadd.f32 %v5777, %v5892
      %s5901 = scalar_lea.vmem %s11, 56
      %v5902 = vld [vmem:[%s5901] sm:$0xf]
      %v5903 = vld [vmem:[%s5901 + $0x4] sm:$0xf]
      %v5906 = vunpack.c.l.b16 %v5902
      %v5907 = vunpack.c.l.b16 %v5903
      %v5908 = vpack.c.b16 %v5907, %v5906
      %5909 = vrot.lane.b32.xlu0 %v5073, 91
      %v5910 = vpop.permute.xlu0 %5909
      %5911 = vrot.lane.b32.xlu0 %v5074, 91
      %v5912 = vpop.permute.xlu0 %5911
      %5913 = vrot.lane.b32.xlu0 %v5075, 91
      %v5914 = vpop.permute.xlu0 %5913
      %5915 = vrot.lane.b32.xlu0 %v5076, 91
      %v5916 = vpop.permute.xlu0 %5915
      %5917 = vrot.lane.b32.xlu0 %v5077, 91
      %v5918 = vpop.permute.xlu0 %5917
      %5919 = vrot.lane.b32.xlu0 %v5078, 91
      %v5920 = vpop.permute.xlu0 %5919
      %v5921 = vsel %vm1629, %v5910, %v5912
      %v5922 = vsel %vm1629, %v5912, %v5914
      %v5923 = vsel %vm1629, %v5916, %v5918
      %v5924 = vsel %vm1629, %v5918, %v5920
      %v5932 = vsel %vm3025, %v5908, 0
      %5934 = vmatprep.subr.bf16.mxu0 0
      %5935 = vmatpush1.bf16.msra.mxu0 0
      %5936 = vmatprep.subr.bf16.mxu0 0
      %5937 = vmatpush1.bf16.msra.mxu0 0
      %5938 = vmatprep.subr.bf16.mxu0 0
      %5939 = vmatpush1.bf16.msra.mxu0 0
      %5940 = vmatprep.subr.bf16.mxu0 0
      %5941 = vmatpush1.bf16.msra.mxu0 0
      %5942 = vmatprep.subr.bf16.mxu0 0
      %5943 = vmatpush1.bf16.msra.mxu0 0
      %5944 = vmatprep.subr.bf16.mxu0 0
      %5945 = vmatpush1.bf16.msra.mxu0 0
      %5946 = vmatprep.subr.bf16.mxu0 %v5924
      %5947 = vmatpush1.bf16.msra.mxu0 %v5923
      %5948 = vmatprep.subr.bf16.mxu0 %v5922
      %5949 = vmatpush1.bf16.msra.mxu0 %v5921
      %5950 = vmatprep.subr.bf16.mxu0 0
      %5951 = vmatpush2.bf16.msra.mxu0 0
      %5952 = vmatprep.subr.bf16.mxu0 0
      %5953 = vmatpush2.bf16.msra.mxu0 0
      %5954 = vmatprep.subr.bf16.mxu0 0
      %5955 = vmatpush2.bf16.msra.mxu0 0
      %5956 = vmatprep.subr.bf16.mxu0 0
      %5957 = vmatpush2.bf16.msra.mxu0 0
      %5958 = vmatprep.subr.bf16.mxu0 0
      %5959 = vmatpush2.bf16.msra.mxu0 0
      %5960 = vmatprep.subr.bf16.mxu0 0
      %5961 = vmatpush2.bf16.msra.mxu0 0
      %5962 = vmatprep.subr.bf16.mxu0 0
      %5963 = vmatpush2.bf16.msra.mxu0 0
      %5964 = vmatprep.subr.bf16.mxu0 0
      %5965 = vmatpush2.bf16.msra.mxu0 0
      %5966 = vmatprep.mubr.bf16.mxu0 0
      %5967 = vmatmul.mubr.bf16.gmra.mxu0 %v5932
      %v5968 = vpop.f32.mrf.mxu0
      %v5969 = vadd.f32 0.0, %v5968
      %v5970 = vpop.f32.mrf.mxu0
      %v5971 = vadd.f32 0.0, %v5970
      %v5972 = vpop.f32.mrf.mxu0
      %v5973 = vadd.f32 0.0, %v5972
      %v5974 = vpop.f32.mrf.mxu0
      %v5975 = vadd.f32 0.0, %v5974
      %5976 = vdwg.mxu0
      %5977 = vmatprep.subr.bf16.mxu0 0
      %5978 = vmatpush1.bf16.msra.mxu0 0
      %5979 = vmatprep.subr.bf16.mxu0 0
      %5980 = vmatpush1.bf16.msra.mxu0 0
      %5981 = vmatprep.subr.bf16.mxu0 0
      %5982 = vmatpush1.bf16.msra.mxu0 0
      %5983 = vmatprep.subr.bf16.mxu0 0
      %5984 = vmatpush1.bf16.msra.mxu0 0
      %5985 = vmatprep.subr.bf16.mxu0 0
      %5986 = vmatpush1.bf16.msra.mxu0 0
      %5987 = vmatprep.subr.bf16.mxu0 0
      %5988 = vmatpush1.bf16.msra.mxu0 0
      %5989 = vmatprep.subr.bf16.mxu0 0
      %5990 = vmatpush1.bf16.msra.mxu0 %v5920
      %5991 = vmatprep.subr.bf16.mxu0 0
      %5992 = vmatpush1.bf16.msra.mxu0 %v5914
      %5993 = vmatprep.subr.bf16.mxu0 0
      %5994 = vmatpush2.bf16.msra.mxu0 0
      %5995 = vmatprep.subr.bf16.mxu0 0
      %5996 = vmatpush2.bf16.msra.mxu0 0
      %5997 = vmatprep.subr.bf16.mxu0 0
      %5998 = vmatpush2.bf16.msra.mxu0 0
      %5999 = vmatprep.subr.bf16.mxu0 0
      %6000 = vmatpush2.bf16.msra.mxu0 0
      %6001 = vmatprep.subr.bf16.mxu0 0
      %6002 = vmatpush2.bf16.msra.mxu0 0
      %6003 = vmatprep.subr.bf16.mxu0 0
      %6004 = vmatpush2.bf16.msra.mxu0 0
      %6005 = vmatprep.subr.bf16.mxu0 0
      %6006 = vmatpush2.bf16.msra.mxu0 0
      %6007 = vmatprep.subr.bf16.mxu0 0
      %6008 = vmatpush2.bf16.msra.mxu0 0
      %6009 = vmatprep.mubr.bf16.mxu0 0
      %6010 = vmatmul.mubr.bf16.gmra.mxu0 %v5932
      %v6011 = vpop.f32.mrf.mxu0
      %v6012 = vadd.f32 0.0, %v6011
      %v6013 = vpop.f32.mrf.mxu0
      %v6014 = vpop.f32.mrf.mxu0
      %v6015 = vadd.f32 0.0, %v6014
      %v6016 = vpop.f32.mrf.mxu0
      %6017 = vdwg.mxu0
      %v6018 = vadd.f32 %v5895, %v5969
      %v6019 = vadd.f32 %v5896, %v5971
      %v6020 = vadd.f32 %v5897, %v6012
      %v6021 = vadd.f32 %v5898, %v5973
      %v6022 = vadd.f32 %v5899, %v5975
      %v6023 = vadd.f32 %v5900, %v6015
      %s6024 = scalar_lea.vmem %s11, 64
      %v6025 = vld [vmem:[%s6024] sm:$0xf]
      %v6026 = vld [vmem:[%s6024 + $0x4] sm:$0xf]
      %v6029 = vunpack.c.l.b16 %v6025
      %v6030 = vunpack.c.l.b16 %v6026
      %v6031 = vpack.c.b16 %v6030, %v6029
      %6032 = vrot.lane.b32.xlu0 %v5073, 90
      %v6033 = vpop.permute.xlu0 %6032
      %6034 = vrot.lane.b32.xlu0 %v5074, 90
      %v6035 = vpop.permute.xlu0 %6034
      %6036 = vrot.lane.b32.xlu0 %v5075, 90
      %v6037 = vpop.permute.xlu0 %6036
      %6038 = vrot.lane.b32.xlu0 %v5076, 90
      %v6039 = vpop.permute.xlu0 %6038
      %6040 = vrot.lane.b32.xlu0 %v5077, 90
      %v6041 = vpop.permute.xlu0 %6040
      %6042 = vrot.lane.b32.xlu0 %v5078, 90
      %v6043 = vpop.permute.xlu0 %6042
      %v6044 = vsel %vm1766, %v6033, %v6035
      %v6045 = vsel %vm1766, %v6035, %v6037
      %v6046 = vsel %vm1766, %v6039, %v6041
      %v6047 = vsel %vm1766, %v6041, %v6043
      %v6055 = vsel %vm3025, %v6031, 0
      %6057 = vmatprep.subr.bf16.mxu0 0
      %6058 = vmatpush1.bf16.msra.mxu0 0
      %6059 = vmatprep.subr.bf16.mxu0 0
      %6060 = vmatpush1.bf16.msra.mxu0 0
      %6061 = vmatprep.subr.bf16.mxu0 0
      %6062 = vmatpush1.bf16.msra.mxu0 0
      %6063 = vmatprep.subr.bf16.mxu0 0
      %6064 = vmatpush1.bf16.msra.mxu0 0
      %6065 = vmatprep.subr.bf16.mxu0 0
      %6066 = vmatpush1.bf16.msra.mxu0 0
      %6067 = vmatprep.subr.bf16.mxu0 0
      %6068 = vmatpush1.bf16.msra.mxu0 0
      %6069 = vmatprep.subr.bf16.mxu0 %v6047
      %6070 = vmatpush1.bf16.msra.mxu0 %v6046
      %6071 = vmatprep.subr.bf16.mxu0 %v6045
      %6072 = vmatpush1.bf16.msra.mxu0 %v6044
      %6073 = vmatprep.subr.bf16.mxu0 0
      %6074 = vmatpush2.bf16.msra.mxu0 0
      %6075 = vmatprep.subr.bf16.mxu0 0
      %6076 = vmatpush2.bf16.msra.mxu0 0
      %6077 = vmatprep.subr.bf16.mxu0 0
      %6078 = vmatpush2.bf16.msra.mxu0 0
      %6079 = vmatprep.subr.bf16.mxu0 0
      %6080 = vmatpush2.bf16.msra.mxu0 0
      %6081 = vmatprep.subr.bf16.mxu0 0
      %6082 = vmatpush2.bf16.msra.mxu0 0
      %6083 = vmatprep.subr.bf16.mxu0 0
      %6084 = vmatpush2.bf16.msra.mxu0 0
      %6085 = vmatprep.subr.bf16.mxu0 0
      %6086 = vmatpush2.bf16.msra.mxu0 0
      %6087 = vmatprep.subr.bf16.mxu0 0
      %6088 = vmatpush2.bf16.msra.mxu0 0
      %6089 = vmatprep.mubr.bf16.mxu0 0
      %6090 = vmatmul.mubr.bf16.gmra.mxu0 %v6055
      %v6091 = vpop.f32.mrf.mxu0
      %v6092 = vadd.f32 0.0, %v6091
      %v6093 = vpop.f32.mrf.mxu0
      %v6094 = vadd.f32 0.0, %v6093
      %v6095 = vpop.f32.mrf.mxu0
      %v6096 = vadd.f32 0.0, %v6095
      %v6097 = vpop.f32.mrf.mxu0
      %v6098 = vadd.f32 0.0, %v6097
      %6099 = vdwg.mxu0
      %6100 = vmatprep.subr.bf16.mxu0 0
      %6101 = vmatpush1.bf16.msra.mxu0 0
      %6102 = vmatprep.subr.bf16.mxu0 0
      %6103 = vmatpush1.bf16.msra.mxu0 0
      %6104 = vmatprep.subr.bf16.mxu0 0
      %6105 = vmatpush1.bf16.msra.mxu0 0
      %6106 = vmatprep.subr.bf16.mxu0 0
      %6107 = vmatpush1.bf16.msra.mxu0 0
      %6108 = vmatprep.subr.bf16.mxu0 0
      %6109 = vmatpush1.bf16.msra.mxu0 0
      %6110 = vmatprep.subr.bf16.mxu0 0
      %6111 = vmatpush1.bf16.msra.mxu0 0
      %6112 = vmatprep.subr.bf16.mxu0 0
      %6113 = vmatpush1.bf16.msra.mxu0 %v6043
      %6114 = vmatprep.subr.bf16.mxu0 0
      %6115 = vmatpush1.bf16.msra.mxu0 %v6037
      %6116 = vmatprep.subr.bf16.mxu0 0
      %6117 = vmatpush2.bf16.msra.mxu0 0
      %6118 = vmatprep.subr.bf16.mxu0 0
      %6119 = vmatpush2.bf16.msra.mxu0 0
      %6120 = vmatprep.subr.bf16.mxu0 0
      %6121 = vmatpush2.bf16.msra.mxu0 0
      %6122 = vmatprep.subr.bf16.mxu0 0
      %6123 = vmatpush2.bf16.msra.mxu0 0
      %6124 = vmatprep.subr.bf16.mxu0 0
      %6125 = vmatpush2.bf16.msra.mxu0 0
      %6126 = vmatprep.subr.bf16.mxu0 0
      %6127 = vmatpush2.bf16.msra.mxu0 0
      %6128 = vmatprep.subr.bf16.mxu0 0
      %6129 = vmatpush2.bf16.msra.mxu0 0
      %6130 = vmatprep.subr.bf16.mxu0 0
      %6131 = vmatpush2.bf16.msra.mxu0 0
      %6132 = vmatprep.mubr.bf16.mxu0 0
      %6133 = vmatmul.mubr.bf16.gmra.mxu0 %v6055
      %v6134 = vpop.f32.mrf.mxu0
      %v6135 = vadd.f32 0.0, %v6134
      %v6136 = vpop.f32.mrf.mxu0
      %v6137 = vpop.f32.mrf.mxu0
      %v6138 = vadd.f32 0.0, %v6137
      %v6139 = vpop.f32.mrf.mxu0
      %6140 = vdwg.mxu0
      %v6141 = vadd.f32 %v6018, %v6092
      %v6142 = vadd.f32 %v6019, %v6094
      %v6143 = vadd.f32 %v6020, %v6135
      %v6144 = vadd.f32 %v6021, %v6096
      %v6145 = vadd.f32 %v6022, %v6098
      %v6146 = vadd.f32 %v6023, %v6138
      %v6147 = vld [vmem:[%s12] sm:$0xff]
      %v6148 = vld [vmem:[%s12 + $0x8] sm:$0xff]
      %6150 = vset.pattern.permute.xlu0 0
      %6151 = vperm.xlu0 %6150, %v6147
      %v6152 = vpop.permute.xlu0 %6151
      %6155 = vset.pattern.permute.xlu0 0
      %6156 = vperm.xlu0 %6155, %v6148
      %v6157 = vpop.permute.xlu0 %6156
      %v6159 = vadd.f32 %v6141, %v6152
      %v6160 = vadd.f32 %v6142, %v6152
      %v6161 = vadd.f32 %v6143, %v6152
      %v6162 = vadd.f32 %v6144, %v6157
      %v6163 = vadd.f32 %v6145, %v6157
      %v6164 = vadd.f32 %v6146, %v6157
      %vm6165 = vcmp.ge.f32.partialorder %v6159, 0.0
      %vm6166 = vcmp.ge.f32.partialorder %v6160, 0.0
      %vm6167 = vcmp.ge.f32.partialorder %v6161, 0.0
      %vm6168 = vcmp.ge.f32.partialorder %v6162, 0.0
      %vm6169 = vcmp.ge.f32.partialorder %v6163, 0.0
      %vm6170 = vcmp.ge.f32.partialorder %v6164, 0.0
      %v6171 = vmul.f32 %v6159, 0.01
      %v6172 = vmul.f32 %v6160, 0.01
      %v6173 = vmul.f32 %v6161, 0.01
      %v6174 = vmul.f32 %v6162, 0.01
      %v6175 = vmul.f32 %v6163, 0.01
      %v6176 = vmul.f32 %v6164, 0.01
      %v6177 = vsel %vm6165, %v6159, %v6171
      %v6178 = vsel %vm6166, %v6160, %v6172
      %v6179 = vsel %vm6167, %v6161, %v6173
      %v6180 = vsel %vm6168, %v6162, %v6174
      %v6181 = vsel %vm6169, %v6163, %v6175
      %v6182 = vsel %vm6170, %v6164, %v6176
      %v6183 = vsel %vm1920, %v6177, 0.0
      %v6184 = vsel %vm1921, %v6178, 0.0
      %v6185 = vsel %vm1922, %v6179, 0.0
      %v6186 = vsel %vm1920, %v6180, 0.0
      %v6187 = vsel %vm1921, %v6181, 0.0
      %v6188 = vsel %vm1922, %v6182, 0.0
      %v6189 = vpack.c.bf16 %v6186, %v6183
      %v6190 = vpack.c.bf16 %v6187, %v6184
      %v6191 = vpack.c.bf16 %v6188, %v6185
      %v6195 = vunpack.c.l.b16 %v6189
      %v6196 = vunpack.c.l.b16 %v6190
      %v6197 = vunpack.c.l.b16 %v6191
      %v6198 = vunpack.c.h.b16 %v6189
      %v6199 = vunpack.c.h.b16 %v6190
      %v6200 = vunpack.c.h.b16 %v6191
      %v6201 = vpack.c.b16 %v6196, %v6195
      %v6202 = vpack.c.b16 %v6197, %v6197
      %v6203 = vpack.c.b16 %v6199, %v6198
      %v6204 = vpack.c.b16 %v6200, %v6200
      %6205 = vrot.lane.b32.xlu0 %v6201, 19
      %v6206 = vpop.permute.xlu0 %6205
      %6207 = vrot.lane.b32.xlu0 %v6202, 19
      %v6208 = vpop.permute.xlu0 %6207
      %6209 = vrot.lane.b32.xlu0 %v6203, 19
      %v6210 = vpop.permute.xlu0 %6209
      %6211 = vrot.lane.b32.xlu0 %v6204, 19
      %v6212 = vpop.permute.xlu0 %6211
      %v6213 = vrot.slane %v6206, 4
      %v6214 = vrot.slane %v6210, 4
      %v6215 = vsel %vm1955, %v6213, %v6206
      %v6216 = vsel %vm1955, %v6213, %v6208
      %v6217 = vsel %vm1955, %v6214, %v6210
      %v6218 = vsel %vm1955, %v6214, %v6212
      %6223 = vst.msk [vmem:[#allocation5] sm:$0xff] %vm1966, %v6215
      %6224 = vst.msk [vmem:[#allocation5 + $0x8] sm:$0xf] %vm1968, %v6216
      %6225 = vst.msk [vmem:[#allocation5 + $0xc] sm:$0xff] %vm1966, %v6217
      %6226 = vst.msk [vmem:[#allocation5 + $0x14] sm:$0xf] %vm1968, %v6218
      %v6227 = vld [vmem:[%s13] sm:$0x1]
      %v6228 = vld [vmem:[#allocation5] sm:$0xff]
      %v6229 = vld [vmem:[#allocation5 + $0x8] sm:$0xf]
      %v6230 = vld [vmem:[#allocation5 + $0xc] sm:$0xff]
      %v6231 = vld [vmem:[#allocation5 + $0x14] sm:$0xf]
      %s6232 = scalar_lea.vmem %s13, 1
      %v6233 = vld [vmem:[%s6232] sm:$0x1]
      %v6238 = vunpack.c.l.b16 %v6228
      %v6239 = vunpack.c.h.b16 %v6228
      %v6240 = vunpack.c.l.b16 %v6229
      %v6241 = vunpack.c.l.b16 %v6230
      %v6242 = vunpack.c.h.b16 %v6230
      %v6243 = vunpack.c.l.b16 %v6231
      %v6244 = vpack.c.b16 %v6241, %v6238
      %v6245 = vpack.c.b16 %v6242, %v6239
      %v6246 = vpack.c.b16 %v6243, %v6240
      %6247 = vrot.lane.b32.xlu0 %v6244, 127
      %v6248 = vpop.permute.xlu0 %6247
      %6249 = vrot.lane.b32.xlu0 %v6245, 127
      %v6250 = vpop.permute.xlu0 %6249
      %6251 = vrot.lane.b32.xlu0 %v6246, 127
      %v6252 = vpop.permute.xlu0 %6251
      %v6253 = vsel %vm710, %v6248, %v6250
      %v6254 = vsel %vm710, %v6250, %v6252
      %v6259 = vsel %vm2010, %v6233, 0
      %6261 = vmatprep.subr.bf16.mxu0 0
      %6262 = vmatpush1.bf16.msra.mxu0 0
      %6263 = vmatprep.subr.bf16.mxu0 0
      %6264 = vmatpush1.bf16.msra.mxu0 0
      %6265 = vmatprep.subr.bf16.mxu0 0
      %6266 = vmatpush1.bf16.msra.mxu0 0
      %6267 = vmatprep.subr.bf16.mxu0 0
      %6268 = vmatpush1.bf16.msra.mxu0 0
      %6269 = vmatprep.subr.bf16.mxu0 0
      %6270 = vmatpush1.bf16.msra.mxu0 0
      %6271 = vmatprep.subr.bf16.mxu0 0
      %6272 = vmatpush1.bf16.msra.mxu0 0
      %6273 = vmatprep.subr.bf16.mxu0 0
      %6274 = vmatpush1.bf16.msra.mxu0 0
      %6275 = vmatprep.subr.bf16.mxu0 %v6254
      %6276 = vmatpush1.bf16.msra.mxu0 %v6253
      %6277 = vmatprep.subr.bf16.mxu0 0
      %6278 = vmatpush2.bf16.msra.mxu0 0
      %6279 = vmatprep.subr.bf16.mxu0 0
      %6280 = vmatpush2.bf16.msra.mxu0 0
      %6281 = vmatprep.subr.bf16.mxu0 0
      %6282 = vmatpush2.bf16.msra.mxu0 0
      %6283 = vmatprep.subr.bf16.mxu0 0
      %6284 = vmatpush2.bf16.msra.mxu0 0
      %6285 = vmatprep.subr.bf16.mxu0 0
      %6286 = vmatpush2.bf16.msra.mxu0 0
      %6287 = vmatprep.subr.bf16.mxu0 0
      %6288 = vmatpush2.bf16.msra.mxu0 0
      %6289 = vmatprep.subr.bf16.mxu0 0
      %6290 = vmatpush2.bf16.msra.mxu0 0
      %6291 = vmatprep.subr.bf16.mxu0 0
      %6292 = vmatpush2.bf16.msra.mxu0 0
      %6293 = vmatprep.mubr.bf16.mxu0 0
      %6294 = vmatmul.mubr.bf16.gmra.mxu0 %v6259
      %v6295 = vpop.f32.mrf.mxu0
      %v6296 = vadd.f32 0.0, %v6295
      %v6297 = vpop.f32.mrf.mxu0
      %v6298 = vadd.f32 0.0, %v6297
      %v6299 = vpop.f32.mrf.mxu0
      %v6300 = vpop.f32.mrf.mxu0
      %6301 = vdwg.mxu0
      %6302 = vmatprep.subr.bf16.mxu0 0
      %6303 = vmatpush1.bf16.msra.mxu0 0
      %6304 = vmatprep.subr.bf16.mxu0 0
      %6305 = vmatpush1.bf16.msra.mxu0 0
      %6306 = vmatprep.subr.bf16.mxu0 0
      %6307 = vmatpush1.bf16.msra.mxu0 0
      %6308 = vmatprep.subr.bf16.mxu0 0
      %6309 = vmatpush1.bf16.msra.mxu0 0
      %6310 = vmatprep.subr.bf16.mxu0 0
      %6311 = vmatpush1.bf16.msra.mxu0 0
      %6312 = vmatprep.subr.bf16.mxu0 0
      %6313 = vmatpush1.bf16.msra.mxu0 0
      %6314 = vmatprep.subr.bf16.mxu0 0
      %6315 = vmatpush1.bf16.msra.mxu0 0
      %6316 = vmatprep.subr.bf16.mxu0 0
      %6317 = vmatpush1.bf16.msra.mxu0 %v6252
      %6318 = vmatprep.subr.bf16.mxu0 0
      %6319 = vmatpush2.bf16.msra.mxu0 0
      %6320 = vmatprep.subr.bf16.mxu0 0
      %6321 = vmatpush2.bf16.msra.mxu0 0
      %6322 = vmatprep.subr.bf16.mxu0 0
      %6323 = vmatpush2.bf16.msra.mxu0 0
      %6324 = vmatprep.subr.bf16.mxu0 0
      %6325 = vmatpush2.bf16.msra.mxu0 0
      %6326 = vmatprep.subr.bf16.mxu0 0
      %6327 = vmatpush2.bf16.msra.mxu0 0
      %6328 = vmatprep.subr.bf16.mxu0 0
      %6329 = vmatpush2.bf16.msra.mxu0 0
      %6330 = vmatprep.subr.bf16.mxu0 0
      %6331 = vmatpush2.bf16.msra.mxu0 0
      %6332 = vmatprep.subr.bf16.mxu0 0
      %6333 = vmatpush2.bf16.msra.mxu0 0
      %6334 = vmatprep.mubr.bf16.mxu0 0
      %6335 = vmatmul.mubr.bf16.gmra.mxu0 %v6259
      %v6336 = vpop.f32.mrf.mxu0
      %v6337 = vadd.f32 0.0, %v6336
      %v6338 = vpop.f32.mrf.mxu0
      %v6339 = vpop.f32.mrf.mxu0
      %v6340 = vpop.f32.mrf.mxu0
      %6341 = vdwg.mxu0
      %v6346 = vsel %vm2010, %v6227, 0
      %6348 = vmatprep.subr.bf16.mxu0 0
      %6349 = vmatpush1.bf16.msra.mxu0 0
      %6350 = vmatprep.subr.bf16.mxu0 0
      %6351 = vmatpush1.bf16.msra.mxu0 0
      %6352 = vmatprep.subr.bf16.mxu0 0
      %6353 = vmatpush1.bf16.msra.mxu0 0
      %6354 = vmatprep.subr.bf16.mxu0 0
      %6355 = vmatpush1.bf16.msra.mxu0 0
      %6356 = vmatprep.subr.bf16.mxu0 0
      %6357 = vmatpush1.bf16.msra.mxu0 0
      %6358 = vmatprep.subr.bf16.mxu0 0
      %6359 = vmatpush1.bf16.msra.mxu0 0
      %6360 = vmatprep.subr.bf16.mxu0 0
      %6361 = vmatpush1.bf16.msra.mxu0 0
      %6362 = vmatprep.subr.bf16.mxu0 %v6245
      %6363 = vmatpush1.bf16.msra.mxu0 %v6244
      %6364 = vmatprep.subr.bf16.mxu0 0
      %6365 = vmatpush2.bf16.msra.mxu0 0
      %6366 = vmatprep.subr.bf16.mxu0 0
      %6367 = vmatpush2.bf16.msra.mxu0 0
      %6368 = vmatprep.subr.bf16.mxu0 0
      %6369 = vmatpush2.bf16.msra.mxu0 0
      %6370 = vmatprep.subr.bf16.mxu0 0
      %6371 = vmatpush2.bf16.msra.mxu0 0
      %6372 = vmatprep.subr.bf16.mxu0 0
      %6373 = vmatpush2.bf16.msra.mxu0 0
      %6374 = vmatprep.subr.bf16.mxu0 0
      %6375 = vmatpush2.bf16.msra.mxu0 0
      %6376 = vmatprep.subr.bf16.mxu0 0
      %6377 = vmatpush2.bf16.msra.mxu0 0
      %6378 = vmatprep.subr.bf16.mxu0 0
      %6379 = vmatpush2.bf16.msra.mxu0 0
      %6380 = vmatprep.mubr.bf16.mxu0 0
      %6381 = vmatmul.mubr.bf16.gmra.mxu0 %v6346
      %v6382 = vpop.f32.mrf.mxu0
      %v6383 = vadd.f32 %v6296, %v6382
      %v6384 = vpop.f32.mrf.mxu0
      %v6385 = vadd.f32 %v6298, %v6384
      %v6386 = vpop.f32.mrf.mxu0
      %v6387 = vpop.f32.mrf.mxu0
      %6388 = vdwg.mxu0
      %6389 = vmatprep.subr.bf16.mxu0 0
      %6390 = vmatpush1.bf16.msra.mxu0 0
      %6391 = vmatprep.subr.bf16.mxu0 0
      %6392 = vmatpush1.bf16.msra.mxu0 0
      %6393 = vmatprep.subr.bf16.mxu0 0
      %6394 = vmatpush1.bf16.msra.mxu0 0
      %6395 = vmatprep.subr.bf16.mxu0 0
      %6396 = vmatpush1.bf16.msra.mxu0 0
      %6397 = vmatprep.subr.bf16.mxu0 0
      %6398 = vmatpush1.bf16.msra.mxu0 0
      %6399 = vmatprep.subr.bf16.mxu0 0
      %6400 = vmatpush1.bf16.msra.mxu0 0
      %6401 = vmatprep.subr.bf16.mxu0 0
      %6402 = vmatpush1.bf16.msra.mxu0 0
      %6403 = vmatprep.subr.bf16.mxu0 0
      %6404 = vmatpush1.bf16.msra.mxu0 %v6246
      %6405 = vmatprep.subr.bf16.mxu0 0
      %6406 = vmatpush2.bf16.msra.mxu0 0
      %6407 = vmatprep.subr.bf16.mxu0 0
      %6408 = vmatpush2.bf16.msra.mxu0 0
      %6409 = vmatprep.subr.bf16.mxu0 0
      %6410 = vmatpush2.bf16.msra.mxu0 0
      %6411 = vmatprep.subr.bf16.mxu0 0
      %6412 = vmatpush2.bf16.msra.mxu0 0
      %6413 = vmatprep.subr.bf16.mxu0 0
      %6414 = vmatpush2.bf16.msra.mxu0 0
      %6415 = vmatprep.subr.bf16.mxu0 0
      %6416 = vmatpush2.bf16.msra.mxu0 0
      %6417 = vmatprep.subr.bf16.mxu0 0
      %6418 = vmatpush2.bf16.msra.mxu0 0
      %6419 = vmatprep.subr.bf16.mxu0 0
      %6420 = vmatpush2.bf16.msra.mxu0 0
      %6421 = vmatprep.mubr.bf16.mxu0 0
      %6422 = vmatmul.mubr.bf16.gmra.mxu0 %v6346
      %v6423 = vpop.f32.mrf.mxu0
      %v6424 = vadd.f32 %v6337, %v6423
      %v6425 = vpop.f32.mrf.mxu0
      %v6426 = vpop.f32.mrf.mxu0
      %v6427 = vpop.f32.mrf.mxu0
      %6428 = vdwg.mxu0
      %s6429 = scalar_lea.vmem %s13, 2
      %v6430 = vld [vmem:[%s6429] sm:$0x1]
      %6431 = vrot.lane.b32.xlu0 %v6244, 126
      %v6432 = vpop.permute.xlu0 %6431
      %6433 = vrot.lane.b32.xlu0 %v6245, 126
      %v6434 = vpop.permute.xlu0 %6433
      %6435 = vrot.lane.b32.xlu0 %v6246, 126
      %v6436 = vpop.permute.xlu0 %6435
      %v6437 = vsel %vm944, %v6432, %v6434
      %v6438 = vsel %vm944, %v6434, %v6436
      %v6443 = vsel %vm2010, %v6430, 0
      %6445 = vmatprep.subr.bf16.mxu0 0
      %6446 = vmatpush1.bf16.msra.mxu0 0
      %6447 = vmatprep.subr.bf16.mxu0 0
      %6448 = vmatpush1.bf16.msra.mxu0 0
      %6449 = vmatprep.subr.bf16.mxu0 0
      %6450 = vmatpush1.bf16.msra.mxu0 0
      %6451 = vmatprep.subr.bf16.mxu0 0
      %6452 = vmatpush1.bf16.msra.mxu0 0
      %6453 = vmatprep.subr.bf16.mxu0 0
      %6454 = vmatpush1.bf16.msra.mxu0 0
      %6455 = vmatprep.subr.bf16.mxu0 0
      %6456 = vmatpush1.bf16.msra.mxu0 0
      %6457 = vmatprep.subr.bf16.mxu0 0
      %6458 = vmatpush1.bf16.msra.mxu0 0
      %6459 = vmatprep.subr.bf16.mxu0 %v6438
      %6460 = vmatpush1.bf16.msra.mxu0 %v6437
      %6461 = vmatprep.subr.bf16.mxu0 0
      %6462 = vmatpush2.bf16.msra.mxu0 0
      %6463 = vmatprep.subr.bf16.mxu0 0
      %6464 = vmatpush2.bf16.msra.mxu0 0
      %6465 = vmatprep.subr.bf16.mxu0 0
      %6466 = vmatpush2.bf16.msra.mxu0 0
      %6467 = vmatprep.subr.bf16.mxu0 0
      %6468 = vmatpush2.bf16.msra.mxu0 0
      %6469 = vmatprep.subr.bf16.mxu0 0
      %6470 = vmatpush2.bf16.msra.mxu0 0
      %6471 = vmatprep.subr.bf16.mxu0 0
      %6472 = vmatpush2.bf16.msra.mxu0 0
      %6473 = vmatprep.subr.bf16.mxu0 0
      %6474 = vmatpush2.bf16.msra.mxu0 0
      %6475 = vmatprep.subr.bf16.mxu0 0
      %6476 = vmatpush2.bf16.msra.mxu0 0
      %6477 = vmatprep.mubr.bf16.mxu0 0
      %6478 = vmatmul.mubr.bf16.gmra.mxu0 %v6443
      %v6479 = vpop.f32.mrf.mxu0
      %v6480 = vadd.f32 0.0, %v6479
      %v6481 = vpop.f32.mrf.mxu0
      %v6482 = vadd.f32 0.0, %v6481
      %v6483 = vpop.f32.mrf.mxu0
      %v6484 = vpop.f32.mrf.mxu0
      %6485 = vdwg.mxu0
      %6486 = vmatprep.subr.bf16.mxu0 0
      %6487 = vmatpush1.bf16.msra.mxu0 0
      %6488 = vmatprep.subr.bf16.mxu0 0
      %6489 = vmatpush1.bf16.msra.mxu0 0
      %6490 = vmatprep.subr.bf16.mxu0 0
      %6491 = vmatpush1.bf16.msra.mxu0 0
      %6492 = vmatprep.subr.bf16.mxu0 0
      %6493 = vmatpush1.bf16.msra.mxu0 0
      %6494 = vmatprep.subr.bf16.mxu0 0
      %6495 = vmatpush1.bf16.msra.mxu0 0
      %6496 = vmatprep.subr.bf16.mxu0 0
      %6497 = vmatpush1.bf16.msra.mxu0 0
      %6498 = vmatprep.subr.bf16.mxu0 0
      %6499 = vmatpush1.bf16.msra.mxu0 0
      %6500 = vmatprep.subr.bf16.mxu0 0
      %6501 = vmatpush1.bf16.msra.mxu0 %v6436
      %6502 = vmatprep.subr.bf16.mxu0 0
      %6503 = vmatpush2.bf16.msra.mxu0 0
      %6504 = vmatprep.subr.bf16.mxu0 0
      %6505 = vmatpush2.bf16.msra.mxu0 0
      %6506 = vmatprep.subr.bf16.mxu0 0
      %6507 = vmatpush2.bf16.msra.mxu0 0
      %6508 = vmatprep.subr.bf16.mxu0 0
      %6509 = vmatpush2.bf16.msra.mxu0 0
      %6510 = vmatprep.subr.bf16.mxu0 0
      %6511 = vmatpush2.bf16.msra.mxu0 0
      %6512 = vmatprep.subr.bf16.mxu0 0
      %6513 = vmatpush2.bf16.msra.mxu0 0
      %6514 = vmatprep.subr.bf16.mxu0 0
      %6515 = vmatpush2.bf16.msra.mxu0 0
      %6516 = vmatprep.subr.bf16.mxu0 0
      %6517 = vmatpush2.bf16.msra.mxu0 0
      %6518 = vmatprep.mubr.bf16.mxu0 0
      %6519 = vmatmul.mubr.bf16.gmra.mxu0 %v6443
      %v6520 = vpop.f32.mrf.mxu0
      %v6521 = vadd.f32 0.0, %v6520
      %v6522 = vpop.f32.mrf.mxu0
      %v6523 = vpop.f32.mrf.mxu0
      %v6524 = vpop.f32.mrf.mxu0
      %6525 = vdwg.mxu0
      %v6526 = vadd.f32 %v6383, %v6480
      %v6527 = vadd.f32 %v6385, %v6482
      %v6528 = vadd.f32 %v6424, %v6521
      %s6529 = scalar_lea.vmem %s13, 3
      %v6530 = vld [vmem:[%s6529] sm:$0x1]
      %6531 = vrot.lane.b32.xlu0 %v6244, 110
      %v6532 = vpop.permute.xlu0 %6531
      %6533 = vrot.lane.b32.xlu0 %v6245, 110
      %v6534 = vpop.permute.xlu0 %6533
      %6535 = vrot.lane.b32.xlu0 %v6246, 110
      %v6536 = vpop.permute.xlu0 %6535
      %v6537 = vsel %vm1081, %v6532, %v6534
      %v6538 = vsel %vm1081, %v6534, %v6536
      %v6543 = vsel %vm2010, %v6530, 0
      %6545 = vmatprep.subr.bf16.mxu0 0
      %6546 = vmatpush1.bf16.msra.mxu0 0
      %6547 = vmatprep.subr.bf16.mxu0 0
      %6548 = vmatpush1.bf16.msra.mxu0 0
      %6549 = vmatprep.subr.bf16.mxu0 0
      %6550 = vmatpush1.bf16.msra.mxu0 0
      %6551 = vmatprep.subr.bf16.mxu0 0
      %6552 = vmatpush1.bf16.msra.mxu0 0
      %6553 = vmatprep.subr.bf16.mxu0 0
      %6554 = vmatpush1.bf16.msra.mxu0 0
      %6555 = vmatprep.subr.bf16.mxu0 0
      %6556 = vmatpush1.bf16.msra.mxu0 0
      %6557 = vmatprep.subr.bf16.mxu0 0
      %6558 = vmatpush1.bf16.msra.mxu0 0
      %6559 = vmatprep.subr.bf16.mxu0 %v6538
      %6560 = vmatpush1.bf16.msra.mxu0 %v6537
      %6561 = vmatprep.subr.bf16.mxu0 0
      %6562 = vmatpush2.bf16.msra.mxu0 0
      %6563 = vmatprep.subr.bf16.mxu0 0
      %6564 = vmatpush2.bf16.msra.mxu0 0
      %6565 = vmatprep.subr.bf16.mxu0 0
      %6566 = vmatpush2.bf16.msra.mxu0 0
      %6567 = vmatprep.subr.bf16.mxu0 0
      %6568 = vmatpush2.bf16.msra.mxu0 0
      %6569 = vmatprep.subr.bf16.mxu0 0
      %6570 = vmatpush2.bf16.msra.mxu0 0
      %6571 = vmatprep.subr.bf16.mxu0 0
      %6572 = vmatpush2.bf16.msra.mxu0 0
      %6573 = vmatprep.subr.bf16.mxu0 0
      %6574 = vmatpush2.bf16.msra.mxu0 0
      %6575 = vmatprep.subr.bf16.mxu0 0
      %6576 = vmatpush2.bf16.msra.mxu0 0
      %6577 = vmatprep.mubr.bf16.mxu0 0
      %6578 = vmatmul.mubr.bf16.gmra.mxu0 %v6543
      %v6579 = vpop.f32.mrf.mxu0
      %v6580 = vadd.f32 0.0, %v6579
      %v6581 = vpop.f32.mrf.mxu0
      %v6582 = vadd.f32 0.0, %v6581
      %v6583 = vpop.f32.mrf.mxu0
      %v6584 = vpop.f32.mrf.mxu0
      %6585 = vdwg.mxu0
      %6586 = vmatprep.subr.bf16.mxu0 0
      %6587 = vmatpush1.bf16.msra.mxu0 0
      %6588 = vmatprep.subr.bf16.mxu0 0
      %6589 = vmatpush1.bf16.msra.mxu0 0
      %6590 = vmatprep.subr.bf16.mxu0 0
      %6591 = vmatpush1.bf16.msra.mxu0 0
      %6592 = vmatprep.subr.bf16.mxu0 0
      %6593 = vmatpush1.bf16.msra.mxu0 0
      %6594 = vmatprep.subr.bf16.mxu0 0
      %6595 = vmatpush1.bf16.msra.mxu0 0
      %6596 = vmatprep.subr.bf16.mxu0 0
      %6597 = vmatpush1.bf16.msra.mxu0 0
      %6598 = vmatprep.subr.bf16.mxu0 0
      %6599 = vmatpush1.bf16.msra.mxu0 0
      %6600 = vmatprep.subr.bf16.mxu0 0
      %6601 = vmatpush1.bf16.msra.mxu0 %v6536
      %6602 = vmatprep.subr.bf16.mxu0 0
      %6603 = vmatpush2.bf16.msra.mxu0 0
      %6604 = vmatprep.subr.bf16.mxu0 0
      %6605 = vmatpush2.bf16.msra.mxu0 0
      %6606 = vmatprep.subr.bf16.mxu0 0
      %6607 = vmatpush2.bf16.msra.mxu0 0
      %6608 = vmatprep.subr.bf16.mxu0 0
      %6609 = vmatpush2.bf16.msra.mxu0 0
      %6610 = vmatprep.subr.bf16.mxu0 0
      %6611 = vmatpush2.bf16.msra.mxu0 0
      %6612 = vmatprep.subr.bf16.mxu0 0
      %6613 = vmatpush2.bf16.msra.mxu0 0
      %6614 = vmatprep.subr.bf16.mxu0 0
      %6615 = vmatpush2.bf16.msra.mxu0 0
      %6616 = vmatprep.subr.bf16.mxu0 0
      %6617 = vmatpush2.bf16.msra.mxu0 0
      %6618 = vmatprep.mubr.bf16.mxu0 0
      %6619 = vmatmul.mubr.bf16.gmra.mxu0 %v6543
      %v6620 = vpop.f32.mrf.mxu0
      %v6621 = vadd.f32 0.0, %v6620
      %v6622 = vpop.f32.mrf.mxu0
      %v6623 = vpop.f32.mrf.mxu0
      %v6624 = vpop.f32.mrf.mxu0
      %6625 = vdwg.mxu0
      %v6626 = vadd.f32 %v6526, %v6580
      %v6627 = vadd.f32 %v6527, %v6582
      %v6628 = vadd.f32 %v6528, %v6621
      %s6629 = scalar_lea.vmem %s13, 4
      %v6630 = vld [vmem:[%s6629] sm:$0x1]
      %6631 = vrot.lane.b32.xlu0 %v6244, 109
      %v6632 = vpop.permute.xlu0 %6631
      %6633 = vrot.lane.b32.xlu0 %v6245, 109
      %v6634 = vpop.permute.xlu0 %6633
      %6635 = vrot.lane.b32.xlu0 %v6246, 109
      %v6636 = vpop.permute.xlu0 %6635
      %v6637 = vsel %vm1218, %v6632, %v6634
      %v6638 = vsel %vm1218, %v6634, %v6636
      %v6643 = vsel %vm2010, %v6630, 0
      %6645 = vmatprep.subr.bf16.mxu0 0
      %6646 = vmatpush1.bf16.msra.mxu0 0
      %6647 = vmatprep.subr.bf16.mxu0 0
      %6648 = vmatpush1.bf16.msra.mxu0 0
      %6649 = vmatprep.subr.bf16.mxu0 0
      %6650 = vmatpush1.bf16.msra.mxu0 0
      %6651 = vmatprep.subr.bf16.mxu0 0
      %6652 = vmatpush1.bf16.msra.mxu0 0
      %6653 = vmatprep.subr.bf16.mxu0 0
      %6654 = vmatpush1.bf16.msra.mxu0 0
      %6655 = vmatprep.subr.bf16.mxu0 0
      %6656 = vmatpush1.bf16.msra.mxu0 0
      %6657 = vmatprep.subr.bf16.mxu0 0
      %6658 = vmatpush1.bf16.msra.mxu0 0
      %6659 = vmatprep.subr.bf16.mxu0 %v6638
      %6660 = vmatpush1.bf16.msra.mxu0 %v6637
      %6661 = vmatprep.subr.bf16.mxu0 0
      %6662 = vmatpush2.bf16.msra.mxu0 0
      %6663 = vmatprep.subr.bf16.mxu0 0
      %6664 = vmatpush2.bf16.msra.mxu0 0
      %6665 = vmatprep.subr.bf16.mxu0 0
      %6666 = vmatpush2.bf16.msra.mxu0 0
      %6667 = vmatprep.subr.bf16.mxu0 0
      %6668 = vmatpush2.bf16.msra.mxu0 0
      %6669 = vmatprep.subr.bf16.mxu0 0
      %6670 = vmatpush2.bf16.msra.mxu0 0
      %6671 = vmatprep.subr.bf16.mxu0 0
      %6672 = vmatpush2.bf16.msra.mxu0 0
      %6673 = vmatprep.subr.bf16.mxu0 0
      %6674 = vmatpush2.bf16.msra.mxu0 0
      %6675 = vmatprep.subr.bf16.mxu0 0
      %6676 = vmatpush2.bf16.msra.mxu0 0
      %6677 = vmatprep.mubr.bf16.mxu0 0
      %6678 = vmatmul.mubr.bf16.gmra.mxu0 %v6643
      %v6679 = vpop.f32.mrf.mxu0
      %v6680 = vadd.f32 0.0, %v6679
      %v6681 = vpop.f32.mrf.mxu0
      %v6682 = vadd.f32 0.0, %v6681
      %v6683 = vpop.f32.mrf.mxu0
      %v6684 = vpop.f32.mrf.mxu0
      %6685 = vdwg.mxu0
      %6686 = vmatprep.subr.bf16.mxu0 0
      %6687 = vmatpush1.bf16.msra.mxu0 0
      %6688 = vmatprep.subr.bf16.mxu0 0
      %6689 = vmatpush1.bf16.msra.mxu0 0
      %6690 = vmatprep.subr.bf16.mxu0 0
      %6691 = vmatpush1.bf16.msra.mxu0 0
      %6692 = vmatprep.subr.bf16.mxu0 0
      %6693 = vmatpush1.bf16.msra.mxu0 0
      %6694 = vmatprep.subr.bf16.mxu0 0
      %6695 = vmatpush1.bf16.msra.mxu0 0
      %6696 = vmatprep.subr.bf16.mxu0 0
      %6697 = vmatpush1.bf16.msra.mxu0 0
      %6698 = vmatprep.subr.bf16.mxu0 0
      %6699 = vmatpush1.bf16.msra.mxu0 0
      %6700 = vmatprep.subr.bf16.mxu0 0
      %6701 = vmatpush1.bf16.msra.mxu0 %v6636
      %6702 = vmatprep.subr.bf16.mxu0 0
      %6703 = vmatpush2.bf16.msra.mxu0 0
      %6704 = vmatprep.subr.bf16.mxu0 0
      %6705 = vmatpush2.bf16.msra.mxu0 0
      %6706 = vmatprep.subr.bf16.mxu0 0
      %6707 = vmatpush2.bf16.msra.mxu0 0
      %6708 = vmatprep.subr.bf16.mxu0 0
      %6709 = vmatpush2.bf16.msra.mxu0 0
      %6710 = vmatprep.subr.bf16.mxu0 0
      %6711 = vmatpush2.bf16.msra.mxu0 0
      %6712 = vmatprep.subr.bf16.mxu0 0
      %6713 = vmatpush2.bf16.msra.mxu0 0
      %6714 = vmatprep.subr.bf16.mxu0 0
      %6715 = vmatpush2.bf16.msra.mxu0 0
      %6716 = vmatprep.subr.bf16.mxu0 0
      %6717 = vmatpush2.bf16.msra.mxu0 0
      %6718 = vmatprep.mubr.bf16.mxu0 0
      %6719 = vmatmul.mubr.bf16.gmra.mxu0 %v6643
      %v6720 = vpop.f32.mrf.mxu0
      %v6721 = vadd.f32 0.0, %v6720
      %v6722 = vpop.f32.mrf.mxu0
      %v6723 = vpop.f32.mrf.mxu0
      %v6724 = vpop.f32.mrf.mxu0
      %6725 = vdwg.mxu0
      %v6726 = vadd.f32 %v6626, %v6680
      %v6727 = vadd.f32 %v6627, %v6682
      %v6728 = vadd.f32 %v6628, %v6721
      %s6729 = scalar_lea.vmem %s13, 5
      %v6730 = vld [vmem:[%s6729] sm:$0x1]
      %6731 = vrot.lane.b32.xlu0 %v6244, 108
      %v6732 = vpop.permute.xlu0 %6731
      %6733 = vrot.lane.b32.xlu0 %v6245, 108
      %v6734 = vpop.permute.xlu0 %6733
      %6735 = vrot.lane.b32.xlu0 %v6246, 108
      %v6736 = vpop.permute.xlu0 %6735
      %v6737 = vsel %vm1355, %v6732, %v6734
      %v6738 = vsel %vm1355, %v6734, %v6736
      %v6743 = vsel %vm2010, %v6730, 0
      %6745 = vmatprep.subr.bf16.mxu0 0
      %6746 = vmatpush1.bf16.msra.mxu0 0
      %6747 = vmatprep.subr.bf16.mxu0 0
      %6748 = vmatpush1.bf16.msra.mxu0 0
      %6749 = vmatprep.subr.bf16.mxu0 0
      %6750 = vmatpush1.bf16.msra.mxu0 0
      %6751 = vmatprep.subr.bf16.mxu0 0
      %6752 = vmatpush1.bf16.msra.mxu0 0
      %6753 = vmatprep.subr.bf16.mxu0 0
      %6754 = vmatpush1.bf16.msra.mxu0 0
      %6755 = vmatprep.subr.bf16.mxu0 0
      %6756 = vmatpush1.bf16.msra.mxu0 0
      %6757 = vmatprep.subr.bf16.mxu0 0
      %6758 = vmatpush1.bf16.msra.mxu0 0
      %6759 = vmatprep.subr.bf16.mxu0 %v6738
      %6760 = vmatpush1.bf16.msra.mxu0 %v6737
      %6761 = vmatprep.subr.bf16.mxu0 0
      %6762 = vmatpush2.bf16.msra.mxu0 0
      %6763 = vmatprep.subr.bf16.mxu0 0
      %6764 = vmatpush2.bf16.msra.mxu0 0
      %6765 = vmatprep.subr.bf16.mxu0 0
      %6766 = vmatpush2.bf16.msra.mxu0 0
      %6767 = vmatprep.subr.bf16.mxu0 0
      %6768 = vmatpush2.bf16.msra.mxu0 0
      %6769 = vmatprep.subr.bf16.mxu0 0
      %6770 = vmatpush2.bf16.msra.mxu0 0
      %6771 = vmatprep.subr.bf16.mxu0 0
      %6772 = vmatpush2.bf16.msra.mxu0 0
      %6773 = vmatprep.subr.bf16.mxu0 0
      %6774 = vmatpush2.bf16.msra.mxu0 0
      %6775 = vmatprep.subr.bf16.mxu0 0
      %6776 = vmatpush2.bf16.msra.mxu0 0
      %6777 = vmatprep.mubr.bf16.mxu0 0
      %6778 = vmatmul.mubr.bf16.gmra.mxu0 %v6743
      %v6779 = vpop.f32.mrf.mxu0
      %v6780 = vadd.f32 0.0, %v6779
      %v6781 = vpop.f32.mrf.mxu0
      %v6782 = vadd.f32 0.0, %v6781
      %v6783 = vpop.f32.mrf.mxu0
      %v6784 = vpop.f32.mrf.mxu0
      %6785 = vdwg.mxu0
      %6786 = vmatprep.subr.bf16.mxu0 0
      %6787 = vmatpush1.bf16.msra.mxu0 0
      %6788 = vmatprep.subr.bf16.mxu0 0
      %6789 = vmatpush1.bf16.msra.mxu0 0
      %6790 = vmatprep.subr.bf16.mxu0 0
      %6791 = vmatpush1.bf16.msra.mxu0 0
      %6792 = vmatprep.subr.bf16.mxu0 0
      %6793 = vmatpush1.bf16.msra.mxu0 0
      %6794 = vmatprep.subr.bf16.mxu0 0
      %6795 = vmatpush1.bf16.msra.mxu0 0
      %6796 = vmatprep.subr.bf16.mxu0 0
      %6797 = vmatpush1.bf16.msra.mxu0 0
      %6798 = vmatprep.subr.bf16.mxu0 0
      %6799 = vmatpush1.bf16.msra.mxu0 0
      %6800 = vmatprep.subr.bf16.mxu0 0
      %6801 = vmatpush1.bf16.msra.mxu0 %v6736
      %6802 = vmatprep.subr.bf16.mxu0 0
      %6803 = vmatpush2.bf16.msra.mxu0 0
      %6804 = vmatprep.subr.bf16.mxu0 0
      %6805 = vmatpush2.bf16.msra.mxu0 0
      %6806 = vmatprep.subr.bf16.mxu0 0
      %6807 = vmatpush2.bf16.msra.mxu0 0
      %6808 = vmatprep.subr.bf16.mxu0 0
      %6809 = vmatpush2.bf16.msra.mxu0 0
      %6810 = vmatprep.subr.bf16.mxu0 0
      %6811 = vmatpush2.bf16.msra.mxu0 0
      %6812 = vmatprep.subr.bf16.mxu0 0
      %6813 = vmatpush2.bf16.msra.mxu0 0
      %6814 = vmatprep.subr.bf16.mxu0 0
      %6815 = vmatpush2.bf16.msra.mxu0 0
      %6816 = vmatprep.subr.bf16.mxu0 0
      %6817 = vmatpush2.bf16.msra.mxu0 0
      %6818 = vmatprep.mubr.bf16.mxu0 0
      %6819 = vmatmul.mubr.bf16.gmra.mxu0 %v6743
      %v6820 = vpop.f32.mrf.mxu0
      %v6821 = vadd.f32 0.0, %v6820
      %v6822 = vpop.f32.mrf.mxu0
      %v6823 = vpop.f32.mrf.mxu0
      %v6824 = vpop.f32.mrf.mxu0
      %6825 = vdwg.mxu0
      %v6826 = vadd.f32 %v6726, %v6780
      %v6827 = vadd.f32 %v6727, %v6782
      %v6828 = vadd.f32 %v6728, %v6821
      %s6829 = scalar_lea.vmem %s13, 6
      %v6830 = vld [vmem:[%s6829] sm:$0x1]
      %6831 = vrot.lane.b32.xlu0 %v6244, 92
      %v6832 = vpop.permute.xlu0 %6831
      %6833 = vrot.lane.b32.xlu0 %v6245, 92
      %v6834 = vpop.permute.xlu0 %6833
      %6835 = vrot.lane.b32.xlu0 %v6246, 92
      %v6836 = vpop.permute.xlu0 %6835
      %v6837 = vsel %vm1492, %v6832, %v6834
      %v6838 = vsel %vm1492, %v6834, %v6836
      %v6843 = vsel %vm2010, %v6830, 0
      %6845 = vmatprep.subr.bf16.mxu0 0
      %6846 = vmatpush1.bf16.msra.mxu0 0
      %6847 = vmatprep.subr.bf16.mxu0 0
      %6848 = vmatpush1.bf16.msra.mxu0 0
      %6849 = vmatprep.subr.bf16.mxu0 0
      %6850 = vmatpush1.bf16.msra.mxu0 0
      %6851 = vmatprep.subr.bf16.mxu0 0
      %6852 = vmatpush1.bf16.msra.mxu0 0
      %6853 = vmatprep.subr.bf16.mxu0 0
      %6854 = vmatpush1.bf16.msra.mxu0 0
      %6855 = vmatprep.subr.bf16.mxu0 0
      %6856 = vmatpush1.bf16.msra.mxu0 0
      %6857 = vmatprep.subr.bf16.mxu0 0
      %6858 = vmatpush1.bf16.msra.mxu0 0
      %6859 = vmatprep.subr.bf16.mxu0 %v6838
      %6860 = vmatpush1.bf16.msra.mxu0 %v6837
      %6861 = vmatprep.subr.bf16.mxu0 0
      %6862 = vmatpush2.bf16.msra.mxu0 0
      %6863 = vmatprep.subr.bf16.mxu0 0
      %6864 = vmatpush2.bf16.msra.mxu0 0
      %6865 = vmatprep.subr.bf16.mxu0 0
      %6866 = vmatpush2.bf16.msra.mxu0 0
      %6867 = vmatprep.subr.bf16.mxu0 0
      %6868 = vmatpush2.bf16.msra.mxu0 0
      %6869 = vmatprep.subr.bf16.mxu0 0
      %6870 = vmatpush2.bf16.msra.mxu0 0
      %6871 = vmatprep.subr.bf16.mxu0 0
      %6872 = vmatpush2.bf16.msra.mxu0 0
      %6873 = vmatprep.subr.bf16.mxu0 0
      %6874 = vmatpush2.bf16.msra.mxu0 0
      %6875 = vmatprep.subr.bf16.mxu0 0
      %6876 = vmatpush2.bf16.msra.mxu0 0
      %6877 = vmatprep.mubr.bf16.mxu0 0
      %6878 = vmatmul.mubr.bf16.gmra.mxu0 %v6843
      %v6879 = vpop.f32.mrf.mxu0
      %v6880 = vadd.f32 0.0, %v6879
      %v6881 = vpop.f32.mrf.mxu0
      %v6882 = vadd.f32 0.0, %v6881
      %v6883 = vpop.f32.mrf.mxu0
      %v6884 = vpop.f32.mrf.mxu0
      %6885 = vdwg.mxu0
      %6886 = vmatprep.subr.bf16.mxu0 0
      %6887 = vmatpush1.bf16.msra.mxu0 0
      %6888 = vmatprep.subr.bf16.mxu0 0
      %6889 = vmatpush1.bf16.msra.mxu0 0
      %6890 = vmatprep.subr.bf16.mxu0 0
      %6891 = vmatpush1.bf16.msra.mxu0 0
      %6892 = vmatprep.subr.bf16.mxu0 0
      %6893 = vmatpush1.bf16.msra.mxu0 0
      %6894 = vmatprep.subr.bf16.mxu0 0
      %6895 = vmatpush1.bf16.msra.mxu0 0
      %6896 = vmatprep.subr.bf16.mxu0 0
      %6897 = vmatpush1.bf16.msra.mxu0 0
      %6898 = vmatprep.subr.bf16.mxu0 0
      %6899 = vmatpush1.bf16.msra.mxu0 0
      %6900 = vmatprep.subr.bf16.mxu0 0
      %6901 = vmatpush1.bf16.msra.mxu0 %v6836
      %6902 = vmatprep.subr.bf16.mxu0 0
      %6903 = vmatpush2.bf16.msra.mxu0 0
      %6904 = vmatprep.subr.bf16.mxu0 0
      %6905 = vmatpush2.bf16.msra.mxu0 0
      %6906 = vmatprep.subr.bf16.mxu0 0
      %6907 = vmatpush2.bf16.msra.mxu0 0
      %6908 = vmatprep.subr.bf16.mxu0 0
      %6909 = vmatpush2.bf16.msra.mxu0 0
      %6910 = vmatprep.subr.bf16.mxu0 0
      %6911 = vmatpush2.bf16.msra.mxu0 0
      %6912 = vmatprep.subr.bf16.mxu0 0
      %6913 = vmatpush2.bf16.msra.mxu0 0
      %6914 = vmatprep.subr.bf16.mxu0 0
      %6915 = vmatpush2.bf16.msra.mxu0 0
      %6916 = vmatprep.subr.bf16.mxu0 0
      %6917 = vmatpush2.bf16.msra.mxu0 0
      %6918 = vmatprep.mubr.bf16.mxu0 0
      %6919 = vmatmul.mubr.bf16.gmra.mxu0 %v6843
      %v6920 = vpop.f32.mrf.mxu0
      %v6921 = vadd.f32 0.0, %v6920
      %v6922 = vpop.f32.mrf.mxu0
      %v6923 = vpop.f32.mrf.mxu0
      %v6924 = vpop.f32.mrf.mxu0
      %6925 = vdwg.mxu0
      %v6926 = vadd.f32 %v6826, %v6880
      %v6927 = vadd.f32 %v6827, %v6882
      %v6928 = vadd.f32 %v6828, %v6921
      %s6929 = scalar_lea.vmem %s13, 7
      %v6930 = vld [vmem:[%s6929] sm:$0x1]
      %6931 = vrot.lane.b32.xlu0 %v6244, 91
      %v6932 = vpop.permute.xlu0 %6931
      %6933 = vrot.lane.b32.xlu0 %v6245, 91
      %v6934 = vpop.permute.xlu0 %6933
      %6935 = vrot.lane.b32.xlu0 %v6246, 91
      %v6936 = vpop.permute.xlu0 %6935
      %v6937 = vsel %vm1629, %v6932, %v6934
      %v6938 = vsel %vm1629, %v6934, %v6936
      %v6943 = vsel %vm2010, %v6930, 0
      %6945 = vmatprep.subr.bf16.mxu0 0
      %6946 = vmatpush1.bf16.msra.mxu0 0
      %6947 = vmatprep.subr.bf16.mxu0 0
      %6948 = vmatpush1.bf16.msra.mxu0 0
      %6949 = vmatprep.subr.bf16.mxu0 0
      %6950 = vmatpush1.bf16.msra.mxu0 0
      %6951 = vmatprep.subr.bf16.mxu0 0
      %6952 = vmatpush1.bf16.msra.mxu0 0
      %6953 = vmatprep.subr.bf16.mxu0 0
      %6954 = vmatpush1.bf16.msra.mxu0 0
      %6955 = vmatprep.subr.bf16.mxu0 0
      %6956 = vmatpush1.bf16.msra.mxu0 0
      %6957 = vmatprep.subr.bf16.mxu0 0
      %6958 = vmatpush1.bf16.msra.mxu0 0
      %6959 = vmatprep.subr.bf16.mxu0 %v6938
      %6960 = vmatpush1.bf16.msra.mxu0 %v6937
      %6961 = vmatprep.subr.bf16.mxu0 0
      %6962 = vmatpush2.bf16.msra.mxu0 0
      %6963 = vmatprep.subr.bf16.mxu0 0
      %6964 = vmatpush2.bf16.msra.mxu0 0
      %6965 = vmatprep.subr.bf16.mxu0 0
      %6966 = vmatpush2.bf16.msra.mxu0 0
      %6967 = vmatprep.subr.bf16.mxu0 0
      %6968 = vmatpush2.bf16.msra.mxu0 0
      %6969 = vmatprep.subr.bf16.mxu0 0
      %6970 = vmatpush2.bf16.msra.mxu0 0
      %6971 = vmatprep.subr.bf16.mxu0 0
      %6972 = vmatpush2.bf16.msra.mxu0 0
      %6973 = vmatprep.subr.bf16.mxu0 0
      %6974 = vmatpush2.bf16.msra.mxu0 0
      %6975 = vmatprep.subr.bf16.mxu0 0
      %6976 = vmatpush2.bf16.msra.mxu0 0
      %6977 = vmatprep.mubr.bf16.mxu0 0
      %6978 = vmatmul.mubr.bf16.gmra.mxu0 %v6943
      %v6979 = vpop.f32.mrf.mxu0
      %v6980 = vadd.f32 0.0, %v6979
      %v6981 = vpop.f32.mrf.mxu0
      %v6982 = vadd.f32 0.0, %v6981
      %v6983 = vpop.f32.mrf.mxu0
      %v6984 = vpop.f32.mrf.mxu0
      %6985 = vdwg.mxu0
      %6986 = vmatprep.subr.bf16.mxu0 0
      %6987 = vmatpush1.bf16.msra.mxu0 0
      %6988 = vmatprep.subr.bf16.mxu0 0
      %6989 = vmatpush1.bf16.msra.mxu0 0
      %6990 = vmatprep.subr.bf16.mxu0 0
      %6991 = vmatpush1.bf16.msra.mxu0 0
      %6992 = vmatprep.subr.bf16.mxu0 0
      %6993 = vmatpush1.bf16.msra.mxu0 0
      %6994 = vmatprep.subr.bf16.mxu0 0
      %6995 = vmatpush1.bf16.msra.mxu0 0
      %6996 = vmatprep.subr.bf16.mxu0 0
      %6997 = vmatpush1.bf16.msra.mxu0 0
      %6998 = vmatprep.subr.bf16.mxu0 0
      %6999 = vmatpush1.bf16.msra.mxu0 0
      %7000 = vmatprep.subr.bf16.mxu0 0
      %7001 = vmatpush1.bf16.msra.mxu0 %v6936
      %7002 = vmatprep.subr.bf16.mxu0 0
      %7003 = vmatpush2.bf16.msra.mxu0 0
      %7004 = vmatprep.subr.bf16.mxu0 0
      %7005 = vmatpush2.bf16.msra.mxu0 0
      %7006 = vmatprep.subr.bf16.mxu0 0
      %7007 = vmatpush2.bf16.msra.mxu0 0
      %7008 = vmatprep.subr.bf16.mxu0 0
      %7009 = vmatpush2.bf16.msra.mxu0 0
      %7010 = vmatprep.subr.bf16.mxu0 0
      %7011 = vmatpush2.bf16.msra.mxu0 0
      %7012 = vmatprep.subr.bf16.mxu0 0
      %7013 = vmatpush2.bf16.msra.mxu0 0
      %7014 = vmatprep.subr.bf16.mxu0 0
      %7015 = vmatpush2.bf16.msra.mxu0 0
      %7016 = vmatprep.subr.bf16.mxu0 0
      %7017 = vmatpush2.bf16.msra.mxu0 0
      %7018 = vmatprep.mubr.bf16.mxu0 0
      %7019 = vmatmul.mubr.bf16.gmra.mxu0 %v6943
      %v7020 = vpop.f32.mrf.mxu0
      %v7021 = vadd.f32 0.0, %v7020
      %v7022 = vpop.f32.mrf.mxu0
      %v7023 = vpop.f32.mrf.mxu0
      %v7024 = vpop.f32.mrf.mxu0
      %7025 = vdwg.mxu0
      %v7026 = vadd.f32 %v6926, %v6980
      %v7027 = vadd.f32 %v6927, %v6982
      %v7028 = vadd.f32 %v6928, %v7021
      %s7029 = scalar_lea.vmem %s13, 8
      %v7030 = vld [vmem:[%s7029] sm:$0x1]
      %7031 = vrot.lane.b32.xlu0 %v6244, 90
      %v7032 = vpop.permute.xlu0 %7031
      %7033 = vrot.lane.b32.xlu0 %v6245, 90
      %v7034 = vpop.permute.xlu0 %7033
      %7035 = vrot.lane.b32.xlu0 %v6246, 90
      %v7036 = vpop.permute.xlu0 %7035
      %v7037 = vsel %vm1766, %v7032, %v7034
      %v7038 = vsel %vm1766, %v7034, %v7036
      %v7043 = vsel %vm2010, %v7030, 0
      %7045 = vmatprep.subr.bf16.mxu0 0
      %7046 = vmatpush1.bf16.msra.mxu0 0
      %7047 = vmatprep.subr.bf16.mxu0 0
      %7048 = vmatpush1.bf16.msra.mxu0 0
      %7049 = vmatprep.subr.bf16.mxu0 0
      %7050 = vmatpush1.bf16.msra.mxu0 0
      %7051 = vmatprep.subr.bf16.mxu0 0
      %7052 = vmatpush1.bf16.msra.mxu0 0
      %7053 = vmatprep.subr.bf16.mxu0 0
      %7054 = vmatpush1.bf16.msra.mxu0 0
      %7055 = vmatprep.subr.bf16.mxu0 0
      %7056 = vmatpush1.bf16.msra.mxu0 0
      %7057 = vmatprep.subr.bf16.mxu0 0
      %7058 = vmatpush1.bf16.msra.mxu0 0
      %7059 = vmatprep.subr.bf16.mxu0 %v7038
      %7060 = vmatpush1.bf16.msra.mxu0 %v7037
      %7061 = vmatprep.subr.bf16.mxu0 0
      %7062 = vmatpush2.bf16.msra.mxu0 0
      %7063 = vmatprep.subr.bf16.mxu0 0
      %7064 = vmatpush2.bf16.msra.mxu0 0
      %7065 = vmatprep.subr.bf16.mxu0 0
      %7066 = vmatpush2.bf16.msra.mxu0 0
      %7067 = vmatprep.subr.bf16.mxu0 0
      %7068 = vmatpush2.bf16.msra.mxu0 0
      %7069 = vmatprep.subr.bf16.mxu0 0
      %7070 = vmatpush2.bf16.msra.mxu0 0
      %7071 = vmatprep.subr.bf16.mxu0 0
      %7072 = vmatpush2.bf16.msra.mxu0 0
      %7073 = vmatprep.subr.bf16.mxu0 0
      %7074 = vmatpush2.bf16.msra.mxu0 0
      %7075 = vmatprep.subr.bf16.mxu0 0
      %7076 = vmatpush2.bf16.msra.mxu0 0
      %7077 = vmatprep.mubr.bf16.mxu0 0
      %7078 = vmatmul.mubr.bf16.gmra.mxu0 %v7043
      %v7079 = vpop.f32.mrf.mxu0
      %v7080 = vadd.f32 0.0, %v7079
      %v7081 = vpop.f32.mrf.mxu0
      %v7082 = vadd.f32 0.0, %v7081
      %v7083 = vpop.f32.mrf.mxu0
      %v7084 = vpop.f32.mrf.mxu0
      %7085 = vdwg.mxu0
      %7086 = vmatprep.subr.bf16.mxu0 0
      %7087 = vmatpush1.bf16.msra.mxu0 0
      %7088 = vmatprep.subr.bf16.mxu0 0
      %7089 = vmatpush1.bf16.msra.mxu0 0
      %7090 = vmatprep.subr.bf16.mxu0 0
      %7091 = vmatpush1.bf16.msra.mxu0 0
      %7092 = vmatprep.subr.bf16.mxu0 0
      %7093 = vmatpush1.bf16.msra.mxu0 0
      %7094 = vmatprep.subr.bf16.mxu0 0
      %7095 = vmatpush1.bf16.msra.mxu0 0
      %7096 = vmatprep.subr.bf16.mxu0 0
      %7097 = vmatpush1.bf16.msra.mxu0 0
      %7098 = vmatprep.subr.bf16.mxu0 0
      %7099 = vmatpush1.bf16.msra.mxu0 0
      %7100 = vmatprep.subr.bf16.mxu0 0
      %7101 = vmatpush1.bf16.msra.mxu0 %v7036
      %7102 = vmatprep.subr.bf16.mxu0 0
      %7103 = vmatpush2.bf16.msra.mxu0 0
      %7104 = vmatprep.subr.bf16.mxu0 0
      %7105 = vmatpush2.bf16.msra.mxu0 0
      %7106 = vmatprep.subr.bf16.mxu0 0
      %7107 = vmatpush2.bf16.msra.mxu0 0
      %7108 = vmatprep.subr.bf16.mxu0 0
      %7109 = vmatpush2.bf16.msra.mxu0 0
      %7110 = vmatprep.subr.bf16.mxu0 0
      %7111 = vmatpush2.bf16.msra.mxu0 0
      %7112 = vmatprep.subr.bf16.mxu0 0
      %7113 = vmatpush2.bf16.msra.mxu0 0
      %7114 = vmatprep.subr.bf16.mxu0 0
      %7115 = vmatpush2.bf16.msra.mxu0 0
      %7116 = vmatprep.subr.bf16.mxu0 0
      %7117 = vmatpush2.bf16.msra.mxu0 0
      %7118 = vmatprep.mubr.bf16.mxu0 0
      %7119 = vmatmul.mubr.bf16.gmra.mxu0 %v7043
      %v7120 = vpop.f32.mrf.mxu0
      %v7121 = vadd.f32 0.0, %v7120
      %v7122 = vpop.f32.mrf.mxu0
      %v7123 = vpop.f32.mrf.mxu0
      %v7124 = vpop.f32.mrf.mxu0
      %7125 = vdwg.mxu0
      %v7126 = vadd.f32 %v7026, %v7080
      %v7127 = vadd.f32 %v7027, %v7082
      %v7128 = vadd.f32 %v7028, %v7121
      %v7129 = vld [vmem:[%s14] sm:$0x3]
      %7131 = vset.pattern.permute.xlu0 0
      %7132 = vperm.xlu0 %7131, %v7129
      %v7133 = vpop.permute.xlu0 %7132
      %v7135 = vadd.f32 %v7126, %v7133
      %v7136 = vadd.f32 %v7127, %v7133
      %v7137 = vadd.f32 %v7128, %v7133
      %v7141 = vcombine.low %v7135, %v7136
      %v7143 = vunpack.c.l.s4 1983009808
      %v7144 = vunpack.c.0.s8 %v7143
      %v7145 = vlaneseq
      %v7146 = vshrl.u32 %v7145, 7
      %v7147 = vsub.s32 %v7144, %v7146
      %v7148 = vrot.slane %v7141, %v7147
      %v7150 = vunpack.c.l.s4 1983009808
      %v7151 = vunpack.c.0.s8 %v7150
      %v7152 = vlaneseq
      %v7153 = vshrl.u32 %v7152, 7
      %v7154 = vsub.s32 %v7151, %v7153
      %v7155 = vrot.slane %v7137, %v7154
      %v7156 = vcombine.low %v7148, %v7155
      %vm7158 = vcmask 1043458
      %vm7159 = vmor %vm7158, %vm717
      %vm7160 = vcmask 259076
      %vm7161 = vmor %vm7160, %vm7159
      %7162 = vst.msk [vmem:[%s637] sm:$0x3f] %vm7161, %v7156
      %p7163 = scmp.lt.s32.totalorder %s32, 1
      %s7164 = scalar_select %p7163, %s32, 1
      %s7165 = smul.addr %s7164, 3
      %s7166 = smul.addr %s7165, 2
      %s7167 = scalar_lea.vmem %s19, %s7166
      %p7168 = scmp.lt.s32.totalorder %s32, 1
      %s7169 = scalar_select %p7168, %s32, 1
      %s7170 = smul.addr %s7169, 4
      %s7171 = smul.addr %s7170, 8
      %s7172 = scalar_lea.vmem %s20, %s7171
      // Predicated region
      $region97: #{unet_ld_forward.1} parent=95 // pred_check
        %p7173 = pneg %p454
      $region98: #{unet_ld_forward.1} parent=95 // pred_check_branch
        %7175 = sbr.rel (%p7173) target = $region100
      $region99: #{unet_ld_forward.1} parent=95 // pred_region
        _
      $region100: #{unet_ld_forward.1} parent=95 // pred_fallthru
        _
      // Predicated region
      $region101: #{unet_ld_forward.1} parent=95 // pred_check
        %p7176 = pneg %p480
      $region102: #{unet_ld_forward.1} parent=95 // pred_check_branch
        %7178 = sbr.rel (%p7176) target = $region104
      $region103: #{unet_ld_forward.1} parent=95 // pred_region
        _
      $region104: #{unet_ld_forward.1} parent=95 // pred_fallthru
        _
    $region96: #{unet_ld_forward.1} parent=5 // pred_fallthru
      _
    %p7179 = scmp.le.s32.totalorder 2, %s27
    // Predicated region
    $region105: #{unet_ld_forward.1} parent=5 // pred_check
      %p7180 = pneg %p7179
    $region106: #{unet_ld_forward.1} parent=5 // pred_check_branch
      %7182 = sbr.rel (%p7180) target = $region108
    $region107: #{unet_ld_forward.1} parent=5 // pred_region
      %s7183 = ssub.s32 %s27, 2
      // Predicated region
      $region109: #{unet_ld_forward.1} parent=107 // pred_check
        %p7184 = pneg %p460
      $region110: #{unet_ld_forward.1} parent=107 // pred_check_branch
        %7186 = sbr.rel (%p7184) target = $region112
      $region111: #{unet_ld_forward.1} parent=107 // pred_region
        %p7187 = scmp.lt.s32.totalorder %s33, 1
        %s7188 = scalar_select %p7187, %s33, 1
        %s7189 = smul.addr %s7188, 3
        %s7190 = smul.addr %s7189, 2
        %s7191 = scalar_lea.vmem %s19, %s7190
      $region112: #{unet_ld_forward.1} parent=107 // pred_fallthru
        _
      // Predicated region
      $region113: #{unet_ld_forward.1} parent=107 // pred_check
        %p7192 = pneg %p486
      $region114: #{unet_ld_forward.1} parent=107 // pred_check_branch
        %7194 = sbr.rel (%p7192) target = $region116
      $region115: #{unet_ld_forward.1} parent=107 // pred_region
        %p7195 = scmp.lt.s32.totalorder %s33, 1
        %s7196 = scalar_select %p7195, %s33, 1
        %s7197 = smul.addr %s7196, 4
        %s7198 = smul.addr %s7197, 8
        %s7199 = scalar_lea.vmem %s20, %s7198
      $region116: #{unet_ld_forward.1} parent=107 // pred_fallthru
        _
    $region108: #{unet_ld_forward.1} parent=5 // pred_fallthru
      _
  $region6: #{unet_ld_forward.1} parent=0 // loop_footer
    %s31 = sadd.s32 1, %s27
  $region7: #{unet_ld_forward.1} parent=0 // loop_footer_branch
    %26 = sbr.rel target = $region3
  $region8: #{unet_ld_forward.1} parent=0 // loop_exit
    _

</llo_original>
